<compile_context>
chip_gen: v6e
topology: v6e:2x2x1
jax: 0.10.0
libtpu: 0.0.40
codegen_flags: <defaults>
</compile_context>

<pallas_src>
import math
import functools

import numpy as np
import jax
import jax.numpy as jnp
from jax import lax
from jax.experimental import pallas as pl
from jax.experimental.pallas import tpu as pltpu


_EPS = 1e-5
_VMEM = pl.BlockSpec(memory_space=pltpu.MemorySpace.VMEM)


# ------------------------------------------------------------------ Pallas kernels

def _stem_kernel(p_ref, w_ref, b_ref, o_ref):
    # fused Conv (im2col matmul, BN scale folded into w) + bias(=BN shift) + ReLU
    acc = jnp.dot(p_ref[...].astype(jnp.bfloat16),
                  w_ref[...].astype(jnp.bfloat16),
                  preferred_element_type=jnp.float32)
    o_ref[...] = jnp.maximum(acc + b_ref[...], 0.0)


def _maxpool_kernel(p_ref, o_ref):
    # p_ref: (K, M, C) window taps; reduce max over K (static unrolled loop)
    acc = p_ref[0]
    for k in range(1, p_ref.shape[0]):
        acc = jnp.maximum(acc, p_ref[k])
    o_ref[...] = acc


def _bottleneck_kernel(x_ref, mask_ref, s1_ref, b1_ref, w1_ref,
                       s2_ref, b2_ref, w2_ref, o_ref, *, ext, mp, wp, growth):
    # x_ref:   (Mext, Cin)  activation in padded/extended flat spatial layout (f32)
    # mask_ref:(Mext, 1)    1.0 at valid interior positions, 0.0 at padding/extension
    # w1_ref:  (Cin, 4g)    1x1 conv weights
    # w2_ref:  (9, 4g, g)   3x3 conv weights, tap-major (dy, dx)
    # o_ref:   (Mp, g)      new features at every padded-center position
    x = x_ref[...]
    # BN1 + ReLU (f32 elementwise)
    h = jnp.maximum(x * s1_ref[...] + b1_ref[...], 0.0)
    # 1x1 conv on MXU (bf16 operands, f32 accumulate)
    t = jnp.dot(h.astype(jnp.bfloat16), w1_ref[...].astype(jnp.bfloat16),
                preferred_element_type=jnp.float32)
    # BN2 + ReLU, then zero the padding rows -> emulates Conv2d(padding=1) zero padding
    t = jnp.maximum(t * s2_ref[...] + b2_ref[...], 0.0)
    t = jnp.where(mask_ref[...] > 0.0, t, 0.0)
    # 3x3 conv as 9 constant-offset row slices (in-kernel im2col)
    acc = jnp.zeros((mp, growth), jnp.float32)
    k = 0
    for dy in (-1, 0, 1):
        for dx in (-1, 0, 1):
            off = ext + dy * wp + dx
            acc = acc + jnp.dot(t[off:off + mp, :].astype(jnp.bfloat16),
                                w2_ref[k].astype(jnp.bfloat16),
                                preferred_element_type=jnp.float32)
            k += 1
    o_ref[...] = acc


def _transition_kernel(x_ref, s_ref, b_ref, w_ref, o_ref, *, ext, mp, wp):
    # BN + ReLU + 1x1 conv + 2x2 average (at every padded-center position);
    # stride-2 subsampling of the valid centers is done by the (cheap) JAX wrapper.
    h = jnp.maximum(x_ref[...] * s_ref[...] + b_ref[...], 0.0)
    t = jnp.dot(h.astype(jnp.bfloat16), w_ref[...].astype(jnp.bfloat16),
                preferred_element_type=jnp.float32)
    o_ref[...] = (t[ext:ext + mp]
                  + t[ext + 1:ext + 1 + mp]
                  + t[ext + wp:ext + wp + mp]
                  + t[ext + wp + 1:ext + wp + 1 + mp]) * 0.25


def _head_kernel(x_ref, s_ref, b_ref, p_ref, w_ref, bias_ref, o_ref):
    # final BN + ReLU, AvgPool(3)->Flatten folded into a selection matmul, then Linear.
    h = jnp.maximum(x_ref[...] * s_ref[...] + b_ref[...], 0.0)     # (Mext, C)
    pooled = jnp.dot(p_ref[...], h, preferred_element_type=jnp.float32)   # (N, C)
    o_ref[...] = (jnp.dot(pooled, w_ref[...], preferred_element_type=jnp.float32)
                  + bias_ref[...])


# ------------------------------------------------------------------ pallas_call wrappers

def pallas_stem(patches, w_folded, shift):
    m = patches.shape[0]
    c = w_folded.shape[1]
    return pl.pallas_call(
        _stem_kernel,
        out_shape=jax.ShapeDtypeStruct((m, c), jnp.float32),
        in_specs=[_VMEM, _VMEM, _VMEM],
        out_specs=_VMEM,
    )(patches, w_folded, shift.reshape(1, c))


def pallas_maxpool(taps_kmc):
    k, m, c = taps_kmc.shape
    return pl.pallas_call(
        _maxpool_kernel,
        out_shape=jax.ShapeDtypeStruct((m, c), jnp.float32),
        in_specs=[_VMEM],
        out_specs=_VMEM,
    )(taps_kmc)


def _bn_affine(bn):
    scale = bn["gamma"] * lax.rsqrt(bn["var"] + _EPS)
    shift = bn["beta"] - bn["mean"] * scale
    return scale, shift


def pallas_bottleneck(x_ext, mask, bp, gm):
    mext, cin = x_ext.shape
    c_mid = bp["w1"].shape[1]
    growth = bp["w2"].shape[-1]
    s1, b1 = _bn_affine(bp["bn1"])
    s2, b2 = _bn_affine(bp["bn2"])
    kern = functools.partial(_bottleneck_kernel,
                             ext=gm["ext"], mp=gm["mp"], wp=gm["wp"], growth=growth)
    return pl.pallas_call(
        kern,
        out_shape=jax.ShapeDtypeStruct((gm["mp"], growth), jnp.float32),
        in_specs=[_VMEM] * 8,
        out_specs=_VMEM,
    )(x_ext, mask, s1.reshape(1, cin), b1.reshape(1, cin), bp["w1"],
      s2.reshape(1, c_mid), b2.reshape(1, c_mid), bp["w2"])


def pallas_transition(x_ext, tp, gm):
    mext, cin = x_ext.shape
    cout = tp["w"].shape[1]
    s, b = _bn_affine(tp["bn"])
    kern = functools.partial(_transition_kernel, ext=gm["ext"], mp=gm["mp"], wp=gm["wp"])
    return pl.pallas_call(
        kern,
        out_shape=jax.ShapeDtypeStruct((gm["mp"], cout), jnp.float32),
        in_specs=[_VMEM] * 4,
        out_specs=_VMEM,
    )(x_ext, s.reshape(1, cin), b.reshape(1, cin), tp["w"])


def pallas_head(x_ext, p_sel, bn, fc_w, fc_b):
    mext, c = x_ext.shape
    nb = p_sel.shape[0]
    ncls = fc_w.shape[1]
    s, b = _bn_affine(bn)
    return pl.pallas_call(
        _head_kernel,
        out_shape=jax.ShapeDtypeStruct((nb, ncls), jnp.float32),
        in_specs=[_VMEM] * 6,
        out_specs=_VMEM,
    )(x_ext, s.reshape(1, c), b.reshape(1, c), p_sel, fc_w, fc_b.reshape(1, ncls))


# ------------------------------------------------------------------ layout / glue helpers

def _window_taps(x_nhwc, kh, kw, stride, pad, pad_value):
    """Return list of kh*kw taps, each (N, Ho, Wo, C), plus (Ho, Wo)."""
    n, h, w, c = x_nhwc.shape
    xp = jnp.pad(x_nhwc, ((0, 0), (pad, pad), (pad, pad), (0, 0)),
                 constant_values=pad_value)
    ho = (h + 2 * pad - kh) // stride + 1
    wo = (w + 2 * pad - kw) // stride + 1
    taps = []
    for dy in range(kh):
        for dx in range(kw):
            taps.append(xp[:, dy:dy + stride * (ho - 1) + 1:stride,
                              dx:dx + stride * (wo - 1) + 1:stride, :])
    return taps, ho, wo


def _geom(n, h, w):
    hp, wp = h + 2, w + 2
    ext = wp + 1                      # head/tail row extension so all tap slices stay in-bounds
    mp = n * hp * wp
    return dict(n=n, h=h, w=w, hp=hp, wp=wp, ext=ext, mp=mp, mext=mp + 2 * ext)


def _to_ext_layout(x_nhwc):
    """(N,H,W,C) -> (Mext, C) zero-padded flat spatial layout with row extension."""
    n, h, w, c = x_nhwc.shape
    gm = _geom(n, h, w)
    xp = jnp.pad(x_nhwc, ((0, 0), (1, 1), (1, 1), (0, 0)))
    flat = xp.reshape(gm["mp"], c)
    return jnp.pad(flat, ((gm["ext"], gm["ext"]), (0, 0))), gm


def _interior_mask(gm):
    """(Mext, 1) f32 mask: 1 at valid interior spatial positions, 0 elsewhere (constant)."""
    m = np.zeros((gm["n"], gm["hp"], gm["wp"]), np.float32)
    m[:, 1:gm["h"] + 1, 1:gm["w"] + 1] = 1.0
    m = m.reshape(gm["mp"], 1)
    m = np.pad(m, ((gm["ext"], gm["ext"]), (0, 0)))
    return jnp.asarray(m)


def _avg_select(gm):
    """(N, Mext) selection matrix implementing global average over the HxW interior."""
    p = np.zeros((gm["n"], gm["mext"]), np.float32)
    inv = 1.0 / float(gm["h"] * gm["w"])
    for nn in range(gm["n"]):
        for pi in range(1, gm["h"] + 1):
            for pj in range(1, gm["w"] + 1):
                p[nn, gm["ext"] + nn * gm["hp"] * gm["wp"] + pi * gm["wp"] + pj] = inv
    return jnp.asarray(p)


# ------------------------------------------------------------------ parameters

def _make_bn(key, c):
    k1, k2, k3, k4 = jax.random.split(key, 4)
    return dict(
        gamma=jax.random.uniform(k1, (c,), jnp.float32, 0.5, 1.5),
        beta=jax.random.normal(k2, (c,), jnp.float32) * 0.1,
        mean=jax.random.normal(k3, (c,), jnp.float32) * 0.1,
        var=jax.random.uniform(k4, (c,), jnp.float32, 0.5, 1.5),
    )


def init_params(key, nblocks, growth_rate, num_classes=20):
    keys = iter(jax.random.split(key, 256))
    params = {}
    in_channels = 2 * growth_rate

    # stem: Conv(1->in_ch, 7x7, s2, p3) as (49, C) matmul weights
    params["stem_conv"] = (jax.random.normal(next(keys), (49, in_channels), jnp.float32)
                           / math.sqrt(49.0))
    params["stem_bn"] = _make_bn(next(keys), in_channels)

    blocks = []
    for i, num_bn in enumerate(nblocks):
        bottlenecks = []
        for j in range(num_bn):
            cin = in_channels + j * growth_rate
            mid = 4 * growth_rate
            bottlenecks.append(dict(
                bn1=_make_bn(next(keys), cin),
                w1=jax.random.normal(next(keys), (cin, mid), jnp.float32) / math.sqrt(cin),
                bn2=_make_bn(next(keys), mid),
                # 3x3 conv weights stored tap-major: (9, mid, growth)
                w2=(jax.random.normal(next(keys), (9, mid, growth_rate), jnp.float32)
                    / math.sqrt(9.0 * mid)),
            ))
        in_channels += num_bn * growth_rate
        trans = None
        if i != len(nblocks) - 1:
            trans = dict(
                bn=_make_bn(next(keys), in_channels),
                w=(jax.random.normal(next(keys), (in_channels, in_channels // 2), jnp.float32)
                   / math.sqrt(in_channels)),
            )
            in_channels //= 2
        blocks.append(dict(bottlenecks=bottlenecks, transition=trans))
    params["blocks"] = blocks

    params["final_bn"] = _make_bn(next(keys), in_channels)
    params["fc_w"] = (jax.random.normal(next(keys), (in_channels, num_classes), jnp.float32)
                      / math.sqrt(in_channels))
    params["fc_b"] = jax.random.normal(next(keys), (num_classes,), jnp.float32) * 0.1
    return params


# ------------------------------------------------------------------ forward pass

@jax.jit
def mycnn_forward(x_nchw, params):
    # NCHW (PyTorch) -> NHWC internally
    x = jnp.transpose(x_nchw, (0, 2, 3, 1)).astype(jnp.float32)
    n = x.shape[0]

    # ---- stem: Conv7x7 s2 p3 + BN + ReLU fused into a single matmul kernel
    taps, ho, wo = _window_taps(x, 7, 7, 2, 3, 0.0)
    patches = jnp.stack(taps, axis=3).reshape(n * ho * wo, -1)     # (M, 49*Cin)
    scale, shift = _bn_affine(params["stem_bn"])
    x = pallas_stem(patches, params["stem_conv"] * scale[None, :], shift)
    c = x.shape[-1]
    x = x.reshape(n, ho, wo, c)

    # ---- MaxPool 3x3 s2 p1 (taps stacked on a leading axis: no transpose)
    taps, ho, wo = _window_taps(x, 3, 3, 2, 1, -jnp.inf)
    taps = jnp.stack(taps, axis=0).reshape(len(taps), n * ho * wo, c)
    x = pallas_maxpool(taps).reshape(n, ho, wo, c)

    # ---- dense blocks (+ transitions); one fused kernel per bottleneck / transition
    x_ext, gm = None, None
    for blk in params["blocks"]:
        x_ext, gm = _to_ext_layout(x)
        mask = _interior_mask(gm)
        for bp in blk["bottlenecks"]:
            y = pallas_bottleneck(x_ext, mask, bp, gm)             # (Mp, growth)
            y_ext = jnp.pad(y, ((gm["ext"], gm["ext"]), (0, 0)))
            # torch.cat([bottle_neck(x), x], dim=channel)
            x_ext = jnp.concatenate([y_ext, x_ext], axis=-1)
        if blk["transition"] is not None:
            s = pallas_transition(x_ext, blk["transition"], gm)    # (Mp, Cout)
            s4 = s.reshape(gm["n"], gm["hp"], gm["wp"], -1)
            x = s4[:, 1:gm["h"] + 1:2, 1:gm["w"] + 1:2, :]         # AvgPool2d(2,2) subsample

    # ---- head: final BN+ReLU + AvgPool(3) + Flatten + Dropout + Linear (one kernel)
    # TODO(synk): Dropout(p=0.25) is an inference-mode identity here (no RNG masking).
    p_sel = _avg_select(gm)
    out = pallas_head(x_ext, p_sel, params["final_bn"], params["fc_w"], params["fc_b"])
    return out


# ------------------------------------------------------------------ main

if __name__ == "__main__":
    nblocks = [2, 2]
    growth_rate = 4

    key = jax.random.PRNGKey(0)
    k_params, k_input = jax.random.split(key)

    params = init_params(k_params, nblocks, growth_rate, num_classes=20)

    # Input chosen so the spatial size before the final AvgPool2d(3) is 3x3,
    # matching Linear(in_channels, 20) after Flatten (as the PyTorch module assumes).
    x = jax.random.normal(k_input, (2, 1, 24, 24), jnp.float32)    # NCHW

    out = mycnn_forward(x, params)
    out = jax.block_until_ready(out)

    assert out.shape == (2, 20), out.shape
    assert jnp.all(jnp.isfinite(out))
    print("KERNEL_OK")
</pallas_src>

<mosaic_0001>
module attributes {stable_mosaic.version = 11 : i64} {
  func.func @_stem_kernel(%arg0: memref<288x49xf32, #tpu.memory_space<vmem>>, %arg1: memref<49x8xf32, #tpu.memory_space<vmem>>, %arg2: memref<1x8xf32, #tpu.memory_space<vmem>>, %arg3: memref<288x8xf32, #tpu.memory_space<vmem>>) attributes {dimension_semantics = [], scalar_prefetch = 0 : i64, scratch_operands = 0 : i64, tpu.core_type = #tpu.core_type<tc>} {
    %c0 = arith.constant 0 : index
    %c0_0 = arith.constant 0 : index
    %0 = vector.load %arg0[%c0, %c0_0] : memref<288x49xf32, #tpu.memory_space<vmem>>, vector<288x49xf32>
    %1 = arith.truncf %0 : vector<288x49xf32> to vector<288x49xbf16>
    %c0_1 = arith.constant 0 : index
    %c0_2 = arith.constant 0 : index
    %2 = vector.load %arg1[%c0_1, %c0_2] : memref<49x8xf32, #tpu.memory_space<vmem>>, vector<49x8xf32>
    %3 = arith.truncf %2 : vector<49x8xf32> to vector<49x8xbf16>
    %cst = arith.constant dense<0.000000e+00> : vector<288x8xf32>
    %4 = tpu.matmul %1, %3, %cst {dimension_numbers = #tpu.dot_dimension_numbers<[1], [0], [0], [1], [0, 0, 1, 1], [], []>} : vector<288x49xbf16>, vector<49x8xbf16>, vector<288x8xf32> -> vector<288x8xf32>
    %c0_3 = arith.constant 0 : index
    %c0_4 = arith.constant 0 : index
    %5 = vector.load %arg2[%c0_3, %c0_4] : memref<1x8xf32, #tpu.memory_space<vmem>>, vector<1x8xf32>
    %6 = vector.broadcast %5 : vector<1x8xf32> to vector<288x8xf32>
    %7 = arith.addf %4, %6 : vector<288x8xf32>
    %cst_5 = arith.constant 0.000000e+00 : f32
    %8 = vector.broadcast %cst_5 : f32 to vector<288x8xf32>
    %9 = arith.maximumf %7, %8 : vector<288x8xf32>
    %c0_6 = arith.constant 0 : index
    %c0_7 = arith.constant 0 : index
    %10 = vector.load %arg3[%c0_6, %c0_7] : memref<288x8xf32, #tpu.memory_space<vmem>>, vector<288x8xf32>
    tpu.vector_store %arg3[%c0_6, %c0_7], %9 {strides = array<i32>} : memref<288x8xf32, #tpu.memory_space<vmem>>, vector<288x8xf32>,
    return
  }
}

module attributes {stable_mosaic.version = 11 : i64} {
  func.func @_maxpool_kernel(%arg0: memref<9x72x8xf32, #tpu.memory_space<vmem>>, %arg1: memref<72x8xf32, #tpu.memory_space<vmem>>) attributes {dimension_semantics = [], scalar_prefetch = 0 : i64, scratch_operands = 0 : i64, tpu.core_type = #tpu.core_type<tc>} {
    %c0 = arith.constant 0 : index
    %c0_0 = arith.constant 0 : index
    %c0_1 = arith.constant 0 : index
    %0 = vector.load %arg0[%c0, %c0_0, %c0_1] : memref<9x72x8xf32, #tpu.memory_space<vmem>>, vector<1x72x8xf32>
    %1 = vector.shape_cast %0 : vector<1x72x8xf32> to vector<72x8xf32>
    %c1 = arith.constant 1 : index
    %c0_2 = arith.constant 0 : index
    %c0_3 = arith.constant 0 : index
    %2 = vector.load %arg0[%c1, %c0_2, %c0_3] : memref<9x72x8xf32, #tpu.memory_space<vmem>>, vector<1x72x8xf32>
    %3 = vector.shape_cast %2 : vector<1x72x8xf32> to vector<72x8xf32>
    %4 = arith.maximumf %1, %3 : vector<72x8xf32>
    %c2 = arith.constant 2 : index
    %c0_4 = arith.constant 0 : index
    %c0_5 = arith.constant 0 : index
    %5 = vector.load %arg0[%c2, %c0_4, %c0_5] : memref<9x72x8xf32, #tpu.memory_space<vmem>>, vector<1x72x8xf32>
    %6 = vector.shape_cast %5 : vector<1x72x8xf32> to vector<72x8xf32>
    %7 = arith.maximumf %4, %6 : vector<72x8xf32>
    %c3 = arith.constant 3 : index
    %c0_6 = arith.constant 0 : index
    %c0_7 = arith.constant 0 : index
    %8 = vector.load %arg0[%c3, %c0_6, %c0_7] : memref<9x72x8xf32, #tpu.memory_space<vmem>>, vector<1x72x8xf32>
    %9 = vector.shape_cast %8 : vector<1x72x8xf32> to vector<72x8xf32>
    %10 = arith.maximumf %7, %9 : vector<72x8xf32>
    %c4 = arith.constant 4 : index
    %c0_8 = arith.constant 0 : index
    %c0_9 = arith.constant 0 : index
    %11 = vector.load %arg0[%c4, %c0_8, %c0_9] : memref<9x72x8xf32, #tpu.memory_space<vmem>>, vector<1x72x8xf32>
    %12 = vector.shape_cast %11 : vector<1x72x8xf32> to vector<72x8xf32>
    %13 = arith.maximumf %10, %12 : vector<72x8xf32>
    %c5 = arith.constant 5 : index
    %c0_10 = arith.constant 0 : index
    %c0_11 = arith.constant 0 : index
    %14 = vector.load %arg0[%c5, %c0_10, %c0_11] : memref<9x72x8xf32, #tpu.memory_space<vmem>>, vector<1x72x8xf32>
    %15 = vector.shape_cast %14 : vector<1x72x8xf32> to vector<72x8xf32>
    %16 = arith.maximumf %13, %15 : vector<72x8xf32>
    %c6 = arith.constant 6 : index
    %c0_12 = arith.constant 0 : index
    %c0_13 = arith.constant 0 : index
    %17 = vector.load %arg0[%c6, %c0_12, %c0_13] : memref<9x72x8xf32, #tpu.memory_space<vmem>>, vector<1x72x8xf32>
    %18 = vector.shape_cast %17 : vector<1x72x8xf32> to vector<72x8xf32>
    %19 = arith.maximumf %16, %18 : vector<72x8xf32>
    %c7 = arith.constant 7 : index
    %c0_14 = arith.constant 0 : index
    %c0_15 = arith.constant 0 : index
    %20 = vector.load %arg0[%c7, %c0_14, %c0_15] : memref<9x72x8xf32, #tpu.memory_space<vmem>>, vector<1x72x8xf32>
    %21 = vector.shape_cast %20 : vector<1x72x8xf32> to vector<72x8xf32>
    %22 = arith.maximumf %19, %21 : vector<72x8xf32>
    %c8 = arith.constant 8 : index
    %c0_16 = arith.constant 0 : index
    %c0_17 = arith.constant 0 : index
    %23 = vector.load %arg0[%c8, %c0_16, %c0_17] : memref<9x72x8xf32, #tpu.memory_space<vmem>>, vector<1x72x8xf32>
    %24 = vector.shape_cast %23 : vector<1x72x8xf32> to vector<72x8xf32>
    %25 = arith.maximumf %22, %24 : vector<72x8xf32>
    %c0_18 = arith.constant 0 : index
    %c0_19 = arith.constant 0 : index
    %26 = vector.load %arg1[%c0_18, %c0_19] : memref<72x8xf32, #tpu.memory_space<vmem>>, vector<72x8xf32>
    tpu.vector_store %arg1[%c0_18, %c0_19], %25 {strides = array<i32>} : memref<72x8xf32, #tpu.memory_space<vmem>>, vector<72x8xf32>,
    return
  }
}

module attributes {stable_mosaic.version = 11 : i64} {
  func.func @_bottleneck_kernel(%arg0: memref<146x8xf32, #tpu.memory_space<vmem>>, %arg1: memref<146x1xf32, #tpu.memory_space<vmem>>, %arg2: memref<1x8xf32, #tpu.memory_space<vmem>>, %arg3: memref<1x8xf32, #tpu.memory_space<vmem>>, %arg4: memref<8x16xf32, #tpu.memory_space<vmem>>, %arg5: memref<1x16xf32, #tpu.memory_space<vmem>>, %arg6: memref<1x16xf32, #tpu.memory_space<vmem>>, %arg7: memref<9x16x4xf32, #tpu.memory_space<vmem>>, %arg8: memref<128x4xf32, #tpu.memory_space<vmem>>) attributes {dimension_semantics = [], scalar_prefetch = 0 : i64, scratch_operands = 0 : i64, tpu.core_type = #tpu.core_type<tc>} {
    %c0 = arith.constant 0 : index
    %c0_0 = arith.constant 0 : index
    %0 = vector.load %arg0[%c0, %c0_0] : memref<146x8xf32, #tpu.memory_space<vmem>>, vector<146x8xf32>
    %c0_1 = arith.constant 0 : index
    %c0_2 = arith.constant 0 : index
    %1 = vector.load %arg2[%c0_1, %c0_2] : memref<1x8xf32, #tpu.memory_space<vmem>>, vector<1x8xf32>
    %2 = vector.broadcast %1 : vector<1x8xf32> to vector<146x8xf32>
    %3 = arith.mulf %0, %2 : vector<146x8xf32>
    %c0_3 = arith.constant 0 : index
    %c0_4 = arith.constant 0 : index
    %4 = vector.load %arg3[%c0_3, %c0_4] : memref<1x8xf32, #tpu.memory_space<vmem>>, vector<1x8xf32>
    %5 = vector.broadcast %4 : vector<1x8xf32> to vector<146x8xf32>
    %6 = arith.addf %3, %5 : vector<146x8xf32>
    %cst = arith.constant 0.000000e+00 : f32
    %7 = vector.broadcast %cst : f32 to vector<146x8xf32>
    %8 = arith.maximumf %6, %7 : vector<146x8xf32>
    %9 = arith.truncf %8 : vector<146x8xf32> to vector<146x8xbf16>
    %c0_5 = arith.constant 0 : index
    %c0_6 = arith.constant 0 : index
    %10 = vector.load %arg4[%c0_5, %c0_6] : memref<8x16xf32, #tpu.memory_space<vmem>>, vector<8x16xf32>
    %11 = arith.truncf %10 : vector<8x16xf32> to vector<8x16xbf16>
    %cst_7 = arith.constant dense<0.000000e+00> : vector<146x16xf32>
    %12 = tpu.matmul %9, %11, %cst_7 {dimension_numbers = #tpu.dot_dimension_numbers<[1], [0], [0], [1], [0, 0, 1, 1], [], []>} : vector<146x8xbf16>, vector<8x16xbf16>, vector<146x16xf32> -> vector<146x16xf32>
    %c0_8 = arith.constant 0 : index
    %c0_9 = arith.constant 0 : index
    %13 = vector.load %arg5[%c0_8, %c0_9] : memref<1x16xf32, #tpu.memory_space<vmem>>, vector<1x16xf32>
    %14 = vector.broadcast %13 : vector<1x16xf32> to vector<146x16xf32>
    %15 = arith.mulf %12, %14 : vector<146x16xf32>
    %c0_10 = arith.constant 0 : index
    %c0_11 = arith.constant 0 : index
    %16 = vector.load %arg6[%c0_10, %c0_11] : memref<1x16xf32, #tpu.memory_space<vmem>>, vector<1x16xf32>
    %17 = vector.broadcast %16 : vector<1x16xf32> to vector<146x16xf32>
    %18 = arith.addf %15, %17 : vector<146x16xf32>
    %cst_12 = arith.constant 0.000000e+00 : f32
    %19 = vector.broadcast %cst_12 : f32 to vector<146x16xf32>
    %20 = arith.maximumf %18, %19 : vector<146x16xf32>
    %c0_13 = arith.constant 0 : index
    %c0_14 = arith.constant 0 : index
    %21 = vector.load %arg1[%c0_13, %c0_14] : memref<146x1xf32, #tpu.memory_space<vmem>>, vector<146x1xf32>
    %cst_15 = arith.constant 0.000000e+00 : f32
    %22 = vector.broadcast %cst_15 : f32 to vector<146x1xf32>
    %23 = arith.cmpf ogt, %21, %22 : vector<146x1xf32>
    %cst_16 = arith.constant 0.000000e+00 : f32
    %24 = vector.shape_cast %23 : vector<146x1xi1> to vector<146x1xi1>
    %25 = vector.broadcast %24 : vector<146x1xi1> to vector<146x16xi1>
    %26 = vector.broadcast %cst_16 : f32 to vector<146x16xf32>
    %27 = arith.select %25, %20, %26 : vector<146x16xi1>, vector<146x16xf32>
    %cst_17 = arith.constant 0.000000e+00 : f32
    %28 = vector.broadcast %cst_17 : f32 to vector<128x4xf32>
    %29 = vector.extract_strided_slice %27 {offsets = [0, 0], sizes = [128, 16], strides = [1, 1]} : vector<146x16xf32> to vector<128x16xf32>
    %30 = arith.truncf %29 : vector<128x16xf32> to vector<128x16xbf16>
    %c0_18 = arith.constant 0 : index
    %c0_19 = arith.constant 0 : index
    %c0_20 = arith.constant 0 : index
    %31 = vector.load %arg7[%c0_18, %c0_19, %c0_20] : memref<9x16x4xf32, #tpu.memory_space<vmem>>, vector<1x16x4xf32>
    %32 = vector.shape_cast %31 : vector<1x16x4xf32> to vector<16x4xf32>
    %33 = arith.truncf %32 : vector<16x4xf32> to vector<16x4xbf16>
    %cst_21 = arith.constant dense<0.000000e+00> : vector<128x4xf32>
    %34 = tpu.matmul %30, %33, %cst_21 {dimension_numbers = #tpu.dot_dimension_numbers<[1], [0], [0], [1], [0, 0, 1, 1], [], []>} : vector<128x16xbf16>, vector<16x4xbf16>, vector<128x4xf32> -> vector<128x4xf32>
    %35 = arith.addf %28, %34 : vector<128x4xf32>
    %36 = vector.extract_strided_slice %27 {offsets = [1, 0], sizes = [128, 16], strides = [1, 1]} : vector<146x16xf32> to vector<128x16xf32>
    %37 = arith.truncf %36 : vector<128x16xf32> to vector<128x16xbf16>
    %c1 = arith.constant 1 : index
    %c0_22 = arith.constant 0 : index
    %c0_23 = arith.constant 0 : index
    %38 = vector.load %arg7[%c1, %c0_22, %c0_23] : memref<9x16x4xf32, #tpu.memory_space<vmem>>, vector<1x16x4xf32>
    %39 = vector.shape_cast %38 : vector<1x16x4xf32> to vector<16x4xf32>
    %40 = arith.truncf %39 : vector<16x4xf32> to vector<16x4xbf16>
    %cst_24 = arith.constant dense<0.000000e+00> : vector<128x4xf32>
    %41 = tpu.matmul %37, %40, %cst_24 {dimension_numbers = #tpu.dot_dimension_numbers<[1], [0], [0], [1], [0, 0, 1, 1], [], []>} : vector<128x16xbf16>, vector<16x4xbf16>, vector<128x4xf32> -> vector<128x4xf32>
    %42 = arith.addf %35, %41 : vector<128x4xf32>
    %43 = vector.extract_strided_slice %27 {offsets = [2, 0], sizes = [128, 16], strides = [1, 1]} : vector<146x16xf32> to vector<128x16xf32>
    %44 = arith.truncf %43 : vector<128x16xf32> to vector<128x16xbf16>
    %c2 = arith.constant 2 : index
    %c0_25 = arith.constant 0 : index
    %c0_26 = arith.constant 0 : index
    %45 = vector.load %arg7[%c2, %c0_25, %c0_26] : memref<9x16x4xf32, #tpu.memory_space<vmem>>, vector<1x16x4xf32>
    %46 = vector.shape_cast %45 : vector<1x16x4xf32> to vector<16x4xf32>
    %47 = arith.truncf %46 : vector<16x4xf32> to vector<16x4xbf16>
    %cst_27 = arith.constant dense<0.000000e+00> : vector<128x4xf32>
    %48 = tpu.matmul %44, %47, %cst_27 {dimension_numbers = #tpu.dot_dimension_numbers<[1], [0], [0], [1], [0, 0, 1, 1], [], []>} : vector<128x16xbf16>, vector<16x4xbf16>, vector<128x4xf32> -> vector<128x4xf32>
    %49 = arith.addf %42, %48 : vector<128x4xf32>
    %50 = vector.extract_strided_slice %27 {offsets = [8, 0], sizes = [128, 16], strides = [1, 1]} : vector<146x16xf32> to vector<128x16xf32>
    %51 = arith.truncf %50 : vector<128x16xf32> to vector<128x16xbf16>
    %c3 = arith.constant 3 : index
    %c0_28 = arith.constant 0 : index
    %c0_29 = arith.constant 0 : index
    %52 = vector.load %arg7[%c3, %c0_28, %c0_29] : memref<9x16x4xf32, #tpu.memory_space<vmem>>, vector<1x16x4xf32>
    %53 = vector.shape_cast %52 : vector<1x16x4xf32> to vector<16x4xf32>
    %54 = arith.truncf %53 : vector<16x4xf32> to vector<16x4xbf16>
    %cst_30 = arith.constant dense<0.000000e+00> : vector<128x4xf32>
    %55 = tpu.matmul %51, %54, %cst_30 {dimension_numbers = #tpu.dot_dimension_numbers<[1], [0], [0], [1], [0, 0, 1, 1], [], []>} : vector<128x16xbf16>, vector<16x4xbf16>, vector<128x4xf32> -> vector<128x4xf32>
    %56 = arith.addf %49, %55 : vector<128x4xf32>
    %57 = vector.extract_strided_slice %27 {offsets = [9, 0], sizes = [128, 16], strides = [1, 1]} : vector<146x16xf32> to vector<128x16xf32>
    %58 = arith.truncf %57 : vector<128x16xf32> to vector<128x16xbf16>
    %c4 = arith.constant 4 : index
    %c0_31 = arith.constant 0 : index
    %c0_32 = arith.constant 0 : index
    %59 = vector.load %arg7[%c4, %c0_31, %c0_32] : memref<9x16x4xf32, #tpu.memory_space<vmem>>, vector<1x16x4xf32>
    %60 = vector.shape_cast %59 : vector<1x16x4xf32> to vector<16x4xf32>
    %61 = arith.truncf %60 : vector<16x4xf32> to vector<16x4xbf16>
    %cst_33 = arith.constant dense<0.000000e+00> : vector<128x4xf32>
    %62 = tpu.matmul %58, %61, %cst_33 {dimension_numbers = #tpu.dot_dimension_numbers<[1], [0], [0], [1], [0, 0, 1, 1], [], []>} : vector<128x16xbf16>, vector<16x4xbf16>, vector<128x4xf32> -> vector<128x4xf32>
    %63 = arith.addf %56, %62 : vector<128x4xf32>
    %64 = vector.extract_strided_slice %27 {offsets = [10, 0], sizes = [128, 16], strides = [1, 1]} : vector<146x16xf32> to vector<128x16xf32>
    %65 = arith.truncf %64 : vector<128x16xf32> to vector<128x16xbf16>
    %c5 = arith.constant 5 : index
    %c0_34 = arith.constant 0 : index
    %c0_35 = arith.constant 0 : index
    %66 = vector.load %arg7[%c5, %c0_34, %c0_35] : memref<9x16x4xf32, #tpu.memory_space<vmem>>, vector<1x16x4xf32>
    %67 = vector.shape_cast %66 : vector<1x16x4xf32> to vector<16x4xf32>
    %68 = arith.truncf %67 : vector<16x4xf32> to vector<16x4xbf16>
    %cst_36 = arith.constant dense<0.000000e+00> : vector<128x4xf32>
    %69 = tpu.matmul %65, %68, %cst_36 {dimension_numbers = #tpu.dot_dimension_numbers<[1], [0], [0], [1], [0, 0, 1, 1], [], []>} : vector<128x16xbf16>, vector<16x4xbf16>, vector<128x4xf32> -> vector<128x4xf32>
    %70 = arith.addf %63, %69 : vector<128x4xf32>
    %71 = vector.extract_strided_slice %27 {offsets = [16, 0], sizes = [128, 16], strides = [1, 1]} : vector<146x16xf32> to vector<128x16xf32>
    %72 = arith.truncf %71 : vector<128x16xf32> to vector<128x16xbf16>
    %c6 = arith.constant 6 : index
    %c0_37 = arith.constant 0 : index
    %c0_38 = arith.constant 0 : index
    %73 = vector.load %arg7[%c6, %c0_37, %c0_38] : memref<9x16x4xf32, #tpu.memory_space<vmem>>, vector<1x16x4xf32>
    %74 = vector.shape_cast %73 : vector<1x16x4xf32> to vector<16x4xf32>
    %75 = arith.truncf %74 : vector<16x4xf32> to vector<16x4xbf16>
    %cst_39 = arith.constant dense<0.000000e+00> : vector<128x4xf32>
    %76 = tpu.matmul %72, %75, %cst_39 {dimension_numbers = #tpu.dot_dimension_numbers<[1], [0], [0], [1], [0, 0, 1, 1], [], []>} : vector<128x16xbf16>, vector<16x4xbf16>, vector<128x4xf32> -> vector<128x4xf32>
    %77 = arith.addf %70, %76 : vector<128x4xf32>
    %78 = vector.extract_strided_slice %27 {offsets = [17, 0], sizes = [128, 16], strides = [1, 1]} : vector<146x16xf32> to vector<128x16xf32>
    %79 = arith.truncf %78 : vector<128x16xf32> to vector<128x16xbf16>
    %c7 = arith.constant 7 : index
    %c0_40 = arith.constant 0 : index
    %c0_41 = arith.constant 0 : index
    %80 = vector.load %arg7[%c7, %c0_40, %c0_41] : memref<9x16x4xf32, #tpu.memory_space<vmem>>, vector<1x16x4xf32>
    %81 = vector.shape_cast %80 : vector<1x16x4xf32> to vector<16x4xf32>
    %82 = arith.truncf %81 : vector<16x4xf32> to vector<16x4xbf16>
    %cst_42 = arith.constant dense<0.000000e+00> : vector<128x4xf32>
    %83 = tpu.matmul %79, %82, %cst_42 {dimension_numbers = #tpu.dot_dimension_numbers<[1], [0], [0], [1], [0, 0, 1, 1], [], []>} : vector<128x16xbf16>, vector<16x4xbf16>, vector<128x4xf32> -> vector<128x4xf32>
    %84 = arith.addf %77, %83 : vector<128x4xf32>
    %85 = vector.extract_strided_slice %27 {offsets = [18, 0], sizes = [128, 16], strides = [1, 1]} : vector<146x16xf32> to vector<128x16xf32>
    %86 = arith.truncf %85 : vector<128x16xf32> to vector<128x16xbf16>
    %c8 = arith.constant 8 : index
    %c0_43 = arith.constant 0 : index
    %c0_44 = arith.constant 0 : index
    %87 = vector.load %arg7[%c8, %c0_43, %c0_44] : memref<9x16x4xf32, #tpu.memory_space<vmem>>, vector<1x16x4xf32>
    %88 = vector.shape_cast %87 : vector<1x16x4xf32> to vector<16x4xf32>
    %89 = arith.truncf %88 : vector<16x4xf32> to vector<16x4xbf16>
    %cst_45 = arith.constant dense<0.000000e+00> : vector<128x4xf32>
    %90 = tpu.matmul %86, %89, %cst_45 {dimension_numbers = #tpu.dot_dimension_numbers<[1], [0], [0], [1], [0, 0, 1, 1], [], []>} : vector<128x16xbf16>, vector<16x4xbf16>, vector<128x4xf32> -> vector<128x4xf32>
    %91 = arith.addf %84, %90 : vector<128x4xf32>
    %c0_46 = arith.constant 0 : index
    %c0_47 = arith.constant 0 : index
    %92 = vector.load %arg8[%c0_46, %c0_47] : memref<128x4xf32, #tpu.memory_space<vmem>>, vector<128x4xf32>
    tpu.vector_store %arg8[%c0_46, %c0_47], %91 {strides = array<i32>} : memref<128x4xf32, #tpu.memory_space<vmem>>, vector<128x4xf32>,
    return
  }
}

module attributes {stable_mosaic.version = 11 : i64} {
  func.func @_bottleneck_kernel(%arg0: memref<146x12xf32, #tpu.memory_space<vmem>>, %arg1: memref<146x1xf32, #tpu.memory_space<vmem>>, %arg2: memref<1x12xf32, #tpu.memory_space<vmem>>, %arg3: memref<1x12xf32, #tpu.memory_space<vmem>>, %arg4: memref<12x16xf32, #tpu.memory_space<vmem>>, %arg5: memref<1x16xf32, #tpu.memory_space<vmem>>, %arg6: memref<1x16xf32, #tpu.memory_space<vmem>>, %arg7: memref<9x16x4xf32, #tpu.memory_space<vmem>>, %arg8: memref<128x4xf32, #tpu.memory_space<vmem>>) attributes {dimension_semantics = [], scalar_prefetch = 0 : i64, scratch_operands = 0 : i64, tpu.core_type = #tpu.core_type<tc>} {
    %c0 = arith.constant 0 : index
    %c0_0 = arith.constant 0 : index
    %0 = vector.load %arg0[%c0, %c0_0] : memref<146x12xf32, #tpu.memory_space<vmem>>, vector<146x12xf32>
    %c0_1 = arith.constant 0 : index
    %c0_2 = arith.constant 0 : index
    %1 = vector.load %arg2[%c0_1, %c0_2] : memref<1x12xf32, #tpu.memory_space<vmem>>, vector<1x12xf32>
    %2 = vector.broadcast %1 : vector<1x12xf32> to vector<146x12xf32>
    %3 = arith.mulf %0, %2 : vector<146x12xf32>
    %c0_3 = arith.constant 0 : index
    %c0_4 = arith.constant 0 : index
    %4 = vector.load %arg3[%c0_3, %c0_4] : memref<1x12xf32, #tpu.memory_space<vmem>>, vector<1x12xf32>
    %5 = vector.broadcast %4 : vector<1x12xf32> to vector<146x12xf32>
    %6 = arith.addf %3, %5 : vector<146x12xf32>
    %cst = arith.constant 0.000000e+00 : f32
    %7 = vector.broadcast %cst : f32 to vector<146x12xf32>
    %8 = arith.maximumf %6, %7 : vector<146x12xf32>
    %9 = arith.truncf %8 : vector<146x12xf32> to vector<146x12xbf16>
    %c0_5 = arith.constant 0 : index
    %c0_6 = arith.constant 0 : index
    %10 = vector.load %arg4[%c0_5, %c0_6] : memref<12x16xf32, #tpu.memory_space<vmem>>, vector<12x16xf32>
    %11 = arith.truncf %10 : vector<12x16xf32> to vector<12x16xbf16>
    %cst_7 = arith.constant dense<0.000000e+00> : vector<146x16xf32>
    %12 = tpu.matmul %9, %11, %cst_7 {dimension_numbers = #tpu.dot_dimension_numbers<[1], [0], [0], [1], [0, 0, 1, 1], [], []>} : vector<146x12xbf16>, vector<12x16xbf16>, vector<146x16xf32> -> vector<146x16xf32>
    %c0_8 = arith.constant 0 : index
    %c0_9 = arith.constant 0 : index
    %13 = vector.load %arg5[%c0_8, %c0_9] : memref<1x16xf32, #tpu.memory_space<vmem>>, vector<1x16xf32>
    %14 = vector.broadcast %13 : vector<1x16xf32> to vector<146x16xf32>
    %15 = arith.mulf %12, %14 : vector<146x16xf32>
    %c0_10 = arith.constant 0 : index
    %c0_11 = arith.constant 0 : index
    %16 = vector.load %arg6[%c0_10, %c0_11] : memref<1x16xf32, #tpu.memory_space<vmem>>, vector<1x16xf32>
    %17 = vector.broadcast %16 : vector<1x16xf32> to vector<146x16xf32>
    %18 = arith.addf %15, %17 : vector<146x16xf32>
    %cst_12 = arith.constant 0.000000e+00 : f32
    %19 = vector.broadcast %cst_12 : f32 to vector<146x16xf32>
    %20 = arith.maximumf %18, %19 : vector<146x16xf32>
    %c0_13 = arith.constant 0 : index
    %c0_14 = arith.constant 0 : index
    %21 = vector.load %arg1[%c0_13, %c0_14] : memref<146x1xf32, #tpu.memory_space<vmem>>, vector<146x1xf32>
    %cst_15 = arith.constant 0.000000e+00 : f32
    %22 = vector.broadcast %cst_15 : f32 to vector<146x1xf32>
    %23 = arith.cmpf ogt, %21, %22 : vector<146x1xf32>
    %cst_16 = arith.constant 0.000000e+00 : f32
    %24 = vector.shape_cast %23 : vector<146x1xi1> to vector<146x1xi1>
    %25 = vector.broadcast %24 : vector<146x1xi1> to vector<146x16xi1>
    %26 = vector.broadcast %cst_16 : f32 to vector<146x16xf32>
    %27 = arith.select %25, %20, %26 : vector<146x16xi1>, vector<146x16xf32>
    %cst_17 = arith.constant 0.000000e+00 : f32
    %28 = vector.broadcast %cst_17 : f32 to vector<128x4xf32>
    %29 = vector.extract_strided_slice %27 {offsets = [0, 0], sizes = [128, 16], strides = [1, 1]} : vector<146x16xf32> to vector<128x16xf32>
    %30 = arith.truncf %29 : vector<128x16xf32> to vector<128x16xbf16>
    %c0_18 = arith.constant 0 : index
    %c0_19 = arith.constant 0 : index
    %c0_20 = arith.constant 0 : index
    %31 = vector.load %arg7[%c0_18, %c0_19, %c0_20] : memref<9x16x4xf32, #tpu.memory_space<vmem>>, vector<1x16x4xf32>
    %32 = vector.shape_cast %31 : vector<1x16x4xf32> to vector<16x4xf32>
    %33 = arith.truncf %32 : vector<16x4xf32> to vector<16x4xbf16>
    %cst_21 = arith.constant dense<0.000000e+00> : vector<128x4xf32>
    %34 = tpu.matmul %30, %33, %cst_21 {dimension_numbers = #tpu.dot_dimension_numbers<[1], [0], [0], [1], [0, 0, 1, 1], [], []>} : vector<128x16xbf16>, vector<16x4xbf16>, vector<128x4xf32> -> vector<128x4xf32>
    %35 = arith.addf %28, %34 : vector<128x4xf32>
    %36 = vector.extract_strided_slice %27 {offsets = [1, 0], sizes = [128, 16], strides = [1, 1]} : vector<146x16xf32> to vector<128x16xf32>
    %37 = arith.truncf %36 : vector<128x16xf32> to vector<128x16xbf16>
    %c1 = arith.constant 1 : index
    %c0_22 = arith.constant 0 : index
    %c0_23 = arith.constant 0 : index
    %38 = vector.load %arg7[%c1, %c0_22, %c0_23] : memref<9x16x4xf32, #tpu.memory_space<vmem>>, vector<1x16x4xf32>
    %39 = vector.shape_cast %38 : vector<1x16x4xf32> to vector<16x4xf32>
    %40 = arith.truncf %39 : vector<16x4xf32> to vector<16x4xbf16>
    %cst_24 = arith.constant dense<0.000000e+00> : vector<128x4xf32>
    %41 = tpu.matmul %37, %40, %cst_24 {dimension_numbers = #tpu.dot_dimension_numbers<[1], [0], [0], [1], [0, 0, 1, 1], [], []>} : vector<128x16xbf16>, vector<16x4xbf16>, vector<128x4xf32> -> vector<128x4xf32>
    %42 = arith.addf %35, %41 : vector<128x4xf32>
    %43 = vector.extract_strided_slice %27 {offsets = [2, 0], sizes = [128, 16], strides = [1, 1]} : vector<146x16xf32> to vector<128x16xf32>
    %44 = arith.truncf %43 : vector<128x16xf32> to vector<128x16xbf16>
    %c2 = arith.constant 2 : index
    %c0_25 = arith.constant 0 : index
    %c0_26 = arith.constant 0 : index
    %45 = vector.load %arg7[%c2, %c0_25, %c0_26] : memref<9x16x4xf32, #tpu.memory_space<vmem>>, vector<1x16x4xf32>
    %46 = vector.shape_cast %45 : vector<1x16x4xf32> to vector<16x4xf32>
    %47 = arith.truncf %46 : vector<16x4xf32> to vector<16x4xbf16>
    %cst_27 = arith.constant dense<0.000000e+00> : vector<128x4xf32>
    %48 = tpu.matmul %44, %47, %cst_27 {dimension_numbers = #tpu.dot_dimension_numbers<[1], [0], [0], [1], [0, 0, 1, 1], [], []>} : vector<128x16xbf16>, vector<16x4xbf16>, vector<128x4xf32> -> vector<128x4xf32>
    %49 = arith.addf %42, %48 : vector<128x4xf32>
    %50 = vector.extract_strided_slice %27 {offsets = [8, 0], sizes = [128, 16], strides = [1, 1]} : vector<146x16xf32> to vector<128x16xf32>
    %51 = arith.truncf %50 : vector<128x16xf32> to vector<128x16xbf16>
    %c3 = arith.constant 3 : index
    %c0_28 = arith.constant 0 : index
    %c0_29 = arith.constant 0 : index
    %52 = vector.load %arg7[%c3, %c0_28, %c0_29] : memref<9x16x4xf32, #tpu.memory_space<vmem>>, vector<1x16x4xf32>
    %53 = vector.shape_cast %52 : vector<1x16x4xf32> to vector<16x4xf32>
    %54 = arith.truncf %53 : vector<16x4xf32> to vector<16x4xbf16>
    %cst_30 = arith.constant dense<0.000000e+00> : vector<128x4xf32>
    %55 = tpu.matmul %51, %54, %cst_30 {dimension_numbers = #tpu.dot_dimension_numbers<[1], [0], [0], [1], [0, 0, 1, 1], [], []>} : vector<128x16xbf16>, vector<16x4xbf16>, vector<128x4xf32> -> vector<128x4xf32>
    %56 = arith.addf %49, %55 : vector<128x4xf32>
    %57 = vector.extract_strided_slice %27 {offsets = [9, 0], sizes = [128, 16], strides = [1, 1]} : vector<146x16xf32> to vector<128x16xf32>
    %58 = arith.truncf %57 : vector<128x16xf32> to vector<128x16xbf16>
    %c4 = arith.constant 4 : index
    %c0_31 = arith.constant 0 : index
    %c0_32 = arith.constant 0 : index
    %59 = vector.load %arg7[%c4, %c0_31, %c0_32] : memref<9x16x4xf32, #tpu.memory_space<vmem>>, vector<1x16x4xf32>
    %60 = vector.shape_cast %59 : vector<1x16x4xf32> to vector<16x4xf32>
    %61 = arith.truncf %60 : vector<16x4xf32> to vector<16x4xbf16>
    %cst_33 = arith.constant dense<0.000000e+00> : vector<128x4xf32>
    %62 = tpu.matmul %58, %61, %cst_33 {dimension_numbers = #tpu.dot_dimension_numbers<[1], [0], [0], [1], [0, 0, 1, 1], [], []>} : vector<128x16xbf16>, vector<16x4xbf16>, vector<128x4xf32> -> vector<128x4xf32>
    %63 = arith.addf %56, %62 : vector<128x4xf32>
    %64 = vector.extract_strided_slice %27 {offsets = [10, 0], sizes = [128, 16], strides = [1, 1]} : vector<146x16xf32> to vector<128x16xf32>
    %65 = arith.truncf %64 : vector<128x16xf32> to vector<128x16xbf16>
    %c5 = arith.constant 5 : index
    %c0_34 = arith.constant 0 : index
    %c0_35 = arith.constant 0 : index
    %66 = vector.load %arg7[%c5, %c0_34, %c0_35] : memref<9x16x4xf32, #tpu.memory_space<vmem>>, vector<1x16x4xf32>
    %67 = vector.shape_cast %66 : vector<1x16x4xf32> to vector<16x4xf32>
    %68 = arith.truncf %67 : vector<16x4xf32> to vector<16x4xbf16>
    %cst_36 = arith.constant dense<0.000000e+00> : vector<128x4xf32>
    %69 = tpu.matmul %65, %68, %cst_36 {dimension_numbers = #tpu.dot_dimension_numbers<[1], [0], [0], [1], [0, 0, 1, 1], [], []>} : vector<128x16xbf16>, vector<16x4xbf16>, vector<128x4xf32> -> vector<128x4xf32>
    %70 = arith.addf %63, %69 : vector<128x4xf32>
    %71 = vector.extract_strided_slice %27 {offsets = [16, 0], sizes = [128, 16], strides = [1, 1]} : vector<146x16xf32> to vector<128x16xf32>
    %72 = arith.truncf %71 : vector<128x16xf32> to vector<128x16xbf16>
    %c6 = arith.constant 6 : index
    %c0_37 = arith.constant 0 : index
    %c0_38 = arith.constant 0 : index
    %73 = vector.load %arg7[%c6, %c0_37, %c0_38] : memref<9x16x4xf32, #tpu.memory_space<vmem>>, vector<1x16x4xf32>
    %74 = vector.shape_cast %73 : vector<1x16x4xf32> to vector<16x4xf32>
    %75 = arith.truncf %74 : vector<16x4xf32> to vector<16x4xbf16>
    %cst_39 = arith.constant dense<0.000000e+00> : vector<128x4xf32>
    %76 = tpu.matmul %72, %75, %cst_39 {dimension_numbers = #tpu.dot_dimension_numbers<[1], [0], [0], [1], [0, 0, 1, 1], [], []>} : vector<128x16xbf16>, vector<16x4xbf16>, vector<128x4xf32> -> vector<128x4xf32>
    %77 = arith.addf %70, %76 : vector<128x4xf32>
    %78 = vector.extract_strided_slice %27 {offsets = [17, 0], sizes = [128, 16], strides = [1, 1]} : vector<146x16xf32> to vector<128x16xf32>
    %79 = arith.truncf %78 : vector<128x16xf32> to vector<128x16xbf16>
    %c7 = arith.constant 7 : index
    %c0_40 = arith.constant 0 : index
    %c0_41 = arith.constant 0 : index
    %80 = vector.load %arg7[%c7, %c0_40, %c0_41] : memref<9x16x4xf32, #tpu.memory_space<vmem>>, vector<1x16x4xf32>
    %81 = vector.shape_cast %80 : vector<1x16x4xf32> to vector<16x4xf32>
    %82 = arith.truncf %81 : vector<16x4xf32> to vector<16x4xbf16>
    %cst_42 = arith.constant dense<0.000000e+00> : vector<128x4xf32>
    %83 = tpu.matmul %79, %82, %cst_42 {dimension_numbers = #tpu.dot_dimension_numbers<[1], [0], [0], [1], [0, 0, 1, 1], [], []>} : vector<128x16xbf16>, vector<16x4xbf16>, vector<128x4xf32> -> vector<128x4xf32>
    %84 = arith.addf %77, %83 : vector<128x4xf32>
    %85 = vector.extract_strided_slice %27 {offsets = [18, 0], sizes = [128, 16], strides = [1, 1]} : vector<146x16xf32> to vector<128x16xf32>
    %86 = arith.truncf %85 : vector<128x16xf32> to vector<128x16xbf16>
    %c8 = arith.constant 8 : index
    %c0_43 = arith.constant 0 : index
    %c0_44 = arith.constant 0 : index
    %87 = vector.load %arg7[%c8, %c0_43, %c0_44] : memref<9x16x4xf32, #tpu.memory_space<vmem>>, vector<1x16x4xf32>
    %88 = vector.shape_cast %87 : vector<1x16x4xf32> to vector<16x4xf32>
    %89 = arith.truncf %88 : vector<16x4xf32> to vector<16x4xbf16>
    %cst_45 = arith.constant dense<0.000000e+00> : vector<128x4xf32>
    %90 = tpu.matmul %86, %89, %cst_45 {dimension_numbers = #tpu.dot_dimension_numbers<[1], [0], [0], [1], [0, 0, 1, 1], [], []>} : vector<128x16xbf16>, vector<16x4xbf16>, vector<128x4xf32> -> vector<128x4xf32>
    %91 = arith.addf %84, %90 : vector<128x4xf32>
    %c0_46 = arith.constant 0 : index
    %c0_47 = arith.constant 0 : index
    %92 = vector.load %arg8[%c0_46, %c0_47] : memref<128x4xf32, #tpu.memory_space<vmem>>, vector<128x4xf32>
    tpu.vector_store %arg8[%c0_46, %c0_47], %91 {strides = array<i32>} : memref<128x4xf32, #tpu.memory_space<vmem>>, vector<128x4xf32>,
    return
  }
}

module attributes {stable_mosaic.version = 11 : i64} {
  func.func @_transition_kernel(%arg0: memref<146x16xf32, #tpu.memory_space<vmem>>, %arg1: memref<1x16xf32, #tpu.memory_space<vmem>>, %arg2: memref<1x16xf32, #tpu.memory_space<vmem>>, %arg3: memref<16x8xf32, #tpu.memory_space<vmem>>, %arg4: memref<128x8xf32, #tpu.memory_space<vmem>>) attributes {dimension_semantics = [], scalar_prefetch = 0 : i64, scratch_operands = 0 : i64, tpu.core_type = #tpu.core_type<tc>} {
    %c0 = arith.constant 0 : index
    %c0_0 = arith.constant 0 : index
    %0 = vector.load %arg0[%c0, %c0_0] : memref<146x16xf32, #tpu.memory_space<vmem>>, vector<146x16xf32>
    %c0_1 = arith.constant 0 : index
    %c0_2 = arith.constant 0 : index
    %1 = vector.load %arg1[%c0_1, %c0_2] : memref<1x16xf32, #tpu.memory_space<vmem>>, vector<1x16xf32>
    %2 = vector.broadcast %1 : vector<1x16xf32> to vector<146x16xf32>
    %3 = arith.mulf %0, %2 : vector<146x16xf32>
    %c0_3 = arith.constant 0 : index
    %c0_4 = arith.constant 0 : index
    %4 = vector.load %arg2[%c0_3, %c0_4] : memref<1x16xf32, #tpu.memory_space<vmem>>, vector<1x16xf32>
    %5 = vector.broadcast %4 : vector<1x16xf32> to vector<146x16xf32>
    %6 = arith.addf %3, %5 : vector<146x16xf32>
    %cst = arith.constant 0.000000e+00 : f32
    %7 = vector.broadcast %cst : f32 to vector<146x16xf32>
    %8 = arith.maximumf %6, %7 : vector<146x16xf32>
    %9 = arith.truncf %8 : vector<146x16xf32> to vector<146x16xbf16>
    %c0_5 = arith.constant 0 : index
    %c0_6 = arith.constant 0 : index
    %10 = vector.load %arg3[%c0_5, %c0_6] : memref<16x8xf32, #tpu.memory_space<vmem>>, vector<16x8xf32>
    %11 = arith.truncf %10 : vector<16x8xf32> to vector<16x8xbf16>
    %cst_7 = arith.constant dense<0.000000e+00> : vector<146x8xf32>
    %12 = tpu.matmul %9, %11, %cst_7 {dimension_numbers = #tpu.dot_dimension_numbers<[1], [0], [0], [1], [0, 0, 1, 1], [], []>} : vector<146x16xbf16>, vector<16x8xbf16>, vector<146x8xf32> -> vector<146x8xf32>
    %13 = vector.extract_strided_slice %12 {offsets = [9, 0], sizes = [128, 8], strides = [1, 1]} : vector<146x8xf32> to vector<128x8xf32>
    %14 = vector.extract_strided_slice %12 {offsets = [10, 0], sizes = [128, 8], strides = [1, 1]} : vector<146x8xf32> to vector<128x8xf32>
    %15 = arith.addf %13, %14 : vector<128x8xf32>
    %16 = vector.extract_strided_slice %12 {offsets = [17, 0], sizes = [128, 8], strides = [1, 1]} : vector<146x8xf32> to vector<128x8xf32>
    %17 = arith.addf %15, %16 : vector<128x8xf32>
    %18 = vector.extract_strided_slice %12 {offsets = [18, 0], sizes = [128, 8], strides = [1, 1]} : vector<146x8xf32> to vector<128x8xf32>
    %19 = arith.addf %17, %18 : vector<128x8xf32>
    %cst_8 = arith.constant 2.500000e-01 : f32
    %20 = vector.broadcast %cst_8 : f32 to vector<128x8xf32>
    %21 = arith.mulf %19, %20 : vector<128x8xf32>
    %c0_9 = arith.constant 0 : index
    %c0_10 = arith.constant 0 : index
    %22 = vector.load %arg4[%c0_9, %c0_10] : memref<128x8xf32, #tpu.memory_space<vmem>>, vector<128x8xf32>
    tpu.vector_store %arg4[%c0_9, %c0_10], %21 {strides = array<i32>} : memref<128x8xf32, #tpu.memory_space<vmem>>, vector<128x8xf32>,
    return
  }
}

module attributes {stable_mosaic.version = 11 : i64} {
  func.func @_bottleneck_kernel(%arg0: memref<62x8xf32, #tpu.memory_space<vmem>>, %arg1: memref<62x1xf32, #tpu.memory_space<vmem>>, %arg2: memref<1x8xf32, #tpu.memory_space<vmem>>, %arg3: memref<1x8xf32, #tpu.memory_space<vmem>>, %arg4: memref<8x16xf32, #tpu.memory_space<vmem>>, %arg5: memref<1x16xf32, #tpu.memory_space<vmem>>, %arg6: memref<1x16xf32, #tpu.memory_space<vmem>>, %arg7: memref<9x16x4xf32, #tpu.memory_space<vmem>>, %arg8: memref<50x4xf32, #tpu.memory_space<vmem>>) attributes {dimension_semantics = [], scalar_prefetch = 0 : i64, scratch_operands = 0 : i64, tpu.core_type = #tpu.core_type<tc>} {
    %c0 = arith.constant 0 : index
    %c0_0 = arith.constant 0 : index
    %0 = vector.load %arg0[%c0, %c0_0] : memref<62x8xf32, #tpu.memory_space<vmem>>, vector<62x8xf32>
    %c0_1 = arith.constant 0 : index
    %c0_2 = arith.constant 0 : index
    %1 = vector.load %arg2[%c0_1, %c0_2] : memref<1x8xf32, #tpu.memory_space<vmem>>, vector<1x8xf32>
    %2 = vector.broadcast %1 : vector<1x8xf32> to vector<62x8xf32>
    %3 = arith.mulf %0, %2 : vector<62x8xf32>
    %c0_3 = arith.constant 0 : index
    %c0_4 = arith.constant 0 : index
    %4 = vector.load %arg3[%c0_3, %c0_4] : memref<1x8xf32, #tpu.memory_space<vmem>>, vector<1x8xf32>
    %5 = vector.broadcast %4 : vector<1x8xf32> to vector<62x8xf32>
    %6 = arith.addf %3, %5 : vector<62x8xf32>
    %cst = arith.constant 0.000000e+00 : f32
    %7 = vector.broadcast %cst : f32 to vector<62x8xf32>
    %8 = arith.maximumf %6, %7 : vector<62x8xf32>
    %9 = arith.truncf %8 : vector<62x8xf32> to vector<62x8xbf16>
    %c0_5 = arith.constant 0 : index
    %c0_6 = arith.constant 0 : index
    %10 = vector.load %arg4[%c0_5, %c0_6] : memref<8x16xf32, #tpu.memory_space<vmem>>, vector<8x16xf32>
    %11 = arith.truncf %10 : vector<8x16xf32> to vector<8x16xbf16>
    %cst_7 = arith.constant dense<0.000000e+00> : vector<62x16xf32>
    %12 = tpu.matmul %9, %11, %cst_7 {dimension_numbers = #tpu.dot_dimension_numbers<[1], [0], [0], [1], [0, 0, 1, 1], [], []>} : vector<62x8xbf16>, vector<8x16xbf16>, vector<62x16xf32> -> vector<62x16xf32>
    %c0_8 = arith.constant 0 : index
    %c0_9 = arith.constant 0 : index
    %13 = vector.load %arg5[%c0_8, %c0_9] : memref<1x16xf32, #tpu.memory_space<vmem>>, vector<1x16xf32>
    %14 = vector.broadcast %13 : vector<1x16xf32> to vector<62x16xf32>
    %15 = arith.mulf %12, %14 : vector<62x16xf32>
    %c0_10 = arith.constant 0 : index
    %c0_11 = arith.constant 0 : index
    %16 = vector.load %arg6[%c0_10, %c0_11] : memref<1x16xf32, #tpu.memory_space<vmem>>, vector<1x16xf32>
    %17 = vector.broadcast %16 : vector<1x16xf32> to vector<62x16xf32>
    %18 = arith.addf %15, %17 : vector<62x16xf32>
    %cst_12 = arith.constant 0.000000e+00 : f32
    %19 = vector.broadcast %cst_12 : f32 to vector<62x16xf32>
    %20 = arith.maximumf %18, %19 : vector<62x16xf32>
    %c0_13 = arith.constant 0 : index
    %c0_14 = arith.constant 0 : index
    %21 = vector.load %arg1[%c0_13, %c0_14] : memref<62x1xf32, #tpu.memory_space<vmem>>, vector<62x1xf32>
    %cst_15 = arith.constant 0.000000e+00 : f32
    %22 = vector.broadcast %cst_15 : f32 to vector<62x1xf32>
    %23 = arith.cmpf ogt, %21, %22 : vector<62x1xf32>
    %cst_16 = arith.constant 0.000000e+00 : f32
    %24 = vector.shape_cast %23 : vector<62x1xi1> to vector<62x1xi1>
    %25 = vector.broadcast %24 : vector<62x1xi1> to vector<62x16xi1>
    %26 = vector.broadcast %cst_16 : f32 to vector<62x16xf32>
    %27 = arith.select %25, %20, %26 : vector<62x16xi1>, vector<62x16xf32>
    %cst_17 = arith.constant 0.000000e+00 : f32
    %28 = vector.broadcast %cst_17 : f32 to vector<50x4xf32>
    %29 = vector.extract_strided_slice %27 {offsets = [0, 0], sizes = [50, 16], strides = [1, 1]} : vector<62x16xf32> to vector<50x16xf32>
    %30 = arith.truncf %29 : vector<50x16xf32> to vector<50x16xbf16>
    %c0_18 = arith.constant 0 : index
    %c0_19 = arith.constant 0 : index
    %c0_20 = arith.constant 0 : index
    %31 = vector.load %arg7[%c0_18, %c0_19, %c0_20] : memref<9x16x4xf32, #tpu.memory_space<vmem>>, vector<1x16x4xf32>
    %32 = vector.shape_cast %31 : vector<1x16x4xf32> to vector<16x4xf32>
    %33 = arith.truncf %32 : vector<16x4xf32> to vector<16x4xbf16>
    %cst_21 = arith.constant dense<0.000000e+00> : vector<50x4xf32>
    %34 = tpu.matmul %30, %33, %cst_21 {dimension_numbers = #tpu.dot_dimension_numbers<[1], [0], [0], [1], [0, 0, 1, 1], [], []>} : vector<50x16xbf16>, vector<16x4xbf16>, vector<50x4xf32> -> vector<50x4xf32>
    %35 = arith.addf %28, %34 : vector<50x4xf32>
    %36 = vector.extract_strided_slice %27 {offsets = [1, 0], sizes = [50, 16], strides = [1, 1]} : vector<62x16xf32> to vector<50x16xf32>
    %37 = arith.truncf %36 : vector<50x16xf32> to vector<50x16xbf16>
    %c1 = arith.constant 1 : index
    %c0_22 = arith.constant 0 : index
    %c0_23 = arith.constant 0 : index
    %38 = vector.load %arg7[%c1, %c0_22, %c0_23] : memref<9x16x4xf32, #tpu.memory_space<vmem>>, vector<1x16x4xf32>
    %39 = vector.shape_cast %38 : vector<1x16x4xf32> to vector<16x4xf32>
    %40 = arith.truncf %39 : vector<16x4xf32> to vector<16x4xbf16>
    %cst_24 = arith.constant dense<0.000000e+00> : vector<50x4xf32>
    %41 = tpu.matmul %37, %40, %cst_24 {dimension_numbers = #tpu.dot_dimension_numbers<[1], [0], [0], [1], [0, 0, 1, 1], [], []>} : vector<50x16xbf16>, vector<16x4xbf16>, vector<50x4xf32> -> vector<50x4xf32>
    %42 = arith.addf %35, %41 : vector<50x4xf32>
    %43 = vector.extract_strided_slice %27 {offsets = [2, 0], sizes = [50, 16], strides = [1, 1]} : vector<62x16xf32> to vector<50x16xf32>
    %44 = arith.truncf %43 : vector<50x16xf32> to vector<50x16xbf16>
    %c2 = arith.constant 2 : index
    %c0_25 = arith.constant 0 : index
    %c0_26 = arith.constant 0 : index
    %45 = vector.load %arg7[%c2, %c0_25, %c0_26] : memref<9x16x4xf32, #tpu.memory_space<vmem>>, vector<1x16x4xf32>
    %46 = vector.shape_cast %45 : vector<1x16x4xf32> to vector<16x4xf32>
    %47 = arith.truncf %46 : vector<16x4xf32> to vector<16x4xbf16>
    %cst_27 = arith.constant dense<0.000000e+00> : vector<50x4xf32>
    %48 = tpu.matmul %44, %47, %cst_27 {dimension_numbers = #tpu.dot_dimension_numbers<[1], [0], [0], [1], [0, 0, 1, 1], [], []>} : vector<50x16xbf16>, vector<16x4xbf16>, vector<50x4xf32> -> vector<50x4xf32>
    %49 = arith.addf %42, %48 : vector<50x4xf32>
    %50 = vector.extract_strided_slice %27 {offsets = [5, 0], sizes = [50, 16], strides = [1, 1]} : vector<62x16xf32> to vector<50x16xf32>
    %51 = arith.truncf %50 : vector<50x16xf32> to vector<50x16xbf16>
    %c3 = arith.constant 3 : index
    %c0_28 = arith.constant 0 : index
    %c0_29 = arith.constant 0 : index
    %52 = vector.load %arg7[%c3, %c0_28, %c0_29] : memref<9x16x4xf32, #tpu.memory_space<vmem>>, vector<1x16x4xf32>
    %53 = vector.shape_cast %52 : vector<1x16x4xf32> to vector<16x4xf32>
    %54 = arith.truncf %53 : vector<16x4xf32> to vector<16x4xbf16>
    %cst_30 = arith.constant dense<0.000000e+00> : vector<50x4xf32>
    %55 = tpu.matmul %51, %54, %cst_30 {dimension_numbers = #tpu.dot_dimension_numbers<[1], [0], [0], [1], [0, 0, 1, 1], [], []>} : vector<50x16xbf16>, vector<16x4xbf16>, vector<50x4xf32> -> vector<50x4xf32>
    %56 = arith.addf %49, %55 : vector<50x4xf32>
    %57 = vector.extract_strided_slice %27 {offsets = [6, 0], sizes = [50, 16], strides = [1, 1]} : vector<62x16xf32> to vector<50x16xf32>
    %58 = arith.truncf %57 : vector<50x16xf32> to vector<50x16xbf16>
    %c4 = arith.constant 4 : index
    %c0_31 = arith.constant 0 : index
    %c0_32 = arith.constant 0 : index
    %59 = vector.load %arg7[%c4, %c0_31, %c0_32] : memref<9x16x4xf32, #tpu.memory_space<vmem>>, vector<1x16x4xf32>
    %60 = vector.shape_cast %59 : vector<1x16x4xf32> to vector<16x4xf32>
    %61 = arith.truncf %60 : vector<16x4xf32> to vector<16x4xbf16>
    %cst_33 = arith.constant dense<0.000000e+00> : vector<50x4xf32>
    %62 = tpu.matmul %58, %61, %cst_33 {dimension_numbers = #tpu.dot_dimension_numbers<[1], [0], [0], [1], [0, 0, 1, 1], [], []>} : vector<50x16xbf16>, vector<16x4xbf16>, vector<50x4xf32> -> vector<50x4xf32>
    %63 = arith.addf %56, %62 : vector<50x4xf32>
    %64 = vector.extract_strided_slice %27 {offsets = [7, 0], sizes = [50, 16], strides = [1, 1]} : vector<62x16xf32> to vector<50x16xf32>
    %65 = arith.truncf %64 : vector<50x16xf32> to vector<50x16xbf16>
    %c5 = arith.constant 5 : index
    %c0_34 = arith.constant 0 : index
    %c0_35 = arith.constant 0 : index
    %66 = vector.load %arg7[%c5, %c0_34, %c0_35] : memref<9x16x4xf32, #tpu.memory_space<vmem>>, vector<1x16x4xf32>
    %67 = vector.shape_cast %66 : vector<1x16x4xf32> to vector<16x4xf32>
    %68 = arith.truncf %67 : vector<16x4xf32> to vector<16x4xbf16>
    %cst_36 = arith.constant dense<0.000000e+00> : vector<50x4xf32>
    %69 = tpu.matmul %65, %68, %cst_36 {dimension_numbers = #tpu.dot_dimension_numbers<[1], [0], [0], [1], [0, 0, 1, 1], [], []>} : vector<50x16xbf16>, vector<16x4xbf16>, vector<50x4xf32> -> vector<50x4xf32>
    %70 = arith.addf %63, %69 : vector<50x4xf32>
    %71 = vector.extract_strided_slice %27 {offsets = [10, 0], sizes = [50, 16], strides = [1, 1]} : vector<62x16xf32> to vector<50x16xf32>
    %72 = arith.truncf %71 : vector<50x16xf32> to vector<50x16xbf16>
    %c6 = arith.constant 6 : index
    %c0_37 = arith.constant 0 : index
    %c0_38 = arith.constant 0 : index
    %73 = vector.load %arg7[%c6, %c0_37, %c0_38] : memref<9x16x4xf32, #tpu.memory_space<vmem>>, vector<1x16x4xf32>
    %74 = vector.shape_cast %73 : vector<1x16x4xf32> to vector<16x4xf32>
    %75 = arith.truncf %74 : vector<16x4xf32> to vector<16x4xbf16>
    %cst_39 = arith.constant dense<0.000000e+00> : vector<50x4xf32>
    %76 = tpu.matmul %72, %75, %cst_39 {dimension_numbers = #tpu.dot_dimension_numbers<[1], [0], [0], [1], [0, 0, 1, 1], [], []>} : vector<50x16xbf16>, vector<16x4xbf16>, vector<50x4xf32> -> vector<50x4xf32>
    %77 = arith.addf %70, %76 : vector<50x4xf32>
    %78 = vector.extract_strided_slice %27 {offsets = [11, 0], sizes = [50, 16], strides = [1, 1]} : vector<62x16xf32> to vector<50x16xf32>
    %79 = arith.truncf %78 : vector<50x16xf32> to vector<50x16xbf16>
    %c7 = arith.constant 7 : index
    %c0_40 = arith.constant 0 : index
    %c0_41 = arith.constant 0 : index
    %80 = vector.load %arg7[%c7, %c0_40, %c0_41] : memref<9x16x4xf32, #tpu.memory_space<vmem>>, vector<1x16x4xf32>
    %81 = vector.shape_cast %80 : vector<1x16x4xf32> to vector<16x4xf32>
    %82 = arith.truncf %81 : vector<16x4xf32> to vector<16x4xbf16>
    %cst_42 = arith.constant dense<0.000000e+00> : vector<50x4xf32>
    %83 = tpu.matmul %79, %82, %cst_42 {dimension_numbers = #tpu.dot_dimension_numbers<[1], [0], [0], [1], [0, 0, 1, 1], [], []>} : vector<50x16xbf16>, vector<16x4xbf16>, vector<50x4xf32> -> vector<50x4xf32>
    %84 = arith.addf %77, %83 : vector<50x4xf32>
    %85 = vector.extract_strided_slice %27 {offsets = [12, 0], sizes = [50, 16], strides = [1, 1]} : vector<62x16xf32> to vector<50x16xf32>
    %86 = arith.truncf %85 : vector<50x16xf32> to vector<50x16xbf16>
    %c8 = arith.constant 8 : index
    %c0_43 = arith.constant 0 : index
    %c0_44 = arith.constant 0 : index
    %87 = vector.load %arg7[%c8, %c0_43, %c0_44] : memref<9x16x4xf32, #tpu.memory_space<vmem>>, vector<1x16x4xf32>
    %88 = vector.shape_cast %87 : vector<1x16x4xf32> to vector<16x4xf32>
    %89 = arith.truncf %88 : vector<16x4xf32> to vector<16x4xbf16>
    %cst_45 = arith.constant dense<0.000000e+00> : vector<50x4xf32>
    %90 = tpu.matmul %86, %89, %cst_45 {dimension_numbers = #tpu.dot_dimension_numbers<[1], [0], [0], [1], [0, 0, 1, 1], [], []>} : vector<50x16xbf16>, vector<16x4xbf16>, vector<50x4xf32> -> vector<50x4xf32>
    %91 = arith.addf %84, %90 : vector<50x4xf32>
    %c0_46 = arith.constant 0 : index
    %c0_47 = arith.constant 0 : index
    %92 = vector.load %arg8[%c0_46, %c0_47] : memref<50x4xf32, #tpu.memory_space<vmem>>, vector<50x4xf32>
    tpu.vector_store %arg8[%c0_46, %c0_47], %91 {strides = array<i32>} : memref<50x4xf32, #tpu.memory_space<vmem>>, vector<50x4xf32>,
    return
  }
}

module attributes {stable_mosaic.version = 11 : i64} {
  func.func @_head_kernel(%arg0: memref<62x16xf32, #tpu.memory_space<vmem>>, %arg1: memref<1x16xf32, #tpu.memory_space<vmem>>, %arg2: memref<1x16xf32, #tpu.memory_space<vmem>>, %arg3: memref<2x62xf32, #tpu.memory_space<vmem>>, %arg4: memref<16x20xf32, #tpu.memory_space<vmem>>, %arg5: memref<1x20xf32, #tpu.memory_space<vmem>>, %arg6: memref<2x20xf32, #tpu.memory_space<vmem>>) attributes {dimension_semantics = [], scalar_prefetch = 0 : i64, scratch_operands = 0 : i64, tpu.core_type = #tpu.core_type<tc>} {
    %c0 = arith.constant 0 : index
    %c0_0 = arith.constant 0 : index
    %0 = vector.load %arg0[%c0, %c0_0] : memref<62x16xf32, #tpu.memory_space<vmem>>, vector<62x16xf32>
    %c0_1 = arith.constant 0 : index
    %c0_2 = arith.constant 0 : index
    %1 = vector.load %arg1[%c0_1, %c0_2] : memref<1x16xf32, #tpu.memory_space<vmem>>, vector<1x16xf32>
    %2 = vector.broadcast %1 : vector<1x16xf32> to vector<62x16xf32>
    %3 = arith.mulf %0, %2 : vector<62x16xf32>
    %c0_3 = arith.constant 0 : index
    %c0_4 = arith.constant 0 : index
    %4 = vector.load %arg2[%c0_3, %c0_4] : memref<1x16xf32, #tpu.memory_space<vmem>>, vector<1x16xf32>
    %5 = vector.broadcast %4 : vector<1x16xf32> to vector<62x16xf32>
    %6 = arith.addf %3, %5 : vector<62x16xf32>
    %cst = arith.constant 0.000000e+00 : f32
    %7 = vector.broadcast %cst : f32 to vector<62x16xf32>
    %8 = arith.maximumf %6, %7 : vector<62x16xf32>
    %c0_5 = arith.constant 0 : index
    %c0_6 = arith.constant 0 : index
    %9 = vector.load %arg3[%c0_5, %c0_6] : memref<2x62xf32, #tpu.memory_space<vmem>>, vector<2x62xf32>
    %cst_7 = arith.constant dense<0.000000e+00> : vector<2x16xf32>
    %10 = tpu.matmul %9, %8, %cst_7 {dimension_numbers = #tpu.dot_dimension_numbers<[1], [0], [0], [1], [0, 0, 1, 1], [], []>} : vector<2x62xf32>, vector<62x16xf32>, vector<2x16xf32> -> vector<2x16xf32>
    %c0_8 = arith.constant 0 : index
    %c0_9 = arith.constant 0 : index
    %11 = vector.load %arg4[%c0_8, %c0_9] : memref<16x20xf32, #tpu.memory_space<vmem>>, vector<16x20xf32>
    %cst_10 = arith.constant dense<0.000000e+00> : vector<2x20xf32>
    %12 = tpu.matmul %10, %11, %cst_10 {dimension_numbers = #tpu.dot_dimension_numbers<[1], [0], [0], [1], [0, 0, 1, 1], [], []>} : vector<2x16xf32>, vector<16x20xf32>, vector<2x20xf32> -> vector<2x20xf32>
    %c0_11 = arith.constant 0 : index
    %c0_12 = arith.constant 0 : index
    %13 = vector.load %arg5[%c0_11, %c0_12] : memref<1x20xf32, #tpu.memory_space<vmem>>, vector<1x20xf32>
    %14 = vector.broadcast %13 : vector<1x20xf32> to vector<2x20xf32>
    %15 = arith.addf %12, %14 : vector<2x20xf32>
    %c0_13 = arith.constant 0 : index
    %c0_14 = arith.constant 0 : index
    %16 = vector.load %arg6[%c0_13, %c0_14] : memref<2x20xf32, #tpu.memory_space<vmem>>, vector<2x20xf32>
    tpu.vector_store %arg6[%c0_13, %c0_14], %15 {strides = array<i32>} : memref<2x20xf32, #tpu.memory_space<vmem>>, vector<2x20xf32>,
    return
  }
}

module attributes {stable_mosaic.version = 11 : i64} {
  func.func @_bottleneck_kernel(%arg0: memref<62x12xf32, #tpu.memory_space<vmem>>, %arg1: memref<62x1xf32, #tpu.memory_space<vmem>>, %arg2: memref<1x12xf32, #tpu.memory_space<vmem>>, %arg3: memref<1x12xf32, #tpu.memory_space<vmem>>, %arg4: memref<12x16xf32, #tpu.memory_space<vmem>>, %arg5: memref<1x16xf32, #tpu.memory_space<vmem>>, %arg6: memref<1x16xf32, #tpu.memory_space<vmem>>, %arg7: memref<9x16x4xf32, #tpu.memory_space<vmem>>, %arg8: memref<50x4xf32, #tpu.memory_space<vmem>>) attributes {dimension_semantics = [], scalar_prefetch = 0 : i64, scratch_operands = 0 : i64, tpu.core_type = #tpu.core_type<tc>} {
    %c0 = arith.constant 0 : index
    %c0_0 = arith.constant 0 : index
    %0 = vector.load %arg0[%c0, %c0_0] : memref<62x12xf32, #tpu.memory_space<vmem>>, vector<62x12xf32>
    %c0_1 = arith.constant 0 : index
    %c0_2 = arith.constant 0 : index
    %1 = vector.load %arg2[%c0_1, %c0_2] : memref<1x12xf32, #tpu.memory_space<vmem>>, vector<1x12xf32>
    %2 = vector.broadcast %1 : vector<1x12xf32> to vector<62x12xf32>
    %3 = arith.mulf %0, %2 : vector<62x12xf32>
    %c0_3 = arith.constant 0 : index
    %c0_4 = arith.constant 0 : index
    %4 = vector.load %arg3[%c0_3, %c0_4] : memref<1x12xf32, #tpu.memory_space<vmem>>, vector<1x12xf32>
    %5 = vector.broadcast %4 : vector<1x12xf32> to vector<62x12xf32>
    %6 = arith.addf %3, %5 : vector<62x12xf32>
    %cst = arith.constant 0.000000e+00 : f32
    %7 = vector.broadcast %cst : f32 to vector<62x12xf32>
    %8 = arith.maximumf %6, %7 : vector<62x12xf32>
    %9 = arith.truncf %8 : vector<62x12xf32> to vector<62x12xbf16>
    %c0_5 = arith.constant 0 : index
    %c0_6 = arith.constant 0 : index
    %10 = vector.load %arg4[%c0_5, %c0_6] : memref<12x16xf32, #tpu.memory_space<vmem>>, vector<12x16xf32>
    %11 = arith.truncf %10 : vector<12x16xf32> to vector<12x16xbf16>
    %cst_7 = arith.constant dense<0.000000e+00> : vector<62x16xf32>
    %12 = tpu.matmul %9, %11, %cst_7 {dimension_numbers = #tpu.dot_dimension_numbers<[1], [0], [0], [1], [0, 0, 1, 1], [], []>} : vector<62x12xbf16>, vector<12x16xbf16>, vector<62x16xf32> -> vector<62x16xf32>
    %c0_8 = arith.constant 0 : index
    %c0_9 = arith.constant 0 : index
    %13 = vector.load %arg5[%c0_8, %c0_9] : memref<1x16xf32, #tpu.memory_space<vmem>>, vector<1x16xf32>
    %14 = vector.broadcast %13 : vector<1x16xf32> to vector<62x16xf32>
    %15 = arith.mulf %12, %14 : vector<62x16xf32>
    %c0_10 = arith.constant 0 : index
    %c0_11 = arith.constant 0 : index
    %16 = vector.load %arg6[%c0_10, %c0_11] : memref<1x16xf32, #tpu.memory_space<vmem>>, vector<1x16xf32>
    %17 = vector.broadcast %16 : vector<1x16xf32> to vector<62x16xf32>
    %18 = arith.addf %15, %17 : vector<62x16xf32>
    %cst_12 = arith.constant 0.000000e+00 : f32
    %19 = vector.broadcast %cst_12 : f32 to vector<62x16xf32>
    %20 = arith.maximumf %18, %19 : vector<62x16xf32>
    %c0_13 = arith.constant 0 : index
    %c0_14 = arith.constant 0 : index
    %21 = vector.load %arg1[%c0_13, %c0_14] : memref<62x1xf32, #tpu.memory_space<vmem>>, vector<62x1xf32>
    %cst_15 = arith.constant 0.000000e+00 : f32
    %22 = vector.broadcast %cst_15 : f32 to vector<62x1xf32>
    %23 = arith.cmpf ogt, %21, %22 : vector<62x1xf32>
    %cst_16 = arith.constant 0.000000e+00 : f32
    %24 = vector.shape_cast %23 : vector<62x1xi1> to vector<62x1xi1>
    %25 = vector.broadcast %24 : vector<62x1xi1> to vector<62x16xi1>
    %26 = vector.broadcast %cst_16 : f32 to vector<62x16xf32>
    %27 = arith.select %25, %20, %26 : vector<62x16xi1>, vector<62x16xf32>
    %cst_17 = arith.constant 0.000000e+00 : f32
    %28 = vector.broadcast %cst_17 : f32 to vector<50x4xf32>
    %29 = vector.extract_strided_slice %27 {offsets = [0, 0], sizes = [50, 16], strides = [1, 1]} : vector<62x16xf32> to vector<50x16xf32>
    %30 = arith.truncf %29 : vector<50x16xf32> to vector<50x16xbf16>
    %c0_18 = arith.constant 0 : index
    %c0_19 = arith.constant 0 : index
    %c0_20 = arith.constant 0 : index
    %31 = vector.load %arg7[%c0_18, %c0_19, %c0_20] : memref<9x16x4xf32, #tpu.memory_space<vmem>>, vector<1x16x4xf32>
    %32 = vector.shape_cast %31 : vector<1x16x4xf32> to vector<16x4xf32>
    %33 = arith.truncf %32 : vector<16x4xf32> to vector<16x4xbf16>
    %cst_21 = arith.constant dense<0.000000e+00> : vector<50x4xf32>
    %34 = tpu.matmul %30, %33, %cst_21 {dimension_numbers = #tpu.dot_dimension_numbers<[1], [0], [0], [1], [0, 0, 1, 1], [], []>} : vector<50x16xbf16>, vector<16x4xbf16>, vector<50x4xf32> -> vector<50x4xf32>
    %35 = arith.addf %28, %34 : vector<50x4xf32>
    %36 = vector.extract_strided_slice %27 {offsets = [1, 0], sizes = [50, 16], strides = [1, 1]} : vector<62x16xf32> to vector<50x16xf32>
    %37 = arith.truncf %36 : vector<50x16xf32> to vector<50x16xbf16>
    %c1 = arith.constant 1 : index
    %c0_22 = arith.constant 0 : index
    %c0_23 = arith.constant 0 : index
    %38 = vector.load %arg7[%c1, %c0_22, %c0_23] : memref<9x16x4xf32, #tpu.memory_space<vmem>>, vector<1x16x4xf32>
    %39 = vector.shape_cast %38 : vector<1x16x4xf32> to vector<16x4xf32>
    %40 = arith.truncf %39 : vector<16x4xf32> to vector<16x4xbf16>
    %cst_24 = arith.constant dense<0.000000e+00> : vector<50x4xf32>
    %41 = tpu.matmul %37, %40, %cst_24 {dimension_numbers = #tpu.dot_dimension_numbers<[1], [0], [0], [1], [0, 0, 1, 1], [], []>} : vector<50x16xbf16>, vector<16x4xbf16>, vector<50x4xf32> -> vector<50x4xf32>
    %42 = arith.addf %35, %41 : vector<50x4xf32>
    %43 = vector.extract_strided_slice %27 {offsets = [2, 0], sizes = [50, 16], strides = [1, 1]} : vector<62x16xf32> to vector<50x16xf32>
    %44 = arith.truncf %43 : vector<50x16xf32> to vector<50x16xbf16>
    %c2 = arith.constant 2 : index
    %c0_25 = arith.constant 0 : index
    %c0_26 = arith.constant 0 : index
    %45 = vector.load %arg7[%c2, %c0_25, %c0_26] : memref<9x16x4xf32, #tpu.memory_space<vmem>>, vector<1x16x4xf32>
    %46 = vector.shape_cast %45 : vector<1x16x4xf32> to vector<16x4xf32>
    %47 = arith.truncf %46 : vector<16x4xf32> to vector<16x4xbf16>
    %cst_27 = arith.constant dense<0.000000e+00> : vector<50x4xf32>
    %48 = tpu.matmul %44, %47, %cst_27 {dimension_numbers = #tpu.dot_dimension_numbers<[1], [0], [0], [1], [0, 0, 1, 1], [], []>} : vector<50x16xbf16>, vector<16x4xbf16>, vector<50x4xf32> -> vector<50x4xf32>
    %49 = arith.addf %42, %48 : vector<50x4xf32>
    %50 = vector.extract_strided_slice %27 {offsets = [5, 0], sizes = [50, 16], strides = [1, 1]} : vector<62x16xf32> to vector<50x16xf32>
    %51 = arith.truncf %50 : vector<50x16xf32> to vector<50x16xbf16>
    %c3 = arith.constant 3 : index
    %c0_28 = arith.constant 0 : index
    %c0_29 = arith.constant 0 : index
    %52 = vector.load %arg7[%c3, %c0_28, %c0_29] : memref<9x16x4xf32, #tpu.memory_space<vmem>>, vector<1x16x4xf32>
    %53 = vector.shape_cast %52 : vector<1x16x4xf32> to vector<16x4xf32>
    %54 = arith.truncf %53 : vector<16x4xf32> to vector<16x4xbf16>
    %cst_30 = arith.constant dense<0.000000e+00> : vector<50x4xf32>
    %55 = tpu.matmul %51, %54, %cst_30 {dimension_numbers = #tpu.dot_dimension_numbers<[1], [0], [0], [1], [0, 0, 1, 1], [], []>} : vector<50x16xbf16>, vector<16x4xbf16>, vector<50x4xf32> -> vector<50x4xf32>
    %56 = arith.addf %49, %55 : vector<50x4xf32>
    %57 = vector.extract_strided_slice %27 {offsets = [6, 0], sizes = [50, 16], strides = [1, 1]} : vector<62x16xf32> to vector<50x16xf32>
    %58 = arith.truncf %57 : vector<50x16xf32> to vector<50x16xbf16>
    %c4 = arith.constant 4 : index
    %c0_31 = arith.constant 0 : index
    %c0_32 = arith.constant 0 : index
    %59 = vector.load %arg7[%c4, %c0_31, %c0_32] : memref<9x16x4xf32, #tpu.memory_space<vmem>>, vector<1x16x4xf32>
    %60 = vector.shape_cast %59 : vector<1x16x4xf32> to vector<16x4xf32>
    %61 = arith.truncf %60 : vector<16x4xf32> to vector<16x4xbf16>
    %cst_33 = arith.constant dense<0.000000e+00> : vector<50x4xf32>
    %62 = tpu.matmul %58, %61, %cst_33 {dimension_numbers = #tpu.dot_dimension_numbers<[1], [0], [0], [1], [0, 0, 1, 1], [], []>} : vector<50x16xbf16>, vector<16x4xbf16>, vector<50x4xf32> -> vector<50x4xf32>
    %63 = arith.addf %56, %62 : vector<50x4xf32>
    %64 = vector.extract_strided_slice %27 {offsets = [7, 0], sizes = [50, 16], strides = [1, 1]} : vector<62x16xf32> to vector<50x16xf32>
    %65 = arith.truncf %64 : vector<50x16xf32> to vector<50x16xbf16>
    %c5 = arith.constant 5 : index
    %c0_34 = arith.constant 0 : index
    %c0_35 = arith.constant 0 : index
    %66 = vector.load %arg7[%c5, %c0_34, %c0_35] : memref<9x16x4xf32, #tpu.memory_space<vmem>>, vector<1x16x4xf32>
    %67 = vector.shape_cast %66 : vector<1x16x4xf32> to vector<16x4xf32>
    %68 = arith.truncf %67 : vector<16x4xf32> to vector<16x4xbf16>
    %cst_36 = arith.constant dense<0.000000e+00> : vector<50x4xf32>
    %69 = tpu.matmul %65, %68, %cst_36 {dimension_numbers = #tpu.dot_dimension_numbers<[1], [0], [0], [1], [0, 0, 1, 1], [], []>} : vector<50x16xbf16>, vector<16x4xbf16>, vector<50x4xf32> -> vector<50x4xf32>
    %70 = arith.addf %63, %69 : vector<50x4xf32>
    %71 = vector.extract_strided_slice %27 {offsets = [10, 0], sizes = [50, 16], strides = [1, 1]} : vector<62x16xf32> to vector<50x16xf32>
    %72 = arith.truncf %71 : vector<50x16xf32> to vector<50x16xbf16>
    %c6 = arith.constant 6 : index
    %c0_37 = arith.constant 0 : index
    %c0_38 = arith.constant 0 : index
    %73 = vector.load %arg7[%c6, %c0_37, %c0_38] : memref<9x16x4xf32, #tpu.memory_space<vmem>>, vector<1x16x4xf32>
    %74 = vector.shape_cast %73 : vector<1x16x4xf32> to vector<16x4xf32>
    %75 = arith.truncf %74 : vector<16x4xf32> to vector<16x4xbf16>
    %cst_39 = arith.constant dense<0.000000e+00> : vector<50x4xf32>
    %76 = tpu.matmul %72, %75, %cst_39 {dimension_numbers = #tpu.dot_dimension_numbers<[1], [0], [0], [1], [0, 0, 1, 1], [], []>} : vector<50x16xbf16>, vector<16x4xbf16>, vector<50x4xf32> -> vector<50x4xf32>
    %77 = arith.addf %70, %76 : vector<50x4xf32>
    %78 = vector.extract_strided_slice %27 {offsets = [11, 0], sizes = [50, 16], strides = [1, 1]} : vector<62x16xf32> to vector<50x16xf32>
    %79 = arith.truncf %78 : vector<50x16xf32> to vector<50x16xbf16>
    %c7 = arith.constant 7 : index
    %c0_40 = arith.constant 0 : index
    %c0_41 = arith.constant 0 : index
    %80 = vector.load %arg7[%c7, %c0_40, %c0_41] : memref<9x16x4xf32, #tpu.memory_space<vmem>>, vector<1x16x4xf32>
    %81 = vector.shape_cast %80 : vector<1x16x4xf32> to vector<16x4xf32>
    %82 = arith.truncf %81 : vector<16x4xf32> to vector<16x4xbf16>
    %cst_42 = arith.constant dense<0.000000e+00> : vector<50x4xf32>
    %83 = tpu.matmul %79, %82, %cst_42 {dimension_numbers = #tpu.dot_dimension_numbers<[1], [0], [0], [1], [0, 0, 1, 1], [], []>} : vector<50x16xbf16>, vector<16x4xbf16>, vector<50x4xf32> -> vector<50x4xf32>
    %84 = arith.addf %77, %83 : vector<50x4xf32>
    %85 = vector.extract_strided_slice %27 {offsets = [12, 0], sizes = [50, 16], strides = [1, 1]} : vector<62x16xf32> to vector<50x16xf32>
    %86 = arith.truncf %85 : vector<50x16xf32> to vector<50x16xbf16>
    %c8 = arith.constant 8 : index
    %c0_43 = arith.constant 0 : index
    %c0_44 = arith.constant 0 : index
    %87 = vector.load %arg7[%c8, %c0_43, %c0_44] : memref<9x16x4xf32, #tpu.memory_space<vmem>>, vector<1x16x4xf32>
    %88 = vector.shape_cast %87 : vector<1x16x4xf32> to vector<16x4xf32>
    %89 = arith.truncf %88 : vector<16x4xf32> to vector<16x4xbf16>
    %cst_45 = arith.constant dense<0.000000e+00> : vector<50x4xf32>
    %90 = tpu.matmul %86, %89, %cst_45 {dimension_numbers = #tpu.dot_dimension_numbers<[1], [0], [0], [1], [0, 0, 1, 1], [], []>} : vector<50x16xbf16>, vector<16x4xbf16>, vector<50x4xf32> -> vector<50x4xf32>
    %91 = arith.addf %84, %90 : vector<50x4xf32>
    %c0_46 = arith.constant 0 : index
    %c0_47 = arith.constant 0 : index
    %92 = vector.load %arg8[%c0_46, %c0_47] : memref<50x4xf32, #tpu.memory_space<vmem>>, vector<50x4xf32>
    tpu.vector_store %arg8[%c0_46, %c0_47], %91 {strides = array<i32>} : memref<50x4xf32, #tpu.memory_space<vmem>>, vector<50x4xf32>,
    return
  }
}

</mosaic_0001>

<llo_original>
// kernel: mycnn_forward.8
$region0: #{mycnn_forward.8}
  #allocation0 [shape = 'u32[]', space=smem, size = 0x4, offset = 0x4, fixed_abs, tag = 'smem constant byte address 0x4 - core index']
  #allocation1 [shape = 'u32[144,128]{1,0:T(1,128)}', space=vmem, size = 0x12000, scoped, tag = 'internal scratch']
  %s0 = inlined_call_operand.vmem [shape: f32[288,49], index: 0, kind: input, shape index: {}]
  %s1 = inlined_call_operand.vmem [shape: f32[49,8], index: 1, kind: input, shape index: {}]
  %s2 = inlined_call_operand.vmem [shape: f32[1,8], index: 2, kind: input, shape index: {}]
  %s3 = inlined_call_operand.vmem [shape: f32[288,8], index: 3, kind: output, shape index: {}]
  %s4 = sld [smem:[#allocation0]]
  $region22: #{mycnn_forward.8} parent=0
    _
  %s6 = ssub.s32 1, %s4
  %s7 = scalar_select 0, %s6, %s4
  // Predicated region
  $region2: #{mycnn_forward.8} parent=0 // pred_check
    _
  $region3: #{mycnn_forward.8} parent=0 // pred_check_branch
    %9 = sbr.rel (0) target = $region5
  $region4: #{mycnn_forward.8} parent=0 // pred_region
    _
  $region5: #{mycnn_forward.8} parent=0 // pred_fallthru
    _
  // Predicated region
  $region6: #{mycnn_forward.8} parent=0 // pred_check
    _
  $region7: #{mycnn_forward.8} parent=0 // pred_check_branch
    %11 = sbr.rel (0) target = $region9
  $region8: #{mycnn_forward.8} parent=0 // pred_region
    _
  $region9: #{mycnn_forward.8} parent=0 // pred_fallthru
    _
  // Predicated region
  $region10: #{mycnn_forward.8} parent=0 // pred_check
    _
  $region11: #{mycnn_forward.8} parent=0 // pred_check_branch
    %13 = sbr.rel (0) target = $region13
  $region12: #{mycnn_forward.8} parent=0 // pred_region
    _
  $region13: #{mycnn_forward.8} parent=0 // pred_fallthru
    _
  %v15 = vld [vmem:[%s0] sm:$0xff]
  %v16 = vld [vmem:[%s0 + $0x8] sm:$0xff]
  %v17 = vld [vmem:[%s0 + $0x10] sm:$0xff]
  %v18 = vld [vmem:[%s0 + $0x18] sm:$0xff]
  %v19 = vld [vmem:[%s0 + $0x20] sm:$0xff]
  %v20 = vld [vmem:[%s0 + $0x28] sm:$0xff]
  %v21 = vld [vmem:[%s0 + $0x30] sm:$0xff]
  %v22 = vld [vmem:[%s0 + $0x38] sm:$0xff]
  %v23 = vld [vmem:[%s0 + $0x40] sm:$0xff]
  %v24 = vld [vmem:[%s0 + $0x48] sm:$0xff]
  %v25 = vld [vmem:[%s0 + $0x50] sm:$0xff]
  %v26 = vld [vmem:[%s0 + $0x58] sm:$0xff]
  %v27 = vld [vmem:[%s0 + $0x60] sm:$0xff]
  %v28 = vld [vmem:[%s0 + $0x68] sm:$0xff]
  %v29 = vld [vmem:[%s0 + $0x70] sm:$0xff]
  %v30 = vld [vmem:[%s0 + $0x78] sm:$0xff]
  %v31 = vld [vmem:[%s0 + $0x80] sm:$0xff]
  %v32 = vld [vmem:[%s0 + $0x88] sm:$0xff]
  %v33 = vld [vmem:[%s0 + $0x90] sm:$0xff]
  %v34 = vld [vmem:[%s0 + $0x98] sm:$0xff]
  %v35 = vld [vmem:[%s0 + $0xa0] sm:$0xff]
  %v36 = vld [vmem:[%s0 + $0xa8] sm:$0xff]
  %v37 = vld [vmem:[%s0 + $0xb0] sm:$0xff]
  %v38 = vld [vmem:[%s0 + $0xb8] sm:$0xff]
  %v39 = vld [vmem:[%s0 + $0xc0] sm:$0xff]
  %v40 = vld [vmem:[%s0 + $0xc8] sm:$0xff]
  %v41 = vld [vmem:[%s0 + $0xd0] sm:$0xff]
  %v42 = vld [vmem:[%s0 + $0xd8] sm:$0xff]
  %v43 = vld [vmem:[%s0 + $0xe0] sm:$0xff]
  %v44 = vld [vmem:[%s0 + $0xe8] sm:$0xff]
  %v45 = vld [vmem:[%s0 + $0xf0] sm:$0xff]
  %v46 = vld [vmem:[%s0 + $0xf8] sm:$0xff]
  %v47 = vld [vmem:[%s0 + $0x100] sm:$0xff]
  %v48 = vld [vmem:[%s0 + $0x108] sm:$0xff]
  %v49 = vld [vmem:[%s0 + $0x110] sm:$0xff]
  %v50 = vld [vmem:[%s0 + $0x118] sm:$0xff]
  %v51 = vpack.c.bf16 %v16, %v15
  %v52 = vpack.c.bf16 %v18, %v17
  %v53 = vpack.c.bf16 %v20, %v19
  %v54 = vpack.c.bf16 %v22, %v21
  %v55 = vpack.c.bf16 %v24, %v23
  %v56 = vpack.c.bf16 %v26, %v25
  %v57 = vpack.c.bf16 %v28, %v27
  %v58 = vpack.c.bf16 %v30, %v29
  %v59 = vpack.c.bf16 %v32, %v31
  %v60 = vpack.c.bf16 %v34, %v33
  %v61 = vpack.c.bf16 %v36, %v35
  %v62 = vpack.c.bf16 %v38, %v37
  %v63 = vpack.c.bf16 %v40, %v39
  %v64 = vpack.c.bf16 %v42, %v41
  %v65 = vpack.c.bf16 %v44, %v43
  %v66 = vpack.c.bf16 %v46, %v45
  %v67 = vpack.c.bf16 %v48, %v47
  %v68 = vpack.c.bf16 %v50, %v49
  %v69 = vld [vmem:[%s1] sm:$0xff]
  %v70 = vld [vmem:[%s1 + $0x8] sm:$0xff]
  %v71 = vld [vmem:[%s1 + $0x10] sm:$0xff]
  %v72 = vld [vmem:[%s1 + $0x18] sm:$0xff]
  %v73 = vld [vmem:[%s1 + $0x20] sm:$0xff]
  %v74 = vld [vmem:[%s1 + $0x28] sm:$0xff]
  %v75 = vld [vmem:[%s1 + $0x30] sm:$0x1]
  %v76 = vpack.c.bf16 %v70, %v69
  %v77 = vpack.c.bf16 %v72, %v71
  %v78 = vpack.c.bf16 %v74, %v73
  %v79 = vpack.c.bf16 %v75, %v75
  %v80 = vld [vmem:[%s2] sm:$0x1]
  %v82 = vlaneseq
  %v83 = vshrl.u32 %v82, 7
  %v84 = vsub.s32 0, %v83
  %v85 = vrot.slane %v80, %v84
  %vm87 = vcmask 400384
  %v89 = vsel %vm87, %v51, 0
  %v92 = vsel %vm87, %v52, 0
  %v95 = vsel %vm87, %v53, 0
  %v98 = vsel %vm87, %v54, 0
  %v101 = vsel %vm87, %v55, 0
  %v104 = vsel %vm87, %v56, 0
  %v107 = vsel %vm87, %v57, 0
  %v110 = vsel %vm87, %v58, 0
  %v113 = vsel %vm87, %v59, 0
  %v116 = vsel %vm87, %v60, 0
  %v119 = vsel %vm87, %v61, 0
  %v122 = vsel %vm87, %v62, 0
  %v125 = vsel %vm87, %v63, 0
  %v128 = vsel %vm87, %v64, 0
  %v131 = vsel %vm87, %v65, 0
  %v134 = vsel %vm87, %v66, 0
  %v137 = vsel %vm87, %v67, 0
  %v140 = vsel %vm87, %v68, 0
  %vm142 = vcmask 1040384
  %v143 = vsel 0, 4294967295, 65535
  %v144 = vsel %vm142, %v143, 0
  %v146 = vand.u32 %v79, %v144
  %148 = vmatprep.subr.bf16.mxu0 0
  %149 = vmatpush1.bf16.msra.mxu0 0
  %150 = vmatprep.subr.bf16.mxu0 0
  %151 = vmatpush1.bf16.msra.mxu0 0
  %152 = vmatprep.subr.bf16.mxu0 0
  %153 = vmatpush1.bf16.msra.mxu0 0
  %154 = vmatprep.subr.bf16.mxu0 0
  %155 = vmatpush1.bf16.msra.mxu0 0
  %156 = vmatprep.subr.bf16.mxu0 0
  %157 = vmatpush1.bf16.msra.mxu0 %v146
  %158 = vmatprep.subr.bf16.mxu0 0
  %159 = vmatpush1.bf16.msra.mxu0 %v78
  %160 = vmatprep.subr.bf16.mxu0 0
  %161 = vmatpush1.bf16.msra.mxu0 %v77
  %162 = vmatprep.subr.bf16.mxu0 0
  %163 = vmatpush1.bf16.msra.mxu0 %v76
  %164 = vmatprep.subr.bf16.mxu0 0
  %165 = vmatpush2.bf16.msra.mxu0 0
  %166 = vmatprep.subr.bf16.mxu0 0
  %167 = vmatpush2.bf16.msra.mxu0 0
  %168 = vmatprep.subr.bf16.mxu0 0
  %169 = vmatpush2.bf16.msra.mxu0 0
  %170 = vmatprep.subr.bf16.mxu0 0
  %171 = vmatpush2.bf16.msra.mxu0 0
  %172 = vmatprep.subr.bf16.mxu0 0
  %173 = vmatpush2.bf16.msra.mxu0 0
  %174 = vmatprep.subr.bf16.mxu0 0
  %175 = vmatpush2.bf16.msra.mxu0 0
  %176 = vmatprep.subr.bf16.mxu0 0
  %177 = vmatpush2.bf16.msra.mxu0 0
  %178 = vmatprep.subr.bf16.mxu0 0
  %179 = vmatpush2.bf16.msra.mxu0 0
  %180 = vmatprep.mubr.bf16.mxu0 0
  %181 = vmatmul.mubr.bf16.gmra.mxu0 %v89
  %v182 = vpop.f32.mrf.mxu0
  %v183 = vadd.f32 %v85, %v182
  %v184 = vpop.f32.mrf.mxu0
  %v185 = vpop.f32.mrf.mxu0
  %v186 = vadd.f32 %v85, %v185
  %v187 = vpop.f32.mrf.mxu0
  %188 = vmatprep.mubr.bf16.mxu0 0
  %189 = vmatmul.mubr.bf16.gmra.mxu0 %v92
  %v190 = vpop.f32.mrf.mxu0
  %v191 = vadd.f32 %v85, %v190
  %v192 = vpop.f32.mrf.mxu0
  %v193 = vpop.f32.mrf.mxu0
  %v194 = vadd.f32 %v85, %v193
  %v195 = vpop.f32.mrf.mxu0
  %196 = vmatprep.mubr.bf16.mxu0 0
  %197 = vmatmul.mubr.bf16.gmra.mxu0 %v95
  %v198 = vpop.f32.mrf.mxu0
  %v199 = vadd.f32 %v85, %v198
  %v200 = vpop.f32.mrf.mxu0
  %v201 = vpop.f32.mrf.mxu0
  %v202 = vadd.f32 %v85, %v201
  %v203 = vpop.f32.mrf.mxu0
  %204 = vmatprep.mubr.bf16.mxu0 0
  %205 = vmatmul.mubr.bf16.gmra.mxu0 %v98
  %v206 = vpop.f32.mrf.mxu0
  %v207 = vadd.f32 %v85, %v206
  %v208 = vpop.f32.mrf.mxu0
  %v209 = vpop.f32.mrf.mxu0
  %v210 = vadd.f32 %v85, %v209
  %v211 = vpop.f32.mrf.mxu0
  %212 = vmatprep.mubr.bf16.mxu0 0
  %213 = vmatmul.mubr.bf16.gmra.mxu0 %v101
  %v214 = vpop.f32.mrf.mxu0
  %v215 = vadd.f32 %v85, %v214
  %v216 = vpop.f32.mrf.mxu0
  %v217 = vpop.f32.mrf.mxu0
  %v218 = vadd.f32 %v85, %v217
  %v219 = vpop.f32.mrf.mxu0
  %220 = vmatprep.mubr.bf16.mxu0 0
  %221 = vmatmul.mubr.bf16.gmra.mxu0 %v104
  %v222 = vpop.f32.mrf.mxu0
  %v223 = vadd.f32 %v85, %v222
  %v224 = vpop.f32.mrf.mxu0
  %v225 = vpop.f32.mrf.mxu0
  %v226 = vadd.f32 %v85, %v225
  %v227 = vpop.f32.mrf.mxu0
  %228 = vmatprep.mubr.bf16.mxu0 0
  %229 = vmatmul.mubr.bf16.gmra.mxu0 %v107
  %v230 = vpop.f32.mrf.mxu0
  %v231 = vadd.f32 %v85, %v230
  %v232 = vpop.f32.mrf.mxu0
  %v233 = vpop.f32.mrf.mxu0
  %v234 = vadd.f32 %v85, %v233
  %v235 = vpop.f32.mrf.mxu0
  %236 = vmatprep.mubr.bf16.mxu0 0
  %237 = vmatmul.mubr.bf16.gmra.mxu0 %v110
  %v238 = vpop.f32.mrf.mxu0
  %v239 = vadd.f32 %v85, %v238
  %v240 = vpop.f32.mrf.mxu0
  %v241 = vpop.f32.mrf.mxu0
  %v242 = vadd.f32 %v85, %v241
  %v243 = vpop.f32.mrf.mxu0
  %244 = vmatprep.mubr.bf16.mxu0 0
  %245 = vmatmul.mubr.bf16.gmra.mxu0 %v113
  %v246 = vpop.f32.mrf.mxu0
  %v247 = vadd.f32 %v85, %v246
  %v248 = vpop.f32.mrf.mxu0
  %v249 = vpop.f32.mrf.mxu0
  %v250 = vadd.f32 %v85, %v249
  %v251 = vpop.f32.mrf.mxu0
  %252 = vmatprep.mubr.bf16.mxu0 0
  %253 = vmatmul.mubr.bf16.gmra.mxu0 %v116
  %v254 = vpop.f32.mrf.mxu0
  %v255 = vadd.f32 %v85, %v254
  %v256 = vpop.f32.mrf.mxu0
  %v257 = vpop.f32.mrf.mxu0
  %v258 = vadd.f32 %v85, %v257
  %v259 = vpop.f32.mrf.mxu0
  %260 = vmatprep.mubr.bf16.mxu0 0
  %261 = vmatmul.mubr.bf16.gmra.mxu0 %v119
  %v262 = vpop.f32.mrf.mxu0
  %v263 = vadd.f32 %v85, %v262
  %v264 = vpop.f32.mrf.mxu0
  %v265 = vpop.f32.mrf.mxu0
  %v266 = vadd.f32 %v85, %v265
  %v267 = vpop.f32.mrf.mxu0
  %268 = vmatprep.mubr.bf16.mxu0 0
  %269 = vmatmul.mubr.bf16.gmra.mxu0 %v122
  %v270 = vpop.f32.mrf.mxu0
  %v271 = vadd.f32 %v85, %v270
  %v272 = vpop.f32.mrf.mxu0
  %v273 = vpop.f32.mrf.mxu0
  %v274 = vadd.f32 %v85, %v273
  %v275 = vpop.f32.mrf.mxu0
  %276 = vmatprep.mubr.bf16.mxu0 0
  %277 = vmatmul.mubr.bf16.gmra.mxu0 %v125
  %v278 = vpop.f32.mrf.mxu0
  %v279 = vadd.f32 %v85, %v278
  %v280 = vpop.f32.mrf.mxu0
  %v281 = vpop.f32.mrf.mxu0
  %v282 = vadd.f32 %v85, %v281
  %v283 = vpop.f32.mrf.mxu0
  %284 = vmatprep.mubr.bf16.mxu0 0
  %285 = vmatmul.mubr.bf16.gmra.mxu0 %v128
  %v286 = vpop.f32.mrf.mxu0
  %v287 = vadd.f32 %v85, %v286
  %v288 = vpop.f32.mrf.mxu0
  %v289 = vpop.f32.mrf.mxu0
  %v290 = vadd.f32 %v85, %v289
  %v291 = vpop.f32.mrf.mxu0
  %292 = vmatprep.mubr.bf16.mxu0 0
  %293 = vmatmul.mubr.bf16.gmra.mxu0 %v131
  %v294 = vpop.f32.mrf.mxu0
  %v295 = vadd.f32 %v85, %v294
  %v296 = vpop.f32.mrf.mxu0
  %v297 = vpop.f32.mrf.mxu0
  %v298 = vadd.f32 %v85, %v297
  %v299 = vpop.f32.mrf.mxu0
  %300 = vmatprep.mubr.bf16.mxu0 0
  %301 = vmatmul.mubr.bf16.gmra.mxu0 %v134
  %v302 = vpop.f32.mrf.mxu0
  %v303 = vadd.f32 %v85, %v302
  %v304 = vpop.f32.mrf.mxu0
  %v305 = vpop.f32.mrf.mxu0
  %v306 = vadd.f32 %v85, %v305
  %v307 = vpop.f32.mrf.mxu0
  %308 = vmatprep.mubr.bf16.mxu0 0
  %309 = vmatmul.mubr.bf16.gmra.mxu0 %v137
  %v310 = vpop.f32.mrf.mxu0
  %v311 = vadd.f32 %v85, %v310
  %v312 = vpop.f32.mrf.mxu0
  %v313 = vpop.f32.mrf.mxu0
  %v314 = vadd.f32 %v85, %v313
  %v315 = vpop.f32.mrf.mxu0
  %316 = vmatprep.mubr.bf16.mxu0 0
  %317 = vmatmul.mubr.bf16.gmra.mxu0 %v140
  %v318 = vpop.f32.mrf.mxu0
  %v319 = vadd.f32 %v85, %v318
  %v320 = vpop.f32.mrf.mxu0
  %v321 = vpop.f32.mrf.mxu0
  %v322 = vadd.f32 %v85, %v321
  %v323 = vpop.f32.mrf.mxu0
  %324 = vdwg.mxu0
  %v325 = vmax.f32 %v183, 0.0
  %v326 = vmax.f32 %v186, 0.0
  %v327 = vmax.f32 %v191, 0.0
  %v328 = vmax.f32 %v194, 0.0
  %v329 = vmax.f32 %v199, 0.0
  %v330 = vmax.f32 %v202, 0.0
  %v331 = vmax.f32 %v207, 0.0
  %v332 = vmax.f32 %v210, 0.0
  %v333 = vmax.f32 %v215, 0.0
  %v334 = vmax.f32 %v218, 0.0
  %v335 = vmax.f32 %v223, 0.0
  %v336 = vmax.f32 %v226, 0.0
  %v337 = vmax.f32 %v231, 0.0
  %v338 = vmax.f32 %v234, 0.0
  %v339 = vmax.f32 %v239, 0.0
  %v340 = vmax.f32 %v242, 0.0
  %v341 = vmax.f32 %v247, 0.0
  %v342 = vmax.f32 %v250, 0.0
  %v343 = vmax.f32 %v255, 0.0
  %v344 = vmax.f32 %v258, 0.0
  %v345 = vmax.f32 %v263, 0.0
  %v346 = vmax.f32 %v266, 0.0
  %v347 = vmax.f32 %v271, 0.0
  %v348 = vmax.f32 %v274, 0.0
  %v349 = vmax.f32 %v279, 0.0
  %v350 = vmax.f32 %v282, 0.0
  %v351 = vmax.f32 %v287, 0.0
  %v352 = vmax.f32 %v290, 0.0
  %v353 = vmax.f32 %v295, 0.0
  %v354 = vmax.f32 %v298, 0.0
  %v355 = vmax.f32 %v303, 0.0
  %v356 = vmax.f32 %v306, 0.0
  %v357 = vmax.f32 %v311, 0.0
  %v358 = vmax.f32 %v314, 0.0
  %v359 = vmax.f32 %v319, 0.0
  %v360 = vmax.f32 %v322, 0.0
  %vm361 = vcmask 64512
  %362 = vst.msk [vmem:[%s3] sm:$0xff] %vm361, %v325
  %363 = vst.msk [vmem:[%s3 + $0x8] sm:$0xff] %vm361, %v326
  %364 = vst.msk [vmem:[%s3 + $0x10] sm:$0xff] %vm361, %v327
  %365 = vst.msk [vmem:[%s3 + $0x18] sm:$0xff] %vm361, %v328
  %366 = vst.msk [vmem:[%s3 + $0x20] sm:$0xff] %vm361, %v329
  %367 = vst.msk [vmem:[%s3 + $0x28] sm:$0xff] %vm361, %v330
  %368 = vst.msk [vmem:[%s3 + $0x30] sm:$0xff] %vm361, %v331
  %369 = vst.msk [vmem:[%s3 + $0x38] sm:$0xff] %vm361, %v332
  %370 = vst.msk [vmem:[%s3 + $0x40] sm:$0xff] %vm361, %v333
  %371 = vst.msk [vmem:[%s3 + $0x48] sm:$0xff] %vm361, %v334
  %372 = vst.msk [vmem:[%s3 + $0x50] sm:$0xff] %vm361, %v335
  %373 = vst.msk [vmem:[%s3 + $0x58] sm:$0xff] %vm361, %v336
  %374 = vst.msk [vmem:[%s3 + $0x60] sm:$0xff] %vm361, %v337
  %375 = vst.msk [vmem:[%s3 + $0x68] sm:$0xff] %vm361, %v338
  %376 = vst.msk [vmem:[%s3 + $0x70] sm:$0xff] %vm361, %v339
  %377 = vst.msk [vmem:[%s3 + $0x78] sm:$0xff] %vm361, %v340
  %378 = vst.msk [vmem:[%s3 + $0x80] sm:$0xff] %vm361, %v341
  %379 = vst.msk [vmem:[%s3 + $0x88] sm:$0xff] %vm361, %v342
  %380 = vst.msk [vmem:[%s3 + $0x90] sm:$0xff] %vm361, %v343
  %381 = vst.msk [vmem:[%s3 + $0x98] sm:$0xff] %vm361, %v344
  %382 = vst.msk [vmem:[%s3 + $0xa0] sm:$0xff] %vm361, %v345
  %383 = vst.msk [vmem:[%s3 + $0xa8] sm:$0xff] %vm361, %v346
  %384 = vst.msk [vmem:[%s3 + $0xb0] sm:$0xff] %vm361, %v347
  %385 = vst.msk [vmem:[%s3 + $0xb8] sm:$0xff] %vm361, %v348
  %386 = vst.msk [vmem:[%s3 + $0xc0] sm:$0xff] %vm361, %v349
  %387 = vst.msk [vmem:[%s3 + $0xc8] sm:$0xff] %vm361, %v350
  %388 = vst.msk [vmem:[%s3 + $0xd0] sm:$0xff] %vm361, %v351
  %389 = vst.msk [vmem:[%s3 + $0xd8] sm:$0xff] %vm361, %v352
  %390 = vst.msk [vmem:[%s3 + $0xe0] sm:$0xff] %vm361, %v353
  %391 = vst.msk [vmem:[%s3 + $0xe8] sm:$0xff] %vm361, %v354
  %392 = vst.msk [vmem:[%s3 + $0xf0] sm:$0xff] %vm361, %v355
  %393 = vst.msk [vmem:[%s3 + $0xf8] sm:$0xff] %vm361, %v356
  %394 = vst.msk [vmem:[%s3 + $0x100] sm:$0xff] %vm361, %v357
  %395 = vst.msk [vmem:[%s3 + $0x108] sm:$0xff] %vm361, %v358
  %396 = vst.msk [vmem:[%s3 + $0x110] sm:$0xff] %vm361, %v359
  %397 = vst.msk [vmem:[%s3 + $0x118] sm:$0xff] %vm361, %v360
  // Predicated region
  $region14: #{mycnn_forward.8} parent=0 // pred_check
    _
  $region15: #{mycnn_forward.8} parent=0 // pred_check_branch
    %399 = sbr.rel (0) target = $region17
  $region16: #{mycnn_forward.8} parent=0 // pred_region
    _
  $region17: #{mycnn_forward.8} parent=0 // pred_fallthru
    _
  // Predicated region
  $region18: #{mycnn_forward.8} parent=0 // pred_check
    _
  $region19: #{mycnn_forward.8} parent=0 // pred_check_branch
    %401 = sbr.rel (0) target = $region21
  $region20: #{mycnn_forward.8} parent=0 // pred_region
    _
  $region21: #{mycnn_forward.8} parent=0 // pred_fallthru
    _

// kernel: mycnn_forward.9
$region0: #{mycnn_forward.9}
  #allocation0 [shape = 'u32[]', space=smem, size = 0x4, offset = 0x4, fixed_abs, tag = 'smem constant byte address 0x4 - core index']
  #allocation1 [shape = 'u32[144,128]{1,0:T(1,128)}', space=vmem, size = 0x12000, scoped, tag = 'internal scratch']
  %s0 = inlined_call_operand.vmem [shape: f32[9,72,8], index: 0, kind: input, shape index: {}]
  %s1 = inlined_call_operand.vmem [shape: f32[72,8], index: 1, kind: output, shape index: {}]
  %s2 = sld [smem:[#allocation0]]
  $region14: #{mycnn_forward.9} parent=0
    _
  %s4 = ssub.s32 1, %s2
  %s5 = scalar_select 0, %s4, %s2
  // Predicated region
  $region2: #{mycnn_forward.9} parent=0 // pred_check
    _
  $region3: #{mycnn_forward.9} parent=0 // pred_check_branch
    %7 = sbr.rel (0) target = $region5
  $region4: #{mycnn_forward.9} parent=0 // pred_region
    _
  $region5: #{mycnn_forward.9} parent=0 // pred_fallthru
    _
  %v8 = vld [vmem:[%s0] sm:$0xff]
  %v9 = vld [vmem:[%s0 + $0x8] sm:$0xff]
  %v10 = vld [vmem:[%s0 + $0x10] sm:$0xff]
  %v11 = vld [vmem:[%s0 + $0x18] sm:$0xff]
  %v12 = vld [vmem:[%s0 + $0x20] sm:$0xff]
  %v13 = vld [vmem:[%s0 + $0x28] sm:$0xff]
  %v14 = vld [vmem:[%s0 + $0x30] sm:$0xff]
  %v15 = vld [vmem:[%s0 + $0x38] sm:$0xff]
  %v16 = vld [vmem:[%s0 + $0x40] sm:$0xff]
  %s17 = scalar_lea.vmem %s0, 72
  %v18 = vld [vmem:[%s17] sm:$0xff]
  %v19 = vld [vmem:[%s17 + $0x8] sm:$0xff]
  %v20 = vld [vmem:[%s17 + $0x10] sm:$0xff]
  %v21 = vld [vmem:[%s17 + $0x18] sm:$0xff]
  %v22 = vld [vmem:[%s17 + $0x20] sm:$0xff]
  %v23 = vld [vmem:[%s17 + $0x28] sm:$0xff]
  %v24 = vld [vmem:[%s17 + $0x30] sm:$0xff]
  %v25 = vld [vmem:[%s17 + $0x38] sm:$0xff]
  %v26 = vld [vmem:[%s17 + $0x40] sm:$0xff]
  %v27 = vmax.f32 %v8, %v18
  %v28 = vmax.f32 %v9, %v19
  %v29 = vmax.f32 %v10, %v20
  %v30 = vmax.f32 %v11, %v21
  %v31 = vmax.f32 %v12, %v22
  %v32 = vmax.f32 %v13, %v23
  %v33 = vmax.f32 %v14, %v24
  %v34 = vmax.f32 %v15, %v25
  %v35 = vmax.f32 %v16, %v26
  %s36 = scalar_lea.vmem %s0, 144
  %v37 = vld [vmem:[%s36] sm:$0xff]
  %v38 = vld [vmem:[%s36 + $0x8] sm:$0xff]
  %v39 = vld [vmem:[%s36 + $0x10] sm:$0xff]
  %v40 = vld [vmem:[%s36 + $0x18] sm:$0xff]
  %v41 = vld [vmem:[%s36 + $0x20] sm:$0xff]
  %v42 = vld [vmem:[%s36 + $0x28] sm:$0xff]
  %v43 = vld [vmem:[%s36 + $0x30] sm:$0xff]
  %v44 = vld [vmem:[%s36 + $0x38] sm:$0xff]
  %v45 = vld [vmem:[%s36 + $0x40] sm:$0xff]
  %v46 = vmax.f32 %v27, %v37
  %v47 = vmax.f32 %v28, %v38
  %v48 = vmax.f32 %v29, %v39
  %v49 = vmax.f32 %v30, %v40
  %v50 = vmax.f32 %v31, %v41
  %v51 = vmax.f32 %v32, %v42
  %v52 = vmax.f32 %v33, %v43
  %v53 = vmax.f32 %v34, %v44
  %v54 = vmax.f32 %v35, %v45
  %s55 = scalar_lea.vmem %s0, 216
  %v56 = vld [vmem:[%s55] sm:$0xff]
  %v57 = vld [vmem:[%s55 + $0x8] sm:$0xff]
  %v58 = vld [vmem:[%s55 + $0x10] sm:$0xff]
  %v59 = vld [vmem:[%s55 + $0x18] sm:$0xff]
  %v60 = vld [vmem:[%s55 + $0x20] sm:$0xff]
  %v61 = vld [vmem:[%s55 + $0x28] sm:$0xff]
  %v62 = vld [vmem:[%s55 + $0x30] sm:$0xff]
  %v63 = vld [vmem:[%s55 + $0x38] sm:$0xff]
  %v64 = vld [vmem:[%s55 + $0x40] sm:$0xff]
  %v65 = vmax.f32 %v46, %v56
  %v66 = vmax.f32 %v47, %v57
  %v67 = vmax.f32 %v48, %v58
  %v68 = vmax.f32 %v49, %v59
  %v69 = vmax.f32 %v50, %v60
  %v70 = vmax.f32 %v51, %v61
  %v71 = vmax.f32 %v52, %v62
  %v72 = vmax.f32 %v53, %v63
  %v73 = vmax.f32 %v54, %v64
  %s74 = scalar_lea.vmem %s0, 288
  %v75 = vld [vmem:[%s74] sm:$0xff]
  %v76 = vld [vmem:[%s74 + $0x8] sm:$0xff]
  %v77 = vld [vmem:[%s74 + $0x10] sm:$0xff]
  %v78 = vld [vmem:[%s74 + $0x18] sm:$0xff]
  %v79 = vld [vmem:[%s74 + $0x20] sm:$0xff]
  %v80 = vld [vmem:[%s74 + $0x28] sm:$0xff]
  %v81 = vld [vmem:[%s74 + $0x30] sm:$0xff]
  %v82 = vld [vmem:[%s74 + $0x38] sm:$0xff]
  %v83 = vld [vmem:[%s74 + $0x40] sm:$0xff]
  %v84 = vmax.f32 %v65, %v75
  %v85 = vmax.f32 %v66, %v76
  %v86 = vmax.f32 %v67, %v77
  %v87 = vmax.f32 %v68, %v78
  %v88 = vmax.f32 %v69, %v79
  %v89 = vmax.f32 %v70, %v80
  %v90 = vmax.f32 %v71, %v81
  %v91 = vmax.f32 %v72, %v82
  %v92 = vmax.f32 %v73, %v83
  %s93 = scalar_lea.vmem %s0, 360
  %v94 = vld [vmem:[%s93] sm:$0xff]
  %v95 = vld [vmem:[%s93 + $0x8] sm:$0xff]
  %v96 = vld [vmem:[%s93 + $0x10] sm:$0xff]
  %v97 = vld [vmem:[%s93 + $0x18] sm:$0xff]
  %v98 = vld [vmem:[%s93 + $0x20] sm:$0xff]
  %v99 = vld [vmem:[%s93 + $0x28] sm:$0xff]
  %v100 = vld [vmem:[%s93 + $0x30] sm:$0xff]
  %v101 = vld [vmem:[%s93 + $0x38] sm:$0xff]
  %v102 = vld [vmem:[%s93 + $0x40] sm:$0xff]
  %v103 = vmax.f32 %v84, %v94
  %v104 = vmax.f32 %v85, %v95
  %v105 = vmax.f32 %v86, %v96
  %v106 = vmax.f32 %v87, %v97
  %v107 = vmax.f32 %v88, %v98
  %v108 = vmax.f32 %v89, %v99
  %v109 = vmax.f32 %v90, %v100
  %v110 = vmax.f32 %v91, %v101
  %v111 = vmax.f32 %v92, %v102
  %s112 = scalar_lea.vmem %s0, 432
  %v113 = vld [vmem:[%s112] sm:$0xff]
  %v114 = vld [vmem:[%s112 + $0x8] sm:$0xff]
  %v115 = vld [vmem:[%s112 + $0x10] sm:$0xff]
  %v116 = vld [vmem:[%s112 + $0x18] sm:$0xff]
  %v117 = vld [vmem:[%s112 + $0x20] sm:$0xff]
  %v118 = vld [vmem:[%s112 + $0x28] sm:$0xff]
  %v119 = vld [vmem:[%s112 + $0x30] sm:$0xff]
  %v120 = vld [vmem:[%s112 + $0x38] sm:$0xff]
  %v121 = vld [vmem:[%s112 + $0x40] sm:$0xff]
  %v122 = vmax.f32 %v103, %v113
  %v123 = vmax.f32 %v104, %v114
  %v124 = vmax.f32 %v105, %v115
  %v125 = vmax.f32 %v106, %v116
  %v126 = vmax.f32 %v107, %v117
  %v127 = vmax.f32 %v108, %v118
  %v128 = vmax.f32 %v109, %v119
  %v129 = vmax.f32 %v110, %v120
  %v130 = vmax.f32 %v111, %v121
  %s131 = scalar_lea.vmem %s0, 504
  %v132 = vld [vmem:[%s131] sm:$0xff]
  %v133 = vld [vmem:[%s131 + $0x8] sm:$0xff]
  %v134 = vld [vmem:[%s131 + $0x10] sm:$0xff]
  %v135 = vld [vmem:[%s131 + $0x18] sm:$0xff]
  %v136 = vld [vmem:[%s131 + $0x20] sm:$0xff]
  %v137 = vld [vmem:[%s131 + $0x28] sm:$0xff]
  %v138 = vld [vmem:[%s131 + $0x30] sm:$0xff]
  %v139 = vld [vmem:[%s131 + $0x38] sm:$0xff]
  %v140 = vld [vmem:[%s131 + $0x40] sm:$0xff]
  %v141 = vmax.f32 %v122, %v132
  %v142 = vmax.f32 %v123, %v133
  %v143 = vmax.f32 %v124, %v134
  %v144 = vmax.f32 %v125, %v135
  %v145 = vmax.f32 %v126, %v136
  %v146 = vmax.f32 %v127, %v137
  %v147 = vmax.f32 %v128, %v138
  %v148 = vmax.f32 %v129, %v139
  %v149 = vmax.f32 %v130, %v140
  %s150 = scalar_lea.vmem %s0, 576
  %v151 = vld [vmem:[%s150] sm:$0xff]
  %v152 = vld [vmem:[%s150 + $0x8] sm:$0xff]
  %v153 = vld [vmem:[%s150 + $0x10] sm:$0xff]
  %v154 = vld [vmem:[%s150 + $0x18] sm:$0xff]
  %v155 = vld [vmem:[%s150 + $0x20] sm:$0xff]
  %v156 = vld [vmem:[%s150 + $0x28] sm:$0xff]
  %v157 = vld [vmem:[%s150 + $0x30] sm:$0xff]
  %v158 = vld [vmem:[%s150 + $0x38] sm:$0xff]
  %v159 = vld [vmem:[%s150 + $0x40] sm:$0xff]
  %v160 = vmax.f32 %v141, %v151
  %v161 = vmax.f32 %v142, %v152
  %v162 = vmax.f32 %v143, %v153
  %v163 = vmax.f32 %v144, %v154
  %v164 = vmax.f32 %v145, %v155
  %v165 = vmax.f32 %v146, %v156
  %v166 = vmax.f32 %v147, %v157
  %v167 = vmax.f32 %v148, %v158
  %v168 = vmax.f32 %v149, %v159
  %vm169 = vcmask 64512
  %170 = vst.msk [vmem:[%s1] sm:$0xff] %vm169, %v160
  %171 = vst.msk [vmem:[%s1 + $0x8] sm:$0xff] %vm169, %v161
  %172 = vst.msk [vmem:[%s1 + $0x10] sm:$0xff] %vm169, %v162
  %173 = vst.msk [vmem:[%s1 + $0x18] sm:$0xff] %vm169, %v163
  %174 = vst.msk [vmem:[%s1 + $0x20] sm:$0xff] %vm169, %v164
  %175 = vst.msk [vmem:[%s1 + $0x28] sm:$0xff] %vm169, %v165
  %176 = vst.msk [vmem:[%s1 + $0x30] sm:$0xff] %vm169, %v166
  %177 = vst.msk [vmem:[%s1 + $0x38] sm:$0xff] %vm169, %v167
  %178 = vst.msk [vmem:[%s1 + $0x40] sm:$0xff] %vm169, %v168
  // Predicated region
  $region6: #{mycnn_forward.9} parent=0 // pred_check
    _
  $region7: #{mycnn_forward.9} parent=0 // pred_check_branch
    %180 = sbr.rel (0) target = $region9
  $region8: #{mycnn_forward.9} parent=0 // pred_region
    _
  $region9: #{mycnn_forward.9} parent=0 // pred_fallthru
    _
  // Predicated region
  $region10: #{mycnn_forward.9} parent=0 // pred_check
    _
  $region11: #{mycnn_forward.9} parent=0 // pred_check_branch
    %182 = sbr.rel (0) target = $region13
  $region12: #{mycnn_forward.9} parent=0 // pred_region
    _
  $region13: #{mycnn_forward.9} parent=0 // pred_fallthru
    _

// kernel: mycnn_forward.10
$region0: #{mycnn_forward.10}
  #allocation0 [shape = 'u32[]', space=smem, size = 0x4, offset = 0x4, fixed_abs, tag = 'smem constant byte address 0x4 - core index']
  #allocation1 [shape = 'u32[144,128]{1,0:T(1,128)}', space=vmem, size = 0x12000, scoped, tag = 'internal scratch']
  %s0 = inlined_call_operand.vmem [shape: f32[146,8], index: 0, kind: input, shape index: {}]
  %s1 = inlined_call_operand.vmem [shape: f32[146,1], index: 1, kind: input, shape index: {}]
  %s2 = inlined_call_operand.vmem [shape: f32[1,8], index: 2, kind: input, shape index: {}]
  %s3 = inlined_call_operand.vmem [shape: f32[1,8], index: 3, kind: input, shape index: {}]
  %s4 = inlined_call_operand.vmem [shape: f32[8,16], index: 4, kind: input, shape index: {}]
  %s5 = inlined_call_operand.vmem [shape: f32[1,16], index: 5, kind: input, shape index: {}]
  %s6 = inlined_call_operand.vmem [shape: f32[1,16], index: 6, kind: input, shape index: {}]
  %s7 = inlined_call_operand.vmem [shape: f32[9,16,4], index: 7, kind: input, shape index: {}]
  %s8 = inlined_call_operand.vmem [shape: f32[128,4], index: 8, kind: output, shape index: {}]
  %s9 = sld [smem:[#allocation0]]
  $region42: #{mycnn_forward.10} parent=0
    _
  %s11 = ssub.s32 1, %s9
  %s12 = scalar_select 0, %s11, %s9
  // Predicated region
  $region2: #{mycnn_forward.10} parent=0 // pred_check
    _
  $region3: #{mycnn_forward.10} parent=0 // pred_check_branch
    %14 = sbr.rel (0) target = $region5
  $region4: #{mycnn_forward.10} parent=0 // pred_region
    _
  $region5: #{mycnn_forward.10} parent=0 // pred_fallthru
    _
  // Predicated region
  $region6: #{mycnn_forward.10} parent=0 // pred_check
    _
  $region7: #{mycnn_forward.10} parent=0 // pred_check_branch
    %16 = sbr.rel (0) target = $region9
  $region8: #{mycnn_forward.10} parent=0 // pred_region
    _
  $region9: #{mycnn_forward.10} parent=0 // pred_fallthru
    _
  // Predicated region
  $region10: #{mycnn_forward.10} parent=0 // pred_check
    _
  $region11: #{mycnn_forward.10} parent=0 // pred_check_branch
    %18 = sbr.rel (0) target = $region13
  $region12: #{mycnn_forward.10} parent=0 // pred_region
    _
  $region13: #{mycnn_forward.10} parent=0 // pred_fallthru
    _
  // Predicated region
  $region14: #{mycnn_forward.10} parent=0 // pred_check
    _
  $region15: #{mycnn_forward.10} parent=0 // pred_check_branch
    %20 = sbr.rel (0) target = $region17
  $region16: #{mycnn_forward.10} parent=0 // pred_region
    _
  $region17: #{mycnn_forward.10} parent=0 // pred_fallthru
    _
  // Predicated region
  $region18: #{mycnn_forward.10} parent=0 // pred_check
    _
  $region19: #{mycnn_forward.10} parent=0 // pred_check_branch
    %22 = sbr.rel (0) target = $region21
  $region20: #{mycnn_forward.10} parent=0 // pred_region
    _
  $region21: #{mycnn_forward.10} parent=0 // pred_fallthru
    _
  // Predicated region
  $region22: #{mycnn_forward.10} parent=0 // pred_check
    _
  $region23: #{mycnn_forward.10} parent=0 // pred_check_branch
    %24 = sbr.rel (0) target = $region25
  $region24: #{mycnn_forward.10} parent=0 // pred_region
    _
  $region25: #{mycnn_forward.10} parent=0 // pred_fallthru
    _
  // Predicated region
  $region26: #{mycnn_forward.10} parent=0 // pred_check
    _
  $region27: #{mycnn_forward.10} parent=0 // pred_check_branch
    %26 = sbr.rel (0) target = $region29
  $region28: #{mycnn_forward.10} parent=0 // pred_region
    _
  $region29: #{mycnn_forward.10} parent=0 // pred_fallthru
    _
  // Predicated region
  $region30: #{mycnn_forward.10} parent=0 // pred_check
    _
  $region31: #{mycnn_forward.10} parent=0 // pred_check_branch
    %28 = sbr.rel (0) target = $region33
  $region32: #{mycnn_forward.10} parent=0 // pred_region
    _
  $region33: #{mycnn_forward.10} parent=0 // pred_fallthru
    _
  %v30 = vld [vmem:[%s0] sm:$0xff]
  %v31 = vld [vmem:[%s0 + $0x8] sm:$0xff]
  %v32 = vld [vmem:[%s0 + $0x10] sm:$0xff]
  %v33 = vld [vmem:[%s0 + $0x18] sm:$0xff]
  %v34 = vld [vmem:[%s0 + $0x20] sm:$0xff]
  %v35 = vld [vmem:[%s0 + $0x28] sm:$0xff]
  %v36 = vld [vmem:[%s0 + $0x30] sm:$0xff]
  %v37 = vld [vmem:[%s0 + $0x38] sm:$0xff]
  %v38 = vld [vmem:[%s0 + $0x40] sm:$0xff]
  %v39 = vld [vmem:[%s0 + $0x48] sm:$0xff]
  %v40 = vld [vmem:[%s0 + $0x50] sm:$0xff]
  %v41 = vld [vmem:[%s0 + $0x58] sm:$0xff]
  %v42 = vld [vmem:[%s0 + $0x60] sm:$0xff]
  %v43 = vld [vmem:[%s0 + $0x68] sm:$0xff]
  %v44 = vld [vmem:[%s0 + $0x70] sm:$0xff]
  %v45 = vld [vmem:[%s0 + $0x78] sm:$0xff]
  %v46 = vld [vmem:[%s0 + $0x80] sm:$0xff]
  %v47 = vld [vmem:[%s0 + $0x88] sm:$0xff]
  %v48 = vld [vmem:[%s0 + $0x90] sm:$0x3]
  %v49 = vld [vmem:[%s2] sm:$0x1]
  %v51 = vlaneseq
  %v52 = vshrl.u32 %v51, 7
  %v53 = vsub.s32 0, %v52
  %v54 = vrot.slane %v49, %v53
  %v56 = vmul.f32 %v30, %v54
  %v57 = vmul.f32 %v31, %v54
  %v58 = vmul.f32 %v32, %v54
  %v59 = vmul.f32 %v33, %v54
  %v60 = vmul.f32 %v34, %v54
  %v61 = vmul.f32 %v35, %v54
  %v62 = vmul.f32 %v36, %v54
  %v63 = vmul.f32 %v37, %v54
  %v64 = vmul.f32 %v38, %v54
  %v65 = vmul.f32 %v39, %v54
  %v66 = vmul.f32 %v40, %v54
  %v67 = vmul.f32 %v41, %v54
  %v68 = vmul.f32 %v42, %v54
  %v69 = vmul.f32 %v43, %v54
  %v70 = vmul.f32 %v44, %v54
  %v71 = vmul.f32 %v45, %v54
  %v72 = vmul.f32 %v46, %v54
  %v73 = vmul.f32 %v47, %v54
  %v74 = vmul.f32 %v48, %v54
  %v75 = vld [vmem:[%s3] sm:$0x1]
  %v77 = vlaneseq
  %v78 = vshrl.u32 %v77, 7
  %v79 = vsub.s32 0, %v78
  %v80 = vrot.slane %v75, %v79
  %v82 = vadd.f32 %v56, %v80
  %v83 = vadd.f32 %v57, %v80
  %v84 = vadd.f32 %v58, %v80
  %v85 = vadd.f32 %v59, %v80
  %v86 = vadd.f32 %v60, %v80
  %v87 = vadd.f32 %v61, %v80
  %v88 = vadd.f32 %v62, %v80
  %v89 = vadd.f32 %v63, %v80
  %v90 = vadd.f32 %v64, %v80
  %v91 = vadd.f32 %v65, %v80
  %v92 = vadd.f32 %v66, %v80
  %v93 = vadd.f32 %v67, %v80
  %v94 = vadd.f32 %v68, %v80
  %v95 = vadd.f32 %v69, %v80
  %v96 = vadd.f32 %v70, %v80
  %v97 = vadd.f32 %v71, %v80
  %v98 = vadd.f32 %v72, %v80
  %v99 = vadd.f32 %v73, %v80
  %v100 = vadd.f32 %v74, %v80
  %v101 = vmax.f32 %v82, 0.0
  %v102 = vmax.f32 %v83, 0.0
  %v103 = vmax.f32 %v84, 0.0
  %v104 = vmax.f32 %v85, 0.0
  %v105 = vmax.f32 %v86, 0.0
  %v106 = vmax.f32 %v87, 0.0
  %v107 = vmax.f32 %v88, 0.0
  %v108 = vmax.f32 %v89, 0.0
  %v109 = vmax.f32 %v90, 0.0
  %v110 = vmax.f32 %v91, 0.0
  %v111 = vmax.f32 %v92, 0.0
  %v112 = vmax.f32 %v93, 0.0
  %v113 = vmax.f32 %v94, 0.0
  %v114 = vmax.f32 %v95, 0.0
  %v115 = vmax.f32 %v96, 0.0
  %v116 = vmax.f32 %v97, 0.0
  %v117 = vmax.f32 %v98, 0.0
  %v118 = vmax.f32 %v99, 0.0
  %v119 = vmax.f32 %v100, 0.0
  %v120 = vpack.c.bf16 %v102, %v101
  %v121 = vpack.c.bf16 %v104, %v103
  %v122 = vpack.c.bf16 %v106, %v105
  %v123 = vpack.c.bf16 %v108, %v107
  %v124 = vpack.c.bf16 %v110, %v109
  %v125 = vpack.c.bf16 %v112, %v111
  %v126 = vpack.c.bf16 %v114, %v113
  %v127 = vpack.c.bf16 %v116, %v115
  %v128 = vpack.c.bf16 %v118, %v117
  %v129 = vpack.c.bf16 %v119, %v119
  %v130 = vld [vmem:[%s4] sm:$0xff]
  %v131 = vpack.c.bf16 %v130, %v130
  %vm132 = vcmask 64512
  %v134 = vsel %vm132, %v120, 0
  %v137 = vsel %vm132, %v121, 0
  %v140 = vsel %vm132, %v122, 0
  %v143 = vsel %vm132, %v123, 0
  %v146 = vsel %vm132, %v124, 0
  %v149 = vsel %vm132, %v125, 0
  %v152 = vsel %vm132, %v126, 0
  %v155 = vsel %vm132, %v127, 0
  %v158 = vsel %vm132, %v128, 0
  %v161 = vsel %vm132, %v129, 0
  %vm163 = vcmask 1043456
  %v165 = vsel %vm163, %v131, 0
  %167 = vmatprep.subr.bf16.mxu0 0
  %168 = vmatpush1.bf16.msra.mxu0 0
  %169 = vmatprep.subr.bf16.mxu0 0
  %170 = vmatpush1.bf16.msra.mxu0 0
  %171 = vmatprep.subr.bf16.mxu0 0
  %172 = vmatpush1.bf16.msra.mxu0 0
  %173 = vmatprep.subr.bf16.mxu0 0
  %174 = vmatpush1.bf16.msra.mxu0 0
  %175 = vmatprep.subr.bf16.mxu0 0
  %176 = vmatpush1.bf16.msra.mxu0 0
  %177 = vmatprep.subr.bf16.mxu0 0
  %178 = vmatpush1.bf16.msra.mxu0 0
  %179 = vmatprep.subr.bf16.mxu0 0
  %180 = vmatpush1.bf16.msra.mxu0 0
  %181 = vmatprep.subr.bf16.mxu0 0
  %182 = vmatpush1.bf16.msra.mxu0 %v165
  %183 = vmatprep.subr.bf16.mxu0 0
  %184 = vmatpush2.bf16.msra.mxu0 0
  %185 = vmatprep.subr.bf16.mxu0 0
  %186 = vmatpush2.bf16.msra.mxu0 0
  %187 = vmatprep.subr.bf16.mxu0 0
  %188 = vmatpush2.bf16.msra.mxu0 0
  %189 = vmatprep.subr.bf16.mxu0 0
  %190 = vmatpush2.bf16.msra.mxu0 0
  %191 = vmatprep.subr.bf16.mxu0 0
  %192 = vmatpush2.bf16.msra.mxu0 0
  %193 = vmatprep.subr.bf16.mxu0 0
  %194 = vmatpush2.bf16.msra.mxu0 0
  %195 = vmatprep.subr.bf16.mxu0 0
  %196 = vmatpush2.bf16.msra.mxu0 0
  %197 = vmatprep.subr.bf16.mxu0 0
  %198 = vmatpush2.bf16.msra.mxu0 0
  %199 = vmatprep.mubr.bf16.mxu0 0
  %200 = vmatmul.mubr.bf16.gmra.mxu0 %v134
  %v201 = vpop.f32.mrf.mxu0
  %v202 = vadd.f32 0.0, %v201
  %v203 = vpop.f32.mrf.mxu0
  %v204 = vpop.f32.mrf.mxu0
  %v205 = vadd.f32 0.0, %v204
  %v206 = vpop.f32.mrf.mxu0
  %207 = vmatprep.mubr.bf16.mxu0 0
  %208 = vmatmul.mubr.bf16.gmra.mxu0 %v137
  %v209 = vpop.f32.mrf.mxu0
  %v210 = vadd.f32 0.0, %v209
  %v211 = vpop.f32.mrf.mxu0
  %v212 = vpop.f32.mrf.mxu0
  %v213 = vadd.f32 0.0, %v212
  %v214 = vpop.f32.mrf.mxu0
  %215 = vmatprep.mubr.bf16.mxu0 0
  %216 = vmatmul.mubr.bf16.gmra.mxu0 %v140
  %v217 = vpop.f32.mrf.mxu0
  %v218 = vadd.f32 0.0, %v217
  %v219 = vpop.f32.mrf.mxu0
  %v220 = vpop.f32.mrf.mxu0
  %v221 = vadd.f32 0.0, %v220
  %v222 = vpop.f32.mrf.mxu0
  %223 = vmatprep.mubr.bf16.mxu0 0
  %224 = vmatmul.mubr.bf16.gmra.mxu0 %v143
  %v225 = vpop.f32.mrf.mxu0
  %v226 = vadd.f32 0.0, %v225
  %v227 = vpop.f32.mrf.mxu0
  %v228 = vpop.f32.mrf.mxu0
  %v229 = vadd.f32 0.0, %v228
  %v230 = vpop.f32.mrf.mxu0
  %231 = vmatprep.mubr.bf16.mxu0 0
  %232 = vmatmul.mubr.bf16.gmra.mxu0 %v146
  %v233 = vpop.f32.mrf.mxu0
  %v234 = vadd.f32 0.0, %v233
  %v235 = vpop.f32.mrf.mxu0
  %v236 = vpop.f32.mrf.mxu0
  %v237 = vadd.f32 0.0, %v236
  %v238 = vpop.f32.mrf.mxu0
  %239 = vmatprep.mubr.bf16.mxu0 0
  %240 = vmatmul.mubr.bf16.gmra.mxu0 %v149
  %v241 = vpop.f32.mrf.mxu0
  %v242 = vadd.f32 0.0, %v241
  %v243 = vpop.f32.mrf.mxu0
  %v244 = vpop.f32.mrf.mxu0
  %v245 = vadd.f32 0.0, %v244
  %v246 = vpop.f32.mrf.mxu0
  %247 = vmatprep.mubr.bf16.mxu0 0
  %248 = vmatmul.mubr.bf16.gmra.mxu0 %v152
  %v249 = vpop.f32.mrf.mxu0
  %v250 = vadd.f32 0.0, %v249
  %v251 = vpop.f32.mrf.mxu0
  %v252 = vpop.f32.mrf.mxu0
  %v253 = vadd.f32 0.0, %v252
  %v254 = vpop.f32.mrf.mxu0
  %255 = vmatprep.mubr.bf16.mxu0 0
  %256 = vmatmul.mubr.bf16.gmra.mxu0 %v155
  %v257 = vpop.f32.mrf.mxu0
  %v258 = vadd.f32 0.0, %v257
  %v259 = vpop.f32.mrf.mxu0
  %v260 = vpop.f32.mrf.mxu0
  %v261 = vadd.f32 0.0, %v260
  %v262 = vpop.f32.mrf.mxu0
  %263 = vmatprep.mubr.bf16.mxu0 0
  %264 = vmatmul.mubr.bf16.gmra.mxu0 %v158
  %v265 = vpop.f32.mrf.mxu0
  %v266 = vadd.f32 0.0, %v265
  %v267 = vpop.f32.mrf.mxu0
  %v268 = vpop.f32.mrf.mxu0
  %v269 = vadd.f32 0.0, %v268
  %v270 = vpop.f32.mrf.mxu0
  %271 = vmatprep.mubr.bf16.mxu0 0
  %272 = vmatmul.mubr.bf16.gmra.mxu0 %v161
  %v273 = vpop.f32.mrf.mxu0
  %v274 = vadd.f32 0.0, %v273
  %v275 = vpop.f32.mrf.mxu0
  %v276 = vpop.f32.mrf.mxu0
  %v277 = vpop.f32.mrf.mxu0
  %278 = vdwg.mxu0
  %v279 = vld [vmem:[%s5] sm:$0x1]
  %v281 = vlaneseq
  %v282 = vshrl.u32 %v281, 7
  %v283 = vsub.s32 0, %v282
  %v284 = vrot.slane %v279, %v283
  %v286 = vmul.f32 %v202, %v284
  %v287 = vmul.f32 %v205, %v284
  %v288 = vmul.f32 %v210, %v284
  %v289 = vmul.f32 %v213, %v284
  %v290 = vmul.f32 %v218, %v284
  %v291 = vmul.f32 %v221, %v284
  %v292 = vmul.f32 %v226, %v284
  %v293 = vmul.f32 %v229, %v284
  %v294 = vmul.f32 %v234, %v284
  %v295 = vmul.f32 %v237, %v284
  %v296 = vmul.f32 %v242, %v284
  %v297 = vmul.f32 %v245, %v284
  %v298 = vmul.f32 %v250, %v284
  %v299 = vmul.f32 %v253, %v284
  %v300 = vmul.f32 %v258, %v284
  %v301 = vmul.f32 %v261, %v284
  %v302 = vmul.f32 %v266, %v284
  %v303 = vmul.f32 %v269, %v284
  %v304 = vmul.f32 %v274, %v284
  %v305 = vld [vmem:[%s6] sm:$0x1]
  %v307 = vlaneseq
  %v308 = vshrl.u32 %v307, 7
  %v309 = vsub.s32 0, %v308
  %v310 = vrot.slane %v305, %v309
  %v312 = vadd.f32 %v286, %v310
  %v313 = vadd.f32 %v287, %v310
  %v314 = vadd.f32 %v288, %v310
  %v315 = vadd.f32 %v289, %v310
  %v316 = vadd.f32 %v290, %v310
  %v317 = vadd.f32 %v291, %v310
  %v318 = vadd.f32 %v292, %v310
  %v319 = vadd.f32 %v293, %v310
  %v320 = vadd.f32 %v294, %v310
  %v321 = vadd.f32 %v295, %v310
  %v322 = vadd.f32 %v296, %v310
  %v323 = vadd.f32 %v297, %v310
  %v324 = vadd.f32 %v298, %v310
  %v325 = vadd.f32 %v299, %v310
  %v326 = vadd.f32 %v300, %v310
  %v327 = vadd.f32 %v301, %v310
  %v328 = vadd.f32 %v302, %v310
  %v329 = vadd.f32 %v303, %v310
  %v330 = vadd.f32 %v304, %v310
  %v331 = vmax.f32 %v312, 0.0
  %v332 = vmax.f32 %v313, 0.0
  %v333 = vmax.f32 %v314, 0.0
  %v334 = vmax.f32 %v315, 0.0
  %v335 = vmax.f32 %v316, 0.0
  %v336 = vmax.f32 %v317, 0.0
  %v337 = vmax.f32 %v318, 0.0
  %v338 = vmax.f32 %v319, 0.0
  %v339 = vmax.f32 %v320, 0.0
  %v340 = vmax.f32 %v321, 0.0
  %v341 = vmax.f32 %v322, 0.0
  %v342 = vmax.f32 %v323, 0.0
  %v343 = vmax.f32 %v324, 0.0
  %v344 = vmax.f32 %v325, 0.0
  %v345 = vmax.f32 %v326, 0.0
  %v346 = vmax.f32 %v327, 0.0
  %v347 = vmax.f32 %v328, 0.0
  %v348 = vmax.f32 %v329, 0.0
  %v349 = vmax.f32 %v330, 0.0
  %v350 = vld [vmem:[%s1] sm:$0xff]
  %v351 = vld [vmem:[%s1 + $0x8] sm:$0xff]
  %v352 = vld [vmem:[%s1 + $0x10] sm:$0xff]
  %v353 = vld [vmem:[%s1 + $0x18] sm:$0xff]
  %v354 = vld [vmem:[%s1 + $0x20] sm:$0xff]
  %v355 = vld [vmem:[%s1 + $0x28] sm:$0xff]
  %v356 = vld [vmem:[%s1 + $0x30] sm:$0xff]
  %v357 = vld [vmem:[%s1 + $0x38] sm:$0xff]
  %v358 = vld [vmem:[%s1 + $0x40] sm:$0xff]
  %v359 = vld [vmem:[%s1 + $0x48] sm:$0xff]
  %v360 = vld [vmem:[%s1 + $0x50] sm:$0xff]
  %v361 = vld [vmem:[%s1 + $0x58] sm:$0xff]
  %v362 = vld [vmem:[%s1 + $0x60] sm:$0xff]
  %v363 = vld [vmem:[%s1 + $0x68] sm:$0xff]
  %v364 = vld [vmem:[%s1 + $0x70] sm:$0xff]
  %v365 = vld [vmem:[%s1 + $0x78] sm:$0xff]
  %v366 = vld [vmem:[%s1 + $0x80] sm:$0xff]
  %v367 = vld [vmem:[%s1 + $0x88] sm:$0xff]
  %v368 = vld [vmem:[%s1 + $0x90] sm:$0x3]
  %vm369 = vcmp.gt.f32.partialorder %v350, 0.0
  %vm370 = vcmp.gt.f32.partialorder %v351, 0.0
  %vm371 = vcmp.gt.f32.partialorder %v352, 0.0
  %vm372 = vcmp.gt.f32.partialorder %v353, 0.0
  %vm373 = vcmp.gt.f32.partialorder %v354, 0.0
  %vm374 = vcmp.gt.f32.partialorder %v355, 0.0
  %vm375 = vcmp.gt.f32.partialorder %v356, 0.0
  %vm376 = vcmp.gt.f32.partialorder %v357, 0.0
  %vm377 = vcmp.gt.f32.partialorder %v358, 0.0
  %vm378 = vcmp.gt.f32.partialorder %v359, 0.0
  %vm379 = vcmp.gt.f32.partialorder %v360, 0.0
  %vm380 = vcmp.gt.f32.partialorder %v361, 0.0
  %vm381 = vcmp.gt.f32.partialorder %v362, 0.0
  %vm382 = vcmp.gt.f32.partialorder %v363, 0.0
  %vm383 = vcmp.gt.f32.partialorder %v364, 0.0
  %vm384 = vcmp.gt.f32.partialorder %v365, 0.0
  %vm385 = vcmp.gt.f32.partialorder %v366, 0.0
  %vm386 = vcmp.gt.f32.partialorder %v367, 0.0
  %vm387 = vcmp.gt.f32.partialorder %v368, 0.0
  %v388 = vsel %vm369, 1, 0
  %v389 = vsel %vm370, 1, 0
  %v390 = vsel %vm371, 1, 0
  %v391 = vsel %vm372, 1, 0
  %v392 = vsel %vm373, 1, 0
  %v393 = vsel %vm374, 1, 0
  %v394 = vsel %vm375, 1, 0
  %v395 = vsel %vm376, 1, 0
  %v396 = vsel %vm377, 1, 0
  %v397 = vsel %vm378, 1, 0
  %v398 = vsel %vm379, 1, 0
  %v399 = vsel %vm380, 1, 0
  %v400 = vsel %vm381, 1, 0
  %v401 = vsel %vm382, 1, 0
  %v402 = vsel %vm383, 1, 0
  %v403 = vsel %vm384, 1, 0
  %v404 = vsel %vm385, 1, 0
  %v405 = vsel %vm386, 1, 0
  %v406 = vsel %vm387, 1, 0
  %407 = vset.pattern.permute.xlu0 0
  %408 = vperm.xlu0 %407, %v388
  %v409 = vpop.permute.xlu0 %408
  %410 = vset.pattern.permute.xlu0 0
  %411 = vperm.xlu0 %410, %v389
  %v412 = vpop.permute.xlu0 %411
  %413 = vset.pattern.permute.xlu0 0
  %414 = vperm.xlu0 %413, %v390
  %v415 = vpop.permute.xlu0 %414
  %416 = vset.pattern.permute.xlu0 0
  %417 = vperm.xlu0 %416, %v391
  %v418 = vpop.permute.xlu0 %417
  %419 = vset.pattern.permute.xlu0 0
  %420 = vperm.xlu0 %419, %v392
  %v421 = vpop.permute.xlu0 %420
  %422 = vset.pattern.permute.xlu0 0
  %423 = vperm.xlu0 %422, %v393
  %v424 = vpop.permute.xlu0 %423
  %425 = vset.pattern.permute.xlu0 0
  %426 = vperm.xlu0 %425, %v394
  %v427 = vpop.permute.xlu0 %426
  %428 = vset.pattern.permute.xlu0 0
  %429 = vperm.xlu0 %428, %v395
  %v430 = vpop.permute.xlu0 %429
  %431 = vset.pattern.permute.xlu0 0
  %432 = vperm.xlu0 %431, %v396
  %v433 = vpop.permute.xlu0 %432
  %434 = vset.pattern.permute.xlu0 0
  %435 = vperm.xlu0 %434, %v397
  %v436 = vpop.permute.xlu0 %435
  %437 = vset.pattern.permute.xlu0 0
  %438 = vperm.xlu0 %437, %v398
  %v439 = vpop.permute.xlu0 %438
  %440 = vset.pattern.permute.xlu0 0
  %441 = vperm.xlu0 %440, %v399
  %v442 = vpop.permute.xlu0 %441
  %443 = vset.pattern.permute.xlu0 0
  %444 = vperm.xlu0 %443, %v400
  %v445 = vpop.permute.xlu0 %444
  %446 = vset.pattern.permute.xlu0 0
  %447 = vperm.xlu0 %446, %v401
  %v448 = vpop.permute.xlu0 %447
  %449 = vset.pattern.permute.xlu0 0
  %450 = vperm.xlu0 %449, %v402
  %v451 = vpop.permute.xlu0 %450
  %452 = vset.pattern.permute.xlu0 0
  %453 = vperm.xlu0 %452, %v403
  %v454 = vpop.permute.xlu0 %453
  %455 = vset.pattern.permute.xlu0 0
  %456 = vperm.xlu0 %455, %v404
  %v457 = vpop.permute.xlu0 %456
  %458 = vset.pattern.permute.xlu0 0
  %459 = vperm.xlu0 %458, %v405
  %v460 = vpop.permute.xlu0 %459
  %461 = vset.pattern.permute.xlu0 0
  %462 = vperm.xlu0 %461, %v406
  %v463 = vpop.permute.xlu0 %462
  %vm464 = vcmp.eq.s32.totalorder %v409, 1
  %vm465 = vcmp.eq.s32.totalorder %v412, 1
  %vm466 = vcmp.eq.s32.totalorder %v415, 1
  %vm467 = vcmp.eq.s32.totalorder %v418, 1
  %vm468 = vcmp.eq.s32.totalorder %v421, 1
  %vm469 = vcmp.eq.s32.totalorder %v424, 1
  %vm470 = vcmp.eq.s32.totalorder %v427, 1
  %vm471 = vcmp.eq.s32.totalorder %v430, 1
  %vm472 = vcmp.eq.s32.totalorder %v433, 1
  %vm473 = vcmp.eq.s32.totalorder %v436, 1
  %vm474 = vcmp.eq.s32.totalorder %v439, 1
  %vm475 = vcmp.eq.s32.totalorder %v442, 1
  %vm476 = vcmp.eq.s32.totalorder %v445, 1
  %vm477 = vcmp.eq.s32.totalorder %v448, 1
  %vm478 = vcmp.eq.s32.totalorder %v451, 1
  %vm479 = vcmp.eq.s32.totalorder %v454, 1
  %vm480 = vcmp.eq.s32.totalorder %v457, 1
  %vm481 = vcmp.eq.s32.totalorder %v460, 1
  %vm482 = vcmp.eq.s32.totalorder %v463, 1
  %v483 = vsel %vm464, %v331, 0.0
  %v484 = vsel %vm465, %v332, 0.0
  %v485 = vsel %vm466, %v333, 0.0
  %v486 = vsel %vm467, %v334, 0.0
  %v487 = vsel %vm468, %v335, 0.0
  %v488 = vsel %vm469, %v336, 0.0
  %v489 = vsel %vm470, %v337, 0.0
  %v490 = vsel %vm471, %v338, 0.0
  %v491 = vsel %vm472, %v339, 0.0
  %v492 = vsel %vm473, %v340, 0.0
  %v493 = vsel %vm474, %v341, 0.0
  %v494 = vsel %vm475, %v342, 0.0
  %v495 = vsel %vm476, %v343, 0.0
  %v496 = vsel %vm477, %v344, 0.0
  %v497 = vsel %vm478, %v345, 0.0
  %v498 = vsel %vm479, %v346, 0.0
  %v499 = vsel %vm480, %v347, 0.0
  %v500 = vsel %vm481, %v348, 0.0
  %v501 = vsel %vm482, %v349, 0.0
  %v502 = vpack.c.bf16 %v484, %v483
  %v503 = vpack.c.bf16 %v486, %v485
  %v504 = vpack.c.bf16 %v488, %v487
  %v505 = vpack.c.bf16 %v490, %v489
  %v506 = vpack.c.bf16 %v492, %v491
  %v507 = vpack.c.bf16 %v494, %v493
  %v508 = vpack.c.bf16 %v496, %v495
  %v509 = vpack.c.bf16 %v498, %v497
  %v510 = vld [vmem:[%s7] sm:$0xff]
  %v511 = vld [vmem:[%s7 + $0x8] sm:$0xff]
  %v512 = vpack.c.bf16 %v511, %v510
  %v513 = vpack.c.bf16 %v499, %v499
  %s514 = scalar_lea.vmem %s7, 16
  %v515 = vld [vmem:[%s514] sm:$0xff]
  %v516 = vld [vmem:[%s514 + $0x8] sm:$0xff]
  %v517 = vpack.c.bf16 %v516, %v515
  %vm518 = vsmask.f32 7424
  %v520 = vshrl.u32 %v502, 16
  %v522 = vshll.u32 %v502, 16
  %v524 = vrot.slane %v522, 1
  %v525 = vor.u32 %v520, %v524
  %v527 = vshll.u32 %v503, 16
  %v529 = vrot.slane %v527, 1
  %v530 = vsel %vm518, %v525, %v529
  %v531 = vshrl.u32 %v503, 16
  %v533 = vor.u32 %v531, %v529
  %v535 = vshll.u32 %v504, 16
  %v537 = vrot.slane %v535, 1
  %v538 = vsel %vm518, %v533, %v537
  %v539 = vshrl.u32 %v504, 16
  %v541 = vor.u32 %v539, %v537
  %v543 = vshll.u32 %v505, 16
  %v545 = vrot.slane %v543, 1
  %v546 = vsel %vm518, %v541, %v545
  %v547 = vshrl.u32 %v505, 16
  %v549 = vor.u32 %v547, %v545
  %v551 = vshll.u32 %v506, 16
  %v553 = vrot.slane %v551, 1
  %v554 = vsel %vm518, %v549, %v553
  %v555 = vshrl.u32 %v506, 16
  %v557 = vor.u32 %v555, %v553
  %v559 = vshll.u32 %v507, 16
  %v561 = vrot.slane %v559, 1
  %v562 = vsel %vm518, %v557, %v561
  %v563 = vshrl.u32 %v507, 16
  %v565 = vor.u32 %v563, %v561
  %v567 = vshll.u32 %v508, 16
  %v569 = vrot.slane %v567, 1
  %v570 = vsel %vm518, %v565, %v569
  %v571 = vshrl.u32 %v508, 16
  %v573 = vor.u32 %v571, %v569
  %v575 = vshll.u32 %v509, 16
  %v577 = vrot.slane %v575, 1
  %v578 = vsel %vm518, %v573, %v577
  %v579 = vshrl.u32 %v509, 16
  %v581 = vor.u32 %v579, %v577
  %v583 = vshll.u32 %v513, 16
  %v585 = vrot.slane %v583, 1
  %v586 = vsel %vm518, %v581, %v585
  %vm587 = vcmask 130048
  %v589 = vsel %vm587, %v530, 0
  %v592 = vsel %vm587, %v538, 0
  %v595 = vsel %vm587, %v546, 0
  %v598 = vsel %vm587, %v554, 0
  %v601 = vsel %vm587, %v562, 0
  %v604 = vsel %vm587, %v570, 0
  %v607 = vsel %vm587, %v578, 0
  %v610 = vsel %vm587, %v586, 0
  %612 = vmatprep.subr.bf16.mxu0 0
  %613 = vmatpush1.bf16.msra.mxu0 0
  %614 = vmatprep.subr.bf16.mxu0 0
  %615 = vmatpush1.bf16.msra.mxu0 0
  %616 = vmatprep.subr.bf16.mxu0 0
  %617 = vmatpush1.bf16.msra.mxu0 0
  %618 = vmatprep.subr.bf16.mxu0 0
  %619 = vmatpush1.bf16.msra.mxu0 0
  %620 = vmatprep.subr.bf16.mxu0 0
  %621 = vmatpush1.bf16.msra.mxu0 0
  %622 = vmatprep.subr.bf16.mxu0 0
  %623 = vmatpush1.bf16.msra.mxu0 0
  %624 = vmatprep.subr.bf16.mxu0 0
  %625 = vmatpush1.bf16.msra.mxu0 0
  %626 = vmatprep.subr.bf16.mxu0 0
  %627 = vmatpush1.bf16.msra.mxu0 %v517
  %628 = vmatprep.subr.bf16.mxu0 0
  %629 = vmatpush2.bf16.msra.mxu0 0
  %630 = vmatprep.subr.bf16.mxu0 0
  %631 = vmatpush2.bf16.msra.mxu0 0
  %632 = vmatprep.subr.bf16.mxu0 0
  %633 = vmatpush2.bf16.msra.mxu0 0
  %634 = vmatprep.subr.bf16.mxu0 0
  %635 = vmatpush2.bf16.msra.mxu0 0
  %636 = vmatprep.subr.bf16.mxu0 0
  %637 = vmatpush2.bf16.msra.mxu0 0
  %638 = vmatprep.subr.bf16.mxu0 0
  %639 = vmatpush2.bf16.msra.mxu0 0
  %640 = vmatprep.subr.bf16.mxu0 0
  %641 = vmatpush2.bf16.msra.mxu0 0
  %642 = vmatprep.subr.bf16.mxu0 0
  %643 = vmatpush2.bf16.msra.mxu0 0
  %644 = vmatprep.mubr.bf16.mxu0 0
  %645 = vmatmul.mubr.bf16.gmra.mxu0 %v589
  %v646 = vpop.f32.mrf.mxu0
  %v647 = vadd.f32 0.0, %v646
  %v648 = vpop.f32.mrf.mxu0
  %v649 = vpop.f32.mrf.mxu0
  %v650 = vadd.f32 0.0, %v649
  %v651 = vpop.f32.mrf.mxu0
  %652 = vmatprep.mubr.bf16.mxu0 0
  %653 = vmatmul.mubr.bf16.gmra.mxu0 %v592
  %v654 = vpop.f32.mrf.mxu0
  %v655 = vadd.f32 0.0, %v654
  %v656 = vpop.f32.mrf.mxu0
  %v657 = vpop.f32.mrf.mxu0
  %v658 = vadd.f32 0.0, %v657
  %v659 = vpop.f32.mrf.mxu0
  %660 = vmatprep.mubr.bf16.mxu0 0
  %661 = vmatmul.mubr.bf16.gmra.mxu0 %v595
  %v662 = vpop.f32.mrf.mxu0
  %v663 = vadd.f32 0.0, %v662
  %v664 = vpop.f32.mrf.mxu0
  %v665 = vpop.f32.mrf.mxu0
  %v666 = vadd.f32 0.0, %v665
  %v667 = vpop.f32.mrf.mxu0
  %668 = vmatprep.mubr.bf16.mxu0 0
  %669 = vmatmul.mubr.bf16.gmra.mxu0 %v598
  %v670 = vpop.f32.mrf.mxu0
  %v671 = vadd.f32 0.0, %v670
  %v672 = vpop.f32.mrf.mxu0
  %v673 = vpop.f32.mrf.mxu0
  %v674 = vadd.f32 0.0, %v673
  %v675 = vpop.f32.mrf.mxu0
  %676 = vmatprep.mubr.bf16.mxu0 0
  %677 = vmatmul.mubr.bf16.gmra.mxu0 %v601
  %v678 = vpop.f32.mrf.mxu0
  %v679 = vadd.f32 0.0, %v678
  %v680 = vpop.f32.mrf.mxu0
  %v681 = vpop.f32.mrf.mxu0
  %v682 = vadd.f32 0.0, %v681
  %v683 = vpop.f32.mrf.mxu0
  %684 = vmatprep.mubr.bf16.mxu0 0
  %685 = vmatmul.mubr.bf16.gmra.mxu0 %v604
  %v686 = vpop.f32.mrf.mxu0
  %v687 = vadd.f32 0.0, %v686
  %v688 = vpop.f32.mrf.mxu0
  %v689 = vpop.f32.mrf.mxu0
  %v690 = vadd.f32 0.0, %v689
  %v691 = vpop.f32.mrf.mxu0
  %692 = vmatprep.mubr.bf16.mxu0 0
  %693 = vmatmul.mubr.bf16.gmra.mxu0 %v607
  %v694 = vpop.f32.mrf.mxu0
  %v695 = vadd.f32 0.0, %v694
  %v696 = vpop.f32.mrf.mxu0
  %v697 = vpop.f32.mrf.mxu0
  %v698 = vadd.f32 0.0, %v697
  %v699 = vpop.f32.mrf.mxu0
  %700 = vmatprep.mubr.bf16.mxu0 0
  %701 = vmatmul.mubr.bf16.gmra.mxu0 %v610
  %v702 = vpop.f32.mrf.mxu0
  %v703 = vadd.f32 0.0, %v702
  %v704 = vpop.f32.mrf.mxu0
  %v705 = vpop.f32.mrf.mxu0
  %v706 = vadd.f32 0.0, %v705
  %v707 = vpop.f32.mrf.mxu0
  %708 = vdwg.mxu0
  %v709 = vsel %vm587, %v502, 0
  %v711 = vsel %vm587, %v503, 0
  %v713 = vsel %vm587, %v504, 0
  %v715 = vsel %vm587, %v505, 0
  %v717 = vsel %vm587, %v506, 0
  %v719 = vsel %vm587, %v507, 0
  %v721 = vsel %vm587, %v508, 0
  %v723 = vsel %vm587, %v509, 0
  %725 = vmatprep.subr.bf16.mxu0 0
  %726 = vmatpush1.bf16.msra.mxu0 0
  %727 = vmatprep.subr.bf16.mxu0 0
  %728 = vmatpush1.bf16.msra.mxu0 0
  %729 = vmatprep.subr.bf16.mxu0 0
  %730 = vmatpush1.bf16.msra.mxu0 0
  %731 = vmatprep.subr.bf16.mxu0 0
  %732 = vmatpush1.bf16.msra.mxu0 0
  %733 = vmatprep.subr.bf16.mxu0 0
  %734 = vmatpush1.bf16.msra.mxu0 0
  %735 = vmatprep.subr.bf16.mxu0 0
  %736 = vmatpush1.bf16.msra.mxu0 0
  %737 = vmatprep.subr.bf16.mxu0 0
  %738 = vmatpush1.bf16.msra.mxu0 0
  %739 = vmatprep.subr.bf16.mxu0 0
  %740 = vmatpush1.bf16.msra.mxu0 %v512
  %741 = vmatprep.subr.bf16.mxu0 0
  %742 = vmatpush2.bf16.msra.mxu0 0
  %743 = vmatprep.subr.bf16.mxu0 0
  %744 = vmatpush2.bf16.msra.mxu0 0
  %745 = vmatprep.subr.bf16.mxu0 0
  %746 = vmatpush2.bf16.msra.mxu0 0
  %747 = vmatprep.subr.bf16.mxu0 0
  %748 = vmatpush2.bf16.msra.mxu0 0
  %749 = vmatprep.subr.bf16.mxu0 0
  %750 = vmatpush2.bf16.msra.mxu0 0
  %751 = vmatprep.subr.bf16.mxu0 0
  %752 = vmatpush2.bf16.msra.mxu0 0
  %753 = vmatprep.subr.bf16.mxu0 0
  %754 = vmatpush2.bf16.msra.mxu0 0
  %755 = vmatprep.subr.bf16.mxu0 0
  %756 = vmatpush2.bf16.msra.mxu0 0
  %757 = vmatprep.mubr.bf16.mxu0 0
  %758 = vmatmul.mubr.bf16.gmra.mxu0 %v709
  %v759 = vpop.f32.mrf.mxu0
  %v760 = vadd.f32 %v647, %v759
  %v761 = vpop.f32.mrf.mxu0
  %v762 = vpop.f32.mrf.mxu0
  %v763 = vadd.f32 %v650, %v762
  %v764 = vpop.f32.mrf.mxu0
  %765 = vmatprep.mubr.bf16.mxu0 0
  %766 = vmatmul.mubr.bf16.gmra.mxu0 %v711
  %v767 = vpop.f32.mrf.mxu0
  %v768 = vadd.f32 %v655, %v767
  %v769 = vpop.f32.mrf.mxu0
  %v770 = vpop.f32.mrf.mxu0
  %v771 = vadd.f32 %v658, %v770
  %v772 = vpop.f32.mrf.mxu0
  %773 = vmatprep.mubr.bf16.mxu0 0
  %774 = vmatmul.mubr.bf16.gmra.mxu0 %v713
  %v775 = vpop.f32.mrf.mxu0
  %v776 = vadd.f32 %v663, %v775
  %v777 = vpop.f32.mrf.mxu0
  %v778 = vpop.f32.mrf.mxu0
  %v779 = vadd.f32 %v666, %v778
  %v780 = vpop.f32.mrf.mxu0
  %781 = vmatprep.mubr.bf16.mxu0 0
  %782 = vmatmul.mubr.bf16.gmra.mxu0 %v715
  %v783 = vpop.f32.mrf.mxu0
  %v784 = vadd.f32 %v671, %v783
  %v785 = vpop.f32.mrf.mxu0
  %v786 = vpop.f32.mrf.mxu0
  %v787 = vadd.f32 %v674, %v786
  %v788 = vpop.f32.mrf.mxu0
  %789 = vmatprep.mubr.bf16.mxu0 0
  %790 = vmatmul.mubr.bf16.gmra.mxu0 %v717
  %v791 = vpop.f32.mrf.mxu0
  %v792 = vadd.f32 %v679, %v791
  %v793 = vpop.f32.mrf.mxu0
  %v794 = vpop.f32.mrf.mxu0
  %v795 = vadd.f32 %v682, %v794
  %v796 = vpop.f32.mrf.mxu0
  %797 = vmatprep.mubr.bf16.mxu0 0
  %798 = vmatmul.mubr.bf16.gmra.mxu0 %v719
  %v799 = vpop.f32.mrf.mxu0
  %v800 = vadd.f32 %v687, %v799
  %v801 = vpop.f32.mrf.mxu0
  %v802 = vpop.f32.mrf.mxu0
  %v803 = vadd.f32 %v690, %v802
  %v804 = vpop.f32.mrf.mxu0
  %805 = vmatprep.mubr.bf16.mxu0 0
  %806 = vmatmul.mubr.bf16.gmra.mxu0 %v721
  %v807 = vpop.f32.mrf.mxu0
  %v808 = vadd.f32 %v695, %v807
  %v809 = vpop.f32.mrf.mxu0
  %v810 = vpop.f32.mrf.mxu0
  %v811 = vadd.f32 %v698, %v810
  %v812 = vpop.f32.mrf.mxu0
  %813 = vmatprep.mubr.bf16.mxu0 0
  %814 = vmatmul.mubr.bf16.gmra.mxu0 %v723
  %v815 = vpop.f32.mrf.mxu0
  %v816 = vadd.f32 %v703, %v815
  %v817 = vpop.f32.mrf.mxu0
  %v818 = vpop.f32.mrf.mxu0
  %v819 = vadd.f32 %v706, %v818
  %v820 = vpop.f32.mrf.mxu0
  %821 = vdwg.mxu0
  %s822 = scalar_lea.vmem %s7, 32
  %v823 = vld [vmem:[%s822] sm:$0xff]
  %v824 = vld [vmem:[%s822 + $0x8] sm:$0xff]
  %v825 = vpack.c.bf16 %v824, %v823
  %vm835 = vcmask 1046528
  %v836 = vrot.slane %v502, 1
  %v837 = vrot.slane %v503, 1
  %v838 = vsel %vm835, %v836, %v837
  %v839 = vrot.slane %v504, 1
  %v840 = vsel %vm835, %v837, %v839
  %v841 = vrot.slane %v505, 1
  %v842 = vsel %vm835, %v839, %v841
  %v843 = vrot.slane %v506, 1
  %v844 = vsel %vm835, %v841, %v843
  %v845 = vrot.slane %v507, 1
  %v846 = vsel %vm835, %v843, %v845
  %v847 = vrot.slane %v508, 1
  %v848 = vsel %vm835, %v845, %v847
  %v849 = vrot.slane %v509, 1
  %v850 = vsel %vm835, %v847, %v849
  %v851 = vrot.slane %v513, 1
  %v852 = vsel %vm835, %v849, %v851
  %v854 = vsel %vm587, %v838, 0
  %v857 = vsel %vm587, %v840, 0
  %v860 = vsel %vm587, %v842, 0
  %v863 = vsel %vm587, %v844, 0
  %v866 = vsel %vm587, %v846, 0
  %v869 = vsel %vm587, %v848, 0
  %v872 = vsel %vm587, %v850, 0
  %v875 = vsel %vm587, %v852, 0
  %877 = vmatprep.subr.bf16.mxu0 0
  %878 = vmatpush1.bf16.msra.mxu0 0
  %879 = vmatprep.subr.bf16.mxu0 0
  %880 = vmatpush1.bf16.msra.mxu0 0
  %881 = vmatprep.subr.bf16.mxu0 0
  %882 = vmatpush1.bf16.msra.mxu0 0
  %883 = vmatprep.subr.bf16.mxu0 0
  %884 = vmatpush1.bf16.msra.mxu0 0
  %885 = vmatprep.subr.bf16.mxu0 0
  %886 = vmatpush1.bf16.msra.mxu0 0
  %887 = vmatprep.subr.bf16.mxu0 0
  %888 = vmatpush1.bf16.msra.mxu0 0
  %889 = vmatprep.subr.bf16.mxu0 0
  %890 = vmatpush1.bf16.msra.mxu0 0
  %891 = vmatprep.subr.bf16.mxu0 0
  %892 = vmatpush1.bf16.msra.mxu0 %v825
  %893 = vmatprep.subr.bf16.mxu0 0
  %894 = vmatpush2.bf16.msra.mxu0 0
  %895 = vmatprep.subr.bf16.mxu0 0
  %896 = vmatpush2.bf16.msra.mxu0 0
  %897 = vmatprep.subr.bf16.mxu0 0
  %898 = vmatpush2.bf16.msra.mxu0 0
  %899 = vmatprep.subr.bf16.mxu0 0
  %900 = vmatpush2.bf16.msra.mxu0 0
  %901 = vmatprep.subr.bf16.mxu0 0
  %902 = vmatpush2.bf16.msra.mxu0 0
  %903 = vmatprep.subr.bf16.mxu0 0
  %904 = vmatpush2.bf16.msra.mxu0 0
  %905 = vmatprep.subr.bf16.mxu0 0
  %906 = vmatpush2.bf16.msra.mxu0 0
  %907 = vmatprep.subr.bf16.mxu0 0
  %908 = vmatpush2.bf16.msra.mxu0 0
  %909 = vmatprep.mubr.bf16.mxu0 0
  %910 = vmatmul.mubr.bf16.gmra.mxu0 %v854
  %v911 = vpop.f32.mrf.mxu0
  %v912 = vadd.f32 0.0, %v911
  %v913 = vpop.f32.mrf.mxu0
  %v914 = vpop.f32.mrf.mxu0
  %v915 = vadd.f32 0.0, %v914
  %v916 = vpop.f32.mrf.mxu0
  %917 = vmatprep.mubr.bf16.mxu0 0
  %918 = vmatmul.mubr.bf16.gmra.mxu0 %v857
  %v919 = vpop.f32.mrf.mxu0
  %v920 = vadd.f32 0.0, %v919
  %v921 = vpop.f32.mrf.mxu0
  %v922 = vpop.f32.mrf.mxu0
  %v923 = vadd.f32 0.0, %v922
  %v924 = vpop.f32.mrf.mxu0
  %925 = vmatprep.mubr.bf16.mxu0 0
  %926 = vmatmul.mubr.bf16.gmra.mxu0 %v860
  %v927 = vpop.f32.mrf.mxu0
  %v928 = vadd.f32 0.0, %v927
  %v929 = vpop.f32.mrf.mxu0
  %v930 = vpop.f32.mrf.mxu0
  %v931 = vadd.f32 0.0, %v930
  %v932 = vpop.f32.mrf.mxu0
  %933 = vmatprep.mubr.bf16.mxu0 0
  %934 = vmatmul.mubr.bf16.gmra.mxu0 %v863
  %v935 = vpop.f32.mrf.mxu0
  %v936 = vadd.f32 0.0, %v935
  %v937 = vpop.f32.mrf.mxu0
  %v938 = vpop.f32.mrf.mxu0
  %v939 = vadd.f32 0.0, %v938
  %v940 = vpop.f32.mrf.mxu0
  %941 = vmatprep.mubr.bf16.mxu0 0
  %942 = vmatmul.mubr.bf16.gmra.mxu0 %v866
  %v943 = vpop.f32.mrf.mxu0
  %v944 = vadd.f32 0.0, %v943
  %v945 = vpop.f32.mrf.mxu0
  %v946 = vpop.f32.mrf.mxu0
  %v947 = vadd.f32 0.0, %v946
  %v948 = vpop.f32.mrf.mxu0
  %949 = vmatprep.mubr.bf16.mxu0 0
  %950 = vmatmul.mubr.bf16.gmra.mxu0 %v869
  %v951 = vpop.f32.mrf.mxu0
  %v952 = vadd.f32 0.0, %v951
  %v953 = vpop.f32.mrf.mxu0
  %v954 = vpop.f32.mrf.mxu0
  %v955 = vadd.f32 0.0, %v954
  %v956 = vpop.f32.mrf.mxu0
  %957 = vmatprep.mubr.bf16.mxu0 0
  %958 = vmatmul.mubr.bf16.gmra.mxu0 %v872
  %v959 = vpop.f32.mrf.mxu0
  %v960 = vadd.f32 0.0, %v959
  %v961 = vpop.f32.mrf.mxu0
  %v962 = vpop.f32.mrf.mxu0
  %v963 = vadd.f32 0.0, %v962
  %v964 = vpop.f32.mrf.mxu0
  %965 = vmatprep.mubr.bf16.mxu0 0
  %966 = vmatmul.mubr.bf16.gmra.mxu0 %v875
  %v967 = vpop.f32.mrf.mxu0
  %v968 = vadd.f32 0.0, %v967
  %v969 = vpop.f32.mrf.mxu0
  %v970 = vpop.f32.mrf.mxu0
  %v971 = vadd.f32 0.0, %v970
  %v972 = vpop.f32.mrf.mxu0
  %973 = vdwg.mxu0
  %v974 = vadd.f32 %v760, %v912
  %v975 = vadd.f32 %v763, %v915
  %v976 = vadd.f32 %v768, %v920
  %v977 = vadd.f32 %v771, %v923
  %v978 = vadd.f32 %v776, %v928
  %v979 = vadd.f32 %v779, %v931
  %v980 = vadd.f32 %v784, %v936
  %v981 = vadd.f32 %v787, %v939
  %v982 = vadd.f32 %v792, %v944
  %v983 = vadd.f32 %v795, %v947
  %v984 = vadd.f32 %v800, %v952
  %v985 = vadd.f32 %v803, %v955
  %v986 = vadd.f32 %v808, %v960
  %v987 = vadd.f32 %v811, %v963
  %v988 = vadd.f32 %v816, %v968
  %v989 = vadd.f32 %v819, %v971
  %v990 = vpack.c.bf16 %v485, %v484
  %v991 = vpack.c.bf16 %v487, %v486
  %v992 = vpack.c.bf16 %v489, %v488
  %v993 = vpack.c.bf16 %v491, %v490
  %v994 = vpack.c.bf16 %v493, %v492
  %v995 = vpack.c.bf16 %v495, %v494
  %v996 = vpack.c.bf16 %v497, %v496
  %v997 = vpack.c.bf16 %v499, %v498
  %s998 = scalar_lea.vmem %s7, 48
  %v999 = vld [vmem:[%s998] sm:$0xff]
  %v1000 = vld [vmem:[%s998 + $0x8] sm:$0xff]
  %v1001 = vpack.c.bf16 %v1000, %v999
  %v1003 = vsel %vm587, %v990, 0
  %v1006 = vsel %vm587, %v991, 0
  %v1009 = vsel %vm587, %v992, 0
  %v1012 = vsel %vm587, %v993, 0
  %v1015 = vsel %vm587, %v994, 0
  %v1018 = vsel %vm587, %v995, 0
  %v1021 = vsel %vm587, %v996, 0
  %v1024 = vsel %vm587, %v997, 0
  %1026 = vmatprep.subr.bf16.mxu0 0
  %1027 = vmatpush1.bf16.msra.mxu0 0
  %1028 = vmatprep.subr.bf16.mxu0 0
  %1029 = vmatpush1.bf16.msra.mxu0 0
  %1030 = vmatprep.subr.bf16.mxu0 0
  %1031 = vmatpush1.bf16.msra.mxu0 0
  %1032 = vmatprep.subr.bf16.mxu0 0
  %1033 = vmatpush1.bf16.msra.mxu0 0
  %1034 = vmatprep.subr.bf16.mxu0 0
  %1035 = vmatpush1.bf16.msra.mxu0 0
  %1036 = vmatprep.subr.bf16.mxu0 0
  %1037 = vmatpush1.bf16.msra.mxu0 0
  %1038 = vmatprep.subr.bf16.mxu0 0
  %1039 = vmatpush1.bf16.msra.mxu0 0
  %1040 = vmatprep.subr.bf16.mxu0 0
  %1041 = vmatpush1.bf16.msra.mxu0 %v1001
  %1042 = vmatprep.subr.bf16.mxu0 0
  %1043 = vmatpush2.bf16.msra.mxu0 0
  %1044 = vmatprep.subr.bf16.mxu0 0
  %1045 = vmatpush2.bf16.msra.mxu0 0
  %1046 = vmatprep.subr.bf16.mxu0 0
  %1047 = vmatpush2.bf16.msra.mxu0 0
  %1048 = vmatprep.subr.bf16.mxu0 0
  %1049 = vmatpush2.bf16.msra.mxu0 0
  %1050 = vmatprep.subr.bf16.mxu0 0
  %1051 = vmatpush2.bf16.msra.mxu0 0
  %1052 = vmatprep.subr.bf16.mxu0 0
  %1053 = vmatpush2.bf16.msra.mxu0 0
  %1054 = vmatprep.subr.bf16.mxu0 0
  %1055 = vmatpush2.bf16.msra.mxu0 0
  %1056 = vmatprep.subr.bf16.mxu0 0
  %1057 = vmatpush2.bf16.msra.mxu0 0
  %1058 = vmatprep.mubr.bf16.mxu0 0
  %1059 = vmatmul.mubr.bf16.gmra.mxu0 %v1003
  %v1060 = vpop.f32.mrf.mxu0
  %v1061 = vadd.f32 0.0, %v1060
  %v1062 = vpop.f32.mrf.mxu0
  %v1063 = vpop.f32.mrf.mxu0
  %v1064 = vadd.f32 0.0, %v1063
  %v1065 = vpop.f32.mrf.mxu0
  %1066 = vmatprep.mubr.bf16.mxu0 0
  %1067 = vmatmul.mubr.bf16.gmra.mxu0 %v1006
  %v1068 = vpop.f32.mrf.mxu0
  %v1069 = vadd.f32 0.0, %v1068
  %v1070 = vpop.f32.mrf.mxu0
  %v1071 = vpop.f32.mrf.mxu0
  %v1072 = vadd.f32 0.0, %v1071
  %v1073 = vpop.f32.mrf.mxu0
  %1074 = vmatprep.mubr.bf16.mxu0 0
  %1075 = vmatmul.mubr.bf16.gmra.mxu0 %v1009
  %v1076 = vpop.f32.mrf.mxu0
  %v1077 = vadd.f32 0.0, %v1076
  %v1078 = vpop.f32.mrf.mxu0
  %v1079 = vpop.f32.mrf.mxu0
  %v1080 = vadd.f32 0.0, %v1079
  %v1081 = vpop.f32.mrf.mxu0
  %1082 = vmatprep.mubr.bf16.mxu0 0
  %1083 = vmatmul.mubr.bf16.gmra.mxu0 %v1012
  %v1084 = vpop.f32.mrf.mxu0
  %v1085 = vadd.f32 0.0, %v1084
  %v1086 = vpop.f32.mrf.mxu0
  %v1087 = vpop.f32.mrf.mxu0
  %v1088 = vadd.f32 0.0, %v1087
  %v1089 = vpop.f32.mrf.mxu0
  %1090 = vmatprep.mubr.bf16.mxu0 0
  %1091 = vmatmul.mubr.bf16.gmra.mxu0 %v1015
  %v1092 = vpop.f32.mrf.mxu0
  %v1093 = vadd.f32 0.0, %v1092
  %v1094 = vpop.f32.mrf.mxu0
  %v1095 = vpop.f32.mrf.mxu0
  %v1096 = vadd.f32 0.0, %v1095
  %v1097 = vpop.f32.mrf.mxu0
  %1098 = vmatprep.mubr.bf16.mxu0 0
  %1099 = vmatmul.mubr.bf16.gmra.mxu0 %v1018
  %v1100 = vpop.f32.mrf.mxu0
  %v1101 = vadd.f32 0.0, %v1100
  %v1102 = vpop.f32.mrf.mxu0
  %v1103 = vpop.f32.mrf.mxu0
  %v1104 = vadd.f32 0.0, %v1103
  %v1105 = vpop.f32.mrf.mxu0
  %1106 = vmatprep.mubr.bf16.mxu0 0
  %1107 = vmatmul.mubr.bf16.gmra.mxu0 %v1021
  %v1108 = vpop.f32.mrf.mxu0
  %v1109 = vadd.f32 0.0, %v1108
  %v1110 = vpop.f32.mrf.mxu0
  %v1111 = vpop.f32.mrf.mxu0
  %v1112 = vadd.f32 0.0, %v1111
  %v1113 = vpop.f32.mrf.mxu0
  %1114 = vmatprep.mubr.bf16.mxu0 0
  %1115 = vmatmul.mubr.bf16.gmra.mxu0 %v1024
  %v1116 = vpop.f32.mrf.mxu0
  %v1117 = vadd.f32 0.0, %v1116
  %v1118 = vpop.f32.mrf.mxu0
  %v1119 = vpop.f32.mrf.mxu0
  %v1120 = vadd.f32 0.0, %v1119
  %v1121 = vpop.f32.mrf.mxu0
  %1122 = vdwg.mxu0
  %v1123 = vadd.f32 %v974, %v1061
  %v1124 = vadd.f32 %v975, %v1064
  %v1125 = vadd.f32 %v976, %v1069
  %v1126 = vadd.f32 %v977, %v1072
  %v1127 = vadd.f32 %v978, %v1077
  %v1128 = vadd.f32 %v979, %v1080
  %v1129 = vadd.f32 %v980, %v1085
  %v1130 = vadd.f32 %v981, %v1088
  %v1131 = vadd.f32 %v982, %v1093
  %v1132 = vadd.f32 %v983, %v1096
  %v1133 = vadd.f32 %v984, %v1101
  %v1134 = vadd.f32 %v985, %v1104
  %v1135 = vadd.f32 %v986, %v1109
  %v1136 = vadd.f32 %v987, %v1112
  %v1137 = vadd.f32 %v988, %v1117
  %v1138 = vadd.f32 %v989, %v1120
  %v1139 = vpack.c.bf16 %v500, %v500
  %s1140 = scalar_lea.vmem %s7, 64
  %v1141 = vld [vmem:[%s1140] sm:$0xff]
  %v1142 = vld [vmem:[%s1140 + $0x8] sm:$0xff]
  %v1143 = vpack.c.bf16 %v1142, %v1141
  %v1144 = vshrl.u32 %v990, 16
  %v1146 = vshll.u32 %v990, 16
  %v1148 = vrot.slane %v1146, 1
  %v1149 = vor.u32 %v1144, %v1148
  %v1150 = vshll.u32 %v991, 16
  %v1152 = vrot.slane %v1150, 1
  %v1153 = vsel %vm518, %v1149, %v1152
  %v1154 = vshrl.u32 %v991, 16
  %v1156 = vor.u32 %v1154, %v1152
  %v1157 = vshll.u32 %v992, 16
  %v1159 = vrot.slane %v1157, 1
  %v1160 = vsel %vm518, %v1156, %v1159
  %v1161 = vshrl.u32 %v992, 16
  %v1163 = vor.u32 %v1161, %v1159
  %v1164 = vshll.u32 %v993, 16
  %v1166 = vrot.slane %v1164, 1
  %v1167 = vsel %vm518, %v1163, %v1166
  %v1168 = vshrl.u32 %v993, 16
  %v1170 = vor.u32 %v1168, %v1166
  %v1171 = vshll.u32 %v994, 16
  %v1173 = vrot.slane %v1171, 1
  %v1174 = vsel %vm518, %v1170, %v1173
  %v1175 = vshrl.u32 %v994, 16
  %v1177 = vor.u32 %v1175, %v1173
  %v1178 = vshll.u32 %v995, 16
  %v1180 = vrot.slane %v1178, 1
  %v1181 = vsel %vm518, %v1177, %v1180
  %v1182 = vshrl.u32 %v995, 16
  %v1184 = vor.u32 %v1182, %v1180
  %v1185 = vshll.u32 %v996, 16
  %v1187 = vrot.slane %v1185, 1
  %v1188 = vsel %vm518, %v1184, %v1187
  %v1189 = vshrl.u32 %v996, 16
  %v1191 = vor.u32 %v1189, %v1187
  %v1192 = vshll.u32 %v997, 16
  %v1194 = vrot.slane %v1192, 1
  %v1195 = vsel %vm518, %v1191, %v1194
  %v1196 = vshrl.u32 %v997, 16
  %v1198 = vor.u32 %v1196, %v1194
  %v1200 = vshll.u32 %v1139, 16
  %v1202 = vrot.slane %v1200, 1
  %v1203 = vsel %vm518, %v1198, %v1202
  %v1205 = vsel %vm587, %v1153, 0
  %v1208 = vsel %vm587, %v1160, 0
  %v1211 = vsel %vm587, %v1167, 0
  %v1214 = vsel %vm587, %v1174, 0
  %v1217 = vsel %vm587, %v1181, 0
  %v1220 = vsel %vm587, %v1188, 0
  %v1223 = vsel %vm587, %v1195, 0
  %v1226 = vsel %vm587, %v1203, 0
  %1228 = vmatprep.subr.bf16.mxu0 0
  %1229 = vmatpush1.bf16.msra.mxu0 0
  %1230 = vmatprep.subr.bf16.mxu0 0
  %1231 = vmatpush1.bf16.msra.mxu0 0
  %1232 = vmatprep.subr.bf16.mxu0 0
  %1233 = vmatpush1.bf16.msra.mxu0 0
  %1234 = vmatprep.subr.bf16.mxu0 0
  %1235 = vmatpush1.bf16.msra.mxu0 0
  %1236 = vmatprep.subr.bf16.mxu0 0
  %1237 = vmatpush1.bf16.msra.mxu0 0
  %1238 = vmatprep.subr.bf16.mxu0 0
  %1239 = vmatpush1.bf16.msra.mxu0 0
  %1240 = vmatprep.subr.bf16.mxu0 0
  %1241 = vmatpush1.bf16.msra.mxu0 0
  %1242 = vmatprep.subr.bf16.mxu0 0
  %1243 = vmatpush1.bf16.msra.mxu0 %v1143
  %1244 = vmatprep.subr.bf16.mxu0 0
  %1245 = vmatpush2.bf16.msra.mxu0 0
  %1246 = vmatprep.subr.bf16.mxu0 0
  %1247 = vmatpush2.bf16.msra.mxu0 0
  %1248 = vmatprep.subr.bf16.mxu0 0
  %1249 = vmatpush2.bf16.msra.mxu0 0
  %1250 = vmatprep.subr.bf16.mxu0 0
  %1251 = vmatpush2.bf16.msra.mxu0 0
  %1252 = vmatprep.subr.bf16.mxu0 0
  %1253 = vmatpush2.bf16.msra.mxu0 0
  %1254 = vmatprep.subr.bf16.mxu0 0
  %1255 = vmatpush2.bf16.msra.mxu0 0
  %1256 = vmatprep.subr.bf16.mxu0 0
  %1257 = vmatpush2.bf16.msra.mxu0 0
  %1258 = vmatprep.subr.bf16.mxu0 0
  %1259 = vmatpush2.bf16.msra.mxu0 0
  %1260 = vmatprep.mubr.bf16.mxu0 0
  %1261 = vmatmul.mubr.bf16.gmra.mxu0 %v1205
  %v1262 = vpop.f32.mrf.mxu0
  %v1263 = vadd.f32 0.0, %v1262
  %v1264 = vpop.f32.mrf.mxu0
  %v1265 = vpop.f32.mrf.mxu0
  %v1266 = vadd.f32 0.0, %v1265
  %v1267 = vpop.f32.mrf.mxu0
  %1268 = vmatprep.mubr.bf16.mxu0 0
  %1269 = vmatmul.mubr.bf16.gmra.mxu0 %v1208
  %v1270 = vpop.f32.mrf.mxu0
  %v1271 = vadd.f32 0.0, %v1270
  %v1272 = vpop.f32.mrf.mxu0
  %v1273 = vpop.f32.mrf.mxu0
  %v1274 = vadd.f32 0.0, %v1273
  %v1275 = vpop.f32.mrf.mxu0
  %1276 = vmatprep.mubr.bf16.mxu0 0
  %1277 = vmatmul.mubr.bf16.gmra.mxu0 %v1211
  %v1278 = vpop.f32.mrf.mxu0
  %v1279 = vadd.f32 0.0, %v1278
  %v1280 = vpop.f32.mrf.mxu0
  %v1281 = vpop.f32.mrf.mxu0
  %v1282 = vadd.f32 0.0, %v1281
  %v1283 = vpop.f32.mrf.mxu0
  %1284 = vmatprep.mubr.bf16.mxu0 0
  %1285 = vmatmul.mubr.bf16.gmra.mxu0 %v1214
  %v1286 = vpop.f32.mrf.mxu0
  %v1287 = vadd.f32 0.0, %v1286
  %v1288 = vpop.f32.mrf.mxu0
  %v1289 = vpop.f32.mrf.mxu0
  %v1290 = vadd.f32 0.0, %v1289
  %v1291 = vpop.f32.mrf.mxu0
  %1292 = vmatprep.mubr.bf16.mxu0 0
  %1293 = vmatmul.mubr.bf16.gmra.mxu0 %v1217
  %v1294 = vpop.f32.mrf.mxu0
  %v1295 = vadd.f32 0.0, %v1294
  %v1296 = vpop.f32.mrf.mxu0
  %v1297 = vpop.f32.mrf.mxu0
  %v1298 = vadd.f32 0.0, %v1297
  %v1299 = vpop.f32.mrf.mxu0
  %1300 = vmatprep.mubr.bf16.mxu0 0
  %1301 = vmatmul.mubr.bf16.gmra.mxu0 %v1220
  %v1302 = vpop.f32.mrf.mxu0
  %v1303 = vadd.f32 0.0, %v1302
  %v1304 = vpop.f32.mrf.mxu0
  %v1305 = vpop.f32.mrf.mxu0
  %v1306 = vadd.f32 0.0, %v1305
  %v1307 = vpop.f32.mrf.mxu0
  %1308 = vmatprep.mubr.bf16.mxu0 0
  %1309 = vmatmul.mubr.bf16.gmra.mxu0 %v1223
  %v1310 = vpop.f32.mrf.mxu0
  %v1311 = vadd.f32 0.0, %v1310
  %v1312 = vpop.f32.mrf.mxu0
  %v1313 = vpop.f32.mrf.mxu0
  %v1314 = vadd.f32 0.0, %v1313
  %v1315 = vpop.f32.mrf.mxu0
  %1316 = vmatprep.mubr.bf16.mxu0 0
  %1317 = vmatmul.mubr.bf16.gmra.mxu0 %v1226
  %v1318 = vpop.f32.mrf.mxu0
  %v1319 = vadd.f32 0.0, %v1318
  %v1320 = vpop.f32.mrf.mxu0
  %v1321 = vpop.f32.mrf.mxu0
  %v1322 = vadd.f32 0.0, %v1321
  %v1323 = vpop.f32.mrf.mxu0
  %1324 = vdwg.mxu0
  %v1325 = vadd.f32 %v1123, %v1263
  %v1326 = vadd.f32 %v1124, %v1266
  %v1327 = vadd.f32 %v1125, %v1271
  %v1328 = vadd.f32 %v1126, %v1274
  %v1329 = vadd.f32 %v1127, %v1279
  %v1330 = vadd.f32 %v1128, %v1282
  %v1331 = vadd.f32 %v1129, %v1287
  %v1332 = vadd.f32 %v1130, %v1290
  %v1333 = vadd.f32 %v1131, %v1295
  %v1334 = vadd.f32 %v1132, %v1298
  %v1335 = vadd.f32 %v1133, %v1303
  %v1336 = vadd.f32 %v1134, %v1306
  %v1337 = vadd.f32 %v1135, %v1311
  %v1338 = vadd.f32 %v1136, %v1314
  %v1339 = vadd.f32 %v1137, %v1319
  %v1340 = vadd.f32 %v1138, %v1322
  %s1341 = scalar_lea.vmem %s7, 80
  %v1342 = vld [vmem:[%s1341] sm:$0xff]
  %v1343 = vld [vmem:[%s1341 + $0x8] sm:$0xff]
  %v1344 = vpack.c.bf16 %v1343, %v1342
  %v1354 = vrot.slane %v990, 1
  %v1355 = vrot.slane %v991, 1
  %v1356 = vsel %vm835, %v1354, %v1355
  %v1357 = vrot.slane %v992, 1
  %v1358 = vsel %vm835, %v1355, %v1357
  %v1359 = vrot.slane %v993, 1
  %v1360 = vsel %vm835, %v1357, %v1359
  %v1361 = vrot.slane %v994, 1
  %v1362 = vsel %vm835, %v1359, %v1361
  %v1363 = vrot.slane %v995, 1
  %v1364 = vsel %vm835, %v1361, %v1363
  %v1365 = vrot.slane %v996, 1
  %v1366 = vsel %vm835, %v1363, %v1365
  %v1367 = vrot.slane %v997, 1
  %v1368 = vsel %vm835, %v1365, %v1367
  %v1369 = vrot.slane %v1139, 1
  %v1370 = vsel %vm835, %v1367, %v1369
  %v1372 = vsel %vm587, %v1356, 0
  %v1375 = vsel %vm587, %v1358, 0
  %v1378 = vsel %vm587, %v1360, 0
  %v1381 = vsel %vm587, %v1362, 0
  %v1384 = vsel %vm587, %v1364, 0
  %v1387 = vsel %vm587, %v1366, 0
  %v1390 = vsel %vm587, %v1368, 0
  %v1393 = vsel %vm587, %v1370, 0
  %1395 = vmatprep.subr.bf16.mxu0 0
  %1396 = vmatpush1.bf16.msra.mxu0 0
  %1397 = vmatprep.subr.bf16.mxu0 0
  %1398 = vmatpush1.bf16.msra.mxu0 0
  %1399 = vmatprep.subr.bf16.mxu0 0
  %1400 = vmatpush1.bf16.msra.mxu0 0
  %1401 = vmatprep.subr.bf16.mxu0 0
  %1402 = vmatpush1.bf16.msra.mxu0 0
  %1403 = vmatprep.subr.bf16.mxu0 0
  %1404 = vmatpush1.bf16.msra.mxu0 0
  %1405 = vmatprep.subr.bf16.mxu0 0
  %1406 = vmatpush1.bf16.msra.mxu0 0
  %1407 = vmatprep.subr.bf16.mxu0 0
  %1408 = vmatpush1.bf16.msra.mxu0 0
  %1409 = vmatprep.subr.bf16.mxu0 0
  %1410 = vmatpush1.bf16.msra.mxu0 %v1344
  %1411 = vmatprep.subr.bf16.mxu0 0
  %1412 = vmatpush2.bf16.msra.mxu0 0
  %1413 = vmatprep.subr.bf16.mxu0 0
  %1414 = vmatpush2.bf16.msra.mxu0 0
  %1415 = vmatprep.subr.bf16.mxu0 0
  %1416 = vmatpush2.bf16.msra.mxu0 0
  %1417 = vmatprep.subr.bf16.mxu0 0
  %1418 = vmatpush2.bf16.msra.mxu0 0
  %1419 = vmatprep.subr.bf16.mxu0 0
  %1420 = vmatpush2.bf16.msra.mxu0 0
  %1421 = vmatprep.subr.bf16.mxu0 0
  %1422 = vmatpush2.bf16.msra.mxu0 0
  %1423 = vmatprep.subr.bf16.mxu0 0
  %1424 = vmatpush2.bf16.msra.mxu0 0
  %1425 = vmatprep.subr.bf16.mxu0 0
  %1426 = vmatpush2.bf16.msra.mxu0 0
  %1427 = vmatprep.mubr.bf16.mxu0 0
  %1428 = vmatmul.mubr.bf16.gmra.mxu0 %v1372
  %v1429 = vpop.f32.mrf.mxu0
  %v1430 = vadd.f32 0.0, %v1429
  %v1431 = vpop.f32.mrf.mxu0
  %v1432 = vpop.f32.mrf.mxu0
  %v1433 = vadd.f32 0.0, %v1432
  %v1434 = vpop.f32.mrf.mxu0
  %1435 = vmatprep.mubr.bf16.mxu0 0
  %1436 = vmatmul.mubr.bf16.gmra.mxu0 %v1375
  %v1437 = vpop.f32.mrf.mxu0
  %v1438 = vadd.f32 0.0, %v1437
  %v1439 = vpop.f32.mrf.mxu0
  %v1440 = vpop.f32.mrf.mxu0
  %v1441 = vadd.f32 0.0, %v1440
  %v1442 = vpop.f32.mrf.mxu0
  %1443 = vmatprep.mubr.bf16.mxu0 0
  %1444 = vmatmul.mubr.bf16.gmra.mxu0 %v1378
  %v1445 = vpop.f32.mrf.mxu0
  %v1446 = vadd.f32 0.0, %v1445
  %v1447 = vpop.f32.mrf.mxu0
  %v1448 = vpop.f32.mrf.mxu0
  %v1449 = vadd.f32 0.0, %v1448
  %v1450 = vpop.f32.mrf.mxu0
  %1451 = vmatprep.mubr.bf16.mxu0 0
  %1452 = vmatmul.mubr.bf16.gmra.mxu0 %v1381
  %v1453 = vpop.f32.mrf.mxu0
  %v1454 = vadd.f32 0.0, %v1453
  %v1455 = vpop.f32.mrf.mxu0
  %v1456 = vpop.f32.mrf.mxu0
  %v1457 = vadd.f32 0.0, %v1456
  %v1458 = vpop.f32.mrf.mxu0
  %1459 = vmatprep.mubr.bf16.mxu0 0
  %1460 = vmatmul.mubr.bf16.gmra.mxu0 %v1384
  %v1461 = vpop.f32.mrf.mxu0
  %v1462 = vadd.f32 0.0, %v1461
  %v1463 = vpop.f32.mrf.mxu0
  %v1464 = vpop.f32.mrf.mxu0
  %v1465 = vadd.f32 0.0, %v1464
  %v1466 = vpop.f32.mrf.mxu0
  %1467 = vmatprep.mubr.bf16.mxu0 0
  %1468 = vmatmul.mubr.bf16.gmra.mxu0 %v1387
  %v1469 = vpop.f32.mrf.mxu0
  %v1470 = vadd.f32 0.0, %v1469
  %v1471 = vpop.f32.mrf.mxu0
  %v1472 = vpop.f32.mrf.mxu0
  %v1473 = vadd.f32 0.0, %v1472
  %v1474 = vpop.f32.mrf.mxu0
  %1475 = vmatprep.mubr.bf16.mxu0 0
  %1476 = vmatmul.mubr.bf16.gmra.mxu0 %v1390
  %v1477 = vpop.f32.mrf.mxu0
  %v1478 = vadd.f32 0.0, %v1477
  %v1479 = vpop.f32.mrf.mxu0
  %v1480 = vpop.f32.mrf.mxu0
  %v1481 = vadd.f32 0.0, %v1480
  %v1482 = vpop.f32.mrf.mxu0
  %1483 = vmatprep.mubr.bf16.mxu0 0
  %1484 = vmatmul.mubr.bf16.gmra.mxu0 %v1393
  %v1485 = vpop.f32.mrf.mxu0
  %v1486 = vadd.f32 0.0, %v1485
  %v1487 = vpop.f32.mrf.mxu0
  %v1488 = vpop.f32.mrf.mxu0
  %v1489 = vadd.f32 0.0, %v1488
  %v1490 = vpop.f32.mrf.mxu0
  %1491 = vdwg.mxu0
  %v1492 = vadd.f32 %v1325, %v1430
  %v1493 = vadd.f32 %v1326, %v1433
  %v1494 = vadd.f32 %v1327, %v1438
  %v1495 = vadd.f32 %v1328, %v1441
  %v1496 = vadd.f32 %v1329, %v1446
  %v1497 = vadd.f32 %v1330, %v1449
  %v1498 = vadd.f32 %v1331, %v1454
  %v1499 = vadd.f32 %v1332, %v1457
  %v1500 = vadd.f32 %v1333, %v1462
  %v1501 = vadd.f32 %v1334, %v1465
  %v1502 = vadd.f32 %v1335, %v1470
  %v1503 = vadd.f32 %v1336, %v1473
  %v1504 = vadd.f32 %v1337, %v1478
  %v1505 = vadd.f32 %v1338, %v1481
  %v1506 = vadd.f32 %v1339, %v1486
  %v1507 = vadd.f32 %v1340, %v1489
  %v1508 = vpack.c.bf16 %v500, %v499
  %s1509 = scalar_lea.vmem %s7, 96
  %v1510 = vld [vmem:[%s1509] sm:$0xff]
  %v1511 = vld [vmem:[%s1509 + $0x8] sm:$0xff]
  %v1512 = vpack.c.bf16 %v1511, %v1510
  %v1514 = vsel %vm587, %v1508, 0
  %1516 = vmatprep.subr.bf16.mxu0 0
  %1517 = vmatpush1.bf16.msra.mxu0 0
  %1518 = vmatprep.subr.bf16.mxu0 0
  %1519 = vmatpush1.bf16.msra.mxu0 0
  %1520 = vmatprep.subr.bf16.mxu0 0
  %1521 = vmatpush1.bf16.msra.mxu0 0
  %1522 = vmatprep.subr.bf16.mxu0 0
  %1523 = vmatpush1.bf16.msra.mxu0 0
  %1524 = vmatprep.subr.bf16.mxu0 0
  %1525 = vmatpush1.bf16.msra.mxu0 0
  %1526 = vmatprep.subr.bf16.mxu0 0
  %1527 = vmatpush1.bf16.msra.mxu0 0
  %1528 = vmatprep.subr.bf16.mxu0 0
  %1529 = vmatpush1.bf16.msra.mxu0 0
  %1530 = vmatprep.subr.bf16.mxu0 0
  %1531 = vmatpush1.bf16.msra.mxu0 %v1512
  %1532 = vmatprep.subr.bf16.mxu0 0
  %1533 = vmatpush2.bf16.msra.mxu0 0
  %1534 = vmatprep.subr.bf16.mxu0 0
  %1535 = vmatpush2.bf16.msra.mxu0 0
  %1536 = vmatprep.subr.bf16.mxu0 0
  %1537 = vmatpush2.bf16.msra.mxu0 0
  %1538 = vmatprep.subr.bf16.mxu0 0
  %1539 = vmatpush2.bf16.msra.mxu0 0
  %1540 = vmatprep.subr.bf16.mxu0 0
  %1541 = vmatpush2.bf16.msra.mxu0 0
  %1542 = vmatprep.subr.bf16.mxu0 0
  %1543 = vmatpush2.bf16.msra.mxu0 0
  %1544 = vmatprep.subr.bf16.mxu0 0
  %1545 = vmatpush2.bf16.msra.mxu0 0
  %1546 = vmatprep.subr.bf16.mxu0 0
  %1547 = vmatpush2.bf16.msra.mxu0 0
  %1548 = vmatprep.mubr.bf16.mxu0 0
  %1549 = vmatmul.mubr.bf16.gmra.mxu0 %v711
  %v1550 = vpop.f32.mrf.mxu0
  %v1551 = vadd.f32 0.0, %v1550
  %v1552 = vpop.f32.mrf.mxu0
  %v1553 = vpop.f32.mrf.mxu0
  %v1554 = vadd.f32 0.0, %v1553
  %v1555 = vpop.f32.mrf.mxu0
  %1556 = vmatprep.mubr.bf16.mxu0 0
  %1557 = vmatmul.mubr.bf16.gmra.mxu0 %v713
  %v1558 = vpop.f32.mrf.mxu0
  %v1559 = vadd.f32 0.0, %v1558
  %v1560 = vpop.f32.mrf.mxu0
  %v1561 = vpop.f32.mrf.mxu0
  %v1562 = vadd.f32 0.0, %v1561
  %v1563 = vpop.f32.mrf.mxu0
  %1564 = vmatprep.mubr.bf16.mxu0 0
  %1565 = vmatmul.mubr.bf16.gmra.mxu0 %v715
  %v1566 = vpop.f32.mrf.mxu0
  %v1567 = vadd.f32 0.0, %v1566
  %v1568 = vpop.f32.mrf.mxu0
  %v1569 = vpop.f32.mrf.mxu0
  %v1570 = vadd.f32 0.0, %v1569
  %v1571 = vpop.f32.mrf.mxu0
  %1572 = vmatprep.mubr.bf16.mxu0 0
  %1573 = vmatmul.mubr.bf16.gmra.mxu0 %v717
  %v1574 = vpop.f32.mrf.mxu0
  %v1575 = vadd.f32 0.0, %v1574
  %v1576 = vpop.f32.mrf.mxu0
  %v1577 = vpop.f32.mrf.mxu0
  %v1578 = vadd.f32 0.0, %v1577
  %v1579 = vpop.f32.mrf.mxu0
  %1580 = vmatprep.mubr.bf16.mxu0 0
  %1581 = vmatmul.mubr.bf16.gmra.mxu0 %v719
  %v1582 = vpop.f32.mrf.mxu0
  %v1583 = vadd.f32 0.0, %v1582
  %v1584 = vpop.f32.mrf.mxu0
  %v1585 = vpop.f32.mrf.mxu0
  %v1586 = vadd.f32 0.0, %v1585
  %v1587 = vpop.f32.mrf.mxu0
  %1588 = vmatprep.mubr.bf16.mxu0 0
  %1589 = vmatmul.mubr.bf16.gmra.mxu0 %v721
  %v1590 = vpop.f32.mrf.mxu0
  %v1591 = vadd.f32 0.0, %v1590
  %v1592 = vpop.f32.mrf.mxu0
  %v1593 = vpop.f32.mrf.mxu0
  %v1594 = vadd.f32 0.0, %v1593
  %v1595 = vpop.f32.mrf.mxu0
  %1596 = vmatprep.mubr.bf16.mxu0 0
  %1597 = vmatmul.mubr.bf16.gmra.mxu0 %v723
  %v1598 = vpop.f32.mrf.mxu0
  %v1599 = vadd.f32 0.0, %v1598
  %v1600 = vpop.f32.mrf.mxu0
  %v1601 = vpop.f32.mrf.mxu0
  %v1602 = vadd.f32 0.0, %v1601
  %v1603 = vpop.f32.mrf.mxu0
  %1604 = vmatprep.mubr.bf16.mxu0 0
  %1605 = vmatmul.mubr.bf16.gmra.mxu0 %v1514
  %v1606 = vpop.f32.mrf.mxu0
  %v1607 = vadd.f32 0.0, %v1606
  %v1608 = vpop.f32.mrf.mxu0
  %v1609 = vpop.f32.mrf.mxu0
  %v1610 = vadd.f32 0.0, %v1609
  %v1611 = vpop.f32.mrf.mxu0
  %1612 = vdwg.mxu0
  %v1613 = vadd.f32 %v1492, %v1551
  %v1614 = vadd.f32 %v1493, %v1554
  %v1615 = vadd.f32 %v1494, %v1559
  %v1616 = vadd.f32 %v1495, %v1562
  %v1617 = vadd.f32 %v1496, %v1567
  %v1618 = vadd.f32 %v1497, %v1570
  %v1619 = vadd.f32 %v1498, %v1575
  %v1620 = vadd.f32 %v1499, %v1578
  %v1621 = vadd.f32 %v1500, %v1583
  %v1622 = vadd.f32 %v1501, %v1586
  %v1623 = vadd.f32 %v1502, %v1591
  %v1624 = vadd.f32 %v1503, %v1594
  %v1625 = vadd.f32 %v1504, %v1599
  %v1626 = vadd.f32 %v1505, %v1602
  %v1627 = vadd.f32 %v1506, %v1607
  %v1628 = vadd.f32 %v1507, %v1610
  %v1629 = vpack.c.bf16 %v501, %v501
  %s1630 = scalar_lea.vmem %s7, 112
  %v1631 = vld [vmem:[%s1630] sm:$0xff]
  %v1632 = vld [vmem:[%s1630 + $0x8] sm:$0xff]
  %v1633 = vpack.c.bf16 %v1632, %v1631
  %v1634 = vshll.u32 %v1508, 16
  %v1636 = vrot.slane %v1634, 1
  %v1637 = vsel %vm518, %v581, %v1636
  %v1638 = vshrl.u32 %v1508, 16
  %v1640 = vor.u32 %v1638, %v1636
  %v1642 = vshll.u32 %v1629, 16
  %v1644 = vrot.slane %v1642, 1
  %v1645 = vsel %vm518, %v1640, %v1644
  %v1647 = vsel %vm587, %v1637, 0
  %v1650 = vsel %vm587, %v1645, 0
  %1652 = vmatprep.subr.bf16.mxu0 0
  %1653 = vmatpush1.bf16.msra.mxu0 0
  %1654 = vmatprep.subr.bf16.mxu0 0
  %1655 = vmatpush1.bf16.msra.mxu0 0
  %1656 = vmatprep.subr.bf16.mxu0 0
  %1657 = vmatpush1.bf16.msra.mxu0 0
  %1658 = vmatprep.subr.bf16.mxu0 0
  %1659 = vmatpush1.bf16.msra.mxu0 0
  %1660 = vmatprep.subr.bf16.mxu0 0
  %1661 = vmatpush1.bf16.msra.mxu0 0
  %1662 = vmatprep.subr.bf16.mxu0 0
  %1663 = vmatpush1.bf16.msra.mxu0 0
  %1664 = vmatprep.subr.bf16.mxu0 0
  %1665 = vmatpush1.bf16.msra.mxu0 0
  %1666 = vmatprep.subr.bf16.mxu0 0
  %1667 = vmatpush1.bf16.msra.mxu0 %v1633
  %1668 = vmatprep.subr.bf16.mxu0 0
  %1669 = vmatpush2.bf16.msra.mxu0 0
  %1670 = vmatprep.subr.bf16.mxu0 0
  %1671 = vmatpush2.bf16.msra.mxu0 0
  %1672 = vmatprep.subr.bf16.mxu0 0
  %1673 = vmatpush2.bf16.msra.mxu0 0
  %1674 = vmatprep.subr.bf16.mxu0 0
  %1675 = vmatpush2.bf16.msra.mxu0 0
  %1676 = vmatprep.subr.bf16.mxu0 0
  %1677 = vmatpush2.bf16.msra.mxu0 0
  %1678 = vmatprep.subr.bf16.mxu0 0
  %1679 = vmatpush2.bf16.msra.mxu0 0
  %1680 = vmatprep.subr.bf16.mxu0 0
  %1681 = vmatpush2.bf16.msra.mxu0 0
  %1682 = vmatprep.subr.bf16.mxu0 0
  %1683 = vmatpush2.bf16.msra.mxu0 0
  %1684 = vmatprep.mubr.bf16.mxu0 0
  %1685 = vmatmul.mubr.bf16.gmra.mxu0 %v592
  %v1686 = vpop.f32.mrf.mxu0
  %v1687 = vadd.f32 0.0, %v1686
  %v1688 = vpop.f32.mrf.mxu0
  %v1689 = vpop.f32.mrf.mxu0
  %v1690 = vadd.f32 0.0, %v1689
  %v1691 = vpop.f32.mrf.mxu0
  %1692 = vmatprep.mubr.bf16.mxu0 0
  %1693 = vmatmul.mubr.bf16.gmra.mxu0 %v595
  %v1694 = vpop.f32.mrf.mxu0
  %v1695 = vadd.f32 0.0, %v1694
  %v1696 = vpop.f32.mrf.mxu0
  %v1697 = vpop.f32.mrf.mxu0
  %v1698 = vadd.f32 0.0, %v1697
  %v1699 = vpop.f32.mrf.mxu0
  %1700 = vmatprep.mubr.bf16.mxu0 0
  %1701 = vmatmul.mubr.bf16.gmra.mxu0 %v598
  %v1702 = vpop.f32.mrf.mxu0
  %v1703 = vadd.f32 0.0, %v1702
  %v1704 = vpop.f32.mrf.mxu0
  %v1705 = vpop.f32.mrf.mxu0
  %v1706 = vadd.f32 0.0, %v1705
  %v1707 = vpop.f32.mrf.mxu0
  %1708 = vmatprep.mubr.bf16.mxu0 0
  %1709 = vmatmul.mubr.bf16.gmra.mxu0 %v601
  %v1710 = vpop.f32.mrf.mxu0
  %v1711 = vadd.f32 0.0, %v1710
  %v1712 = vpop.f32.mrf.mxu0
  %v1713 = vpop.f32.mrf.mxu0
  %v1714 = vadd.f32 0.0, %v1713
  %v1715 = vpop.f32.mrf.mxu0
  %1716 = vmatprep.mubr.bf16.mxu0 0
  %1717 = vmatmul.mubr.bf16.gmra.mxu0 %v604
  %v1718 = vpop.f32.mrf.mxu0
  %v1719 = vadd.f32 0.0, %v1718
  %v1720 = vpop.f32.mrf.mxu0
  %v1721 = vpop.f32.mrf.mxu0
  %v1722 = vadd.f32 0.0, %v1721
  %v1723 = vpop.f32.mrf.mxu0
  %1724 = vmatprep.mubr.bf16.mxu0 0
  %1725 = vmatmul.mubr.bf16.gmra.mxu0 %v607
  %v1726 = vpop.f32.mrf.mxu0
  %v1727 = vadd.f32 0.0, %v1726
  %v1728 = vpop.f32.mrf.mxu0
  %v1729 = vpop.f32.mrf.mxu0
  %v1730 = vadd.f32 0.0, %v1729
  %v1731 = vpop.f32.mrf.mxu0
  %1732 = vmatprep.mubr.bf16.mxu0 0
  %1733 = vmatmul.mubr.bf16.gmra.mxu0 %v1647
  %v1734 = vpop.f32.mrf.mxu0
  %v1735 = vadd.f32 0.0, %v1734
  %v1736 = vpop.f32.mrf.mxu0
  %v1737 = vpop.f32.mrf.mxu0
  %v1738 = vadd.f32 0.0, %v1737
  %v1739 = vpop.f32.mrf.mxu0
  %1740 = vmatprep.mubr.bf16.mxu0 0
  %1741 = vmatmul.mubr.bf16.gmra.mxu0 %v1650
  %v1742 = vpop.f32.mrf.mxu0
  %v1743 = vadd.f32 0.0, %v1742
  %v1744 = vpop.f32.mrf.mxu0
  %v1745 = vpop.f32.mrf.mxu0
  %v1746 = vadd.f32 0.0, %v1745
  %v1747 = vpop.f32.mrf.mxu0
  %1748 = vdwg.mxu0
  %v1749 = vadd.f32 %v1613, %v1687
  %v1750 = vadd.f32 %v1614, %v1690
  %v1751 = vadd.f32 %v1615, %v1695
  %v1752 = vadd.f32 %v1616, %v1698
  %v1753 = vadd.f32 %v1617, %v1703
  %v1754 = vadd.f32 %v1618, %v1706
  %v1755 = vadd.f32 %v1619, %v1711
  %v1756 = vadd.f32 %v1620, %v1714
  %v1757 = vadd.f32 %v1621, %v1719
  %v1758 = vadd.f32 %v1622, %v1722
  %v1759 = vadd.f32 %v1623, %v1727
  %v1760 = vadd.f32 %v1624, %v1730
  %v1761 = vadd.f32 %v1625, %v1735
  %v1762 = vadd.f32 %v1626, %v1738
  %v1763 = vadd.f32 %v1627, %v1743
  %v1764 = vadd.f32 %v1628, %v1746
  %s1765 = scalar_lea.vmem %s7, 128
  %v1766 = vld [vmem:[%s1765] sm:$0xff]
  %v1767 = vld [vmem:[%s1765 + $0x8] sm:$0xff]
  %v1768 = vpack.c.bf16 %v1767, %v1766
  %v1771 = vrot.slane %v1508, 1
  %v1772 = vsel %vm835, %v849, %v1771
  %v1773 = vrot.slane %v1629, 1
  %v1774 = vsel %vm835, %v1771, %v1773
  %v1776 = vsel %vm587, %v1772, 0
  %v1779 = vsel %vm587, %v1774, 0
  %1781 = vmatprep.subr.bf16.mxu0 0
  %1782 = vmatpush1.bf16.msra.mxu0 0
  %1783 = vmatprep.subr.bf16.mxu0 0
  %1784 = vmatpush1.bf16.msra.mxu0 0
  %1785 = vmatprep.subr.bf16.mxu0 0
  %1786 = vmatpush1.bf16.msra.mxu0 0
  %1787 = vmatprep.subr.bf16.mxu0 0
  %1788 = vmatpush1.bf16.msra.mxu0 0
  %1789 = vmatprep.subr.bf16.mxu0 0
  %1790 = vmatpush1.bf16.msra.mxu0 0
  %1791 = vmatprep.subr.bf16.mxu0 0
  %1792 = vmatpush1.bf16.msra.mxu0 0
  %1793 = vmatprep.subr.bf16.mxu0 0
  %1794 = vmatpush1.bf16.msra.mxu0 0
  %1795 = vmatprep.subr.bf16.mxu0 0
  %1796 = vmatpush1.bf16.msra.mxu0 %v1768
  %1797 = vmatprep.subr.bf16.mxu0 0
  %1798 = vmatpush2.bf16.msra.mxu0 0
  %1799 = vmatprep.subr.bf16.mxu0 0
  %1800 = vmatpush2.bf16.msra.mxu0 0
  %1801 = vmatprep.subr.bf16.mxu0 0
  %1802 = vmatpush2.bf16.msra.mxu0 0
  %1803 = vmatprep.subr.bf16.mxu0 0
  %1804 = vmatpush2.bf16.msra.mxu0 0
  %1805 = vmatprep.subr.bf16.mxu0 0
  %1806 = vmatpush2.bf16.msra.mxu0 0
  %1807 = vmatprep.subr.bf16.mxu0 0
  %1808 = vmatpush2.bf16.msra.mxu0 0
  %1809 = vmatprep.subr.bf16.mxu0 0
  %1810 = vmatpush2.bf16.msra.mxu0 0
  %1811 = vmatprep.subr.bf16.mxu0 0
  %1812 = vmatpush2.bf16.msra.mxu0 0
  %1813 = vmatprep.mubr.bf16.mxu0 0
  %1814 = vmatmul.mubr.bf16.gmra.mxu0 %v857
  %v1815 = vpop.f32.mrf.mxu0
  %v1816 = vadd.f32 0.0, %v1815
  %v1817 = vpop.f32.mrf.mxu0
  %v1818 = vpop.f32.mrf.mxu0
  %v1819 = vadd.f32 0.0, %v1818
  %v1820 = vpop.f32.mrf.mxu0
  %1821 = vmatprep.mubr.bf16.mxu0 0
  %1822 = vmatmul.mubr.bf16.gmra.mxu0 %v860
  %v1823 = vpop.f32.mrf.mxu0
  %v1824 = vadd.f32 0.0, %v1823
  %v1825 = vpop.f32.mrf.mxu0
  %v1826 = vpop.f32.mrf.mxu0
  %v1827 = vadd.f32 0.0, %v1826
  %v1828 = vpop.f32.mrf.mxu0
  %1829 = vmatprep.mubr.bf16.mxu0 0
  %1830 = vmatmul.mubr.bf16.gmra.mxu0 %v863
  %v1831 = vpop.f32.mrf.mxu0
  %v1832 = vadd.f32 0.0, %v1831
  %v1833 = vpop.f32.mrf.mxu0
  %v1834 = vpop.f32.mrf.mxu0
  %v1835 = vadd.f32 0.0, %v1834
  %v1836 = vpop.f32.mrf.mxu0
  %1837 = vmatprep.mubr.bf16.mxu0 0
  %1838 = vmatmul.mubr.bf16.gmra.mxu0 %v866
  %v1839 = vpop.f32.mrf.mxu0
  %v1840 = vadd.f32 0.0, %v1839
  %v1841 = vpop.f32.mrf.mxu0
  %v1842 = vpop.f32.mrf.mxu0
  %v1843 = vadd.f32 0.0, %v1842
  %v1844 = vpop.f32.mrf.mxu0
  %1845 = vmatprep.mubr.bf16.mxu0 0
  %1846 = vmatmul.mubr.bf16.gmra.mxu0 %v869
  %v1847 = vpop.f32.mrf.mxu0
  %v1848 = vadd.f32 0.0, %v1847
  %v1849 = vpop.f32.mrf.mxu0
  %v1850 = vpop.f32.mrf.mxu0
  %v1851 = vadd.f32 0.0, %v1850
  %v1852 = vpop.f32.mrf.mxu0
  %1853 = vmatprep.mubr.bf16.mxu0 0
  %1854 = vmatmul.mubr.bf16.gmra.mxu0 %v872
  %v1855 = vpop.f32.mrf.mxu0
  %v1856 = vadd.f32 0.0, %v1855
  %v1857 = vpop.f32.mrf.mxu0
  %v1858 = vpop.f32.mrf.mxu0
  %v1859 = vadd.f32 0.0, %v1858
  %v1860 = vpop.f32.mrf.mxu0
  %1861 = vmatprep.mubr.bf16.mxu0 0
  %1862 = vmatmul.mubr.bf16.gmra.mxu0 %v1776
  %v1863 = vpop.f32.mrf.mxu0
  %v1864 = vadd.f32 0.0, %v1863
  %v1865 = vpop.f32.mrf.mxu0
  %v1866 = vpop.f32.mrf.mxu0
  %v1867 = vadd.f32 0.0, %v1866
  %v1868 = vpop.f32.mrf.mxu0
  %1869 = vmatprep.mubr.bf16.mxu0 0
  %1870 = vmatmul.mubr.bf16.gmra.mxu0 %v1779
  %v1871 = vpop.f32.mrf.mxu0
  %v1872 = vadd.f32 0.0, %v1871
  %v1873 = vpop.f32.mrf.mxu0
  %v1874 = vpop.f32.mrf.mxu0
  %v1875 = vadd.f32 0.0, %v1874
  %v1876 = vpop.f32.mrf.mxu0
  %1877 = vdwg.mxu0
  %v1878 = vadd.f32 %v1749, %v1816
  %v1879 = vadd.f32 %v1750, %v1819
  %v1880 = vadd.f32 %v1751, %v1824
  %v1881 = vadd.f32 %v1752, %v1827
  %v1882 = vadd.f32 %v1753, %v1832
  %v1883 = vadd.f32 %v1754, %v1835
  %v1884 = vadd.f32 %v1755, %v1840
  %v1885 = vadd.f32 %v1756, %v1843
  %v1886 = vadd.f32 %v1757, %v1848
  %v1887 = vadd.f32 %v1758, %v1851
  %v1888 = vadd.f32 %v1759, %v1856
  %v1889 = vadd.f32 %v1760, %v1859
  %v1890 = vadd.f32 %v1761, %v1864
  %v1891 = vadd.f32 %v1762, %v1867
  %v1892 = vadd.f32 %v1763, %v1872
  %v1893 = vadd.f32 %v1764, %v1875
  %vm1894 = vcmask 31744
  %1895 = vst.msk [vmem:[%s8] sm:$0xff] %vm1894, %v1878
  %1896 = vst.msk [vmem:[%s8 + $0x8] sm:$0xff] %vm1894, %v1879
  %1897 = vst.msk [vmem:[%s8 + $0x10] sm:$0xff] %vm1894, %v1880
  %1898 = vst.msk [vmem:[%s8 + $0x18] sm:$0xff] %vm1894, %v1881
  %1899 = vst.msk [vmem:[%s8 + $0x20] sm:$0xff] %vm1894, %v1882
  %1900 = vst.msk [vmem:[%s8 + $0x28] sm:$0xff] %vm1894, %v1883
  %1901 = vst.msk [vmem:[%s8 + $0x30] sm:$0xff] %vm1894, %v1884
  %1902 = vst.msk [vmem:[%s8 + $0x38] sm:$0xff] %vm1894, %v1885
  %1903 = vst.msk [vmem:[%s8 + $0x40] sm:$0xff] %vm1894, %v1886
  %1904 = vst.msk [vmem:[%s8 + $0x48] sm:$0xff] %vm1894, %v1887
  %1905 = vst.msk [vmem:[%s8 + $0x50] sm:$0xff] %vm1894, %v1888
  %1906 = vst.msk [vmem:[%s8 + $0x58] sm:$0xff] %vm1894, %v1889
  %1907 = vst.msk [vmem:[%s8 + $0x60] sm:$0xff] %vm1894, %v1890
  %1908 = vst.msk [vmem:[%s8 + $0x68] sm:$0xff] %vm1894, %v1891
  %1909 = vst.msk [vmem:[%s8 + $0x70] sm:$0xff] %vm1894, %v1892
  %1910 = vst.msk [vmem:[%s8 + $0x78] sm:$0xff] %vm1894, %v1893
  // Predicated region
  $region34: #{mycnn_forward.10} parent=0 // pred_check
    _
  $region35: #{mycnn_forward.10} parent=0 // pred_check_branch
    %1912 = sbr.rel (0) target = $region37
  $region36: #{mycnn_forward.10} parent=0 // pred_region
    _
  $region37: #{mycnn_forward.10} parent=0 // pred_fallthru
    _
  // Predicated region
  $region38: #{mycnn_forward.10} parent=0 // pred_check
    _
  $region39: #{mycnn_forward.10} parent=0 // pred_check_branch
    %1914 = sbr.rel (0) target = $region41
  $region40: #{mycnn_forward.10} parent=0 // pred_region
    _
  $region41: #{mycnn_forward.10} parent=0 // pred_fallthru
    _

// kernel: mycnn_forward.11
$region0: #{mycnn_forward.11}
  #allocation0 [shape = 'u32[]', space=smem, size = 0x4, offset = 0x4, fixed_abs, tag = 'smem constant byte address 0x4 - core index']
  #allocation1 [shape = 'u32[144,128]{1,0:T(1,128)}', space=vmem, size = 0x12000, scoped, tag = 'internal scratch']
  %s0 = inlined_call_operand.vmem [shape: f32[146,12], index: 0, kind: input, shape index: {}]
  %s1 = inlined_call_operand.vmem [shape: f32[146,1], index: 1, kind: input, shape index: {}]
  %s2 = inlined_call_operand.vmem [shape: f32[1,12], index: 2, kind: input, shape index: {}]
  %s3 = inlined_call_operand.vmem [shape: f32[1,12], index: 3, kind: input, shape index: {}]
  %s4 = inlined_call_operand.vmem [shape: f32[12,16], index: 4, kind: input, shape index: {}]
  %s5 = inlined_call_operand.vmem [shape: f32[1,16], index: 5, kind: input, shape index: {}]
  %s6 = inlined_call_operand.vmem [shape: f32[1,16], index: 6, kind: input, shape index: {}]
  %s7 = inlined_call_operand.vmem [shape: f32[9,16,4], index: 7, kind: input, shape index: {}]
  %s8 = inlined_call_operand.vmem [shape: f32[128,4], index: 8, kind: output, shape index: {}]
  %s9 = sld [smem:[#allocation0]]
  $region42: #{mycnn_forward.11} parent=0
    _
  %s11 = ssub.s32 1, %s9
  %s12 = scalar_select 0, %s11, %s9
  // Predicated region
  $region2: #{mycnn_forward.11} parent=0 // pred_check
    _
  $region3: #{mycnn_forward.11} parent=0 // pred_check_branch
    %14 = sbr.rel (0) target = $region5
  $region4: #{mycnn_forward.11} parent=0 // pred_region
    _
  $region5: #{mycnn_forward.11} parent=0 // pred_fallthru
    _
  // Predicated region
  $region6: #{mycnn_forward.11} parent=0 // pred_check
    _
  $region7: #{mycnn_forward.11} parent=0 // pred_check_branch
    %16 = sbr.rel (0) target = $region9
  $region8: #{mycnn_forward.11} parent=0 // pred_region
    _
  $region9: #{mycnn_forward.11} parent=0 // pred_fallthru
    _
  // Predicated region
  $region10: #{mycnn_forward.11} parent=0 // pred_check
    _
  $region11: #{mycnn_forward.11} parent=0 // pred_check_branch
    %18 = sbr.rel (0) target = $region13
  $region12: #{mycnn_forward.11} parent=0 // pred_region
    _
  $region13: #{mycnn_forward.11} parent=0 // pred_fallthru
    _
  // Predicated region
  $region14: #{mycnn_forward.11} parent=0 // pred_check
    _
  $region15: #{mycnn_forward.11} parent=0 // pred_check_branch
    %20 = sbr.rel (0) target = $region17
  $region16: #{mycnn_forward.11} parent=0 // pred_region
    _
  $region17: #{mycnn_forward.11} parent=0 // pred_fallthru
    _
  // Predicated region
  $region18: #{mycnn_forward.11} parent=0 // pred_check
    _
  $region19: #{mycnn_forward.11} parent=0 // pred_check_branch
    %22 = sbr.rel (0) target = $region21
  $region20: #{mycnn_forward.11} parent=0 // pred_region
    _
  $region21: #{mycnn_forward.11} parent=0 // pred_fallthru
    _
  // Predicated region
  $region22: #{mycnn_forward.11} parent=0 // pred_check
    _
  $region23: #{mycnn_forward.11} parent=0 // pred_check_branch
    %24 = sbr.rel (0) target = $region25
  $region24: #{mycnn_forward.11} parent=0 // pred_region
    _
  $region25: #{mycnn_forward.11} parent=0 // pred_fallthru
    _
  // Predicated region
  $region26: #{mycnn_forward.11} parent=0 // pred_check
    _
  $region27: #{mycnn_forward.11} parent=0 // pred_check_branch
    %26 = sbr.rel (0) target = $region29
  $region28: #{mycnn_forward.11} parent=0 // pred_region
    _
  $region29: #{mycnn_forward.11} parent=0 // pred_fallthru
    _
  // Predicated region
  $region30: #{mycnn_forward.11} parent=0 // pred_check
    _
  $region31: #{mycnn_forward.11} parent=0 // pred_check_branch
    %28 = sbr.rel (0) target = $region33
  $region32: #{mycnn_forward.11} parent=0 // pred_region
    _
  $region33: #{mycnn_forward.11} parent=0 // pred_fallthru
    _
  %v30 = vld [vmem:[%s0] sm:$0xff]
  %v31 = vld [vmem:[%s0 + $0x8] sm:$0xff]
  %v32 = vld [vmem:[%s0 + $0x10] sm:$0xff]
  %v33 = vld [vmem:[%s0 + $0x18] sm:$0xff]
  %v34 = vld [vmem:[%s0 + $0x20] sm:$0xff]
  %v35 = vld [vmem:[%s0 + $0x28] sm:$0xff]
  %v36 = vld [vmem:[%s0 + $0x30] sm:$0xff]
  %v37 = vld [vmem:[%s0 + $0x38] sm:$0xff]
  %v38 = vld [vmem:[%s0 + $0x40] sm:$0xff]
  %v39 = vld [vmem:[%s0 + $0x48] sm:$0xff]
  %v40 = vld [vmem:[%s0 + $0x50] sm:$0xff]
  %v41 = vld [vmem:[%s0 + $0x58] sm:$0xff]
  %v42 = vld [vmem:[%s0 + $0x60] sm:$0xff]
  %v43 = vld [vmem:[%s0 + $0x68] sm:$0xff]
  %v44 = vld [vmem:[%s0 + $0x70] sm:$0xff]
  %v45 = vld [vmem:[%s0 + $0x78] sm:$0xff]
  %v46 = vld [vmem:[%s0 + $0x80] sm:$0xff]
  %v47 = vld [vmem:[%s0 + $0x88] sm:$0xff]
  %v48 = vld [vmem:[%s0 + $0x90] sm:$0x3]
  %v49 = vld [vmem:[%s2] sm:$0x1]
  %v51 = vlaneseq
  %v52 = vshrl.u32 %v51, 7
  %v53 = vsub.s32 0, %v52
  %v54 = vrot.slane %v49, %v53
  %v56 = vmul.f32 %v30, %v54
  %v57 = vmul.f32 %v31, %v54
  %v58 = vmul.f32 %v32, %v54
  %v59 = vmul.f32 %v33, %v54
  %v60 = vmul.f32 %v34, %v54
  %v61 = vmul.f32 %v35, %v54
  %v62 = vmul.f32 %v36, %v54
  %v63 = vmul.f32 %v37, %v54
  %v64 = vmul.f32 %v38, %v54
  %v65 = vmul.f32 %v39, %v54
  %v66 = vmul.f32 %v40, %v54
  %v67 = vmul.f32 %v41, %v54
  %v68 = vmul.f32 %v42, %v54
  %v69 = vmul.f32 %v43, %v54
  %v70 = vmul.f32 %v44, %v54
  %v71 = vmul.f32 %v45, %v54
  %v72 = vmul.f32 %v46, %v54
  %v73 = vmul.f32 %v47, %v54
  %v74 = vmul.f32 %v48, %v54
  %v75 = vld [vmem:[%s3] sm:$0x1]
  %v77 = vlaneseq
  %v78 = vshrl.u32 %v77, 7
  %v79 = vsub.s32 0, %v78
  %v80 = vrot.slane %v75, %v79
  %v82 = vadd.f32 %v56, %v80
  %v83 = vadd.f32 %v57, %v80
  %v84 = vadd.f32 %v58, %v80
  %v85 = vadd.f32 %v59, %v80
  %v86 = vadd.f32 %v60, %v80
  %v87 = vadd.f32 %v61, %v80
  %v88 = vadd.f32 %v62, %v80
  %v89 = vadd.f32 %v63, %v80
  %v90 = vadd.f32 %v64, %v80
  %v91 = vadd.f32 %v65, %v80
  %v92 = vadd.f32 %v66, %v80
  %v93 = vadd.f32 %v67, %v80
  %v94 = vadd.f32 %v68, %v80
  %v95 = vadd.f32 %v69, %v80
  %v96 = vadd.f32 %v70, %v80
  %v97 = vadd.f32 %v71, %v80
  %v98 = vadd.f32 %v72, %v80
  %v99 = vadd.f32 %v73, %v80
  %v100 = vadd.f32 %v74, %v80
  %v101 = vmax.f32 %v82, 0.0
  %v102 = vmax.f32 %v83, 0.0
  %v103 = vmax.f32 %v84, 0.0
  %v104 = vmax.f32 %v85, 0.0
  %v105 = vmax.f32 %v86, 0.0
  %v106 = vmax.f32 %v87, 0.0
  %v107 = vmax.f32 %v88, 0.0
  %v108 = vmax.f32 %v89, 0.0
  %v109 = vmax.f32 %v90, 0.0
  %v110 = vmax.f32 %v91, 0.0
  %v111 = vmax.f32 %v92, 0.0
  %v112 = vmax.f32 %v93, 0.0
  %v113 = vmax.f32 %v94, 0.0
  %v114 = vmax.f32 %v95, 0.0
  %v115 = vmax.f32 %v96, 0.0
  %v116 = vmax.f32 %v97, 0.0
  %v117 = vmax.f32 %v98, 0.0
  %v118 = vmax.f32 %v99, 0.0
  %v119 = vmax.f32 %v100, 0.0
  %v120 = vpack.c.bf16 %v102, %v101
  %v121 = vpack.c.bf16 %v104, %v103
  %v122 = vpack.c.bf16 %v106, %v105
  %v123 = vpack.c.bf16 %v108, %v107
  %v124 = vpack.c.bf16 %v110, %v109
  %v125 = vpack.c.bf16 %v112, %v111
  %v126 = vpack.c.bf16 %v114, %v113
  %v127 = vpack.c.bf16 %v116, %v115
  %v128 = vpack.c.bf16 %v118, %v117
  %v129 = vpack.c.bf16 %v119, %v119
  %v130 = vld [vmem:[%s4] sm:$0xff]
  %v131 = vld [vmem:[%s4 + $0x8] sm:$0xf]
  %v132 = vpack.c.bf16 %v131, %v130
  %vm133 = vcmask 97280
  %v135 = vsel %vm133, %v120, 0
  %v138 = vsel %vm133, %v121, 0
  %v141 = vsel %vm133, %v122, 0
  %v144 = vsel %vm133, %v123, 0
  %v147 = vsel %vm133, %v124, 0
  %v150 = vsel %vm133, %v125, 0
  %v153 = vsel %vm133, %v126, 0
  %v156 = vsel %vm133, %v127, 0
  %v159 = vsel %vm133, %v128, 0
  %v162 = vsel %vm133, %v129, 0
  %vm164 = vcmask 1045504
  %v166 = vsel %vm164, %v132, 0
  %168 = vmatprep.subr.bf16.mxu0 0
  %169 = vmatpush1.bf16.msra.mxu0 0
  %170 = vmatprep.subr.bf16.mxu0 0
  %171 = vmatpush1.bf16.msra.mxu0 0
  %172 = vmatprep.subr.bf16.mxu0 0
  %173 = vmatpush1.bf16.msra.mxu0 0
  %174 = vmatprep.subr.bf16.mxu0 0
  %175 = vmatpush1.bf16.msra.mxu0 0
  %176 = vmatprep.subr.bf16.mxu0 0
  %177 = vmatpush1.bf16.msra.mxu0 0
  %178 = vmatprep.subr.bf16.mxu0 0
  %179 = vmatpush1.bf16.msra.mxu0 0
  %180 = vmatprep.subr.bf16.mxu0 0
  %181 = vmatpush1.bf16.msra.mxu0 0
  %182 = vmatprep.subr.bf16.mxu0 0
  %183 = vmatpush1.bf16.msra.mxu0 %v166
  %184 = vmatprep.subr.bf16.mxu0 0
  %185 = vmatpush2.bf16.msra.mxu0 0
  %186 = vmatprep.subr.bf16.mxu0 0
  %187 = vmatpush2.bf16.msra.mxu0 0
  %188 = vmatprep.subr.bf16.mxu0 0
  %189 = vmatpush2.bf16.msra.mxu0 0
  %190 = vmatprep.subr.bf16.mxu0 0
  %191 = vmatpush2.bf16.msra.mxu0 0
  %192 = vmatprep.subr.bf16.mxu0 0
  %193 = vmatpush2.bf16.msra.mxu0 0
  %194 = vmatprep.subr.bf16.mxu0 0
  %195 = vmatpush2.bf16.msra.mxu0 0
  %196 = vmatprep.subr.bf16.mxu0 0
  %197 = vmatpush2.bf16.msra.mxu0 0
  %198 = vmatprep.subr.bf16.mxu0 0
  %199 = vmatpush2.bf16.msra.mxu0 0
  %200 = vmatprep.mubr.bf16.mxu0 0
  %201 = vmatmul.mubr.bf16.gmra.mxu0 %v135
  %v202 = vpop.f32.mrf.mxu0
  %v203 = vadd.f32 0.0, %v202
  %v204 = vpop.f32.mrf.mxu0
  %v205 = vpop.f32.mrf.mxu0
  %v206 = vadd.f32 0.0, %v205
  %v207 = vpop.f32.mrf.mxu0
  %208 = vmatprep.mubr.bf16.mxu0 0
  %209 = vmatmul.mubr.bf16.gmra.mxu0 %v138
  %v210 = vpop.f32.mrf.mxu0
  %v211 = vadd.f32 0.0, %v210
  %v212 = vpop.f32.mrf.mxu0
  %v213 = vpop.f32.mrf.mxu0
  %v214 = vadd.f32 0.0, %v213
  %v215 = vpop.f32.mrf.mxu0
  %216 = vmatprep.mubr.bf16.mxu0 0
  %217 = vmatmul.mubr.bf16.gmra.mxu0 %v141
  %v218 = vpop.f32.mrf.mxu0
  %v219 = vadd.f32 0.0, %v218
  %v220 = vpop.f32.mrf.mxu0
  %v221 = vpop.f32.mrf.mxu0
  %v222 = vadd.f32 0.0, %v221
  %v223 = vpop.f32.mrf.mxu0
  %224 = vmatprep.mubr.bf16.mxu0 0
  %225 = vmatmul.mubr.bf16.gmra.mxu0 %v144
  %v226 = vpop.f32.mrf.mxu0
  %v227 = vadd.f32 0.0, %v226
  %v228 = vpop.f32.mrf.mxu0
  %v229 = vpop.f32.mrf.mxu0
  %v230 = vadd.f32 0.0, %v229
  %v231 = vpop.f32.mrf.mxu0
  %232 = vmatprep.mubr.bf16.mxu0 0
  %233 = vmatmul.mubr.bf16.gmra.mxu0 %v147
  %v234 = vpop.f32.mrf.mxu0
  %v235 = vadd.f32 0.0, %v234
  %v236 = vpop.f32.mrf.mxu0
  %v237 = vpop.f32.mrf.mxu0
  %v238 = vadd.f32 0.0, %v237
  %v239 = vpop.f32.mrf.mxu0
  %240 = vmatprep.mubr.bf16.mxu0 0
  %241 = vmatmul.mubr.bf16.gmra.mxu0 %v150
  %v242 = vpop.f32.mrf.mxu0
  %v243 = vadd.f32 0.0, %v242
  %v244 = vpop.f32.mrf.mxu0
  %v245 = vpop.f32.mrf.mxu0
  %v246 = vadd.f32 0.0, %v245
  %v247 = vpop.f32.mrf.mxu0
  %248 = vmatprep.mubr.bf16.mxu0 0
  %249 = vmatmul.mubr.bf16.gmra.mxu0 %v153
  %v250 = vpop.f32.mrf.mxu0
  %v251 = vadd.f32 0.0, %v250
  %v252 = vpop.f32.mrf.mxu0
  %v253 = vpop.f32.mrf.mxu0
  %v254 = vadd.f32 0.0, %v253
  %v255 = vpop.f32.mrf.mxu0
  %256 = vmatprep.mubr.bf16.mxu0 0
  %257 = vmatmul.mubr.bf16.gmra.mxu0 %v156
  %v258 = vpop.f32.mrf.mxu0
  %v259 = vadd.f32 0.0, %v258
  %v260 = vpop.f32.mrf.mxu0
  %v261 = vpop.f32.mrf.mxu0
  %v262 = vadd.f32 0.0, %v261
  %v263 = vpop.f32.mrf.mxu0
  %264 = vmatprep.mubr.bf16.mxu0 0
  %265 = vmatmul.mubr.bf16.gmra.mxu0 %v159
  %v266 = vpop.f32.mrf.mxu0
  %v267 = vadd.f32 0.0, %v266
  %v268 = vpop.f32.mrf.mxu0
  %v269 = vpop.f32.mrf.mxu0
  %v270 = vadd.f32 0.0, %v269
  %v271 = vpop.f32.mrf.mxu0
  %272 = vmatprep.mubr.bf16.mxu0 0
  %273 = vmatmul.mubr.bf16.gmra.mxu0 %v162
  %v274 = vpop.f32.mrf.mxu0
  %v275 = vadd.f32 0.0, %v274
  %v276 = vpop.f32.mrf.mxu0
  %v277 = vpop.f32.mrf.mxu0
  %v278 = vpop.f32.mrf.mxu0
  %279 = vdwg.mxu0
  %v280 = vld [vmem:[%s5] sm:$0x1]
  %v282 = vlaneseq
  %v283 = vshrl.u32 %v282, 7
  %v284 = vsub.s32 0, %v283
  %v285 = vrot.slane %v280, %v284
  %v287 = vmul.f32 %v203, %v285
  %v288 = vmul.f32 %v206, %v285
  %v289 = vmul.f32 %v211, %v285
  %v290 = vmul.f32 %v214, %v285
  %v291 = vmul.f32 %v219, %v285
  %v292 = vmul.f32 %v222, %v285
  %v293 = vmul.f32 %v227, %v285
  %v294 = vmul.f32 %v230, %v285
  %v295 = vmul.f32 %v235, %v285
  %v296 = vmul.f32 %v238, %v285
  %v297 = vmul.f32 %v243, %v285
  %v298 = vmul.f32 %v246, %v285
  %v299 = vmul.f32 %v251, %v285
  %v300 = vmul.f32 %v254, %v285
  %v301 = vmul.f32 %v259, %v285
  %v302 = vmul.f32 %v262, %v285
  %v303 = vmul.f32 %v267, %v285
  %v304 = vmul.f32 %v270, %v285
  %v305 = vmul.f32 %v275, %v285
  %v306 = vld [vmem:[%s6] sm:$0x1]
  %v308 = vlaneseq
  %v309 = vshrl.u32 %v308, 7
  %v310 = vsub.s32 0, %v309
  %v311 = vrot.slane %v306, %v310
  %v313 = vadd.f32 %v287, %v311
  %v314 = vadd.f32 %v288, %v311
  %v315 = vadd.f32 %v289, %v311
  %v316 = vadd.f32 %v290, %v311
  %v317 = vadd.f32 %v291, %v311
  %v318 = vadd.f32 %v292, %v311
  %v319 = vadd.f32 %v293, %v311
  %v320 = vadd.f32 %v294, %v311
  %v321 = vadd.f32 %v295, %v311
  %v322 = vadd.f32 %v296, %v311
  %v323 = vadd.f32 %v297, %v311
  %v324 = vadd.f32 %v298, %v311
  %v325 = vadd.f32 %v299, %v311
  %v326 = vadd.f32 %v300, %v311
  %v327 = vadd.f32 %v301, %v311
  %v328 = vadd.f32 %v302, %v311
  %v329 = vadd.f32 %v303, %v311
  %v330 = vadd.f32 %v304, %v311
  %v331 = vadd.f32 %v305, %v311
  %v332 = vmax.f32 %v313, 0.0
  %v333 = vmax.f32 %v314, 0.0
  %v334 = vmax.f32 %v315, 0.0
  %v335 = vmax.f32 %v316, 0.0
  %v336 = vmax.f32 %v317, 0.0
  %v337 = vmax.f32 %v318, 0.0
  %v338 = vmax.f32 %v319, 0.0
  %v339 = vmax.f32 %v320, 0.0
  %v340 = vmax.f32 %v321, 0.0
  %v341 = vmax.f32 %v322, 0.0
  %v342 = vmax.f32 %v323, 0.0
  %v343 = vmax.f32 %v324, 0.0
  %v344 = vmax.f32 %v325, 0.0
  %v345 = vmax.f32 %v326, 0.0
  %v346 = vmax.f32 %v327, 0.0
  %v347 = vmax.f32 %v328, 0.0
  %v348 = vmax.f32 %v329, 0.0
  %v349 = vmax.f32 %v330, 0.0
  %v350 = vmax.f32 %v331, 0.0
  %v351 = vld [vmem:[%s1] sm:$0xff]
  %v352 = vld [vmem:[%s1 + $0x8] sm:$0xff]
  %v353 = vld [vmem:[%s1 + $0x10] sm:$0xff]
  %v354 = vld [vmem:[%s1 + $0x18] sm:$0xff]
  %v355 = vld [vmem:[%s1 + $0x20] sm:$0xff]
  %v356 = vld [vmem:[%s1 + $0x28] sm:$0xff]
  %v357 = vld [vmem:[%s1 + $0x30] sm:$0xff]
  %v358 = vld [vmem:[%s1 + $0x38] sm:$0xff]
  %v359 = vld [vmem:[%s1 + $0x40] sm:$0xff]
  %v360 = vld [vmem:[%s1 + $0x48] sm:$0xff]
  %v361 = vld [vmem:[%s1 + $0x50] sm:$0xff]
  %v362 = vld [vmem:[%s1 + $0x58] sm:$0xff]
  %v363 = vld [vmem:[%s1 + $0x60] sm:$0xff]
  %v364 = vld [vmem:[%s1 + $0x68] sm:$0xff]
  %v365 = vld [vmem:[%s1 + $0x70] sm:$0xff]
  %v366 = vld [vmem:[%s1 + $0x78] sm:$0xff]
  %v367 = vld [vmem:[%s1 + $0x80] sm:$0xff]
  %v368 = vld [vmem:[%s1 + $0x88] sm:$0xff]
  %v369 = vld [vmem:[%s1 + $0x90] sm:$0x3]
  %vm370 = vcmp.gt.f32.partialorder %v351, 0.0
  %vm371 = vcmp.gt.f32.partialorder %v352, 0.0
  %vm372 = vcmp.gt.f32.partialorder %v353, 0.0
  %vm373 = vcmp.gt.f32.partialorder %v354, 0.0
  %vm374 = vcmp.gt.f32.partialorder %v355, 0.0
  %vm375 = vcmp.gt.f32.partialorder %v356, 0.0
  %vm376 = vcmp.gt.f32.partialorder %v357, 0.0
  %vm377 = vcmp.gt.f32.partialorder %v358, 0.0
  %vm378 = vcmp.gt.f32.partialorder %v359, 0.0
  %vm379 = vcmp.gt.f32.partialorder %v360, 0.0
  %vm380 = vcmp.gt.f32.partialorder %v361, 0.0
  %vm381 = vcmp.gt.f32.partialorder %v362, 0.0
  %vm382 = vcmp.gt.f32.partialorder %v363, 0.0
  %vm383 = vcmp.gt.f32.partialorder %v364, 0.0
  %vm384 = vcmp.gt.f32.partialorder %v365, 0.0
  %vm385 = vcmp.gt.f32.partialorder %v366, 0.0
  %vm386 = vcmp.gt.f32.partialorder %v367, 0.0
  %vm387 = vcmp.gt.f32.partialorder %v368, 0.0
  %vm388 = vcmp.gt.f32.partialorder %v369, 0.0
  %v389 = vsel %vm370, 1, 0
  %v390 = vsel %vm371, 1, 0
  %v391 = vsel %vm372, 1, 0
  %v392 = vsel %vm373, 1, 0
  %v393 = vsel %vm374, 1, 0
  %v394 = vsel %vm375, 1, 0
  %v395 = vsel %vm376, 1, 0
  %v396 = vsel %vm377, 1, 0
  %v397 = vsel %vm378, 1, 0
  %v398 = vsel %vm379, 1, 0
  %v399 = vsel %vm380, 1, 0
  %v400 = vsel %vm381, 1, 0
  %v401 = vsel %vm382, 1, 0
  %v402 = vsel %vm383, 1, 0
  %v403 = vsel %vm384, 1, 0
  %v404 = vsel %vm385, 1, 0
  %v405 = vsel %vm386, 1, 0
  %v406 = vsel %vm387, 1, 0
  %v407 = vsel %vm388, 1, 0
  %408 = vset.pattern.permute.xlu0 0
  %409 = vperm.xlu0 %408, %v389
  %v410 = vpop.permute.xlu0 %409
  %411 = vset.pattern.permute.xlu0 0
  %412 = vperm.xlu0 %411, %v390
  %v413 = vpop.permute.xlu0 %412
  %414 = vset.pattern.permute.xlu0 0
  %415 = vperm.xlu0 %414, %v391
  %v416 = vpop.permute.xlu0 %415
  %417 = vset.pattern.permute.xlu0 0
  %418 = vperm.xlu0 %417, %v392
  %v419 = vpop.permute.xlu0 %418
  %420 = vset.pattern.permute.xlu0 0
  %421 = vperm.xlu0 %420, %v393
  %v422 = vpop.permute.xlu0 %421
  %423 = vset.pattern.permute.xlu0 0
  %424 = vperm.xlu0 %423, %v394
  %v425 = vpop.permute.xlu0 %424
  %426 = vset.pattern.permute.xlu0 0
  %427 = vperm.xlu0 %426, %v395
  %v428 = vpop.permute.xlu0 %427
  %429 = vset.pattern.permute.xlu0 0
  %430 = vperm.xlu0 %429, %v396
  %v431 = vpop.permute.xlu0 %430
  %432 = vset.pattern.permute.xlu0 0
  %433 = vperm.xlu0 %432, %v397
  %v434 = vpop.permute.xlu0 %433
  %435 = vset.pattern.permute.xlu0 0
  %436 = vperm.xlu0 %435, %v398
  %v437 = vpop.permute.xlu0 %436
  %438 = vset.pattern.permute.xlu0 0
  %439 = vperm.xlu0 %438, %v399
  %v440 = vpop.permute.xlu0 %439
  %441 = vset.pattern.permute.xlu0 0
  %442 = vperm.xlu0 %441, %v400
  %v443 = vpop.permute.xlu0 %442
  %444 = vset.pattern.permute.xlu0 0
  %445 = vperm.xlu0 %444, %v401
  %v446 = vpop.permute.xlu0 %445
  %447 = vset.pattern.permute.xlu0 0
  %448 = vperm.xlu0 %447, %v402
  %v449 = vpop.permute.xlu0 %448
  %450 = vset.pattern.permute.xlu0 0
  %451 = vperm.xlu0 %450, %v403
  %v452 = vpop.permute.xlu0 %451
  %453 = vset.pattern.permute.xlu0 0
  %454 = vperm.xlu0 %453, %v404
  %v455 = vpop.permute.xlu0 %454
  %456 = vset.pattern.permute.xlu0 0
  %457 = vperm.xlu0 %456, %v405
  %v458 = vpop.permute.xlu0 %457
  %459 = vset.pattern.permute.xlu0 0
  %460 = vperm.xlu0 %459, %v406
  %v461 = vpop.permute.xlu0 %460
  %462 = vset.pattern.permute.xlu0 0
  %463 = vperm.xlu0 %462, %v407
  %v464 = vpop.permute.xlu0 %463
  %vm465 = vcmp.eq.s32.totalorder %v410, 1
  %vm466 = vcmp.eq.s32.totalorder %v413, 1
  %vm467 = vcmp.eq.s32.totalorder %v416, 1
  %vm468 = vcmp.eq.s32.totalorder %v419, 1
  %vm469 = vcmp.eq.s32.totalorder %v422, 1
  %vm470 = vcmp.eq.s32.totalorder %v425, 1
  %vm471 = vcmp.eq.s32.totalorder %v428, 1
  %vm472 = vcmp.eq.s32.totalorder %v431, 1
  %vm473 = vcmp.eq.s32.totalorder %v434, 1
  %vm474 = vcmp.eq.s32.totalorder %v437, 1
  %vm475 = vcmp.eq.s32.totalorder %v440, 1
  %vm476 = vcmp.eq.s32.totalorder %v443, 1
  %vm477 = vcmp.eq.s32.totalorder %v446, 1
  %vm478 = vcmp.eq.s32.totalorder %v449, 1
  %vm479 = vcmp.eq.s32.totalorder %v452, 1
  %vm480 = vcmp.eq.s32.totalorder %v455, 1
  %vm481 = vcmp.eq.s32.totalorder %v458, 1
  %vm482 = vcmp.eq.s32.totalorder %v461, 1
  %vm483 = vcmp.eq.s32.totalorder %v464, 1
  %v484 = vsel %vm465, %v332, 0.0
  %v485 = vsel %vm466, %v333, 0.0
  %v486 = vsel %vm467, %v334, 0.0
  %v487 = vsel %vm468, %v335, 0.0
  %v488 = vsel %vm469, %v336, 0.0
  %v489 = vsel %vm470, %v337, 0.0
  %v490 = vsel %vm471, %v338, 0.0
  %v491 = vsel %vm472, %v339, 0.0
  %v492 = vsel %vm473, %v340, 0.0
  %v493 = vsel %vm474, %v341, 0.0
  %v494 = vsel %vm475, %v342, 0.0
  %v495 = vsel %vm476, %v343, 0.0
  %v496 = vsel %vm477, %v344, 0.0
  %v497 = vsel %vm478, %v345, 0.0
  %v498 = vsel %vm479, %v346, 0.0
  %v499 = vsel %vm480, %v347, 0.0
  %v500 = vsel %vm481, %v348, 0.0
  %v501 = vsel %vm482, %v349, 0.0
  %v502 = vsel %vm483, %v350, 0.0
  %v503 = vpack.c.bf16 %v485, %v484
  %v504 = vpack.c.bf16 %v487, %v486
  %v505 = vpack.c.bf16 %v489, %v488
  %v506 = vpack.c.bf16 %v491, %v490
  %v507 = vpack.c.bf16 %v493, %v492
  %v508 = vpack.c.bf16 %v495, %v494
  %v509 = vpack.c.bf16 %v497, %v496
  %v510 = vpack.c.bf16 %v499, %v498
  %v511 = vld [vmem:[%s7] sm:$0xff]
  %v512 = vld [vmem:[%s7 + $0x8] sm:$0xff]
  %v513 = vpack.c.bf16 %v512, %v511
  %v514 = vpack.c.bf16 %v500, %v500
  %s515 = scalar_lea.vmem %s7, 16
  %v516 = vld [vmem:[%s515] sm:$0xff]
  %v517 = vld [vmem:[%s515 + $0x8] sm:$0xff]
  %v518 = vpack.c.bf16 %v517, %v516
  %vm519 = vsmask.f32 7424
  %v521 = vshrl.u32 %v503, 16
  %v523 = vshll.u32 %v503, 16
  %v525 = vrot.slane %v523, 1
  %v526 = vor.u32 %v521, %v525
  %v528 = vshll.u32 %v504, 16
  %v530 = vrot.slane %v528, 1
  %v531 = vsel %vm519, %v526, %v530
  %v532 = vshrl.u32 %v504, 16
  %v534 = vor.u32 %v532, %v530
  %v536 = vshll.u32 %v505, 16
  %v538 = vrot.slane %v536, 1
  %v539 = vsel %vm519, %v534, %v538
  %v540 = vshrl.u32 %v505, 16
  %v542 = vor.u32 %v540, %v538
  %v544 = vshll.u32 %v506, 16
  %v546 = vrot.slane %v544, 1
  %v547 = vsel %vm519, %v542, %v546
  %v548 = vshrl.u32 %v506, 16
  %v550 = vor.u32 %v548, %v546
  %v552 = vshll.u32 %v507, 16
  %v554 = vrot.slane %v552, 1
  %v555 = vsel %vm519, %v550, %v554
  %v556 = vshrl.u32 %v507, 16
  %v558 = vor.u32 %v556, %v554
  %v560 = vshll.u32 %v508, 16
  %v562 = vrot.slane %v560, 1
  %v563 = vsel %vm519, %v558, %v562
  %v564 = vshrl.u32 %v508, 16
  %v566 = vor.u32 %v564, %v562
  %v568 = vshll.u32 %v509, 16
  %v570 = vrot.slane %v568, 1
  %v571 = vsel %vm519, %v566, %v570
  %v572 = vshrl.u32 %v509, 16
  %v574 = vor.u32 %v572, %v570
  %v576 = vshll.u32 %v510, 16
  %v578 = vrot.slane %v576, 1
  %v579 = vsel %vm519, %v574, %v578
  %v580 = vshrl.u32 %v510, 16
  %v582 = vor.u32 %v580, %v578
  %v584 = vshll.u32 %v514, 16
  %v586 = vrot.slane %v584, 1
  %v587 = vsel %vm519, %v582, %v586
  %vm588 = vcmask 130048
  %v590 = vsel %vm588, %v531, 0
  %v593 = vsel %vm588, %v539, 0
  %v596 = vsel %vm588, %v547, 0
  %v599 = vsel %vm588, %v555, 0
  %v602 = vsel %vm588, %v563, 0
  %v605 = vsel %vm588, %v571, 0
  %v608 = vsel %vm588, %v579, 0
  %v611 = vsel %vm588, %v587, 0
  %613 = vmatprep.subr.bf16.mxu0 0
  %614 = vmatpush1.bf16.msra.mxu0 0
  %615 = vmatprep.subr.bf16.mxu0 0
  %616 = vmatpush1.bf16.msra.mxu0 0
  %617 = vmatprep.subr.bf16.mxu0 0
  %618 = vmatpush1.bf16.msra.mxu0 0
  %619 = vmatprep.subr.bf16.mxu0 0
  %620 = vmatpush1.bf16.msra.mxu0 0
  %621 = vmatprep.subr.bf16.mxu0 0
  %622 = vmatpush1.bf16.msra.mxu0 0
  %623 = vmatprep.subr.bf16.mxu0 0
  %624 = vmatpush1.bf16.msra.mxu0 0
  %625 = vmatprep.subr.bf16.mxu0 0
  %626 = vmatpush1.bf16.msra.mxu0 0
  %627 = vmatprep.subr.bf16.mxu0 0
  %628 = vmatpush1.bf16.msra.mxu0 %v518
  %629 = vmatprep.subr.bf16.mxu0 0
  %630 = vmatpush2.bf16.msra.mxu0 0
  %631 = vmatprep.subr.bf16.mxu0 0
  %632 = vmatpush2.bf16.msra.mxu0 0
  %633 = vmatprep.subr.bf16.mxu0 0
  %634 = vmatpush2.bf16.msra.mxu0 0
  %635 = vmatprep.subr.bf16.mxu0 0
  %636 = vmatpush2.bf16.msra.mxu0 0
  %637 = vmatprep.subr.bf16.mxu0 0
  %638 = vmatpush2.bf16.msra.mxu0 0
  %639 = vmatprep.subr.bf16.mxu0 0
  %640 = vmatpush2.bf16.msra.mxu0 0
  %641 = vmatprep.subr.bf16.mxu0 0
  %642 = vmatpush2.bf16.msra.mxu0 0
  %643 = vmatprep.subr.bf16.mxu0 0
  %644 = vmatpush2.bf16.msra.mxu0 0
  %645 = vmatprep.mubr.bf16.mxu0 0
  %646 = vmatmul.mubr.bf16.gmra.mxu0 %v590
  %v647 = vpop.f32.mrf.mxu0
  %v648 = vadd.f32 0.0, %v647
  %v649 = vpop.f32.mrf.mxu0
  %v650 = vpop.f32.mrf.mxu0
  %v651 = vadd.f32 0.0, %v650
  %v652 = vpop.f32.mrf.mxu0
  %653 = vmatprep.mubr.bf16.mxu0 0
  %654 = vmatmul.mubr.bf16.gmra.mxu0 %v593
  %v655 = vpop.f32.mrf.mxu0
  %v656 = vadd.f32 0.0, %v655
  %v657 = vpop.f32.mrf.mxu0
  %v658 = vpop.f32.mrf.mxu0
  %v659 = vadd.f32 0.0, %v658
  %v660 = vpop.f32.mrf.mxu0
  %661 = vmatprep.mubr.bf16.mxu0 0
  %662 = vmatmul.mubr.bf16.gmra.mxu0 %v596
  %v663 = vpop.f32.mrf.mxu0
  %v664 = vadd.f32 0.0, %v663
  %v665 = vpop.f32.mrf.mxu0
  %v666 = vpop.f32.mrf.mxu0
  %v667 = vadd.f32 0.0, %v666
  %v668 = vpop.f32.mrf.mxu0
  %669 = vmatprep.mubr.bf16.mxu0 0
  %670 = vmatmul.mubr.bf16.gmra.mxu0 %v599
  %v671 = vpop.f32.mrf.mxu0
  %v672 = vadd.f32 0.0, %v671
  %v673 = vpop.f32.mrf.mxu0
  %v674 = vpop.f32.mrf.mxu0
  %v675 = vadd.f32 0.0, %v674
  %v676 = vpop.f32.mrf.mxu0
  %677 = vmatprep.mubr.bf16.mxu0 0
  %678 = vmatmul.mubr.bf16.gmra.mxu0 %v602
  %v679 = vpop.f32.mrf.mxu0
  %v680 = vadd.f32 0.0, %v679
  %v681 = vpop.f32.mrf.mxu0
  %v682 = vpop.f32.mrf.mxu0
  %v683 = vadd.f32 0.0, %v682
  %v684 = vpop.f32.mrf.mxu0
  %685 = vmatprep.mubr.bf16.mxu0 0
  %686 = vmatmul.mubr.bf16.gmra.mxu0 %v605
  %v687 = vpop.f32.mrf.mxu0
  %v688 = vadd.f32 0.0, %v687
  %v689 = vpop.f32.mrf.mxu0
  %v690 = vpop.f32.mrf.mxu0
  %v691 = vadd.f32 0.0, %v690
  %v692 = vpop.f32.mrf.mxu0
  %693 = vmatprep.mubr.bf16.mxu0 0
  %694 = vmatmul.mubr.bf16.gmra.mxu0 %v608
  %v695 = vpop.f32.mrf.mxu0
  %v696 = vadd.f32 0.0, %v695
  %v697 = vpop.f32.mrf.mxu0
  %v698 = vpop.f32.mrf.mxu0
  %v699 = vadd.f32 0.0, %v698
  %v700 = vpop.f32.mrf.mxu0
  %701 = vmatprep.mubr.bf16.mxu0 0
  %702 = vmatmul.mubr.bf16.gmra.mxu0 %v611
  %v703 = vpop.f32.mrf.mxu0
  %v704 = vadd.f32 0.0, %v703
  %v705 = vpop.f32.mrf.mxu0
  %v706 = vpop.f32.mrf.mxu0
  %v707 = vadd.f32 0.0, %v706
  %v708 = vpop.f32.mrf.mxu0
  %709 = vdwg.mxu0
  %v710 = vsel %vm588, %v503, 0
  %v712 = vsel %vm588, %v504, 0
  %v714 = vsel %vm588, %v505, 0
  %v716 = vsel %vm588, %v506, 0
  %v718 = vsel %vm588, %v507, 0
  %v720 = vsel %vm588, %v508, 0
  %v722 = vsel %vm588, %v509, 0
  %v724 = vsel %vm588, %v510, 0
  %726 = vmatprep.subr.bf16.mxu0 0
  %727 = vmatpush1.bf16.msra.mxu0 0
  %728 = vmatprep.subr.bf16.mxu0 0
  %729 = vmatpush1.bf16.msra.mxu0 0
  %730 = vmatprep.subr.bf16.mxu0 0
  %731 = vmatpush1.bf16.msra.mxu0 0
  %732 = vmatprep.subr.bf16.mxu0 0
  %733 = vmatpush1.bf16.msra.mxu0 0
  %734 = vmatprep.subr.bf16.mxu0 0
  %735 = vmatpush1.bf16.msra.mxu0 0
  %736 = vmatprep.subr.bf16.mxu0 0
  %737 = vmatpush1.bf16.msra.mxu0 0
  %738 = vmatprep.subr.bf16.mxu0 0
  %739 = vmatpush1.bf16.msra.mxu0 0
  %740 = vmatprep.subr.bf16.mxu0 0
  %741 = vmatpush1.bf16.msra.mxu0 %v513
  %742 = vmatprep.subr.bf16.mxu0 0
  %743 = vmatpush2.bf16.msra.mxu0 0
  %744 = vmatprep.subr.bf16.mxu0 0
  %745 = vmatpush2.bf16.msra.mxu0 0
  %746 = vmatprep.subr.bf16.mxu0 0
  %747 = vmatpush2.bf16.msra.mxu0 0
  %748 = vmatprep.subr.bf16.mxu0 0
  %749 = vmatpush2.bf16.msra.mxu0 0
  %750 = vmatprep.subr.bf16.mxu0 0
  %751 = vmatpush2.bf16.msra.mxu0 0
  %752 = vmatprep.subr.bf16.mxu0 0
  %753 = vmatpush2.bf16.msra.mxu0 0
  %754 = vmatprep.subr.bf16.mxu0 0
  %755 = vmatpush2.bf16.msra.mxu0 0
  %756 = vmatprep.subr.bf16.mxu0 0
  %757 = vmatpush2.bf16.msra.mxu0 0
  %758 = vmatprep.mubr.bf16.mxu0 0
  %759 = vmatmul.mubr.bf16.gmra.mxu0 %v710
  %v760 = vpop.f32.mrf.mxu0
  %v761 = vadd.f32 %v648, %v760
  %v762 = vpop.f32.mrf.mxu0
  %v763 = vpop.f32.mrf.mxu0
  %v764 = vadd.f32 %v651, %v763
  %v765 = vpop.f32.mrf.mxu0
  %766 = vmatprep.mubr.bf16.mxu0 0
  %767 = vmatmul.mubr.bf16.gmra.mxu0 %v712
  %v768 = vpop.f32.mrf.mxu0
  %v769 = vadd.f32 %v656, %v768
  %v770 = vpop.f32.mrf.mxu0
  %v771 = vpop.f32.mrf.mxu0
  %v772 = vadd.f32 %v659, %v771
  %v773 = vpop.f32.mrf.mxu0
  %774 = vmatprep.mubr.bf16.mxu0 0
  %775 = vmatmul.mubr.bf16.gmra.mxu0 %v714
  %v776 = vpop.f32.mrf.mxu0
  %v777 = vadd.f32 %v664, %v776
  %v778 = vpop.f32.mrf.mxu0
  %v779 = vpop.f32.mrf.mxu0
  %v780 = vadd.f32 %v667, %v779
  %v781 = vpop.f32.mrf.mxu0
  %782 = vmatprep.mubr.bf16.mxu0 0
  %783 = vmatmul.mubr.bf16.gmra.mxu0 %v716
  %v784 = vpop.f32.mrf.mxu0
  %v785 = vadd.f32 %v672, %v784
  %v786 = vpop.f32.mrf.mxu0
  %v787 = vpop.f32.mrf.mxu0
  %v788 = vadd.f32 %v675, %v787
  %v789 = vpop.f32.mrf.mxu0
  %790 = vmatprep.mubr.bf16.mxu0 0
  %791 = vmatmul.mubr.bf16.gmra.mxu0 %v718
  %v792 = vpop.f32.mrf.mxu0
  %v793 = vadd.f32 %v680, %v792
  %v794 = vpop.f32.mrf.mxu0
  %v795 = vpop.f32.mrf.mxu0
  %v796 = vadd.f32 %v683, %v795
  %v797 = vpop.f32.mrf.mxu0
  %798 = vmatprep.mubr.bf16.mxu0 0
  %799 = vmatmul.mubr.bf16.gmra.mxu0 %v720
  %v800 = vpop.f32.mrf.mxu0
  %v801 = vadd.f32 %v688, %v800
  %v802 = vpop.f32.mrf.mxu0
  %v803 = vpop.f32.mrf.mxu0
  %v804 = vadd.f32 %v691, %v803
  %v805 = vpop.f32.mrf.mxu0
  %806 = vmatprep.mubr.bf16.mxu0 0
  %807 = vmatmul.mubr.bf16.gmra.mxu0 %v722
  %v808 = vpop.f32.mrf.mxu0
  %v809 = vadd.f32 %v696, %v808
  %v810 = vpop.f32.mrf.mxu0
  %v811 = vpop.f32.mrf.mxu0
  %v812 = vadd.f32 %v699, %v811
  %v813 = vpop.f32.mrf.mxu0
  %814 = vmatprep.mubr.bf16.mxu0 0
  %815 = vmatmul.mubr.bf16.gmra.mxu0 %v724
  %v816 = vpop.f32.mrf.mxu0
  %v817 = vadd.f32 %v704, %v816
  %v818 = vpop.f32.mrf.mxu0
  %v819 = vpop.f32.mrf.mxu0
  %v820 = vadd.f32 %v707, %v819
  %v821 = vpop.f32.mrf.mxu0
  %822 = vdwg.mxu0
  %s823 = scalar_lea.vmem %s7, 32
  %v824 = vld [vmem:[%s823] sm:$0xff]
  %v825 = vld [vmem:[%s823 + $0x8] sm:$0xff]
  %v826 = vpack.c.bf16 %v825, %v824
  %vm836 = vcmask 1046528
  %v837 = vrot.slane %v503, 1
  %v838 = vrot.slane %v504, 1
  %v839 = vsel %vm836, %v837, %v838
  %v840 = vrot.slane %v505, 1
  %v841 = vsel %vm836, %v838, %v840
  %v842 = vrot.slane %v506, 1
  %v843 = vsel %vm836, %v840, %v842
  %v844 = vrot.slane %v507, 1
  %v845 = vsel %vm836, %v842, %v844
  %v846 = vrot.slane %v508, 1
  %v847 = vsel %vm836, %v844, %v846
  %v848 = vrot.slane %v509, 1
  %v849 = vsel %vm836, %v846, %v848
  %v850 = vrot.slane %v510, 1
  %v851 = vsel %vm836, %v848, %v850
  %v852 = vrot.slane %v514, 1
  %v853 = vsel %vm836, %v850, %v852
  %v855 = vsel %vm588, %v839, 0
  %v858 = vsel %vm588, %v841, 0
  %v861 = vsel %vm588, %v843, 0
  %v864 = vsel %vm588, %v845, 0
  %v867 = vsel %vm588, %v847, 0
  %v870 = vsel %vm588, %v849, 0
  %v873 = vsel %vm588, %v851, 0
  %v876 = vsel %vm588, %v853, 0
  %878 = vmatprep.subr.bf16.mxu0 0
  %879 = vmatpush1.bf16.msra.mxu0 0
  %880 = vmatprep.subr.bf16.mxu0 0
  %881 = vmatpush1.bf16.msra.mxu0 0
  %882 = vmatprep.subr.bf16.mxu0 0
  %883 = vmatpush1.bf16.msra.mxu0 0
  %884 = vmatprep.subr.bf16.mxu0 0
  %885 = vmatpush1.bf16.msra.mxu0 0
  %886 = vmatprep.subr.bf16.mxu0 0
  %887 = vmatpush1.bf16.msra.mxu0 0
  %888 = vmatprep.subr.bf16.mxu0 0
  %889 = vmatpush1.bf16.msra.mxu0 0
  %890 = vmatprep.subr.bf16.mxu0 0
  %891 = vmatpush1.bf16.msra.mxu0 0
  %892 = vmatprep.subr.bf16.mxu0 0
  %893 = vmatpush1.bf16.msra.mxu0 %v826
  %894 = vmatprep.subr.bf16.mxu0 0
  %895 = vmatpush2.bf16.msra.mxu0 0
  %896 = vmatprep.subr.bf16.mxu0 0
  %897 = vmatpush2.bf16.msra.mxu0 0
  %898 = vmatprep.subr.bf16.mxu0 0
  %899 = vmatpush2.bf16.msra.mxu0 0
  %900 = vmatprep.subr.bf16.mxu0 0
  %901 = vmatpush2.bf16.msra.mxu0 0
  %902 = vmatprep.subr.bf16.mxu0 0
  %903 = vmatpush2.bf16.msra.mxu0 0
  %904 = vmatprep.subr.bf16.mxu0 0
  %905 = vmatpush2.bf16.msra.mxu0 0
  %906 = vmatprep.subr.bf16.mxu0 0
  %907 = vmatpush2.bf16.msra.mxu0 0
  %908 = vmatprep.subr.bf16.mxu0 0
  %909 = vmatpush2.bf16.msra.mxu0 0
  %910 = vmatprep.mubr.bf16.mxu0 0
  %911 = vmatmul.mubr.bf16.gmra.mxu0 %v855
  %v912 = vpop.f32.mrf.mxu0
  %v913 = vadd.f32 0.0, %v912
  %v914 = vpop.f32.mrf.mxu0
  %v915 = vpop.f32.mrf.mxu0
  %v916 = vadd.f32 0.0, %v915
  %v917 = vpop.f32.mrf.mxu0
  %918 = vmatprep.mubr.bf16.mxu0 0
  %919 = vmatmul.mubr.bf16.gmra.mxu0 %v858
  %v920 = vpop.f32.mrf.mxu0
  %v921 = vadd.f32 0.0, %v920
  %v922 = vpop.f32.mrf.mxu0
  %v923 = vpop.f32.mrf.mxu0
  %v924 = vadd.f32 0.0, %v923
  %v925 = vpop.f32.mrf.mxu0
  %926 = vmatprep.mubr.bf16.mxu0 0
  %927 = vmatmul.mubr.bf16.gmra.mxu0 %v861
  %v928 = vpop.f32.mrf.mxu0
  %v929 = vadd.f32 0.0, %v928
  %v930 = vpop.f32.mrf.mxu0
  %v931 = vpop.f32.mrf.mxu0
  %v932 = vadd.f32 0.0, %v931
  %v933 = vpop.f32.mrf.mxu0
  %934 = vmatprep.mubr.bf16.mxu0 0
  %935 = vmatmul.mubr.bf16.gmra.mxu0 %v864
  %v936 = vpop.f32.mrf.mxu0
  %v937 = vadd.f32 0.0, %v936
  %v938 = vpop.f32.mrf.mxu0
  %v939 = vpop.f32.mrf.mxu0
  %v940 = vadd.f32 0.0, %v939
  %v941 = vpop.f32.mrf.mxu0
  %942 = vmatprep.mubr.bf16.mxu0 0
  %943 = vmatmul.mubr.bf16.gmra.mxu0 %v867
  %v944 = vpop.f32.mrf.mxu0
  %v945 = vadd.f32 0.0, %v944
  %v946 = vpop.f32.mrf.mxu0
  %v947 = vpop.f32.mrf.mxu0
  %v948 = vadd.f32 0.0, %v947
  %v949 = vpop.f32.mrf.mxu0
  %950 = vmatprep.mubr.bf16.mxu0 0
  %951 = vmatmul.mubr.bf16.gmra.mxu0 %v870
  %v952 = vpop.f32.mrf.mxu0
  %v953 = vadd.f32 0.0, %v952
  %v954 = vpop.f32.mrf.mxu0
  %v955 = vpop.f32.mrf.mxu0
  %v956 = vadd.f32 0.0, %v955
  %v957 = vpop.f32.mrf.mxu0
  %958 = vmatprep.mubr.bf16.mxu0 0
  %959 = vmatmul.mubr.bf16.gmra.mxu0 %v873
  %v960 = vpop.f32.mrf.mxu0
  %v961 = vadd.f32 0.0, %v960
  %v962 = vpop.f32.mrf.mxu0
  %v963 = vpop.f32.mrf.mxu0
  %v964 = vadd.f32 0.0, %v963
  %v965 = vpop.f32.mrf.mxu0
  %966 = vmatprep.mubr.bf16.mxu0 0
  %967 = vmatmul.mubr.bf16.gmra.mxu0 %v876
  %v968 = vpop.f32.mrf.mxu0
  %v969 = vadd.f32 0.0, %v968
  %v970 = vpop.f32.mrf.mxu0
  %v971 = vpop.f32.mrf.mxu0
  %v972 = vadd.f32 0.0, %v971
  %v973 = vpop.f32.mrf.mxu0
  %974 = vdwg.mxu0
  %v975 = vadd.f32 %v761, %v913
  %v976 = vadd.f32 %v764, %v916
  %v977 = vadd.f32 %v769, %v921
  %v978 = vadd.f32 %v772, %v924
  %v979 = vadd.f32 %v777, %v929
  %v980 = vadd.f32 %v780, %v932
  %v981 = vadd.f32 %v785, %v937
  %v982 = vadd.f32 %v788, %v940
  %v983 = vadd.f32 %v793, %v945
  %v984 = vadd.f32 %v796, %v948
  %v985 = vadd.f32 %v801, %v953
  %v986 = vadd.f32 %v804, %v956
  %v987 = vadd.f32 %v809, %v961
  %v988 = vadd.f32 %v812, %v964
  %v989 = vadd.f32 %v817, %v969
  %v990 = vadd.f32 %v820, %v972
  %v991 = vpack.c.bf16 %v486, %v485
  %v992 = vpack.c.bf16 %v488, %v487
  %v993 = vpack.c.bf16 %v490, %v489
  %v994 = vpack.c.bf16 %v492, %v491
  %v995 = vpack.c.bf16 %v494, %v493
  %v996 = vpack.c.bf16 %v496, %v495
  %v997 = vpack.c.bf16 %v498, %v497
  %v998 = vpack.c.bf16 %v500, %v499
  %s999 = scalar_lea.vmem %s7, 48
  %v1000 = vld [vmem:[%s999] sm:$0xff]
  %v1001 = vld [vmem:[%s999 + $0x8] sm:$0xff]
  %v1002 = vpack.c.bf16 %v1001, %v1000
  %v1004 = vsel %vm588, %v991, 0
  %v1007 = vsel %vm588, %v992, 0
  %v1010 = vsel %vm588, %v993, 0
  %v1013 = vsel %vm588, %v994, 0
  %v1016 = vsel %vm588, %v995, 0
  %v1019 = vsel %vm588, %v996, 0
  %v1022 = vsel %vm588, %v997, 0
  %v1025 = vsel %vm588, %v998, 0
  %1027 = vmatprep.subr.bf16.mxu0 0
  %1028 = vmatpush1.bf16.msra.mxu0 0
  %1029 = vmatprep.subr.bf16.mxu0 0
  %1030 = vmatpush1.bf16.msra.mxu0 0
  %1031 = vmatprep.subr.bf16.mxu0 0
  %1032 = vmatpush1.bf16.msra.mxu0 0
  %1033 = vmatprep.subr.bf16.mxu0 0
  %1034 = vmatpush1.bf16.msra.mxu0 0
  %1035 = vmatprep.subr.bf16.mxu0 0
  %1036 = vmatpush1.bf16.msra.mxu0 0
  %1037 = vmatprep.subr.bf16.mxu0 0
  %1038 = vmatpush1.bf16.msra.mxu0 0
  %1039 = vmatprep.subr.bf16.mxu0 0
  %1040 = vmatpush1.bf16.msra.mxu0 0
  %1041 = vmatprep.subr.bf16.mxu0 0
  %1042 = vmatpush1.bf16.msra.mxu0 %v1002
  %1043 = vmatprep.subr.bf16.mxu0 0
  %1044 = vmatpush2.bf16.msra.mxu0 0
  %1045 = vmatprep.subr.bf16.mxu0 0
  %1046 = vmatpush2.bf16.msra.mxu0 0
  %1047 = vmatprep.subr.bf16.mxu0 0
  %1048 = vmatpush2.bf16.msra.mxu0 0
  %1049 = vmatprep.subr.bf16.mxu0 0
  %1050 = vmatpush2.bf16.msra.mxu0 0
  %1051 = vmatprep.subr.bf16.mxu0 0
  %1052 = vmatpush2.bf16.msra.mxu0 0
  %1053 = vmatprep.subr.bf16.mxu0 0
  %1054 = vmatpush2.bf16.msra.mxu0 0
  %1055 = vmatprep.subr.bf16.mxu0 0
  %1056 = vmatpush2.bf16.msra.mxu0 0
  %1057 = vmatprep.subr.bf16.mxu0 0
  %1058 = vmatpush2.bf16.msra.mxu0 0
  %1059 = vmatprep.mubr.bf16.mxu0 0
  %1060 = vmatmul.mubr.bf16.gmra.mxu0 %v1004
  %v1061 = vpop.f32.mrf.mxu0
  %v1062 = vadd.f32 0.0, %v1061
  %v1063 = vpop.f32.mrf.mxu0
  %v1064 = vpop.f32.mrf.mxu0
  %v1065 = vadd.f32 0.0, %v1064
  %v1066 = vpop.f32.mrf.mxu0
  %1067 = vmatprep.mubr.bf16.mxu0 0
  %1068 = vmatmul.mubr.bf16.gmra.mxu0 %v1007
  %v1069 = vpop.f32.mrf.mxu0
  %v1070 = vadd.f32 0.0, %v1069
  %v1071 = vpop.f32.mrf.mxu0
  %v1072 = vpop.f32.mrf.mxu0
  %v1073 = vadd.f32 0.0, %v1072
  %v1074 = vpop.f32.mrf.mxu0
  %1075 = vmatprep.mubr.bf16.mxu0 0
  %1076 = vmatmul.mubr.bf16.gmra.mxu0 %v1010
  %v1077 = vpop.f32.mrf.mxu0
  %v1078 = vadd.f32 0.0, %v1077
  %v1079 = vpop.f32.mrf.mxu0
  %v1080 = vpop.f32.mrf.mxu0
  %v1081 = vadd.f32 0.0, %v1080
  %v1082 = vpop.f32.mrf.mxu0
  %1083 = vmatprep.mubr.bf16.mxu0 0
  %1084 = vmatmul.mubr.bf16.gmra.mxu0 %v1013
  %v1085 = vpop.f32.mrf.mxu0
  %v1086 = vadd.f32 0.0, %v1085
  %v1087 = vpop.f32.mrf.mxu0
  %v1088 = vpop.f32.mrf.mxu0
  %v1089 = vadd.f32 0.0, %v1088
  %v1090 = vpop.f32.mrf.mxu0
  %1091 = vmatprep.mubr.bf16.mxu0 0
  %1092 = vmatmul.mubr.bf16.gmra.mxu0 %v1016
  %v1093 = vpop.f32.mrf.mxu0
  %v1094 = vadd.f32 0.0, %v1093
  %v1095 = vpop.f32.mrf.mxu0
  %v1096 = vpop.f32.mrf.mxu0
  %v1097 = vadd.f32 0.0, %v1096
  %v1098 = vpop.f32.mrf.mxu0
  %1099 = vmatprep.mubr.bf16.mxu0 0
  %1100 = vmatmul.mubr.bf16.gmra.mxu0 %v1019
  %v1101 = vpop.f32.mrf.mxu0
  %v1102 = vadd.f32 0.0, %v1101
  %v1103 = vpop.f32.mrf.mxu0
  %v1104 = vpop.f32.mrf.mxu0
  %v1105 = vadd.f32 0.0, %v1104
  %v1106 = vpop.f32.mrf.mxu0
  %1107 = vmatprep.mubr.bf16.mxu0 0
  %1108 = vmatmul.mubr.bf16.gmra.mxu0 %v1022
  %v1109 = vpop.f32.mrf.mxu0
  %v1110 = vadd.f32 0.0, %v1109
  %v1111 = vpop.f32.mrf.mxu0
  %v1112 = vpop.f32.mrf.mxu0
  %v1113 = vadd.f32 0.0, %v1112
  %v1114 = vpop.f32.mrf.mxu0
  %1115 = vmatprep.mubr.bf16.mxu0 0
  %1116 = vmatmul.mubr.bf16.gmra.mxu0 %v1025
  %v1117 = vpop.f32.mrf.mxu0
  %v1118 = vadd.f32 0.0, %v1117
  %v1119 = vpop.f32.mrf.mxu0
  %v1120 = vpop.f32.mrf.mxu0
  %v1121 = vadd.f32 0.0, %v1120
  %v1122 = vpop.f32.mrf.mxu0
  %1123 = vdwg.mxu0
  %v1124 = vadd.f32 %v975, %v1062
  %v1125 = vadd.f32 %v976, %v1065
  %v1126 = vadd.f32 %v977, %v1070
  %v1127 = vadd.f32 %v978, %v1073
  %v1128 = vadd.f32 %v979, %v1078
  %v1129 = vadd.f32 %v980, %v1081
  %v1130 = vadd.f32 %v981, %v1086
  %v1131 = vadd.f32 %v982, %v1089
  %v1132 = vadd.f32 %v983, %v1094
  %v1133 = vadd.f32 %v984, %v1097
  %v1134 = vadd.f32 %v985, %v1102
  %v1135 = vadd.f32 %v986, %v1105
  %v1136 = vadd.f32 %v987, %v1110
  %v1137 = vadd.f32 %v988, %v1113
  %v1138 = vadd.f32 %v989, %v1118
  %v1139 = vadd.f32 %v990, %v1121
  %v1140 = vpack.c.bf16 %v501, %v501
  %s1141 = scalar_lea.vmem %s7, 64
  %v1142 = vld [vmem:[%s1141] sm:$0xff]
  %v1143 = vld [vmem:[%s1141 + $0x8] sm:$0xff]
  %v1144 = vpack.c.bf16 %v1143, %v1142
  %v1145 = vshrl.u32 %v991, 16
  %v1147 = vshll.u32 %v991, 16
  %v1149 = vrot.slane %v1147, 1
  %v1150 = vor.u32 %v1145, %v1149
  %v1151 = vshll.u32 %v992, 16
  %v1153 = vrot.slane %v1151, 1
  %v1154 = vsel %vm519, %v1150, %v1153
  %v1155 = vshrl.u32 %v992, 16
  %v1157 = vor.u32 %v1155, %v1153
  %v1158 = vshll.u32 %v993, 16
  %v1160 = vrot.slane %v1158, 1
  %v1161 = vsel %vm519, %v1157, %v1160
  %v1162 = vshrl.u32 %v993, 16
  %v1164 = vor.u32 %v1162, %v1160
  %v1165 = vshll.u32 %v994, 16
  %v1167 = vrot.slane %v1165, 1
  %v1168 = vsel %vm519, %v1164, %v1167
  %v1169 = vshrl.u32 %v994, 16
  %v1171 = vor.u32 %v1169, %v1167
  %v1172 = vshll.u32 %v995, 16
  %v1174 = vrot.slane %v1172, 1
  %v1175 = vsel %vm519, %v1171, %v1174
  %v1176 = vshrl.u32 %v995, 16
  %v1178 = vor.u32 %v1176, %v1174
  %v1179 = vshll.u32 %v996, 16
  %v1181 = vrot.slane %v1179, 1
  %v1182 = vsel %vm519, %v1178, %v1181
  %v1183 = vshrl.u32 %v996, 16
  %v1185 = vor.u32 %v1183, %v1181
  %v1186 = vshll.u32 %v997, 16
  %v1188 = vrot.slane %v1186, 1
  %v1189 = vsel %vm519, %v1185, %v1188
  %v1190 = vshrl.u32 %v997, 16
  %v1192 = vor.u32 %v1190, %v1188
  %v1193 = vshll.u32 %v998, 16
  %v1195 = vrot.slane %v1193, 1
  %v1196 = vsel %vm519, %v1192, %v1195
  %v1197 = vshrl.u32 %v998, 16
  %v1199 = vor.u32 %v1197, %v1195
  %v1201 = vshll.u32 %v1140, 16
  %v1203 = vrot.slane %v1201, 1
  %v1204 = vsel %vm519, %v1199, %v1203
  %v1206 = vsel %vm588, %v1154, 0
  %v1209 = vsel %vm588, %v1161, 0
  %v1212 = vsel %vm588, %v1168, 0
  %v1215 = vsel %vm588, %v1175, 0
  %v1218 = vsel %vm588, %v1182, 0
  %v1221 = vsel %vm588, %v1189, 0
  %v1224 = vsel %vm588, %v1196, 0
  %v1227 = vsel %vm588, %v1204, 0
  %1229 = vmatprep.subr.bf16.mxu0 0
  %1230 = vmatpush1.bf16.msra.mxu0 0
  %1231 = vmatprep.subr.bf16.mxu0 0
  %1232 = vmatpush1.bf16.msra.mxu0 0
  %1233 = vmatprep.subr.bf16.mxu0 0
  %1234 = vmatpush1.bf16.msra.mxu0 0
  %1235 = vmatprep.subr.bf16.mxu0 0
  %1236 = vmatpush1.bf16.msra.mxu0 0
  %1237 = vmatprep.subr.bf16.mxu0 0
  %1238 = vmatpush1.bf16.msra.mxu0 0
  %1239 = vmatprep.subr.bf16.mxu0 0
  %1240 = vmatpush1.bf16.msra.mxu0 0
  %1241 = vmatprep.subr.bf16.mxu0 0
  %1242 = vmatpush1.bf16.msra.mxu0 0
  %1243 = vmatprep.subr.bf16.mxu0 0
  %1244 = vmatpush1.bf16.msra.mxu0 %v1144
  %1245 = vmatprep.subr.bf16.mxu0 0
  %1246 = vmatpush2.bf16.msra.mxu0 0
  %1247 = vmatprep.subr.bf16.mxu0 0
  %1248 = vmatpush2.bf16.msra.mxu0 0
  %1249 = vmatprep.subr.bf16.mxu0 0
  %1250 = vmatpush2.bf16.msra.mxu0 0
  %1251 = vmatprep.subr.bf16.mxu0 0
  %1252 = vmatpush2.bf16.msra.mxu0 0
  %1253 = vmatprep.subr.bf16.mxu0 0
  %1254 = vmatpush2.bf16.msra.mxu0 0
  %1255 = vmatprep.subr.bf16.mxu0 0
  %1256 = vmatpush2.bf16.msra.mxu0 0
  %1257 = vmatprep.subr.bf16.mxu0 0
  %1258 = vmatpush2.bf16.msra.mxu0 0
  %1259 = vmatprep.subr.bf16.mxu0 0
  %1260 = vmatpush2.bf16.msra.mxu0 0
  %1261 = vmatprep.mubr.bf16.mxu0 0
  %1262 = vmatmul.mubr.bf16.gmra.mxu0 %v1206
  %v1263 = vpop.f32.mrf.mxu0
  %v1264 = vadd.f32 0.0, %v1263
  %v1265 = vpop.f32.mrf.mxu0
  %v1266 = vpop.f32.mrf.mxu0
  %v1267 = vadd.f32 0.0, %v1266
  %v1268 = vpop.f32.mrf.mxu0
  %1269 = vmatprep.mubr.bf16.mxu0 0
  %1270 = vmatmul.mubr.bf16.gmra.mxu0 %v1209
  %v1271 = vpop.f32.mrf.mxu0
  %v1272 = vadd.f32 0.0, %v1271
  %v1273 = vpop.f32.mrf.mxu0
  %v1274 = vpop.f32.mrf.mxu0
  %v1275 = vadd.f32 0.0, %v1274
  %v1276 = vpop.f32.mrf.mxu0
  %1277 = vmatprep.mubr.bf16.mxu0 0
  %1278 = vmatmul.mubr.bf16.gmra.mxu0 %v1212
  %v1279 = vpop.f32.mrf.mxu0
  %v1280 = vadd.f32 0.0, %v1279
  %v1281 = vpop.f32.mrf.mxu0
  %v1282 = vpop.f32.mrf.mxu0
  %v1283 = vadd.f32 0.0, %v1282
  %v1284 = vpop.f32.mrf.mxu0
  %1285 = vmatprep.mubr.bf16.mxu0 0
  %1286 = vmatmul.mubr.bf16.gmra.mxu0 %v1215
  %v1287 = vpop.f32.mrf.mxu0
  %v1288 = vadd.f32 0.0, %v1287
  %v1289 = vpop.f32.mrf.mxu0
  %v1290 = vpop.f32.mrf.mxu0
  %v1291 = vadd.f32 0.0, %v1290
  %v1292 = vpop.f32.mrf.mxu0
  %1293 = vmatprep.mubr.bf16.mxu0 0
  %1294 = vmatmul.mubr.bf16.gmra.mxu0 %v1218
  %v1295 = vpop.f32.mrf.mxu0
  %v1296 = vadd.f32 0.0, %v1295
  %v1297 = vpop.f32.mrf.mxu0
  %v1298 = vpop.f32.mrf.mxu0
  %v1299 = vadd.f32 0.0, %v1298
  %v1300 = vpop.f32.mrf.mxu0
  %1301 = vmatprep.mubr.bf16.mxu0 0
  %1302 = vmatmul.mubr.bf16.gmra.mxu0 %v1221
  %v1303 = vpop.f32.mrf.mxu0
  %v1304 = vadd.f32 0.0, %v1303
  %v1305 = vpop.f32.mrf.mxu0
  %v1306 = vpop.f32.mrf.mxu0
  %v1307 = vadd.f32 0.0, %v1306
  %v1308 = vpop.f32.mrf.mxu0
  %1309 = vmatprep.mubr.bf16.mxu0 0
  %1310 = vmatmul.mubr.bf16.gmra.mxu0 %v1224
  %v1311 = vpop.f32.mrf.mxu0
  %v1312 = vadd.f32 0.0, %v1311
  %v1313 = vpop.f32.mrf.mxu0
  %v1314 = vpop.f32.mrf.mxu0
  %v1315 = vadd.f32 0.0, %v1314
  %v1316 = vpop.f32.mrf.mxu0
  %1317 = vmatprep.mubr.bf16.mxu0 0
  %1318 = vmatmul.mubr.bf16.gmra.mxu0 %v1227
  %v1319 = vpop.f32.mrf.mxu0
  %v1320 = vadd.f32 0.0, %v1319
  %v1321 = vpop.f32.mrf.mxu0
  %v1322 = vpop.f32.mrf.mxu0
  %v1323 = vadd.f32 0.0, %v1322
  %v1324 = vpop.f32.mrf.mxu0
  %1325 = vdwg.mxu0
  %v1326 = vadd.f32 %v1124, %v1264
  %v1327 = vadd.f32 %v1125, %v1267
  %v1328 = vadd.f32 %v1126, %v1272
  %v1329 = vadd.f32 %v1127, %v1275
  %v1330 = vadd.f32 %v1128, %v1280
  %v1331 = vadd.f32 %v1129, %v1283
  %v1332 = vadd.f32 %v1130, %v1288
  %v1333 = vadd.f32 %v1131, %v1291
  %v1334 = vadd.f32 %v1132, %v1296
  %v1335 = vadd.f32 %v1133, %v1299
  %v1336 = vadd.f32 %v1134, %v1304
  %v1337 = vadd.f32 %v1135, %v1307
  %v1338 = vadd.f32 %v1136, %v1312
  %v1339 = vadd.f32 %v1137, %v1315
  %v1340 = vadd.f32 %v1138, %v1320
  %v1341 = vadd.f32 %v1139, %v1323
  %s1342 = scalar_lea.vmem %s7, 80
  %v1343 = vld [vmem:[%s1342] sm:$0xff]
  %v1344 = vld [vmem:[%s1342 + $0x8] sm:$0xff]
  %v1345 = vpack.c.bf16 %v1344, %v1343
  %v1355 = vrot.slane %v991, 1
  %v1356 = vrot.slane %v992, 1
  %v1357 = vsel %vm836, %v1355, %v1356
  %v1358 = vrot.slane %v993, 1
  %v1359 = vsel %vm836, %v1356, %v1358
  %v1360 = vrot.slane %v994, 1
  %v1361 = vsel %vm836, %v1358, %v1360
  %v1362 = vrot.slane %v995, 1
  %v1363 = vsel %vm836, %v1360, %v1362
  %v1364 = vrot.slane %v996, 1
  %v1365 = vsel %vm836, %v1362, %v1364
  %v1366 = vrot.slane %v997, 1
  %v1367 = vsel %vm836, %v1364, %v1366
  %v1368 = vrot.slane %v998, 1
  %v1369 = vsel %vm836, %v1366, %v1368
  %v1370 = vrot.slane %v1140, 1
  %v1371 = vsel %vm836, %v1368, %v1370
  %v1373 = vsel %vm588, %v1357, 0
  %v1376 = vsel %vm588, %v1359, 0
  %v1379 = vsel %vm588, %v1361, 0
  %v1382 = vsel %vm588, %v1363, 0
  %v1385 = vsel %vm588, %v1365, 0
  %v1388 = vsel %vm588, %v1367, 0
  %v1391 = vsel %vm588, %v1369, 0
  %v1394 = vsel %vm588, %v1371, 0
  %1396 = vmatprep.subr.bf16.mxu0 0
  %1397 = vmatpush1.bf16.msra.mxu0 0
  %1398 = vmatprep.subr.bf16.mxu0 0
  %1399 = vmatpush1.bf16.msra.mxu0 0
  %1400 = vmatprep.subr.bf16.mxu0 0
  %1401 = vmatpush1.bf16.msra.mxu0 0
  %1402 = vmatprep.subr.bf16.mxu0 0
  %1403 = vmatpush1.bf16.msra.mxu0 0
  %1404 = vmatprep.subr.bf16.mxu0 0
  %1405 = vmatpush1.bf16.msra.mxu0 0
  %1406 = vmatprep.subr.bf16.mxu0 0
  %1407 = vmatpush1.bf16.msra.mxu0 0
  %1408 = vmatprep.subr.bf16.mxu0 0
  %1409 = vmatpush1.bf16.msra.mxu0 0
  %1410 = vmatprep.subr.bf16.mxu0 0
  %1411 = vmatpush1.bf16.msra.mxu0 %v1345
  %1412 = vmatprep.subr.bf16.mxu0 0
  %1413 = vmatpush2.bf16.msra.mxu0 0
  %1414 = vmatprep.subr.bf16.mxu0 0
  %1415 = vmatpush2.bf16.msra.mxu0 0
  %1416 = vmatprep.subr.bf16.mxu0 0
  %1417 = vmatpush2.bf16.msra.mxu0 0
  %1418 = vmatprep.subr.bf16.mxu0 0
  %1419 = vmatpush2.bf16.msra.mxu0 0
  %1420 = vmatprep.subr.bf16.mxu0 0
  %1421 = vmatpush2.bf16.msra.mxu0 0
  %1422 = vmatprep.subr.bf16.mxu0 0
  %1423 = vmatpush2.bf16.msra.mxu0 0
  %1424 = vmatprep.subr.bf16.mxu0 0
  %1425 = vmatpush2.bf16.msra.mxu0 0
  %1426 = vmatprep.subr.bf16.mxu0 0
  %1427 = vmatpush2.bf16.msra.mxu0 0
  %1428 = vmatprep.mubr.bf16.mxu0 0
  %1429 = vmatmul.mubr.bf16.gmra.mxu0 %v1373
  %v1430 = vpop.f32.mrf.mxu0
  %v1431 = vadd.f32 0.0, %v1430
  %v1432 = vpop.f32.mrf.mxu0
  %v1433 = vpop.f32.mrf.mxu0
  %v1434 = vadd.f32 0.0, %v1433
  %v1435 = vpop.f32.mrf.mxu0
  %1436 = vmatprep.mubr.bf16.mxu0 0
  %1437 = vmatmul.mubr.bf16.gmra.mxu0 %v1376
  %v1438 = vpop.f32.mrf.mxu0
  %v1439 = vadd.f32 0.0, %v1438
  %v1440 = vpop.f32.mrf.mxu0
  %v1441 = vpop.f32.mrf.mxu0
  %v1442 = vadd.f32 0.0, %v1441
  %v1443 = vpop.f32.mrf.mxu0
  %1444 = vmatprep.mubr.bf16.mxu0 0
  %1445 = vmatmul.mubr.bf16.gmra.mxu0 %v1379
  %v1446 = vpop.f32.mrf.mxu0
  %v1447 = vadd.f32 0.0, %v1446
  %v1448 = vpop.f32.mrf.mxu0
  %v1449 = vpop.f32.mrf.mxu0
  %v1450 = vadd.f32 0.0, %v1449
  %v1451 = vpop.f32.mrf.mxu0
  %1452 = vmatprep.mubr.bf16.mxu0 0
  %1453 = vmatmul.mubr.bf16.gmra.mxu0 %v1382
  %v1454 = vpop.f32.mrf.mxu0
  %v1455 = vadd.f32 0.0, %v1454
  %v1456 = vpop.f32.mrf.mxu0
  %v1457 = vpop.f32.mrf.mxu0
  %v1458 = vadd.f32 0.0, %v1457
  %v1459 = vpop.f32.mrf.mxu0
  %1460 = vmatprep.mubr.bf16.mxu0 0
  %1461 = vmatmul.mubr.bf16.gmra.mxu0 %v1385
  %v1462 = vpop.f32.mrf.mxu0
  %v1463 = vadd.f32 0.0, %v1462
  %v1464 = vpop.f32.mrf.mxu0
  %v1465 = vpop.f32.mrf.mxu0
  %v1466 = vadd.f32 0.0, %v1465
  %v1467 = vpop.f32.mrf.mxu0
  %1468 = vmatprep.mubr.bf16.mxu0 0
  %1469 = vmatmul.mubr.bf16.gmra.mxu0 %v1388
  %v1470 = vpop.f32.mrf.mxu0
  %v1471 = vadd.f32 0.0, %v1470
  %v1472 = vpop.f32.mrf.mxu0
  %v1473 = vpop.f32.mrf.mxu0
  %v1474 = vadd.f32 0.0, %v1473
  %v1475 = vpop.f32.mrf.mxu0
  %1476 = vmatprep.mubr.bf16.mxu0 0
  %1477 = vmatmul.mubr.bf16.gmra.mxu0 %v1391
  %v1478 = vpop.f32.mrf.mxu0
  %v1479 = vadd.f32 0.0, %v1478
  %v1480 = vpop.f32.mrf.mxu0
  %v1481 = vpop.f32.mrf.mxu0
  %v1482 = vadd.f32 0.0, %v1481
  %v1483 = vpop.f32.mrf.mxu0
  %1484 = vmatprep.mubr.bf16.mxu0 0
  %1485 = vmatmul.mubr.bf16.gmra.mxu0 %v1394
  %v1486 = vpop.f32.mrf.mxu0
  %v1487 = vadd.f32 0.0, %v1486
  %v1488 = vpop.f32.mrf.mxu0
  %v1489 = vpop.f32.mrf.mxu0
  %v1490 = vadd.f32 0.0, %v1489
  %v1491 = vpop.f32.mrf.mxu0
  %1492 = vdwg.mxu0
  %v1493 = vadd.f32 %v1326, %v1431
  %v1494 = vadd.f32 %v1327, %v1434
  %v1495 = vadd.f32 %v1328, %v1439
  %v1496 = vadd.f32 %v1329, %v1442
  %v1497 = vadd.f32 %v1330, %v1447
  %v1498 = vadd.f32 %v1331, %v1450
  %v1499 = vadd.f32 %v1332, %v1455
  %v1500 = vadd.f32 %v1333, %v1458
  %v1501 = vadd.f32 %v1334, %v1463
  %v1502 = vadd.f32 %v1335, %v1466
  %v1503 = vadd.f32 %v1336, %v1471
  %v1504 = vadd.f32 %v1337, %v1474
  %v1505 = vadd.f32 %v1338, %v1479
  %v1506 = vadd.f32 %v1339, %v1482
  %v1507 = vadd.f32 %v1340, %v1487
  %v1508 = vadd.f32 %v1341, %v1490
  %v1509 = vpack.c.bf16 %v501, %v500
  %s1510 = scalar_lea.vmem %s7, 96
  %v1511 = vld [vmem:[%s1510] sm:$0xff]
  %v1512 = vld [vmem:[%s1510 + $0x8] sm:$0xff]
  %v1513 = vpack.c.bf16 %v1512, %v1511
  %v1515 = vsel %vm588, %v1509, 0
  %1517 = vmatprep.subr.bf16.mxu0 0
  %1518 = vmatpush1.bf16.msra.mxu0 0
  %1519 = vmatprep.subr.bf16.mxu0 0
  %1520 = vmatpush1.bf16.msra.mxu0 0
  %1521 = vmatprep.subr.bf16.mxu0 0
  %1522 = vmatpush1.bf16.msra.mxu0 0
  %1523 = vmatprep.subr.bf16.mxu0 0
  %1524 = vmatpush1.bf16.msra.mxu0 0
  %1525 = vmatprep.subr.bf16.mxu0 0
  %1526 = vmatpush1.bf16.msra.mxu0 0
  %1527 = vmatprep.subr.bf16.mxu0 0
  %1528 = vmatpush1.bf16.msra.mxu0 0
  %1529 = vmatprep.subr.bf16.mxu0 0
  %1530 = vmatpush1.bf16.msra.mxu0 0
  %1531 = vmatprep.subr.bf16.mxu0 0
  %1532 = vmatpush1.bf16.msra.mxu0 %v1513
  %1533 = vmatprep.subr.bf16.mxu0 0
  %1534 = vmatpush2.bf16.msra.mxu0 0
  %1535 = vmatprep.subr.bf16.mxu0 0
  %1536 = vmatpush2.bf16.msra.mxu0 0
  %1537 = vmatprep.subr.bf16.mxu0 0
  %1538 = vmatpush2.bf16.msra.mxu0 0
  %1539 = vmatprep.subr.bf16.mxu0 0
  %1540 = vmatpush2.bf16.msra.mxu0 0
  %1541 = vmatprep.subr.bf16.mxu0 0
  %1542 = vmatpush2.bf16.msra.mxu0 0
  %1543 = vmatprep.subr.bf16.mxu0 0
  %1544 = vmatpush2.bf16.msra.mxu0 0
  %1545 = vmatprep.subr.bf16.mxu0 0
  %1546 = vmatpush2.bf16.msra.mxu0 0
  %1547 = vmatprep.subr.bf16.mxu0 0
  %1548 = vmatpush2.bf16.msra.mxu0 0
  %1549 = vmatprep.mubr.bf16.mxu0 0
  %1550 = vmatmul.mubr.bf16.gmra.mxu0 %v712
  %v1551 = vpop.f32.mrf.mxu0
  %v1552 = vadd.f32 0.0, %v1551
  %v1553 = vpop.f32.mrf.mxu0
  %v1554 = vpop.f32.mrf.mxu0
  %v1555 = vadd.f32 0.0, %v1554
  %v1556 = vpop.f32.mrf.mxu0
  %1557 = vmatprep.mubr.bf16.mxu0 0
  %1558 = vmatmul.mubr.bf16.gmra.mxu0 %v714
  %v1559 = vpop.f32.mrf.mxu0
  %v1560 = vadd.f32 0.0, %v1559
  %v1561 = vpop.f32.mrf.mxu0
  %v1562 = vpop.f32.mrf.mxu0
  %v1563 = vadd.f32 0.0, %v1562
  %v1564 = vpop.f32.mrf.mxu0
  %1565 = vmatprep.mubr.bf16.mxu0 0
  %1566 = vmatmul.mubr.bf16.gmra.mxu0 %v716
  %v1567 = vpop.f32.mrf.mxu0
  %v1568 = vadd.f32 0.0, %v1567
  %v1569 = vpop.f32.mrf.mxu0
  %v1570 = vpop.f32.mrf.mxu0
  %v1571 = vadd.f32 0.0, %v1570
  %v1572 = vpop.f32.mrf.mxu0
  %1573 = vmatprep.mubr.bf16.mxu0 0
  %1574 = vmatmul.mubr.bf16.gmra.mxu0 %v718
  %v1575 = vpop.f32.mrf.mxu0
  %v1576 = vadd.f32 0.0, %v1575
  %v1577 = vpop.f32.mrf.mxu0
  %v1578 = vpop.f32.mrf.mxu0
  %v1579 = vadd.f32 0.0, %v1578
  %v1580 = vpop.f32.mrf.mxu0
  %1581 = vmatprep.mubr.bf16.mxu0 0
  %1582 = vmatmul.mubr.bf16.gmra.mxu0 %v720
  %v1583 = vpop.f32.mrf.mxu0
  %v1584 = vadd.f32 0.0, %v1583
  %v1585 = vpop.f32.mrf.mxu0
  %v1586 = vpop.f32.mrf.mxu0
  %v1587 = vadd.f32 0.0, %v1586
  %v1588 = vpop.f32.mrf.mxu0
  %1589 = vmatprep.mubr.bf16.mxu0 0
  %1590 = vmatmul.mubr.bf16.gmra.mxu0 %v722
  %v1591 = vpop.f32.mrf.mxu0
  %v1592 = vadd.f32 0.0, %v1591
  %v1593 = vpop.f32.mrf.mxu0
  %v1594 = vpop.f32.mrf.mxu0
  %v1595 = vadd.f32 0.0, %v1594
  %v1596 = vpop.f32.mrf.mxu0
  %1597 = vmatprep.mubr.bf16.mxu0 0
  %1598 = vmatmul.mubr.bf16.gmra.mxu0 %v724
  %v1599 = vpop.f32.mrf.mxu0
  %v1600 = vadd.f32 0.0, %v1599
  %v1601 = vpop.f32.mrf.mxu0
  %v1602 = vpop.f32.mrf.mxu0
  %v1603 = vadd.f32 0.0, %v1602
  %v1604 = vpop.f32.mrf.mxu0
  %1605 = vmatprep.mubr.bf16.mxu0 0
  %1606 = vmatmul.mubr.bf16.gmra.mxu0 %v1515
  %v1607 = vpop.f32.mrf.mxu0
  %v1608 = vadd.f32 0.0, %v1607
  %v1609 = vpop.f32.mrf.mxu0
  %v1610 = vpop.f32.mrf.mxu0
  %v1611 = vadd.f32 0.0, %v1610
  %v1612 = vpop.f32.mrf.mxu0
  %1613 = vdwg.mxu0
  %v1614 = vadd.f32 %v1493, %v1552
  %v1615 = vadd.f32 %v1494, %v1555
  %v1616 = vadd.f32 %v1495, %v1560
  %v1617 = vadd.f32 %v1496, %v1563
  %v1618 = vadd.f32 %v1497, %v1568
  %v1619 = vadd.f32 %v1498, %v1571
  %v1620 = vadd.f32 %v1499, %v1576
  %v1621 = vadd.f32 %v1500, %v1579
  %v1622 = vadd.f32 %v1501, %v1584
  %v1623 = vadd.f32 %v1502, %v1587
  %v1624 = vadd.f32 %v1503, %v1592
  %v1625 = vadd.f32 %v1504, %v1595
  %v1626 = vadd.f32 %v1505, %v1600
  %v1627 = vadd.f32 %v1506, %v1603
  %v1628 = vadd.f32 %v1507, %v1608
  %v1629 = vadd.f32 %v1508, %v1611
  %v1630 = vpack.c.bf16 %v502, %v502
  %s1631 = scalar_lea.vmem %s7, 112
  %v1632 = vld [vmem:[%s1631] sm:$0xff]
  %v1633 = vld [vmem:[%s1631 + $0x8] sm:$0xff]
  %v1634 = vpack.c.bf16 %v1633, %v1632
  %v1635 = vshll.u32 %v1509, 16
  %v1637 = vrot.slane %v1635, 1
  %v1638 = vsel %vm519, %v582, %v1637
  %v1639 = vshrl.u32 %v1509, 16
  %v1641 = vor.u32 %v1639, %v1637
  %v1643 = vshll.u32 %v1630, 16
  %v1645 = vrot.slane %v1643, 1
  %v1646 = vsel %vm519, %v1641, %v1645
  %v1648 = vsel %vm588, %v1638, 0
  %v1651 = vsel %vm588, %v1646, 0
  %1653 = vmatprep.subr.bf16.mxu0 0
  %1654 = vmatpush1.bf16.msra.mxu0 0
  %1655 = vmatprep.subr.bf16.mxu0 0
  %1656 = vmatpush1.bf16.msra.mxu0 0
  %1657 = vmatprep.subr.bf16.mxu0 0
  %1658 = vmatpush1.bf16.msra.mxu0 0
  %1659 = vmatprep.subr.bf16.mxu0 0
  %1660 = vmatpush1.bf16.msra.mxu0 0
  %1661 = vmatprep.subr.bf16.mxu0 0
  %1662 = vmatpush1.bf16.msra.mxu0 0
  %1663 = vmatprep.subr.bf16.mxu0 0
  %1664 = vmatpush1.bf16.msra.mxu0 0
  %1665 = vmatprep.subr.bf16.mxu0 0
  %1666 = vmatpush1.bf16.msra.mxu0 0
  %1667 = vmatprep.subr.bf16.mxu0 0
  %1668 = vmatpush1.bf16.msra.mxu0 %v1634
  %1669 = vmatprep.subr.bf16.mxu0 0
  %1670 = vmatpush2.bf16.msra.mxu0 0
  %1671 = vmatprep.subr.bf16.mxu0 0
  %1672 = vmatpush2.bf16.msra.mxu0 0
  %1673 = vmatprep.subr.bf16.mxu0 0
  %1674 = vmatpush2.bf16.msra.mxu0 0
  %1675 = vmatprep.subr.bf16.mxu0 0
  %1676 = vmatpush2.bf16.msra.mxu0 0
  %1677 = vmatprep.subr.bf16.mxu0 0
  %1678 = vmatpush2.bf16.msra.mxu0 0
  %1679 = vmatprep.subr.bf16.mxu0 0
  %1680 = vmatpush2.bf16.msra.mxu0 0
  %1681 = vmatprep.subr.bf16.mxu0 0
  %1682 = vmatpush2.bf16.msra.mxu0 0
  %1683 = vmatprep.subr.bf16.mxu0 0
  %1684 = vmatpush2.bf16.msra.mxu0 0
  %1685 = vmatprep.mubr.bf16.mxu0 0
  %1686 = vmatmul.mubr.bf16.gmra.mxu0 %v593
  %v1687 = vpop.f32.mrf.mxu0
  %v1688 = vadd.f32 0.0, %v1687
  %v1689 = vpop.f32.mrf.mxu0
  %v1690 = vpop.f32.mrf.mxu0
  %v1691 = vadd.f32 0.0, %v1690
  %v1692 = vpop.f32.mrf.mxu0
  %1693 = vmatprep.mubr.bf16.mxu0 0
  %1694 = vmatmul.mubr.bf16.gmra.mxu0 %v596
  %v1695 = vpop.f32.mrf.mxu0
  %v1696 = vadd.f32 0.0, %v1695
  %v1697 = vpop.f32.mrf.mxu0
  %v1698 = vpop.f32.mrf.mxu0
  %v1699 = vadd.f32 0.0, %v1698
  %v1700 = vpop.f32.mrf.mxu0
  %1701 = vmatprep.mubr.bf16.mxu0 0
  %1702 = vmatmul.mubr.bf16.gmra.mxu0 %v599
  %v1703 = vpop.f32.mrf.mxu0
  %v1704 = vadd.f32 0.0, %v1703
  %v1705 = vpop.f32.mrf.mxu0
  %v1706 = vpop.f32.mrf.mxu0
  %v1707 = vadd.f32 0.0, %v1706
  %v1708 = vpop.f32.mrf.mxu0
  %1709 = vmatprep.mubr.bf16.mxu0 0
  %1710 = vmatmul.mubr.bf16.gmra.mxu0 %v602
  %v1711 = vpop.f32.mrf.mxu0
  %v1712 = vadd.f32 0.0, %v1711
  %v1713 = vpop.f32.mrf.mxu0
  %v1714 = vpop.f32.mrf.mxu0
  %v1715 = vadd.f32 0.0, %v1714
  %v1716 = vpop.f32.mrf.mxu0
  %1717 = vmatprep.mubr.bf16.mxu0 0
  %1718 = vmatmul.mubr.bf16.gmra.mxu0 %v605
  %v1719 = vpop.f32.mrf.mxu0
  %v1720 = vadd.f32 0.0, %v1719
  %v1721 = vpop.f32.mrf.mxu0
  %v1722 = vpop.f32.mrf.mxu0
  %v1723 = vadd.f32 0.0, %v1722
  %v1724 = vpop.f32.mrf.mxu0
  %1725 = vmatprep.mubr.bf16.mxu0 0
  %1726 = vmatmul.mubr.bf16.gmra.mxu0 %v608
  %v1727 = vpop.f32.mrf.mxu0
  %v1728 = vadd.f32 0.0, %v1727
  %v1729 = vpop.f32.mrf.mxu0
  %v1730 = vpop.f32.mrf.mxu0
  %v1731 = vadd.f32 0.0, %v1730
  %v1732 = vpop.f32.mrf.mxu0
  %1733 = vmatprep.mubr.bf16.mxu0 0
  %1734 = vmatmul.mubr.bf16.gmra.mxu0 %v1648
  %v1735 = vpop.f32.mrf.mxu0
  %v1736 = vadd.f32 0.0, %v1735
  %v1737 = vpop.f32.mrf.mxu0
  %v1738 = vpop.f32.mrf.mxu0
  %v1739 = vadd.f32 0.0, %v1738
  %v1740 = vpop.f32.mrf.mxu0
  %1741 = vmatprep.mubr.bf16.mxu0 0
  %1742 = vmatmul.mubr.bf16.gmra.mxu0 %v1651
  %v1743 = vpop.f32.mrf.mxu0
  %v1744 = vadd.f32 0.0, %v1743
  %v1745 = vpop.f32.mrf.mxu0
  %v1746 = vpop.f32.mrf.mxu0
  %v1747 = vadd.f32 0.0, %v1746
  %v1748 = vpop.f32.mrf.mxu0
  %1749 = vdwg.mxu0
  %v1750 = vadd.f32 %v1614, %v1688
  %v1751 = vadd.f32 %v1615, %v1691
  %v1752 = vadd.f32 %v1616, %v1696
  %v1753 = vadd.f32 %v1617, %v1699
  %v1754 = vadd.f32 %v1618, %v1704
  %v1755 = vadd.f32 %v1619, %v1707
  %v1756 = vadd.f32 %v1620, %v1712
  %v1757 = vadd.f32 %v1621, %v1715
  %v1758 = vadd.f32 %v1622, %v1720
  %v1759 = vadd.f32 %v1623, %v1723
  %v1760 = vadd.f32 %v1624, %v1728
  %v1761 = vadd.f32 %v1625, %v1731
  %v1762 = vadd.f32 %v1626, %v1736
  %v1763 = vadd.f32 %v1627, %v1739
  %v1764 = vadd.f32 %v1628, %v1744
  %v1765 = vadd.f32 %v1629, %v1747
  %s1766 = scalar_lea.vmem %s7, 128
  %v1767 = vld [vmem:[%s1766] sm:$0xff]
  %v1768 = vld [vmem:[%s1766 + $0x8] sm:$0xff]
  %v1769 = vpack.c.bf16 %v1768, %v1767
  %v1772 = vrot.slane %v1509, 1
  %v1773 = vsel %vm836, %v850, %v1772
  %v1774 = vrot.slane %v1630, 1
  %v1775 = vsel %vm836, %v1772, %v1774
  %v1777 = vsel %vm588, %v1773, 0
  %v1780 = vsel %vm588, %v1775, 0
  %1782 = vmatprep.subr.bf16.mxu0 0
  %1783 = vmatpush1.bf16.msra.mxu0 0
  %1784 = vmatprep.subr.bf16.mxu0 0
  %1785 = vmatpush1.bf16.msra.mxu0 0
  %1786 = vmatprep.subr.bf16.mxu0 0
  %1787 = vmatpush1.bf16.msra.mxu0 0
  %1788 = vmatprep.subr.bf16.mxu0 0
  %1789 = vmatpush1.bf16.msra.mxu0 0
  %1790 = vmatprep.subr.bf16.mxu0 0
  %1791 = vmatpush1.bf16.msra.mxu0 0
  %1792 = vmatprep.subr.bf16.mxu0 0
  %1793 = vmatpush1.bf16.msra.mxu0 0
  %1794 = vmatprep.subr.bf16.mxu0 0
  %1795 = vmatpush1.bf16.msra.mxu0 0
  %1796 = vmatprep.subr.bf16.mxu0 0
  %1797 = vmatpush1.bf16.msra.mxu0 %v1769
  %1798 = vmatprep.subr.bf16.mxu0 0
  %1799 = vmatpush2.bf16.msra.mxu0 0
  %1800 = vmatprep.subr.bf16.mxu0 0
  %1801 = vmatpush2.bf16.msra.mxu0 0
  %1802 = vmatprep.subr.bf16.mxu0 0
  %1803 = vmatpush2.bf16.msra.mxu0 0
  %1804 = vmatprep.subr.bf16.mxu0 0
  %1805 = vmatpush2.bf16.msra.mxu0 0
  %1806 = vmatprep.subr.bf16.mxu0 0
  %1807 = vmatpush2.bf16.msra.mxu0 0
  %1808 = vmatprep.subr.bf16.mxu0 0
  %1809 = vmatpush2.bf16.msra.mxu0 0
  %1810 = vmatprep.subr.bf16.mxu0 0
  %1811 = vmatpush2.bf16.msra.mxu0 0
  %1812 = vmatprep.subr.bf16.mxu0 0
  %1813 = vmatpush2.bf16.msra.mxu0 0
  %1814 = vmatprep.mubr.bf16.mxu0 0
  %1815 = vmatmul.mubr.bf16.gmra.mxu0 %v858
  %v1816 = vpop.f32.mrf.mxu0
  %v1817 = vadd.f32 0.0, %v1816
  %v1818 = vpop.f32.mrf.mxu0
  %v1819 = vpop.f32.mrf.mxu0
  %v1820 = vadd.f32 0.0, %v1819
  %v1821 = vpop.f32.mrf.mxu0
  %1822 = vmatprep.mubr.bf16.mxu0 0
  %1823 = vmatmul.mubr.bf16.gmra.mxu0 %v861
  %v1824 = vpop.f32.mrf.mxu0
  %v1825 = vadd.f32 0.0, %v1824
  %v1826 = vpop.f32.mrf.mxu0
  %v1827 = vpop.f32.mrf.mxu0
  %v1828 = vadd.f32 0.0, %v1827
  %v1829 = vpop.f32.mrf.mxu0
  %1830 = vmatprep.mubr.bf16.mxu0 0
  %1831 = vmatmul.mubr.bf16.gmra.mxu0 %v864
  %v1832 = vpop.f32.mrf.mxu0
  %v1833 = vadd.f32 0.0, %v1832
  %v1834 = vpop.f32.mrf.mxu0
  %v1835 = vpop.f32.mrf.mxu0
  %v1836 = vadd.f32 0.0, %v1835
  %v1837 = vpop.f32.mrf.mxu0
  %1838 = vmatprep.mubr.bf16.mxu0 0
  %1839 = vmatmul.mubr.bf16.gmra.mxu0 %v867
  %v1840 = vpop.f32.mrf.mxu0
  %v1841 = vadd.f32 0.0, %v1840
  %v1842 = vpop.f32.mrf.mxu0
  %v1843 = vpop.f32.mrf.mxu0
  %v1844 = vadd.f32 0.0, %v1843
  %v1845 = vpop.f32.mrf.mxu0
  %1846 = vmatprep.mubr.bf16.mxu0 0
  %1847 = vmatmul.mubr.bf16.gmra.mxu0 %v870
  %v1848 = vpop.f32.mrf.mxu0
  %v1849 = vadd.f32 0.0, %v1848
  %v1850 = vpop.f32.mrf.mxu0
  %v1851 = vpop.f32.mrf.mxu0
  %v1852 = vadd.f32 0.0, %v1851
  %v1853 = vpop.f32.mrf.mxu0
  %1854 = vmatprep.mubr.bf16.mxu0 0
  %1855 = vmatmul.mubr.bf16.gmra.mxu0 %v873
  %v1856 = vpop.f32.mrf.mxu0
  %v1857 = vadd.f32 0.0, %v1856
  %v1858 = vpop.f32.mrf.mxu0
  %v1859 = vpop.f32.mrf.mxu0
  %v1860 = vadd.f32 0.0, %v1859
  %v1861 = vpop.f32.mrf.mxu0
  %1862 = vmatprep.mubr.bf16.mxu0 0
  %1863 = vmatmul.mubr.bf16.gmra.mxu0 %v1777
  %v1864 = vpop.f32.mrf.mxu0
  %v1865 = vadd.f32 0.0, %v1864
  %v1866 = vpop.f32.mrf.mxu0
  %v1867 = vpop.f32.mrf.mxu0
  %v1868 = vadd.f32 0.0, %v1867
  %v1869 = vpop.f32.mrf.mxu0
  %1870 = vmatprep.mubr.bf16.mxu0 0
  %1871 = vmatmul.mubr.bf16.gmra.mxu0 %v1780
  %v1872 = vpop.f32.mrf.mxu0
  %v1873 = vadd.f32 0.0, %v1872
  %v1874 = vpop.f32.mrf.mxu0
  %v1875 = vpop.f32.mrf.mxu0
  %v1876 = vadd.f32 0.0, %v1875
  %v1877 = vpop.f32.mrf.mxu0
  %1878 = vdwg.mxu0
  %v1879 = vadd.f32 %v1750, %v1817
  %v1880 = vadd.f32 %v1751, %v1820
  %v1881 = vadd.f32 %v1752, %v1825
  %v1882 = vadd.f32 %v1753, %v1828
  %v1883 = vadd.f32 %v1754, %v1833
  %v1884 = vadd.f32 %v1755, %v1836
  %v1885 = vadd.f32 %v1756, %v1841
  %v1886 = vadd.f32 %v1757, %v1844
  %v1887 = vadd.f32 %v1758, %v1849
  %v1888 = vadd.f32 %v1759, %v1852
  %v1889 = vadd.f32 %v1760, %v1857
  %v1890 = vadd.f32 %v1761, %v1860
  %v1891 = vadd.f32 %v1762, %v1865
  %v1892 = vadd.f32 %v1763, %v1868
  %v1893 = vadd.f32 %v1764, %v1873
  %v1894 = vadd.f32 %v1765, %v1876
  %vm1895 = vcmask 31744
  %1896 = vst.msk [vmem:[%s8] sm:$0xff] %vm1895, %v1879
  %1897 = vst.msk [vmem:[%s8 + $0x8] sm:$0xff] %vm1895, %v1880
  %1898 = vst.msk [vmem:[%s8 + $0x10] sm:$0xff] %vm1895, %v1881
  %1899 = vst.msk [vmem:[%s8 + $0x18] sm:$0xff] %vm1895, %v1882
  %1900 = vst.msk [vmem:[%s8 + $0x20] sm:$0xff] %vm1895, %v1883
  %1901 = vst.msk [vmem:[%s8 + $0x28] sm:$0xff] %vm1895, %v1884
  %1902 = vst.msk [vmem:[%s8 + $0x30] sm:$0xff] %vm1895, %v1885
  %1903 = vst.msk [vmem:[%s8 + $0x38] sm:$0xff] %vm1895, %v1886
  %1904 = vst.msk [vmem:[%s8 + $0x40] sm:$0xff] %vm1895, %v1887
  %1905 = vst.msk [vmem:[%s8 + $0x48] sm:$0xff] %vm1895, %v1888
  %1906 = vst.msk [vmem:[%s8 + $0x50] sm:$0xff] %vm1895, %v1889
  %1907 = vst.msk [vmem:[%s8 + $0x58] sm:$0xff] %vm1895, %v1890
  %1908 = vst.msk [vmem:[%s8 + $0x60] sm:$0xff] %vm1895, %v1891
  %1909 = vst.msk [vmem:[%s8 + $0x68] sm:$0xff] %vm1895, %v1892
  %1910 = vst.msk [vmem:[%s8 + $0x70] sm:$0xff] %vm1895, %v1893
  %1911 = vst.msk [vmem:[%s8 + $0x78] sm:$0xff] %vm1895, %v1894
  // Predicated region
  $region34: #{mycnn_forward.11} parent=0 // pred_check
    _
  $region35: #{mycnn_forward.11} parent=0 // pred_check_branch
    %1913 = sbr.rel (0) target = $region37
  $region36: #{mycnn_forward.11} parent=0 // pred_region
    _
  $region37: #{mycnn_forward.11} parent=0 // pred_fallthru
    _
  // Predicated region
  $region38: #{mycnn_forward.11} parent=0 // pred_check
    _
  $region39: #{mycnn_forward.11} parent=0 // pred_check_branch
    %1915 = sbr.rel (0) target = $region41
  $region40: #{mycnn_forward.11} parent=0 // pred_region
    _
  $region41: #{mycnn_forward.11} parent=0 // pred_fallthru
    _

// kernel: mycnn_forward.12
$region0: #{mycnn_forward.12}
  #allocation0 [shape = 'u32[]', space=smem, size = 0x4, offset = 0x4, fixed_abs, tag = 'smem constant byte address 0x4 - core index']
  #allocation1 [shape = 'u32[144,128]{1,0:T(1,128)}', space=vmem, size = 0x12000, scoped, tag = 'internal scratch']
  %s0 = inlined_call_operand.vmem [shape: f32[146,16], index: 0, kind: input, shape index: {}]
  %s1 = inlined_call_operand.vmem [shape: f32[1,16], index: 1, kind: input, shape index: {}]
  %s2 = inlined_call_operand.vmem [shape: f32[1,16], index: 2, kind: input, shape index: {}]
  %s3 = inlined_call_operand.vmem [shape: f32[16,8], index: 3, kind: input, shape index: {}]
  %s4 = inlined_call_operand.vmem [shape: f32[128,8], index: 4, kind: output, shape index: {}]
  %s5 = sld [smem:[#allocation0]]
  $region26: #{mycnn_forward.12} parent=0
    _
  %s7 = ssub.s32 1, %s5
  %s8 = scalar_select 0, %s7, %s5
  // Predicated region
  $region2: #{mycnn_forward.12} parent=0 // pred_check
    _
  $region3: #{mycnn_forward.12} parent=0 // pred_check_branch
    %10 = sbr.rel (0) target = $region5
  $region4: #{mycnn_forward.12} parent=0 // pred_region
    _
  $region5: #{mycnn_forward.12} parent=0 // pred_fallthru
    _
  // Predicated region
  $region6: #{mycnn_forward.12} parent=0 // pred_check
    _
  $region7: #{mycnn_forward.12} parent=0 // pred_check_branch
    %12 = sbr.rel (0) target = $region9
  $region8: #{mycnn_forward.12} parent=0 // pred_region
    _
  $region9: #{mycnn_forward.12} parent=0 // pred_fallthru
    _
  // Predicated region
  $region10: #{mycnn_forward.12} parent=0 // pred_check
    _
  $region11: #{mycnn_forward.12} parent=0 // pred_check_branch
    %14 = sbr.rel (0) target = $region13
  $region12: #{mycnn_forward.12} parent=0 // pred_region
    _
  $region13: #{mycnn_forward.12} parent=0 // pred_fallthru
    _
  // Predicated region
  $region14: #{mycnn_forward.12} parent=0 // pred_check
    _
  $region15: #{mycnn_forward.12} parent=0 // pred_check_branch
    %16 = sbr.rel (0) target = $region17
  $region16: #{mycnn_forward.12} parent=0 // pred_region
    _
  $region17: #{mycnn_forward.12} parent=0 // pred_fallthru
    _
  %v18 = vld [vmem:[%s0] sm:$0xff]
  %v19 = vld [vmem:[%s0 + $0x8] sm:$0xff]
  %v20 = vld [vmem:[%s0 + $0x10] sm:$0xff]
  %v21 = vld [vmem:[%s0 + $0x18] sm:$0xff]
  %v22 = vld [vmem:[%s0 + $0x20] sm:$0xff]
  %v23 = vld [vmem:[%s0 + $0x28] sm:$0xff]
  %v24 = vld [vmem:[%s0 + $0x30] sm:$0xff]
  %v25 = vld [vmem:[%s0 + $0x38] sm:$0xff]
  %v26 = vld [vmem:[%s0 + $0x40] sm:$0xff]
  %v27 = vld [vmem:[%s0 + $0x48] sm:$0xff]
  %v28 = vld [vmem:[%s0 + $0x50] sm:$0xff]
  %v29 = vld [vmem:[%s0 + $0x58] sm:$0xff]
  %v30 = vld [vmem:[%s0 + $0x60] sm:$0xff]
  %v31 = vld [vmem:[%s0 + $0x68] sm:$0xff]
  %v32 = vld [vmem:[%s0 + $0x70] sm:$0xff]
  %v33 = vld [vmem:[%s0 + $0x78] sm:$0xff]
  %v34 = vld [vmem:[%s0 + $0x80] sm:$0xff]
  %v35 = vld [vmem:[%s0 + $0x88] sm:$0xff]
  %v36 = vld [vmem:[%s0 + $0x90] sm:$0x3]
  %v37 = vld [vmem:[%s1] sm:$0x1]
  %v39 = vlaneseq
  %v40 = vshrl.u32 %v39, 7
  %v41 = vsub.s32 0, %v40
  %v42 = vrot.slane %v37, %v41
  %v44 = vmul.f32 %v18, %v42
  %v45 = vmul.f32 %v19, %v42
  %v46 = vmul.f32 %v20, %v42
  %v47 = vmul.f32 %v21, %v42
  %v48 = vmul.f32 %v22, %v42
  %v49 = vmul.f32 %v23, %v42
  %v50 = vmul.f32 %v24, %v42
  %v51 = vmul.f32 %v25, %v42
  %v52 = vmul.f32 %v26, %v42
  %v53 = vmul.f32 %v27, %v42
  %v54 = vmul.f32 %v28, %v42
  %v55 = vmul.f32 %v29, %v42
  %v56 = vmul.f32 %v30, %v42
  %v57 = vmul.f32 %v31, %v42
  %v58 = vmul.f32 %v32, %v42
  %v59 = vmul.f32 %v33, %v42
  %v60 = vmul.f32 %v34, %v42
  %v61 = vmul.f32 %v35, %v42
  %v62 = vmul.f32 %v36, %v42
  %v63 = vld [vmem:[%s2] sm:$0x1]
  %v65 = vlaneseq
  %v66 = vshrl.u32 %v65, 7
  %v67 = vsub.s32 0, %v66
  %v68 = vrot.slane %v63, %v67
  %v70 = vadd.f32 %v44, %v68
  %v71 = vadd.f32 %v45, %v68
  %v72 = vadd.f32 %v46, %v68
  %v73 = vadd.f32 %v47, %v68
  %v74 = vadd.f32 %v48, %v68
  %v75 = vadd.f32 %v49, %v68
  %v76 = vadd.f32 %v50, %v68
  %v77 = vadd.f32 %v51, %v68
  %v78 = vadd.f32 %v52, %v68
  %v79 = vadd.f32 %v53, %v68
  %v80 = vadd.f32 %v54, %v68
  %v81 = vadd.f32 %v55, %v68
  %v82 = vadd.f32 %v56, %v68
  %v83 = vadd.f32 %v57, %v68
  %v84 = vadd.f32 %v58, %v68
  %v85 = vadd.f32 %v59, %v68
  %v86 = vadd.f32 %v60, %v68
  %v87 = vadd.f32 %v61, %v68
  %v88 = vadd.f32 %v62, %v68
  %v89 = vmax.f32 %v70, 0.0
  %v90 = vmax.f32 %v71, 0.0
  %v91 = vmax.f32 %v72, 0.0
  %v92 = vmax.f32 %v73, 0.0
  %v93 = vmax.f32 %v74, 0.0
  %v94 = vmax.f32 %v75, 0.0
  %v95 = vmax.f32 %v76, 0.0
  %v96 = vmax.f32 %v77, 0.0
  %v97 = vmax.f32 %v78, 0.0
  %v98 = vmax.f32 %v79, 0.0
  %v99 = vmax.f32 %v80, 0.0
  %v100 = vmax.f32 %v81, 0.0
  %v101 = vmax.f32 %v82, 0.0
  %v102 = vmax.f32 %v83, 0.0
  %v103 = vmax.f32 %v84, 0.0
  %v104 = vmax.f32 %v85, 0.0
  %v105 = vmax.f32 %v86, 0.0
  %v106 = vmax.f32 %v87, 0.0
  %v107 = vmax.f32 %v88, 0.0
  %v108 = vpack.c.bf16 %v90, %v89
  %v109 = vpack.c.bf16 %v92, %v91
  %v110 = vpack.c.bf16 %v94, %v93
  %v111 = vpack.c.bf16 %v96, %v95
  %v112 = vpack.c.bf16 %v98, %v97
  %v113 = vpack.c.bf16 %v100, %v99
  %v114 = vpack.c.bf16 %v102, %v101
  %v115 = vpack.c.bf16 %v104, %v103
  %v116 = vpack.c.bf16 %v106, %v105
  %v117 = vpack.c.bf16 %v107, %v107
  %v118 = vld [vmem:[%s3] sm:$0xff]
  %v119 = vld [vmem:[%s3 + $0x8] sm:$0xff]
  %v120 = vpack.c.bf16 %v119, %v118
  %vm121 = vcmask 130048
  %v123 = vsel %vm121, %v108, 0
  %v126 = vsel %vm121, %v109, 0
  %v129 = vsel %vm121, %v110, 0
  %v132 = vsel %vm121, %v111, 0
  %v135 = vsel %vm121, %v112, 0
  %v138 = vsel %vm121, %v113, 0
  %v141 = vsel %vm121, %v114, 0
  %v144 = vsel %vm121, %v115, 0
  %v147 = vsel %vm121, %v116, 0
  %v150 = vsel %vm121, %v117, 0
  %152 = vmatprep.subr.bf16.mxu0 0
  %153 = vmatpush1.bf16.msra.mxu0 0
  %154 = vmatprep.subr.bf16.mxu0 0
  %155 = vmatpush1.bf16.msra.mxu0 0
  %156 = vmatprep.subr.bf16.mxu0 0
  %157 = vmatpush1.bf16.msra.mxu0 0
  %158 = vmatprep.subr.bf16.mxu0 0
  %159 = vmatpush1.bf16.msra.mxu0 0
  %160 = vmatprep.subr.bf16.mxu0 0
  %161 = vmatpush1.bf16.msra.mxu0 0
  %162 = vmatprep.subr.bf16.mxu0 0
  %163 = vmatpush1.bf16.msra.mxu0 0
  %164 = vmatprep.subr.bf16.mxu0 0
  %165 = vmatpush1.bf16.msra.mxu0 0
  %166 = vmatprep.subr.bf16.mxu0 0
  %167 = vmatpush1.bf16.msra.mxu0 %v120
  %168 = vmatprep.subr.bf16.mxu0 0
  %169 = vmatpush2.bf16.msra.mxu0 0
  %170 = vmatprep.subr.bf16.mxu0 0
  %171 = vmatpush2.bf16.msra.mxu0 0
  %172 = vmatprep.subr.bf16.mxu0 0
  %173 = vmatpush2.bf16.msra.mxu0 0
  %174 = vmatprep.subr.bf16.mxu0 0
  %175 = vmatpush2.bf16.msra.mxu0 0
  %176 = vmatprep.subr.bf16.mxu0 0
  %177 = vmatpush2.bf16.msra.mxu0 0
  %178 = vmatprep.subr.bf16.mxu0 0
  %179 = vmatpush2.bf16.msra.mxu0 0
  %180 = vmatprep.subr.bf16.mxu0 0
  %181 = vmatpush2.bf16.msra.mxu0 0
  %182 = vmatprep.subr.bf16.mxu0 0
  %183 = vmatpush2.bf16.msra.mxu0 0
  %184 = vmatprep.mubr.bf16.mxu0 0
  %185 = vmatmul.mubr.bf16.gmra.mxu0 %v123
  %v186 = vpop.f32.mrf.mxu0
  %v187 = vpop.f32.mrf.mxu0
  %v188 = vpop.f32.mrf.mxu0
  %v189 = vadd.f32 0.0, %v188
  %v190 = vpop.f32.mrf.mxu0
  %191 = vmatprep.mubr.bf16.mxu0 0
  %192 = vmatmul.mubr.bf16.gmra.mxu0 %v126
  %v193 = vpop.f32.mrf.mxu0
  %v194 = vadd.f32 0.0, %v193
  %v195 = vpop.f32.mrf.mxu0
  %v196 = vpop.f32.mrf.mxu0
  %v197 = vadd.f32 0.0, %v196
  %v198 = vpop.f32.mrf.mxu0
  %199 = vmatprep.mubr.bf16.mxu0 0
  %200 = vmatmul.mubr.bf16.gmra.mxu0 %v129
  %v201 = vpop.f32.mrf.mxu0
  %v202 = vadd.f32 0.0, %v201
  %v203 = vpop.f32.mrf.mxu0
  %v204 = vpop.f32.mrf.mxu0
  %v205 = vadd.f32 0.0, %v204
  %v206 = vpop.f32.mrf.mxu0
  %207 = vmatprep.mubr.bf16.mxu0 0
  %208 = vmatmul.mubr.bf16.gmra.mxu0 %v132
  %v209 = vpop.f32.mrf.mxu0
  %v210 = vadd.f32 0.0, %v209
  %v211 = vpop.f32.mrf.mxu0
  %v212 = vpop.f32.mrf.mxu0
  %v213 = vadd.f32 0.0, %v212
  %v214 = vpop.f32.mrf.mxu0
  %215 = vmatprep.mubr.bf16.mxu0 0
  %216 = vmatmul.mubr.bf16.gmra.mxu0 %v135
  %v217 = vpop.f32.mrf.mxu0
  %v218 = vadd.f32 0.0, %v217
  %v219 = vpop.f32.mrf.mxu0
  %v220 = vpop.f32.mrf.mxu0
  %v221 = vadd.f32 0.0, %v220
  %v222 = vpop.f32.mrf.mxu0
  %223 = vmatprep.mubr.bf16.mxu0 0
  %224 = vmatmul.mubr.bf16.gmra.mxu0 %v138
  %v225 = vpop.f32.mrf.mxu0
  %v226 = vadd.f32 0.0, %v225
  %v227 = vpop.f32.mrf.mxu0
  %v228 = vpop.f32.mrf.mxu0
  %v229 = vadd.f32 0.0, %v228
  %v230 = vpop.f32.mrf.mxu0
  %231 = vmatprep.mubr.bf16.mxu0 0
  %232 = vmatmul.mubr.bf16.gmra.mxu0 %v141
  %v233 = vpop.f32.mrf.mxu0
  %v234 = vadd.f32 0.0, %v233
  %v235 = vpop.f32.mrf.mxu0
  %v236 = vpop.f32.mrf.mxu0
  %v237 = vadd.f32 0.0, %v236
  %v238 = vpop.f32.mrf.mxu0
  %239 = vmatprep.mubr.bf16.mxu0 0
  %240 = vmatmul.mubr.bf16.gmra.mxu0 %v144
  %v241 = vpop.f32.mrf.mxu0
  %v242 = vadd.f32 0.0, %v241
  %v243 = vpop.f32.mrf.mxu0
  %v244 = vpop.f32.mrf.mxu0
  %v245 = vadd.f32 0.0, %v244
  %v246 = vpop.f32.mrf.mxu0
  %247 = vmatprep.mubr.bf16.mxu0 0
  %248 = vmatmul.mubr.bf16.gmra.mxu0 %v147
  %v249 = vpop.f32.mrf.mxu0
  %v250 = vadd.f32 0.0, %v249
  %v251 = vpop.f32.mrf.mxu0
  %v252 = vpop.f32.mrf.mxu0
  %v253 = vadd.f32 0.0, %v252
  %v254 = vpop.f32.mrf.mxu0
  %255 = vmatprep.mubr.bf16.mxu0 0
  %256 = vmatmul.mubr.bf16.gmra.mxu0 %v150
  %v257 = vpop.f32.mrf.mxu0
  %v258 = vadd.f32 0.0, %v257
  %v259 = vpop.f32.mrf.mxu0
  %v260 = vpop.f32.mrf.mxu0
  %v261 = vpop.f32.mrf.mxu0
  %262 = vdwg.mxu0
  %vm280 = vcmask 1046528
  %v281 = vrot.slane %v189, 1
  %v282 = vrot.slane %v194, 1
  %v283 = vsel %vm280, %v281, %v282
  %v284 = vrot.slane %v197, 1
  %v285 = vsel %vm280, %v282, %v284
  %v286 = vrot.slane %v202, 1
  %v287 = vsel %vm280, %v284, %v286
  %v288 = vrot.slane %v205, 1
  %v289 = vsel %vm280, %v286, %v288
  %v290 = vrot.slane %v210, 1
  %v291 = vsel %vm280, %v288, %v290
  %v292 = vrot.slane %v213, 1
  %v293 = vsel %vm280, %v290, %v292
  %v294 = vrot.slane %v218, 1
  %v295 = vsel %vm280, %v292, %v294
  %v296 = vrot.slane %v221, 1
  %v297 = vsel %vm280, %v294, %v296
  %v298 = vrot.slane %v226, 1
  %v299 = vsel %vm280, %v296, %v298
  %v300 = vrot.slane %v229, 1
  %v301 = vsel %vm280, %v298, %v300
  %v302 = vrot.slane %v234, 1
  %v303 = vsel %vm280, %v300, %v302
  %v304 = vrot.slane %v237, 1
  %v305 = vsel %vm280, %v302, %v304
  %v306 = vrot.slane %v242, 1
  %v307 = vsel %vm280, %v304, %v306
  %v308 = vrot.slane %v245, 1
  %v309 = vsel %vm280, %v306, %v308
  %v310 = vrot.slane %v250, 1
  %v311 = vsel %vm280, %v308, %v310
  %v312 = vrot.slane %v253, 1
  %v313 = vsel %vm280, %v310, %v312
  %v331 = vadd.f32 %v189, %v283
  %v332 = vadd.f32 %v194, %v285
  %v333 = vadd.f32 %v197, %v287
  %v334 = vadd.f32 %v202, %v289
  %v335 = vadd.f32 %v205, %v291
  %v336 = vadd.f32 %v210, %v293
  %v337 = vadd.f32 %v213, %v295
  %v338 = vadd.f32 %v218, %v297
  %v339 = vadd.f32 %v221, %v299
  %v340 = vadd.f32 %v226, %v301
  %v341 = vadd.f32 %v229, %v303
  %v342 = vadd.f32 %v234, %v305
  %v343 = vadd.f32 %v237, %v307
  %v344 = vadd.f32 %v242, %v309
  %v345 = vadd.f32 %v245, %v311
  %v346 = vadd.f32 %v250, %v313
  %v347 = vadd.f32 %v253, %v312
  %v348 = vadd.f32 %v331, %v194
  %v349 = vadd.f32 %v332, %v197
  %v350 = vadd.f32 %v333, %v202
  %v351 = vadd.f32 %v334, %v205
  %v352 = vadd.f32 %v335, %v210
  %v353 = vadd.f32 %v336, %v213
  %v354 = vadd.f32 %v337, %v218
  %v355 = vadd.f32 %v338, %v221
  %v356 = vadd.f32 %v339, %v226
  %v357 = vadd.f32 %v340, %v229
  %v358 = vadd.f32 %v341, %v234
  %v359 = vadd.f32 %v342, %v237
  %v360 = vadd.f32 %v343, %v242
  %v361 = vadd.f32 %v344, %v245
  %v362 = vadd.f32 %v345, %v250
  %v363 = vadd.f32 %v346, %v253
  %v364 = vadd.f32 %v347, %v258
  %v366 = vrot.slane %v258, 1
  %v367 = vsel %vm280, %v312, %v366
  %v370 = vadd.f32 %v348, %v285
  %v371 = vadd.f32 %v349, %v287
  %v372 = vadd.f32 %v350, %v289
  %v373 = vadd.f32 %v351, %v291
  %v374 = vadd.f32 %v352, %v293
  %v375 = vadd.f32 %v353, %v295
  %v376 = vadd.f32 %v354, %v297
  %v377 = vadd.f32 %v355, %v299
  %v378 = vadd.f32 %v356, %v301
  %v379 = vadd.f32 %v357, %v303
  %v380 = vadd.f32 %v358, %v305
  %v381 = vadd.f32 %v359, %v307
  %v382 = vadd.f32 %v360, %v309
  %v383 = vadd.f32 %v361, %v311
  %v384 = vadd.f32 %v362, %v313
  %v385 = vadd.f32 %v363, %v367
  %v386 = vadd.f32 %v364, %v366
  %v387 = vmul.f32 %v370, 0.25
  %v388 = vmul.f32 %v371, 0.25
  %v389 = vmul.f32 %v372, 0.25
  %v390 = vmul.f32 %v373, 0.25
  %v391 = vmul.f32 %v374, 0.25
  %v392 = vmul.f32 %v375, 0.25
  %v393 = vmul.f32 %v376, 0.25
  %v394 = vmul.f32 %v377, 0.25
  %v395 = vmul.f32 %v378, 0.25
  %v396 = vmul.f32 %v379, 0.25
  %v397 = vmul.f32 %v380, 0.25
  %v398 = vmul.f32 %v381, 0.25
  %v399 = vmul.f32 %v382, 0.25
  %v400 = vmul.f32 %v383, 0.25
  %v401 = vmul.f32 %v384, 0.25
  %v402 = vmul.f32 %v385, 0.25
  %v403 = vmul.f32 %v386, 0.25
  %vm404 = vcmask 64513
  %405 = vst.msk [vmem:[%s4 - $0x1] sm:$0xfe] %vm404, %v387
  %vm406 = vcmask 64512
  %407 = vst.msk [vmem:[%s4 + $0x7] sm:$0xff] %vm406, %v388
  %408 = vst.msk [vmem:[%s4 + $0xf] sm:$0xff] %vm406, %v389
  %409 = vst.msk [vmem:[%s4 + $0x17] sm:$0xff] %vm406, %v390
  %410 = vst.msk [vmem:[%s4 + $0x1f] sm:$0xff] %vm406, %v391
  %411 = vst.msk [vmem:[%s4 + $0x27] sm:$0xff] %vm406, %v392
  %412 = vst.msk [vmem:[%s4 + $0x2f] sm:$0xff] %vm406, %v393
  %413 = vst.msk [vmem:[%s4 + $0x37] sm:$0xff] %vm406, %v394
  %414 = vst.msk [vmem:[%s4 + $0x3f] sm:$0xff] %vm406, %v395
  %415 = vst.msk [vmem:[%s4 + $0x47] sm:$0xff] %vm406, %v396
  %416 = vst.msk [vmem:[%s4 + $0x4f] sm:$0xff] %vm406, %v397
  %417 = vst.msk [vmem:[%s4 + $0x57] sm:$0xff] %vm406, %v398
  %418 = vst.msk [vmem:[%s4 + $0x5f] sm:$0xff] %vm406, %v399
  %419 = vst.msk [vmem:[%s4 + $0x67] sm:$0xff] %vm406, %v400
  %420 = vst.msk [vmem:[%s4 + $0x6f] sm:$0xff] %vm406, %v401
  %421 = vst.msk [vmem:[%s4 + $0x77] sm:$0xff] %vm406, %v402
  %vm422 = vcmask 57344
  %423 = vst.msk [vmem:[%s4 + $0x7f] sm:$0x1] %vm422, %v403
  // Predicated region
  $region18: #{mycnn_forward.12} parent=0 // pred_check
    _
  $region19: #{mycnn_forward.12} parent=0 // pred_check_branch
    %425 = sbr.rel (0) target = $region21
  $region20: #{mycnn_forward.12} parent=0 // pred_region
    _
  $region21: #{mycnn_forward.12} parent=0 // pred_fallthru
    _
  // Predicated region
  $region22: #{mycnn_forward.12} parent=0 // pred_check
    _
  $region23: #{mycnn_forward.12} parent=0 // pred_check_branch
    %427 = sbr.rel (0) target = $region25
  $region24: #{mycnn_forward.12} parent=0 // pred_region
    _
  $region25: #{mycnn_forward.12} parent=0 // pred_fallthru
    _

// kernel: mycnn_forward.15
$region0: #{mycnn_forward.15}
  #allocation0 [shape = 'u32[]', space=smem, size = 0x4, offset = 0x4, fixed_abs, tag = 'smem constant byte address 0x4 - core index']
  #allocation1 [shape = 'u32[144,128]{1,0:T(1,128)}', space=vmem, size = 0x12000, scoped, tag = 'internal scratch']
  %s0 = inlined_call_operand.vmem [shape: f32[62,16], index: 0, kind: input, shape index: {}]
  %s1 = inlined_call_operand.vmem [shape: f32[1,16], index: 1, kind: input, shape index: {}]
  %s2 = inlined_call_operand.vmem [shape: f32[1,16], index: 2, kind: input, shape index: {}]
  %s3 = inlined_call_operand.vmem [shape: f32[2,62], index: 3, kind: input, shape index: {}]
  %s4 = inlined_call_operand.vmem [shape: f32[16,20], index: 4, kind: input, shape index: {}]
  %s5 = inlined_call_operand.vmem [shape: f32[1,20], index: 5, kind: input, shape index: {}]
  %s6 = inlined_call_operand.hbm [shape: f32[2,20], index: 6, kind: output, shape index: {}]
  %s7 = sld [smem:[#allocation0]]
  $region34: #{mycnn_forward.15} parent=0
    _
  %s9 = ssub.s32 1, %s7
  %s10 = scalar_select 0, %s9, %s7
  $region1: #{mycnn_forward.15} parent=0
    #allocation2 [shape = 'u8[1024]{0}', space=vmem, size = 0x400, scoped, tag = 'output window, operand 0, single buffered']
    #allocation3 [shape = 's32[1]{0}', space=sflag, size = 0x4, scoped, tag = 'scoped memory for mycnn_forward.15']
    %11 = vsyncpa [#allocation3], 0
    // Predicated region
    $region2: #{mycnn_forward.15} parent=1 // pred_check
      _
    $region3: #{mycnn_forward.15} parent=1 // pred_check_branch
      %13 = sbr.rel (0) target = $region5
    $region4: #{mycnn_forward.15} parent=1 // pred_region
      _
    $region5: #{mycnn_forward.15} parent=1 // pred_fallthru
      _
    // Predicated region
    $region6: #{mycnn_forward.15} parent=1 // pred_check
      _
    $region7: #{mycnn_forward.15} parent=1 // pred_check_branch
      %15 = sbr.rel (0) target = $region9
    $region8: #{mycnn_forward.15} parent=1 // pred_region
      _
    $region9: #{mycnn_forward.15} parent=1 // pred_fallthru
      _
    // Predicated region
    $region10: #{mycnn_forward.15} parent=1 // pred_check
      _
    $region11: #{mycnn_forward.15} parent=1 // pred_check_branch
      %17 = sbr.rel (0) target = $region13
    $region12: #{mycnn_forward.15} parent=1 // pred_region
      _
    $region13: #{mycnn_forward.15} parent=1 // pred_fallthru
      _
    // Predicated region
    $region14: #{mycnn_forward.15} parent=1 // pred_check
      _
    $region15: #{mycnn_forward.15} parent=1 // pred_check_branch
      %19 = sbr.rel (0) target = $region17
    $region16: #{mycnn_forward.15} parent=1 // pred_region
      _
    $region17: #{mycnn_forward.15} parent=1 // pred_fallthru
      _
    // Predicated region
    $region18: #{mycnn_forward.15} parent=1 // pred_check
      _
    $region19: #{mycnn_forward.15} parent=1 // pred_check_branch
      %21 = sbr.rel (0) target = $region21
    $region20: #{mycnn_forward.15} parent=1 // pred_region
      _
    $region21: #{mycnn_forward.15} parent=1 // pred_fallthru
      _
    // Predicated region
    $region22: #{mycnn_forward.15} parent=1 // pred_check
      _
    $region23: #{mycnn_forward.15} parent=1 // pred_check_branch
      %23 = sbr.rel (0) target = $region25
    $region24: #{mycnn_forward.15} parent=1 // pred_region
      _
    $region25: #{mycnn_forward.15} parent=1 // pred_fallthru
      _
    %v24 = vld [vmem:[%s0] sm:$0xff]
    %v25 = vld [vmem:[%s0 + $0x8] sm:$0xff]
    %v26 = vld [vmem:[%s0 + $0x10] sm:$0xff]
    %v27 = vld [vmem:[%s0 + $0x18] sm:$0xff]
    %v28 = vld [vmem:[%s0 + $0x20] sm:$0xff]
    %v29 = vld [vmem:[%s0 + $0x28] sm:$0xff]
    %v30 = vld [vmem:[%s0 + $0x30] sm:$0xff]
    %v31 = vld [vmem:[%s0 + $0x38] sm:$0x3f]
    %v32 = vld [vmem:[%s1] sm:$0x1]
    %v34 = vlaneseq
    %v35 = vshrl.u32 %v34, 7
    %v36 = vsub.s32 0, %v35
    %v37 = vrot.slane %v32, %v36
    %v39 = vmul.f32 %v24, %v37
    %v40 = vmul.f32 %v25, %v37
    %v41 = vmul.f32 %v26, %v37
    %v42 = vmul.f32 %v27, %v37
    %v43 = vmul.f32 %v28, %v37
    %v44 = vmul.f32 %v29, %v37
    %v45 = vmul.f32 %v30, %v37
    %v46 = vmul.f32 %v31, %v37
    %v47 = vld [vmem:[%s2] sm:$0x1]
    %v49 = vlaneseq
    %v50 = vshrl.u32 %v49, 7
    %v51 = vsub.s32 0, %v50
    %v52 = vrot.slane %v47, %v51
    %v54 = vadd.f32 %v39, %v52
    %v55 = vadd.f32 %v40, %v52
    %v56 = vadd.f32 %v41, %v52
    %v57 = vadd.f32 %v42, %v52
    %v58 = vadd.f32 %v43, %v52
    %v59 = vadd.f32 %v44, %v52
    %v60 = vadd.f32 %v45, %v52
    %v61 = vadd.f32 %v46, %v52
    %v62 = vmax.f32 %v54, 0.0
    %v63 = vmax.f32 %v55, 0.0
    %v64 = vmax.f32 %v56, 0.0
    %v65 = vmax.f32 %v57, 0.0
    %v66 = vmax.f32 %v58, 0.0
    %v67 = vmax.f32 %v59, 0.0
    %v68 = vmax.f32 %v60, 0.0
    %v69 = vmax.f32 %v61, 0.0
    %v70 = vld [vmem:[%s3] sm:$0x3]
    %vm71 = vcmask 506880
    %v73 = vsel %vm71, %v70, 0
    %vm75 = vcmask 1045504
    %v77 = vsel %vm75, %v69, 0
    %79 = vmatprep.subr.mxu0 0.0
    %80 = vmatpush1.msra.mxu0 0.0
    %81 = vmatprep.subr.mxu0 0.0
    %82 = vmatpush1.msra.mxu0 0.0
    %83 = vmatprep.subr.mxu0 0.0
    %84 = vmatpush1.msra.mxu0 0.0
    %85 = vmatprep.subr.mxu0 0.0
    %86 = vmatpush1.msra.mxu0 0.0
    %87 = vmatprep.subr.mxu0 0.0
    %88 = vmatpush1.msra.mxu0 0.0
    %89 = vmatprep.subr.mxu0 0.0
    %90 = vmatpush1.msra.mxu0 0.0
    %91 = vmatprep.subr.mxu0 0.0
    %92 = vmatpush1.msra.mxu0 0.0
    %93 = vmatprep.subr.mxu0 0.0
    %94 = vmatpush1.msra.mxu0 0.0
    %95 = vmatprep.subr.mxu0 0.0
    %96 = vmatpush1.msra.mxu0 %v77
    %97 = vmatprep.subr.mxu0 0.0
    %98 = vmatpush1.msra.mxu0 %v68
    %99 = vmatprep.subr.mxu0 0.0
    %100 = vmatpush1.msra.mxu0 %v67
    %101 = vmatprep.subr.mxu0 0.0
    %102 = vmatpush1.msra.mxu0 %v66
    %103 = vmatprep.subr.mxu0 0.0
    %104 = vmatpush1.msra.mxu0 %v65
    %105 = vmatprep.subr.mxu0 0.0
    %106 = vmatpush1.msra.mxu0 %v64
    %107 = vmatprep.subr.mxu0 0.0
    %108 = vmatpush1.msra.mxu0 %v63
    %109 = vmatprep.subr.mxu0 0.0
    %110 = vmatpush1.msra.mxu0 %v62
    %111 = vmatprep.subr.mxu0 0.0
    %112 = vmatpush2.msra.mxu0 0.0
    %113 = vmatprep.subr.mxu0 0.0
    %114 = vmatpush2.msra.mxu0 0.0
    %115 = vmatprep.subr.mxu0 0.0
    %116 = vmatpush2.msra.mxu0 0.0
    %117 = vmatprep.subr.mxu0 0.0
    %118 = vmatpush2.msra.mxu0 0.0
    %119 = vmatprep.subr.mxu0 0.0
    %120 = vmatpush2.msra.mxu0 0.0
    %121 = vmatprep.subr.mxu0 0.0
    %122 = vmatpush2.msra.mxu0 0.0
    %123 = vmatprep.subr.mxu0 0.0
    %124 = vmatpush2.msra.mxu0 0.0
    %125 = vmatprep.subr.mxu0 0.0
    %126 = vmatpush2.msra.mxu0 0.0
    %127 = vmatprep.subr.mxu0 0.0
    %128 = vmatpush2.msra.mxu0 0.0
    %129 = vmatprep.subr.mxu0 0.0
    %130 = vmatpush2.msra.mxu0 0.0
    %131 = vmatprep.subr.mxu0 0.0
    %132 = vmatpush2.msra.mxu0 0.0
    %133 = vmatprep.subr.mxu0 0.0
    %134 = vmatpush2.msra.mxu0 0.0
    %135 = vmatprep.subr.mxu0 0.0
    %136 = vmatpush2.msra.mxu0 0.0
    %137 = vmatprep.subr.mxu0 0.0
    %138 = vmatpush2.msra.mxu0 0.0
    %139 = vmatprep.subr.mxu0 0.0
    %140 = vmatpush2.msra.mxu0 0.0
    %141 = vmatprep.subr.mxu0 0.0
    %142 = vmatpush2.msra.mxu0 0.0
    %143 = vmatprep.mubr.f32.mxu0 0.0
    %144 = vmatmul.mubr.f32.gmra.mxu0 %v73
    %v145 = vpop.f32.mrf.mxu0
    %v146 = vadd.f32 0.0, %v145
    %v147 = vpop.f32.mrf.mxu0
    %148 = vdwg.mxu0
    %v149 = vld [vmem:[%s4] sm:$0xff]
    %v150 = vld [vmem:[%s4 + $0x8] sm:$0xff]
    %v151 = vld [vmem:[%s5] sm:$0x1]
    %v153 = vlaneseq
    %v154 = vshrl.u32 %v153, 7
    %v155 = vsub.s32 0, %v154
    %v156 = vrot.slane %v151, %v155
    %vm158 = vcmask 130048
    %v160 = vsel %vm158, %v146, 0
    %162 = vmatprep.subr.mxu0 0.0
    %163 = vmatpush1.msra.mxu0 0.0
    %164 = vmatprep.subr.mxu0 0.0
    %165 = vmatpush1.msra.mxu0 0.0
    %166 = vmatprep.subr.mxu0 0.0
    %167 = vmatpush1.msra.mxu0 0.0
    %168 = vmatprep.subr.mxu0 0.0
    %169 = vmatpush1.msra.mxu0 0.0
    %170 = vmatprep.subr.mxu0 0.0
    %171 = vmatpush1.msra.mxu0 0.0
    %172 = vmatprep.subr.mxu0 0.0
    %173 = vmatpush1.msra.mxu0 0.0
    %174 = vmatprep.subr.mxu0 0.0
    %175 = vmatpush1.msra.mxu0 0.0
    %176 = vmatprep.subr.mxu0 0.0
    %177 = vmatpush1.msra.mxu0 0.0
    %178 = vmatprep.subr.mxu0 0.0
    %179 = vmatpush1.msra.mxu0 0.0
    %180 = vmatprep.subr.mxu0 0.0
    %181 = vmatpush1.msra.mxu0 0.0
    %182 = vmatprep.subr.mxu0 0.0
    %183 = vmatpush1.msra.mxu0 0.0
    %184 = vmatprep.subr.mxu0 0.0
    %185 = vmatpush1.msra.mxu0 0.0
    %186 = vmatprep.subr.mxu0 0.0
    %187 = vmatpush1.msra.mxu0 0.0
    %188 = vmatprep.subr.mxu0 0.0
    %189 = vmatpush1.msra.mxu0 0.0
    %190 = vmatprep.subr.mxu0 0.0
    %191 = vmatpush1.msra.mxu0 %v150
    %192 = vmatprep.subr.mxu0 0.0
    %193 = vmatpush1.msra.mxu0 %v149
    %194 = vmatprep.subr.mxu0 0.0
    %195 = vmatpush2.msra.mxu0 0.0
    %196 = vmatprep.subr.mxu0 0.0
    %197 = vmatpush2.msra.mxu0 0.0
    %198 = vmatprep.subr.mxu0 0.0
    %199 = vmatpush2.msra.mxu0 0.0
    %200 = vmatprep.subr.mxu0 0.0
    %201 = vmatpush2.msra.mxu0 0.0
    %202 = vmatprep.subr.mxu0 0.0
    %203 = vmatpush2.msra.mxu0 0.0
    %204 = vmatprep.subr.mxu0 0.0
    %205 = vmatpush2.msra.mxu0 0.0
    %206 = vmatprep.subr.mxu0 0.0
    %207 = vmatpush2.msra.mxu0 0.0
    %208 = vmatprep.subr.mxu0 0.0
    %209 = vmatpush2.msra.mxu0 0.0
    %210 = vmatprep.subr.mxu0 0.0
    %211 = vmatpush2.msra.mxu0 0.0
    %212 = vmatprep.subr.mxu0 0.0
    %213 = vmatpush2.msra.mxu0 0.0
    %214 = vmatprep.subr.mxu0 0.0
    %215 = vmatpush2.msra.mxu0 0.0
    %216 = vmatprep.subr.mxu0 0.0
    %217 = vmatpush2.msra.mxu0 0.0
    %218 = vmatprep.subr.mxu0 0.0
    %219 = vmatpush2.msra.mxu0 0.0
    %220 = vmatprep.subr.mxu0 0.0
    %221 = vmatpush2.msra.mxu0 0.0
    %222 = vmatprep.subr.mxu0 0.0
    %223 = vmatpush2.msra.mxu0 0.0
    %224 = vmatprep.subr.mxu0 0.0
    %225 = vmatpush2.msra.mxu0 0.0
    %226 = vmatprep.mubr.f32.mxu0 0.0
    %227 = vmatmul.mubr.f32.gmra.mxu0 %v160
    %v228 = vpop.f32.mrf.mxu0
    %v229 = vadd.f32 %v156, %v228
    %v230 = vpop.f32.mrf.mxu0
    %231 = vdwg.mxu0
    %vm232 = vcmask 156672
    %233 = vst.msk [vmem:[#allocation2] sm:$0x3] %vm232, %v229
    // Predicated region
    $region26: #{mycnn_forward.15} parent=1 // pred_check
      _
    $region27: #{mycnn_forward.15} parent=1 // pred_check_branch
      %235 = sbr.rel (0) target = $region29
    $region28: #{mycnn_forward.15} parent=1 // pred_region
      %s237 = ssub.s32 32, 32
      %238 = vsyncadd [#allocation3], %s237
      %s240 = sshll.u32 [#allocation2], 4
      %s241 = int_to_ptr.vmem [resolvable:$true] %s240
      %243 = dma.vmem_to_hbm [thread:$0]  %s241, 32, %s6, [#allocation3]
    $region29: #{mycnn_forward.15} parent=1 // pred_fallthru
      _
    // Predicated region
    $region30: #{mycnn_forward.15} parent=1 // pred_check
      _
    $region31: #{mycnn_forward.15} parent=1 // pred_check_branch
      %245 = sbr.rel (0) target = $region33
    $region32: #{mycnn_forward.15} parent=1 // pred_region
      %246 = dma.done [#allocation3], 32
    $region33: #{mycnn_forward.15} parent=1 // pred_fallthru
      _
    %247 = vsyncpa [#allocation3], 1

// kernel: mycnn_forward.13
$region0: #{mycnn_forward.13}
  #allocation0 [shape = 'u32[]', space=smem, size = 0x4, offset = 0x4, fixed_abs, tag = 'smem constant byte address 0x4 - core index']
  #allocation1 [shape = 'u32[144,128]{1,0:T(1,128)}', space=vmem, size = 0x12000, scoped, tag = 'internal scratch']
  %s0 = inlined_call_operand.vmem [shape: f32[62,8], index: 0, kind: input, shape index: {}]
  %s1 = inlined_call_operand.vmem [shape: f32[62,1], index: 1, kind: input, shape index: {}]
  %s2 = inlined_call_operand.vmem [shape: f32[1,8], index: 2, kind: input, shape index: {}]
  %s3 = inlined_call_operand.vmem [shape: f32[1,8], index: 3, kind: input, shape index: {}]
  %s4 = inlined_call_operand.vmem [shape: f32[8,16], index: 4, kind: input, shape index: {}]
  %s5 = inlined_call_operand.vmem [shape: f32[1,16], index: 5, kind: input, shape index: {}]
  %s6 = inlined_call_operand.vmem [shape: f32[1,16], index: 6, kind: input, shape index: {}]
  %s7 = inlined_call_operand.vmem [shape: f32[9,16,4], index: 7, kind: input, shape index: {}]
  %s8 = inlined_call_operand.vmem [shape: f32[50,4], index: 8, kind: output, shape index: {}]
  %s9 = sld [smem:[#allocation0]]
  $region42: #{mycnn_forward.13} parent=0
    _
  %s11 = ssub.s32 1, %s9
  %s12 = scalar_select 0, %s11, %s9
  // Predicated region
  $region2: #{mycnn_forward.13} parent=0 // pred_check
    _
  $region3: #{mycnn_forward.13} parent=0 // pred_check_branch
    %14 = sbr.rel (0) target = $region5
  $region4: #{mycnn_forward.13} parent=0 // pred_region
    _
  $region5: #{mycnn_forward.13} parent=0 // pred_fallthru
    _
  // Predicated region
  $region6: #{mycnn_forward.13} parent=0 // pred_check
    _
  $region7: #{mycnn_forward.13} parent=0 // pred_check_branch
    %16 = sbr.rel (0) target = $region9
  $region8: #{mycnn_forward.13} parent=0 // pred_region
    _
  $region9: #{mycnn_forward.13} parent=0 // pred_fallthru
    _
  // Predicated region
  $region10: #{mycnn_forward.13} parent=0 // pred_check
    _
  $region11: #{mycnn_forward.13} parent=0 // pred_check_branch
    %18 = sbr.rel (0) target = $region13
  $region12: #{mycnn_forward.13} parent=0 // pred_region
    _
  $region13: #{mycnn_forward.13} parent=0 // pred_fallthru
    _
  // Predicated region
  $region14: #{mycnn_forward.13} parent=0 // pred_check
    _
  $region15: #{mycnn_forward.13} parent=0 // pred_check_branch
    %20 = sbr.rel (0) target = $region17
  $region16: #{mycnn_forward.13} parent=0 // pred_region
    _
  $region17: #{mycnn_forward.13} parent=0 // pred_fallthru
    _
  // Predicated region
  $region18: #{mycnn_forward.13} parent=0 // pred_check
    _
  $region19: #{mycnn_forward.13} parent=0 // pred_check_branch
    %22 = sbr.rel (0) target = $region21
  $region20: #{mycnn_forward.13} parent=0 // pred_region
    _
  $region21: #{mycnn_forward.13} parent=0 // pred_fallthru
    _
  // Predicated region
  $region22: #{mycnn_forward.13} parent=0 // pred_check
    _
  $region23: #{mycnn_forward.13} parent=0 // pred_check_branch
    %24 = sbr.rel (0) target = $region25
  $region24: #{mycnn_forward.13} parent=0 // pred_region
    _
  $region25: #{mycnn_forward.13} parent=0 // pred_fallthru
    _
  // Predicated region
  $region26: #{mycnn_forward.13} parent=0 // pred_check
    _
  $region27: #{mycnn_forward.13} parent=0 // pred_check_branch
    %26 = sbr.rel (0) target = $region29
  $region28: #{mycnn_forward.13} parent=0 // pred_region
    _
  $region29: #{mycnn_forward.13} parent=0 // pred_fallthru
    _
  // Predicated region
  $region30: #{mycnn_forward.13} parent=0 // pred_check
    _
  $region31: #{mycnn_forward.13} parent=0 // pred_check_branch
    %28 = sbr.rel (0) target = $region33
  $region32: #{mycnn_forward.13} parent=0 // pred_region
    _
  $region33: #{mycnn_forward.13} parent=0 // pred_fallthru
    _
  %v30 = vld [vmem:[%s0] sm:$0xff]
  %v31 = vld [vmem:[%s0 + $0x8] sm:$0xff]
  %v32 = vld [vmem:[%s0 + $0x10] sm:$0xff]
  %v33 = vld [vmem:[%s0 + $0x18] sm:$0xff]
  %v34 = vld [vmem:[%s0 + $0x20] sm:$0xff]
  %v35 = vld [vmem:[%s0 + $0x28] sm:$0xff]
  %v36 = vld [vmem:[%s0 + $0x30] sm:$0xff]
  %v37 = vld [vmem:[%s0 + $0x38] sm:$0x3f]
  %v38 = vld [vmem:[%s2] sm:$0x1]
  %v40 = vlaneseq
  %v41 = vshrl.u32 %v40, 7
  %v42 = vsub.s32 0, %v41
  %v43 = vrot.slane %v38, %v42
  %v45 = vmul.f32 %v30, %v43
  %v46 = vmul.f32 %v31, %v43
  %v47 = vmul.f32 %v32, %v43
  %v48 = vmul.f32 %v33, %v43
  %v49 = vmul.f32 %v34, %v43
  %v50 = vmul.f32 %v35, %v43
  %v51 = vmul.f32 %v36, %v43
  %v52 = vmul.f32 %v37, %v43
  %v53 = vld [vmem:[%s3] sm:$0x1]
  %v55 = vlaneseq
  %v56 = vshrl.u32 %v55, 7
  %v57 = vsub.s32 0, %v56
  %v58 = vrot.slane %v53, %v57
  %v60 = vadd.f32 %v45, %v58
  %v61 = vadd.f32 %v46, %v58
  %v62 = vadd.f32 %v47, %v58
  %v63 = vadd.f32 %v48, %v58
  %v64 = vadd.f32 %v49, %v58
  %v65 = vadd.f32 %v50, %v58
  %v66 = vadd.f32 %v51, %v58
  %v67 = vadd.f32 %v52, %v58
  %v68 = vmax.f32 %v60, 0.0
  %v69 = vmax.f32 %v61, 0.0
  %v70 = vmax.f32 %v62, 0.0
  %v71 = vmax.f32 %v63, 0.0
  %v72 = vmax.f32 %v64, 0.0
  %v73 = vmax.f32 %v65, 0.0
  %v74 = vmax.f32 %v66, 0.0
  %v75 = vmax.f32 %v67, 0.0
  %v76 = vpack.c.bf16 %v69, %v68
  %v77 = vpack.c.bf16 %v71, %v70
  %v78 = vpack.c.bf16 %v73, %v72
  %v79 = vpack.c.bf16 %v75, %v74
  %v80 = vld [vmem:[%s4] sm:$0xff]
  %v81 = vpack.c.bf16 %v80, %v80
  %vm82 = vcmask 64512
  %v84 = vsel %vm82, %v76, 0
  %v87 = vsel %vm82, %v77, 0
  %v90 = vsel %vm82, %v78, 0
  %v93 = vsel %vm82, %v79, 0
  %vm95 = vcmask 1043456
  %v97 = vsel %vm95, %v81, 0
  %99 = vmatprep.subr.bf16.mxu0 0
  %100 = vmatpush1.bf16.msra.mxu0 0
  %101 = vmatprep.subr.bf16.mxu0 0
  %102 = vmatpush1.bf16.msra.mxu0 0
  %103 = vmatprep.subr.bf16.mxu0 0
  %104 = vmatpush1.bf16.msra.mxu0 0
  %105 = vmatprep.subr.bf16.mxu0 0
  %106 = vmatpush1.bf16.msra.mxu0 0
  %107 = vmatprep.subr.bf16.mxu0 0
  %108 = vmatpush1.bf16.msra.mxu0 0
  %109 = vmatprep.subr.bf16.mxu0 0
  %110 = vmatpush1.bf16.msra.mxu0 0
  %111 = vmatprep.subr.bf16.mxu0 0
  %112 = vmatpush1.bf16.msra.mxu0 0
  %113 = vmatprep.subr.bf16.mxu0 0
  %114 = vmatpush1.bf16.msra.mxu0 %v97
  %115 = vmatprep.subr.bf16.mxu0 0
  %116 = vmatpush2.bf16.msra.mxu0 0
  %117 = vmatprep.subr.bf16.mxu0 0
  %118 = vmatpush2.bf16.msra.mxu0 0
  %119 = vmatprep.subr.bf16.mxu0 0
  %120 = vmatpush2.bf16.msra.mxu0 0
  %121 = vmatprep.subr.bf16.mxu0 0
  %122 = vmatpush2.bf16.msra.mxu0 0
  %123 = vmatprep.subr.bf16.mxu0 0
  %124 = vmatpush2.bf16.msra.mxu0 0
  %125 = vmatprep.subr.bf16.mxu0 0
  %126 = vmatpush2.bf16.msra.mxu0 0
  %127 = vmatprep.subr.bf16.mxu0 0
  %128 = vmatpush2.bf16.msra.mxu0 0
  %129 = vmatprep.subr.bf16.mxu0 0
  %130 = vmatpush2.bf16.msra.mxu0 0
  %131 = vmatprep.mubr.bf16.mxu0 0
  %132 = vmatmul.mubr.bf16.gmra.mxu0 %v84
  %v133 = vpop.f32.mrf.mxu0
  %v134 = vadd.f32 0.0, %v133
  %v135 = vpop.f32.mrf.mxu0
  %v136 = vpop.f32.mrf.mxu0
  %v137 = vadd.f32 0.0, %v136
  %v138 = vpop.f32.mrf.mxu0
  %139 = vmatprep.mubr.bf16.mxu0 0
  %140 = vmatmul.mubr.bf16.gmra.mxu0 %v87
  %v141 = vpop.f32.mrf.mxu0
  %v142 = vadd.f32 0.0, %v141
  %v143 = vpop.f32.mrf.mxu0
  %v144 = vpop.f32.mrf.mxu0
  %v145 = vadd.f32 0.0, %v144
  %v146 = vpop.f32.mrf.mxu0
  %147 = vmatprep.mubr.bf16.mxu0 0
  %148 = vmatmul.mubr.bf16.gmra.mxu0 %v90
  %v149 = vpop.f32.mrf.mxu0
  %v150 = vadd.f32 0.0, %v149
  %v151 = vpop.f32.mrf.mxu0
  %v152 = vpop.f32.mrf.mxu0
  %v153 = vadd.f32 0.0, %v152
  %v154 = vpop.f32.mrf.mxu0
  %155 = vmatprep.mubr.bf16.mxu0 0
  %156 = vmatmul.mubr.bf16.gmra.mxu0 %v93
  %v157 = vpop.f32.mrf.mxu0
  %v158 = vadd.f32 0.0, %v157
  %v159 = vpop.f32.mrf.mxu0
  %v160 = vpop.f32.mrf.mxu0
  %v161 = vadd.f32 0.0, %v160
  %v162 = vpop.f32.mrf.mxu0
  %163 = vdwg.mxu0
  %v164 = vld [vmem:[%s5] sm:$0x1]
  %v166 = vlaneseq
  %v167 = vshrl.u32 %v166, 7
  %v168 = vsub.s32 0, %v167
  %v169 = vrot.slane %v164, %v168
  %v171 = vmul.f32 %v134, %v169
  %v172 = vmul.f32 %v137, %v169
  %v173 = vmul.f32 %v142, %v169
  %v174 = vmul.f32 %v145, %v169
  %v175 = vmul.f32 %v150, %v169
  %v176 = vmul.f32 %v153, %v169
  %v177 = vmul.f32 %v158, %v169
  %v178 = vmul.f32 %v161, %v169
  %v179 = vld [vmem:[%s6] sm:$0x1]
  %v181 = vlaneseq
  %v182 = vshrl.u32 %v181, 7
  %v183 = vsub.s32 0, %v182
  %v184 = vrot.slane %v179, %v183
  %v186 = vadd.f32 %v171, %v184
  %v187 = vadd.f32 %v172, %v184
  %v188 = vadd.f32 %v173, %v184
  %v189 = vadd.f32 %v174, %v184
  %v190 = vadd.f32 %v175, %v184
  %v191 = vadd.f32 %v176, %v184
  %v192 = vadd.f32 %v177, %v184
  %v193 = vadd.f32 %v178, %v184
  %v194 = vmax.f32 %v186, 0.0
  %v195 = vmax.f32 %v187, 0.0
  %v196 = vmax.f32 %v188, 0.0
  %v197 = vmax.f32 %v189, 0.0
  %v198 = vmax.f32 %v190, 0.0
  %v199 = vmax.f32 %v191, 0.0
  %v200 = vmax.f32 %v192, 0.0
  %v201 = vmax.f32 %v193, 0.0
  %v202 = vld [vmem:[%s1] sm:$0xff]
  %v203 = vld [vmem:[%s1 + $0x8] sm:$0xff]
  %v204 = vld [vmem:[%s1 + $0x10] sm:$0xff]
  %v205 = vld [vmem:[%s1 + $0x18] sm:$0xff]
  %v206 = vld [vmem:[%s1 + $0x20] sm:$0xff]
  %v207 = vld [vmem:[%s1 + $0x28] sm:$0xff]
  %v208 = vld [vmem:[%s1 + $0x30] sm:$0xff]
  %v209 = vld [vmem:[%s1 + $0x38] sm:$0x3f]
  %vm210 = vcmp.gt.f32.partialorder %v202, 0.0
  %vm211 = vcmp.gt.f32.partialorder %v203, 0.0
  %vm212 = vcmp.gt.f32.partialorder %v204, 0.0
  %vm213 = vcmp.gt.f32.partialorder %v205, 0.0
  %vm214 = vcmp.gt.f32.partialorder %v206, 0.0
  %vm215 = vcmp.gt.f32.partialorder %v207, 0.0
  %vm216 = vcmp.gt.f32.partialorder %v208, 0.0
  %vm217 = vcmp.gt.f32.partialorder %v209, 0.0
  %v218 = vsel %vm210, 1, 0
  %v219 = vsel %vm211, 1, 0
  %v220 = vsel %vm212, 1, 0
  %v221 = vsel %vm213, 1, 0
  %v222 = vsel %vm214, 1, 0
  %v223 = vsel %vm215, 1, 0
  %v224 = vsel %vm216, 1, 0
  %v225 = vsel %vm217, 1, 0
  %226 = vset.pattern.permute.xlu0 0
  %227 = vperm.xlu0 %226, %v218
  %v228 = vpop.permute.xlu0 %227
  %229 = vset.pattern.permute.xlu0 0
  %230 = vperm.xlu0 %229, %v219
  %v231 = vpop.permute.xlu0 %230
  %232 = vset.pattern.permute.xlu0 0
  %233 = vperm.xlu0 %232, %v220
  %v234 = vpop.permute.xlu0 %233
  %235 = vset.pattern.permute.xlu0 0
  %236 = vperm.xlu0 %235, %v221
  %v237 = vpop.permute.xlu0 %236
  %238 = vset.pattern.permute.xlu0 0
  %239 = vperm.xlu0 %238, %v222
  %v240 = vpop.permute.xlu0 %239
  %241 = vset.pattern.permute.xlu0 0
  %242 = vperm.xlu0 %241, %v223
  %v243 = vpop.permute.xlu0 %242
  %244 = vset.pattern.permute.xlu0 0
  %245 = vperm.xlu0 %244, %v224
  %v246 = vpop.permute.xlu0 %245
  %247 = vset.pattern.permute.xlu0 0
  %248 = vperm.xlu0 %247, %v225
  %v249 = vpop.permute.xlu0 %248
  %vm250 = vcmp.eq.s32.totalorder %v228, 1
  %vm251 = vcmp.eq.s32.totalorder %v231, 1
  %vm252 = vcmp.eq.s32.totalorder %v234, 1
  %vm253 = vcmp.eq.s32.totalorder %v237, 1
  %vm254 = vcmp.eq.s32.totalorder %v240, 1
  %vm255 = vcmp.eq.s32.totalorder %v243, 1
  %vm256 = vcmp.eq.s32.totalorder %v246, 1
  %vm257 = vcmp.eq.s32.totalorder %v249, 1
  %v258 = vsel %vm250, %v194, 0.0
  %v259 = vsel %vm251, %v195, 0.0
  %v260 = vsel %vm252, %v196, 0.0
  %v261 = vsel %vm253, %v197, 0.0
  %v262 = vsel %vm254, %v198, 0.0
  %v263 = vsel %vm255, %v199, 0.0
  %v264 = vsel %vm256, %v200, 0.0
  %v265 = vsel %vm257, %v201, 0.0
  %v266 = vpack.c.bf16 %v259, %v258
  %v267 = vpack.c.bf16 %v261, %v260
  %v268 = vpack.c.bf16 %v263, %v262
  %v269 = vpack.c.bf16 %v264, %v264
  %v270 = vld [vmem:[%s7] sm:$0xff]
  %v271 = vld [vmem:[%s7 + $0x8] sm:$0xff]
  %v272 = vpack.c.bf16 %v271, %v270
  %s273 = scalar_lea.vmem %s7, 16
  %v274 = vld [vmem:[%s273] sm:$0xff]
  %v275 = vld [vmem:[%s273 + $0x8] sm:$0xff]
  %v276 = vpack.c.bf16 %v275, %v274
  %vm277 = vsmask.f32 7424
  %v279 = vshrl.u32 %v266, 16
  %v281 = vshll.u32 %v266, 16
  %v283 = vrot.slane %v281, 1
  %v284 = vor.u32 %v279, %v283
  %v286 = vshll.u32 %v267, 16
  %v288 = vrot.slane %v286, 1
  %v289 = vsel %vm277, %v284, %v288
  %v290 = vshrl.u32 %v267, 16
  %v292 = vor.u32 %v290, %v288
  %v294 = vshll.u32 %v268, 16
  %v296 = vrot.slane %v294, 1
  %v297 = vsel %vm277, %v292, %v296
  %v298 = vshrl.u32 %v268, 16
  %v300 = vor.u32 %v298, %v296
  %v302 = vshll.u32 %v269, 16
  %v304 = vrot.slane %v302, 1
  %v305 = vsel %vm277, %v300, %v304
  %v306 = vshrl.u32 %v269, 16
  %v308 = vor.u32 %v306, %v304
  %vm309 = vcmask 130048
  %v311 = vsel %vm309, %v289, 0
  %v314 = vsel %vm309, %v297, 0
  %v317 = vsel %vm309, %v305, 0
  %v320 = vsel %vm309, %v308, 0
  %322 = vmatprep.subr.bf16.mxu0 0
  %323 = vmatpush1.bf16.msra.mxu0 0
  %324 = vmatprep.subr.bf16.mxu0 0
  %325 = vmatpush1.bf16.msra.mxu0 0
  %326 = vmatprep.subr.bf16.mxu0 0
  %327 = vmatpush1.bf16.msra.mxu0 0
  %328 = vmatprep.subr.bf16.mxu0 0
  %329 = vmatpush1.bf16.msra.mxu0 0
  %330 = vmatprep.subr.bf16.mxu0 0
  %331 = vmatpush1.bf16.msra.mxu0 0
  %332 = vmatprep.subr.bf16.mxu0 0
  %333 = vmatpush1.bf16.msra.mxu0 0
  %334 = vmatprep.subr.bf16.mxu0 0
  %335 = vmatpush1.bf16.msra.mxu0 0
  %336 = vmatprep.subr.bf16.mxu0 0
  %337 = vmatpush1.bf16.msra.mxu0 %v276
  %338 = vmatprep.subr.bf16.mxu0 0
  %339 = vmatpush2.bf16.msra.mxu0 0
  %340 = vmatprep.subr.bf16.mxu0 0
  %341 = vmatpush2.bf16.msra.mxu0 0
  %342 = vmatprep.subr.bf16.mxu0 0
  %343 = vmatpush2.bf16.msra.mxu0 0
  %344 = vmatprep.subr.bf16.mxu0 0
  %345 = vmatpush2.bf16.msra.mxu0 0
  %346 = vmatprep.subr.bf16.mxu0 0
  %347 = vmatpush2.bf16.msra.mxu0 0
  %348 = vmatprep.subr.bf16.mxu0 0
  %349 = vmatpush2.bf16.msra.mxu0 0
  %350 = vmatprep.subr.bf16.mxu0 0
  %351 = vmatpush2.bf16.msra.mxu0 0
  %352 = vmatprep.subr.bf16.mxu0 0
  %353 = vmatpush2.bf16.msra.mxu0 0
  %354 = vmatprep.mubr.bf16.mxu0 0
  %355 = vmatmul.mubr.bf16.gmra.mxu0 %v311
  %v356 = vpop.f32.mrf.mxu0
  %v357 = vadd.f32 0.0, %v356
  %v358 = vpop.f32.mrf.mxu0
  %v359 = vpop.f32.mrf.mxu0
  %v360 = vadd.f32 0.0, %v359
  %v361 = vpop.f32.mrf.mxu0
  %362 = vmatprep.mubr.bf16.mxu0 0
  %363 = vmatmul.mubr.bf16.gmra.mxu0 %v314
  %v364 = vpop.f32.mrf.mxu0
  %v365 = vadd.f32 0.0, %v364
  %v366 = vpop.f32.mrf.mxu0
  %v367 = vpop.f32.mrf.mxu0
  %v368 = vadd.f32 0.0, %v367
  %v369 = vpop.f32.mrf.mxu0
  %370 = vmatprep.mubr.bf16.mxu0 0
  %371 = vmatmul.mubr.bf16.gmra.mxu0 %v317
  %v372 = vpop.f32.mrf.mxu0
  %v373 = vadd.f32 0.0, %v372
  %v374 = vpop.f32.mrf.mxu0
  %v375 = vpop.f32.mrf.mxu0
  %v376 = vadd.f32 0.0, %v375
  %v377 = vpop.f32.mrf.mxu0
  %378 = vmatprep.mubr.bf16.mxu0 0
  %379 = vmatmul.mubr.bf16.gmra.mxu0 %v320
  %v380 = vpop.f32.mrf.mxu0
  %v381 = vadd.f32 0.0, %v380
  %v382 = vpop.f32.mrf.mxu0
  %v383 = vpop.f32.mrf.mxu0
  %v384 = vpop.f32.mrf.mxu0
  %385 = vdwg.mxu0
  %v386 = vsel %vm309, %v266, 0
  %v388 = vsel %vm309, %v267, 0
  %v390 = vsel %vm309, %v268, 0
  %v392 = vsel %vm309, %v269, 0
  %394 = vmatprep.subr.bf16.mxu0 0
  %395 = vmatpush1.bf16.msra.mxu0 0
  %396 = vmatprep.subr.bf16.mxu0 0
  %397 = vmatpush1.bf16.msra.mxu0 0
  %398 = vmatprep.subr.bf16.mxu0 0
  %399 = vmatpush1.bf16.msra.mxu0 0
  %400 = vmatprep.subr.bf16.mxu0 0
  %401 = vmatpush1.bf16.msra.mxu0 0
  %402 = vmatprep.subr.bf16.mxu0 0
  %403 = vmatpush1.bf16.msra.mxu0 0
  %404 = vmatprep.subr.bf16.mxu0 0
  %405 = vmatpush1.bf16.msra.mxu0 0
  %406 = vmatprep.subr.bf16.mxu0 0
  %407 = vmatpush1.bf16.msra.mxu0 0
  %408 = vmatprep.subr.bf16.mxu0 0
  %409 = vmatpush1.bf16.msra.mxu0 %v272
  %410 = vmatprep.subr.bf16.mxu0 0
  %411 = vmatpush2.bf16.msra.mxu0 0
  %412 = vmatprep.subr.bf16.mxu0 0
  %413 = vmatpush2.bf16.msra.mxu0 0
  %414 = vmatprep.subr.bf16.mxu0 0
  %415 = vmatpush2.bf16.msra.mxu0 0
  %416 = vmatprep.subr.bf16.mxu0 0
  %417 = vmatpush2.bf16.msra.mxu0 0
  %418 = vmatprep.subr.bf16.mxu0 0
  %419 = vmatpush2.bf16.msra.mxu0 0
  %420 = vmatprep.subr.bf16.mxu0 0
  %421 = vmatpush2.bf16.msra.mxu0 0
  %422 = vmatprep.subr.bf16.mxu0 0
  %423 = vmatpush2.bf16.msra.mxu0 0
  %424 = vmatprep.subr.bf16.mxu0 0
  %425 = vmatpush2.bf16.msra.mxu0 0
  %426 = vmatprep.mubr.bf16.mxu0 0
  %427 = vmatmul.mubr.bf16.gmra.mxu0 %v386
  %v428 = vpop.f32.mrf.mxu0
  %v429 = vadd.f32 %v357, %v428
  %v430 = vpop.f32.mrf.mxu0
  %v431 = vpop.f32.mrf.mxu0
  %v432 = vadd.f32 %v360, %v431
  %v433 = vpop.f32.mrf.mxu0
  %434 = vmatprep.mubr.bf16.mxu0 0
  %435 = vmatmul.mubr.bf16.gmra.mxu0 %v388
  %v436 = vpop.f32.mrf.mxu0
  %v437 = vadd.f32 %v365, %v436
  %v438 = vpop.f32.mrf.mxu0
  %v439 = vpop.f32.mrf.mxu0
  %v440 = vadd.f32 %v368, %v439
  %v441 = vpop.f32.mrf.mxu0
  %442 = vmatprep.mubr.bf16.mxu0 0
  %443 = vmatmul.mubr.bf16.gmra.mxu0 %v390
  %v444 = vpop.f32.mrf.mxu0
  %v445 = vadd.f32 %v373, %v444
  %v446 = vpop.f32.mrf.mxu0
  %v447 = vpop.f32.mrf.mxu0
  %v448 = vadd.f32 %v376, %v447
  %v449 = vpop.f32.mrf.mxu0
  %450 = vmatprep.mubr.bf16.mxu0 0
  %451 = vmatmul.mubr.bf16.gmra.mxu0 %v392
  %v452 = vpop.f32.mrf.mxu0
  %v453 = vadd.f32 %v381, %v452
  %v454 = vpop.f32.mrf.mxu0
  %v455 = vpop.f32.mrf.mxu0
  %v456 = vpop.f32.mrf.mxu0
  %457 = vdwg.mxu0
  %s458 = scalar_lea.vmem %s7, 32
  %v459 = vld [vmem:[%s458] sm:$0xff]
  %v460 = vld [vmem:[%s458 + $0x8] sm:$0xff]
  %v461 = vpack.c.bf16 %v460, %v459
  %vm466 = vcmask 1046528
  %v467 = vrot.slane %v266, 1
  %v468 = vrot.slane %v267, 1
  %v469 = vsel %vm466, %v467, %v468
  %v470 = vrot.slane %v268, 1
  %v471 = vsel %vm466, %v468, %v470
  %v472 = vrot.slane %v269, 1
  %v473 = vsel %vm466, %v470, %v472
  %v475 = vsel %vm309, %v469, 0
  %v478 = vsel %vm309, %v471, 0
  %v481 = vsel %vm309, %v473, 0
  %v484 = vsel %vm309, %v472, 0
  %486 = vmatprep.subr.bf16.mxu0 0
  %487 = vmatpush1.bf16.msra.mxu0 0
  %488 = vmatprep.subr.bf16.mxu0 0
  %489 = vmatpush1.bf16.msra.mxu0 0
  %490 = vmatprep.subr.bf16.mxu0 0
  %491 = vmatpush1.bf16.msra.mxu0 0
  %492 = vmatprep.subr.bf16.mxu0 0
  %493 = vmatpush1.bf16.msra.mxu0 0
  %494 = vmatprep.subr.bf16.mxu0 0
  %495 = vmatpush1.bf16.msra.mxu0 0
  %496 = vmatprep.subr.bf16.mxu0 0
  %497 = vmatpush1.bf16.msra.mxu0 0
  %498 = vmatprep.subr.bf16.mxu0 0
  %499 = vmatpush1.bf16.msra.mxu0 0
  %500 = vmatprep.subr.bf16.mxu0 0
  %501 = vmatpush1.bf16.msra.mxu0 %v461
  %502 = vmatprep.subr.bf16.mxu0 0
  %503 = vmatpush2.bf16.msra.mxu0 0
  %504 = vmatprep.subr.bf16.mxu0 0
  %505 = vmatpush2.bf16.msra.mxu0 0
  %506 = vmatprep.subr.bf16.mxu0 0
  %507 = vmatpush2.bf16.msra.mxu0 0
  %508 = vmatprep.subr.bf16.mxu0 0
  %509 = vmatpush2.bf16.msra.mxu0 0
  %510 = vmatprep.subr.bf16.mxu0 0
  %511 = vmatpush2.bf16.msra.mxu0 0
  %512 = vmatprep.subr.bf16.mxu0 0
  %513 = vmatpush2.bf16.msra.mxu0 0
  %514 = vmatprep.subr.bf16.mxu0 0
  %515 = vmatpush2.bf16.msra.mxu0 0
  %516 = vmatprep.subr.bf16.mxu0 0
  %517 = vmatpush2.bf16.msra.mxu0 0
  %518 = vmatprep.mubr.bf16.mxu0 0
  %519 = vmatmul.mubr.bf16.gmra.mxu0 %v475
  %v520 = vpop.f32.mrf.mxu0
  %v521 = vadd.f32 0.0, %v520
  %v522 = vpop.f32.mrf.mxu0
  %v523 = vpop.f32.mrf.mxu0
  %v524 = vadd.f32 0.0, %v523
  %v525 = vpop.f32.mrf.mxu0
  %526 = vmatprep.mubr.bf16.mxu0 0
  %527 = vmatmul.mubr.bf16.gmra.mxu0 %v478
  %v528 = vpop.f32.mrf.mxu0
  %v529 = vadd.f32 0.0, %v528
  %v530 = vpop.f32.mrf.mxu0
  %v531 = vpop.f32.mrf.mxu0
  %v532 = vadd.f32 0.0, %v531
  %v533 = vpop.f32.mrf.mxu0
  %534 = vmatprep.mubr.bf16.mxu0 0
  %535 = vmatmul.mubr.bf16.gmra.mxu0 %v481
  %v536 = vpop.f32.mrf.mxu0
  %v537 = vadd.f32 0.0, %v536
  %v538 = vpop.f32.mrf.mxu0
  %v539 = vpop.f32.mrf.mxu0
  %v540 = vadd.f32 0.0, %v539
  %v541 = vpop.f32.mrf.mxu0
  %542 = vmatprep.mubr.bf16.mxu0 0
  %543 = vmatmul.mubr.bf16.gmra.mxu0 %v484
  %v544 = vpop.f32.mrf.mxu0
  %v545 = vadd.f32 0.0, %v544
  %v546 = vpop.f32.mrf.mxu0
  %v547 = vpop.f32.mrf.mxu0
  %v548 = vpop.f32.mrf.mxu0
  %549 = vdwg.mxu0
  %v550 = vadd.f32 %v429, %v521
  %v551 = vadd.f32 %v432, %v524
  %v552 = vadd.f32 %v437, %v529
  %v553 = vadd.f32 %v440, %v532
  %v554 = vadd.f32 %v445, %v537
  %v555 = vadd.f32 %v448, %v540
  %v556 = vadd.f32 %v453, %v545
  %s557 = scalar_lea.vmem %s7, 48
  %v558 = vld [vmem:[%s557] sm:$0xff]
  %v559 = vld [vmem:[%s557 + $0x8] sm:$0xff]
  %v560 = vpack.c.bf16 %v559, %v558
  %vm561 = vsmask.f32 5376
  %v562 = vrot.slane %v279, 2
  %v563 = vrot.slane %v281, 3
  %v564 = vor.u32 %v562, %v563
  %v565 = vrot.slane %v290, 2
  %v566 = vrot.slane %v286, 3
  %v567 = vor.u32 %v565, %v566
  %v568 = vsel %vm561, %v564, %v567
  %v569 = vrot.slane %v298, 2
  %v570 = vrot.slane %v294, 3
  %v571 = vor.u32 %v569, %v570
  %v572 = vsel %vm561, %v567, %v571
  %v573 = vrot.slane %v306, 2
  %v574 = vrot.slane %v302, 3
  %v575 = vor.u32 %v573, %v574
  %v576 = vsel %vm561, %v571, %v575
  %v578 = vsel %vm309, %v568, 0
  %v581 = vsel %vm309, %v572, 0
  %v584 = vsel %vm309, %v576, 0
  %v587 = vsel %vm309, %v575, 0
  %589 = vmatprep.subr.bf16.mxu0 0
  %590 = vmatpush1.bf16.msra.mxu0 0
  %591 = vmatprep.subr.bf16.mxu0 0
  %592 = vmatpush1.bf16.msra.mxu0 0
  %593 = vmatprep.subr.bf16.mxu0 0
  %594 = vmatpush1.bf16.msra.mxu0 0
  %595 = vmatprep.subr.bf16.mxu0 0
  %596 = vmatpush1.bf16.msra.mxu0 0
  %597 = vmatprep.subr.bf16.mxu0 0
  %598 = vmatpush1.bf16.msra.mxu0 0
  %599 = vmatprep.subr.bf16.mxu0 0
  %600 = vmatpush1.bf16.msra.mxu0 0
  %601 = vmatprep.subr.bf16.mxu0 0
  %602 = vmatpush1.bf16.msra.mxu0 0
  %603 = vmatprep.subr.bf16.mxu0 0
  %604 = vmatpush1.bf16.msra.mxu0 %v560
  %605 = vmatprep.subr.bf16.mxu0 0
  %606 = vmatpush2.bf16.msra.mxu0 0
  %607 = vmatprep.subr.bf16.mxu0 0
  %608 = vmatpush2.bf16.msra.mxu0 0
  %609 = vmatprep.subr.bf16.mxu0 0
  %610 = vmatpush2.bf16.msra.mxu0 0
  %611 = vmatprep.subr.bf16.mxu0 0
  %612 = vmatpush2.bf16.msra.mxu0 0
  %613 = vmatprep.subr.bf16.mxu0 0
  %614 = vmatpush2.bf16.msra.mxu0 0
  %615 = vmatprep.subr.bf16.mxu0 0
  %616 = vmatpush2.bf16.msra.mxu0 0
  %617 = vmatprep.subr.bf16.mxu0 0
  %618 = vmatpush2.bf16.msra.mxu0 0
  %619 = vmatprep.subr.bf16.mxu0 0
  %620 = vmatpush2.bf16.msra.mxu0 0
  %621 = vmatprep.mubr.bf16.mxu0 0
  %622 = vmatmul.mubr.bf16.gmra.mxu0 %v578
  %v623 = vpop.f32.mrf.mxu0
  %v624 = vadd.f32 0.0, %v623
  %v625 = vpop.f32.mrf.mxu0
  %v626 = vpop.f32.mrf.mxu0
  %v627 = vadd.f32 0.0, %v626
  %v628 = vpop.f32.mrf.mxu0
  %629 = vmatprep.mubr.bf16.mxu0 0
  %630 = vmatmul.mubr.bf16.gmra.mxu0 %v581
  %v631 = vpop.f32.mrf.mxu0
  %v632 = vadd.f32 0.0, %v631
  %v633 = vpop.f32.mrf.mxu0
  %v634 = vpop.f32.mrf.mxu0
  %v635 = vadd.f32 0.0, %v634
  %v636 = vpop.f32.mrf.mxu0
  %637 = vmatprep.mubr.bf16.mxu0 0
  %638 = vmatmul.mubr.bf16.gmra.mxu0 %v584
  %v639 = vpop.f32.mrf.mxu0
  %v640 = vadd.f32 0.0, %v639
  %v641 = vpop.f32.mrf.mxu0
  %v642 = vpop.f32.mrf.mxu0
  %v643 = vadd.f32 0.0, %v642
  %v644 = vpop.f32.mrf.mxu0
  %645 = vmatprep.mubr.bf16.mxu0 0
  %646 = vmatmul.mubr.bf16.gmra.mxu0 %v587
  %v647 = vpop.f32.mrf.mxu0
  %v648 = vadd.f32 0.0, %v647
  %v649 = vpop.f32.mrf.mxu0
  %v650 = vpop.f32.mrf.mxu0
  %v651 = vpop.f32.mrf.mxu0
  %652 = vdwg.mxu0
  %v653 = vadd.f32 %v550, %v624
  %v654 = vadd.f32 %v551, %v627
  %v655 = vadd.f32 %v552, %v632
  %v656 = vadd.f32 %v553, %v635
  %v657 = vadd.f32 %v554, %v640
  %v658 = vadd.f32 %v555, %v643
  %v659 = vadd.f32 %v556, %v648
  %s660 = scalar_lea.vmem %s7, 64
  %v661 = vld [vmem:[%s660] sm:$0xff]
  %v662 = vld [vmem:[%s660 + $0x8] sm:$0xff]
  %v663 = vpack.c.bf16 %v662, %v661
  %vm664 = vcmask 1044480
  %v665 = vrot.slane %v266, 3
  %v666 = vrot.slane %v267, 3
  %v667 = vsel %vm664, %v665, %v666
  %v668 = vrot.slane %v268, 3
  %v669 = vsel %vm664, %v666, %v668
  %v670 = vrot.slane %v269, 3
  %v671 = vsel %vm664, %v668, %v670
  %v673 = vsel %vm309, %v667, 0
  %v676 = vsel %vm309, %v669, 0
  %v679 = vsel %vm309, %v671, 0
  %v682 = vsel %vm309, %v670, 0
  %684 = vmatprep.subr.bf16.mxu0 0
  %685 = vmatpush1.bf16.msra.mxu0 0
  %686 = vmatprep.subr.bf16.mxu0 0
  %687 = vmatpush1.bf16.msra.mxu0 0
  %688 = vmatprep.subr.bf16.mxu0 0
  %689 = vmatpush1.bf16.msra.mxu0 0
  %690 = vmatprep.subr.bf16.mxu0 0
  %691 = vmatpush1.bf16.msra.mxu0 0
  %692 = vmatprep.subr.bf16.mxu0 0
  %693 = vmatpush1.bf16.msra.mxu0 0
  %694 = vmatprep.subr.bf16.mxu0 0
  %695 = vmatpush1.bf16.msra.mxu0 0
  %696 = vmatprep.subr.bf16.mxu0 0
  %697 = vmatpush1.bf16.msra.mxu0 0
  %698 = vmatprep.subr.bf16.mxu0 0
  %699 = vmatpush1.bf16.msra.mxu0 %v663
  %700 = vmatprep.subr.bf16.mxu0 0
  %701 = vmatpush2.bf16.msra.mxu0 0
  %702 = vmatprep.subr.bf16.mxu0 0
  %703 = vmatpush2.bf16.msra.mxu0 0
  %704 = vmatprep.subr.bf16.mxu0 0
  %705 = vmatpush2.bf16.msra.mxu0 0
  %706 = vmatprep.subr.bf16.mxu0 0
  %707 = vmatpush2.bf16.msra.mxu0 0
  %708 = vmatprep.subr.bf16.mxu0 0
  %709 = vmatpush2.bf16.msra.mxu0 0
  %710 = vmatprep.subr.bf16.mxu0 0
  %711 = vmatpush2.bf16.msra.mxu0 0
  %712 = vmatprep.subr.bf16.mxu0 0
  %713 = vmatpush2.bf16.msra.mxu0 0
  %714 = vmatprep.subr.bf16.mxu0 0
  %715 = vmatpush2.bf16.msra.mxu0 0
  %716 = vmatprep.mubr.bf16.mxu0 0
  %717 = vmatmul.mubr.bf16.gmra.mxu0 %v673
  %v718 = vpop.f32.mrf.mxu0
  %v719 = vadd.f32 0.0, %v718
  %v720 = vpop.f32.mrf.mxu0
  %v721 = vpop.f32.mrf.mxu0
  %v722 = vadd.f32 0.0, %v721
  %v723 = vpop.f32.mrf.mxu0
  %724 = vmatprep.mubr.bf16.mxu0 0
  %725 = vmatmul.mubr.bf16.gmra.mxu0 %v676
  %v726 = vpop.f32.mrf.mxu0
  %v727 = vadd.f32 0.0, %v726
  %v728 = vpop.f32.mrf.mxu0
  %v729 = vpop.f32.mrf.mxu0
  %v730 = vadd.f32 0.0, %v729
  %v731 = vpop.f32.mrf.mxu0
  %732 = vmatprep.mubr.bf16.mxu0 0
  %733 = vmatmul.mubr.bf16.gmra.mxu0 %v679
  %v734 = vpop.f32.mrf.mxu0
  %v735 = vadd.f32 0.0, %v734
  %v736 = vpop.f32.mrf.mxu0
  %v737 = vpop.f32.mrf.mxu0
  %v738 = vadd.f32 0.0, %v737
  %v739 = vpop.f32.mrf.mxu0
  %740 = vmatprep.mubr.bf16.mxu0 0
  %741 = vmatmul.mubr.bf16.gmra.mxu0 %v682
  %v742 = vpop.f32.mrf.mxu0
  %v743 = vadd.f32 0.0, %v742
  %v744 = vpop.f32.mrf.mxu0
  %v745 = vpop.f32.mrf.mxu0
  %v746 = vpop.f32.mrf.mxu0
  %747 = vdwg.mxu0
  %v748 = vadd.f32 %v653, %v719
  %v749 = vadd.f32 %v654, %v722
  %v750 = vadd.f32 %v655, %v727
  %v751 = vadd.f32 %v656, %v730
  %v752 = vadd.f32 %v657, %v735
  %v753 = vadd.f32 %v658, %v738
  %v754 = vadd.f32 %v659, %v743
  %v755 = vpack.c.bf16 %v265, %v264
  %s756 = scalar_lea.vmem %s7, 80
  %v757 = vld [vmem:[%s756] sm:$0xff]
  %v758 = vld [vmem:[%s756 + $0x8] sm:$0xff]
  %v759 = vpack.c.bf16 %v758, %v757
  %vm760 = vsmask.f32 4352
  %v761 = vrot.slane %v279, 3
  %v762 = vrot.slane %v281, 4
  %v763 = vor.u32 %v761, %v762
  %v764 = vrot.slane %v290, 3
  %v765 = vrot.slane %v286, 4
  %v766 = vor.u32 %v764, %v765
  %v767 = vsel %vm760, %v763, %v766
  %v768 = vrot.slane %v298, 3
  %v769 = vrot.slane %v294, 4
  %v770 = vor.u32 %v768, %v769
  %v771 = vsel %vm760, %v766, %v770
  %v773 = vshrl.u32 %v755, 16
  %v775 = vrot.slane %v773, 3
  %v776 = vshll.u32 %v755, 16
  %v778 = vrot.slane %v776, 4
  %v779 = vor.u32 %v775, %v778
  %v780 = vsel %vm760, %v770, %v779
  %v782 = vsel %vm309, %v767, 0
  %v785 = vsel %vm309, %v771, 0
  %v788 = vsel %vm309, %v780, 0
  %v791 = vsel %vm309, %v779, 0
  %793 = vmatprep.subr.bf16.mxu0 0
  %794 = vmatpush1.bf16.msra.mxu0 0
  %795 = vmatprep.subr.bf16.mxu0 0
  %796 = vmatpush1.bf16.msra.mxu0 0
  %797 = vmatprep.subr.bf16.mxu0 0
  %798 = vmatpush1.bf16.msra.mxu0 0
  %799 = vmatprep.subr.bf16.mxu0 0
  %800 = vmatpush1.bf16.msra.mxu0 0
  %801 = vmatprep.subr.bf16.mxu0 0
  %802 = vmatpush1.bf16.msra.mxu0 0
  %803 = vmatprep.subr.bf16.mxu0 0
  %804 = vmatpush1.bf16.msra.mxu0 0
  %805 = vmatprep.subr.bf16.mxu0 0
  %806 = vmatpush1.bf16.msra.mxu0 0
  %807 = vmatprep.subr.bf16.mxu0 0
  %808 = vmatpush1.bf16.msra.mxu0 %v759
  %809 = vmatprep.subr.bf16.mxu0 0
  %810 = vmatpush2.bf16.msra.mxu0 0
  %811 = vmatprep.subr.bf16.mxu0 0
  %812 = vmatpush2.bf16.msra.mxu0 0
  %813 = vmatprep.subr.bf16.mxu0 0
  %814 = vmatpush2.bf16.msra.mxu0 0
  %815 = vmatprep.subr.bf16.mxu0 0
  %816 = vmatpush2.bf16.msra.mxu0 0
  %817 = vmatprep.subr.bf16.mxu0 0
  %818 = vmatpush2.bf16.msra.mxu0 0
  %819 = vmatprep.subr.bf16.mxu0 0
  %820 = vmatpush2.bf16.msra.mxu0 0
  %821 = vmatprep.subr.bf16.mxu0 0
  %822 = vmatpush2.bf16.msra.mxu0 0
  %823 = vmatprep.subr.bf16.mxu0 0
  %824 = vmatpush2.bf16.msra.mxu0 0
  %825 = vmatprep.mubr.bf16.mxu0 0
  %826 = vmatmul.mubr.bf16.gmra.mxu0 %v782
  %v827 = vpop.f32.mrf.mxu0
  %v828 = vadd.f32 0.0, %v827
  %v829 = vpop.f32.mrf.mxu0
  %v830 = vpop.f32.mrf.mxu0
  %v831 = vadd.f32 0.0, %v830
  %v832 = vpop.f32.mrf.mxu0
  %833 = vmatprep.mubr.bf16.mxu0 0
  %834 = vmatmul.mubr.bf16.gmra.mxu0 %v785
  %v835 = vpop.f32.mrf.mxu0
  %v836 = vadd.f32 0.0, %v835
  %v837 = vpop.f32.mrf.mxu0
  %v838 = vpop.f32.mrf.mxu0
  %v839 = vadd.f32 0.0, %v838
  %v840 = vpop.f32.mrf.mxu0
  %841 = vmatprep.mubr.bf16.mxu0 0
  %842 = vmatmul.mubr.bf16.gmra.mxu0 %v788
  %v843 = vpop.f32.mrf.mxu0
  %v844 = vadd.f32 0.0, %v843
  %v845 = vpop.f32.mrf.mxu0
  %v846 = vpop.f32.mrf.mxu0
  %v847 = vadd.f32 0.0, %v846
  %v848 = vpop.f32.mrf.mxu0
  %849 = vmatprep.mubr.bf16.mxu0 0
  %850 = vmatmul.mubr.bf16.gmra.mxu0 %v791
  %v851 = vpop.f32.mrf.mxu0
  %v852 = vadd.f32 0.0, %v851
  %v853 = vpop.f32.mrf.mxu0
  %v854 = vpop.f32.mrf.mxu0
  %v855 = vpop.f32.mrf.mxu0
  %856 = vdwg.mxu0
  %v857 = vadd.f32 %v748, %v828
  %v858 = vadd.f32 %v749, %v831
  %v859 = vadd.f32 %v750, %v836
  %v860 = vadd.f32 %v751, %v839
  %v861 = vadd.f32 %v752, %v844
  %v862 = vadd.f32 %v753, %v847
  %v863 = vadd.f32 %v754, %v852
  %v864 = vpack.c.bf16 %v260, %v259
  %v865 = vpack.c.bf16 %v262, %v261
  %v866 = vpack.c.bf16 %v264, %v263
  %v867 = vpack.c.bf16 %v265, %v265
  %s868 = scalar_lea.vmem %s7, 96
  %v869 = vld [vmem:[%s868] sm:$0xff]
  %v870 = vld [vmem:[%s868 + $0x8] sm:$0xff]
  %v871 = vpack.c.bf16 %v870, %v869
  %v876 = vrot.slane %v864, 1
  %v877 = vrot.slane %v865, 1
  %v878 = vsel %vm466, %v876, %v877
  %v879 = vrot.slane %v866, 1
  %v880 = vsel %vm466, %v877, %v879
  %v881 = vrot.slane %v867, 1
  %v882 = vsel %vm466, %v879, %v881
  %v884 = vsel %vm309, %v878, 0
  %v887 = vsel %vm309, %v880, 0
  %v890 = vsel %vm309, %v882, 0
  %v893 = vsel %vm309, %v881, 0
  %895 = vmatprep.subr.bf16.mxu0 0
  %896 = vmatpush1.bf16.msra.mxu0 0
  %897 = vmatprep.subr.bf16.mxu0 0
  %898 = vmatpush1.bf16.msra.mxu0 0
  %899 = vmatprep.subr.bf16.mxu0 0
  %900 = vmatpush1.bf16.msra.mxu0 0
  %901 = vmatprep.subr.bf16.mxu0 0
  %902 = vmatpush1.bf16.msra.mxu0 0
  %903 = vmatprep.subr.bf16.mxu0 0
  %904 = vmatpush1.bf16.msra.mxu0 0
  %905 = vmatprep.subr.bf16.mxu0 0
  %906 = vmatpush1.bf16.msra.mxu0 0
  %907 = vmatprep.subr.bf16.mxu0 0
  %908 = vmatpush1.bf16.msra.mxu0 0
  %909 = vmatprep.subr.bf16.mxu0 0
  %910 = vmatpush1.bf16.msra.mxu0 %v871
  %911 = vmatprep.subr.bf16.mxu0 0
  %912 = vmatpush2.bf16.msra.mxu0 0
  %913 = vmatprep.subr.bf16.mxu0 0
  %914 = vmatpush2.bf16.msra.mxu0 0
  %915 = vmatprep.subr.bf16.mxu0 0
  %916 = vmatpush2.bf16.msra.mxu0 0
  %917 = vmatprep.subr.bf16.mxu0 0
  %918 = vmatpush2.bf16.msra.mxu0 0
  %919 = vmatprep.subr.bf16.mxu0 0
  %920 = vmatpush2.bf16.msra.mxu0 0
  %921 = vmatprep.subr.bf16.mxu0 0
  %922 = vmatpush2.bf16.msra.mxu0 0
  %923 = vmatprep.subr.bf16.mxu0 0
  %924 = vmatpush2.bf16.msra.mxu0 0
  %925 = vmatprep.subr.bf16.mxu0 0
  %926 = vmatpush2.bf16.msra.mxu0 0
  %927 = vmatprep.mubr.bf16.mxu0 0
  %928 = vmatmul.mubr.bf16.gmra.mxu0 %v884
  %v929 = vpop.f32.mrf.mxu0
  %v930 = vadd.f32 0.0, %v929
  %v931 = vpop.f32.mrf.mxu0
  %v932 = vpop.f32.mrf.mxu0
  %v933 = vadd.f32 0.0, %v932
  %v934 = vpop.f32.mrf.mxu0
  %935 = vmatprep.mubr.bf16.mxu0 0
  %936 = vmatmul.mubr.bf16.gmra.mxu0 %v887
  %v937 = vpop.f32.mrf.mxu0
  %v938 = vadd.f32 0.0, %v937
  %v939 = vpop.f32.mrf.mxu0
  %v940 = vpop.f32.mrf.mxu0
  %v941 = vadd.f32 0.0, %v940
  %v942 = vpop.f32.mrf.mxu0
  %943 = vmatprep.mubr.bf16.mxu0 0
  %944 = vmatmul.mubr.bf16.gmra.mxu0 %v890
  %v945 = vpop.f32.mrf.mxu0
  %v946 = vadd.f32 0.0, %v945
  %v947 = vpop.f32.mrf.mxu0
  %v948 = vpop.f32.mrf.mxu0
  %v949 = vadd.f32 0.0, %v948
  %v950 = vpop.f32.mrf.mxu0
  %951 = vmatprep.mubr.bf16.mxu0 0
  %952 = vmatmul.mubr.bf16.gmra.mxu0 %v893
  %v953 = vpop.f32.mrf.mxu0
  %v954 = vadd.f32 0.0, %v953
  %v955 = vpop.f32.mrf.mxu0
  %v956 = vpop.f32.mrf.mxu0
  %v957 = vpop.f32.mrf.mxu0
  %958 = vdwg.mxu0
  %v959 = vadd.f32 %v857, %v930
  %v960 = vadd.f32 %v858, %v933
  %v961 = vadd.f32 %v859, %v938
  %v962 = vadd.f32 %v860, %v941
  %v963 = vadd.f32 %v861, %v946
  %v964 = vadd.f32 %v862, %v949
  %v965 = vadd.f32 %v863, %v954
  %s966 = scalar_lea.vmem %s7, 112
  %v967 = vld [vmem:[%s966] sm:$0xff]
  %v968 = vld [vmem:[%s966 + $0x8] sm:$0xff]
  %v969 = vpack.c.bf16 %v968, %v967
  %vm970 = vsmask.f32 6400
  %v972 = vshrl.u32 %v864, 16
  %v974 = vrot.slane %v972, 1
  %v975 = vshll.u32 %v864, 16
  %v977 = vrot.slane %v975, 2
  %v978 = vor.u32 %v974, %v977
  %v980 = vshrl.u32 %v865, 16
  %v982 = vrot.slane %v980, 1
  %v983 = vshll.u32 %v865, 16
  %v985 = vrot.slane %v983, 2
  %v986 = vor.u32 %v982, %v985
  %v987 = vsel %vm970, %v978, %v986
  %v989 = vshrl.u32 %v866, 16
  %v991 = vrot.slane %v989, 1
  %v992 = vshll.u32 %v866, 16
  %v994 = vrot.slane %v992, 2
  %v995 = vor.u32 %v991, %v994
  %v996 = vsel %vm970, %v986, %v995
  %v998 = vshrl.u32 %v867, 16
  %v1000 = vrot.slane %v998, 1
  %v1001 = vshll.u32 %v867, 16
  %v1003 = vrot.slane %v1001, 2
  %v1004 = vor.u32 %v1000, %v1003
  %v1005 = vsel %vm970, %v995, %v1004
  %v1007 = vsel %vm309, %v987, 0
  %v1010 = vsel %vm309, %v996, 0
  %v1013 = vsel %vm309, %v1005, 0
  %v1016 = vsel %vm309, %v1004, 0
  %1018 = vmatprep.subr.bf16.mxu0 0
  %1019 = vmatpush1.bf16.msra.mxu0 0
  %1020 = vmatprep.subr.bf16.mxu0 0
  %1021 = vmatpush1.bf16.msra.mxu0 0
  %1022 = vmatprep.subr.bf16.mxu0 0
  %1023 = vmatpush1.bf16.msra.mxu0 0
  %1024 = vmatprep.subr.bf16.mxu0 0
  %1025 = vmatpush1.bf16.msra.mxu0 0
  %1026 = vmatprep.subr.bf16.mxu0 0
  %1027 = vmatpush1.bf16.msra.mxu0 0
  %1028 = vmatprep.subr.bf16.mxu0 0
  %1029 = vmatpush1.bf16.msra.mxu0 0
  %1030 = vmatprep.subr.bf16.mxu0 0
  %1031 = vmatpush1.bf16.msra.mxu0 0
  %1032 = vmatprep.subr.bf16.mxu0 0
  %1033 = vmatpush1.bf16.msra.mxu0 %v969
  %1034 = vmatprep.subr.bf16.mxu0 0
  %1035 = vmatpush2.bf16.msra.mxu0 0
  %1036 = vmatprep.subr.bf16.mxu0 0
  %1037 = vmatpush2.bf16.msra.mxu0 0
  %1038 = vmatprep.subr.bf16.mxu0 0
  %1039 = vmatpush2.bf16.msra.mxu0 0
  %1040 = vmatprep.subr.bf16.mxu0 0
  %1041 = vmatpush2.bf16.msra.mxu0 0
  %1042 = vmatprep.subr.bf16.mxu0 0
  %1043 = vmatpush2.bf16.msra.mxu0 0
  %1044 = vmatprep.subr.bf16.mxu0 0
  %1045 = vmatpush2.bf16.msra.mxu0 0
  %1046 = vmatprep.subr.bf16.mxu0 0
  %1047 = vmatpush2.bf16.msra.mxu0 0
  %1048 = vmatprep.subr.bf16.mxu0 0
  %1049 = vmatpush2.bf16.msra.mxu0 0
  %1050 = vmatprep.mubr.bf16.mxu0 0
  %1051 = vmatmul.mubr.bf16.gmra.mxu0 %v1007
  %v1052 = vpop.f32.mrf.mxu0
  %v1053 = vadd.f32 0.0, %v1052
  %v1054 = vpop.f32.mrf.mxu0
  %v1055 = vpop.f32.mrf.mxu0
  %v1056 = vadd.f32 0.0, %v1055
  %v1057 = vpop.f32.mrf.mxu0
  %1058 = vmatprep.mubr.bf16.mxu0 0
  %1059 = vmatmul.mubr.bf16.gmra.mxu0 %v1010
  %v1060 = vpop.f32.mrf.mxu0
  %v1061 = vadd.f32 0.0, %v1060
  %v1062 = vpop.f32.mrf.mxu0
  %v1063 = vpop.f32.mrf.mxu0
  %v1064 = vadd.f32 0.0, %v1063
  %v1065 = vpop.f32.mrf.mxu0
  %1066 = vmatprep.mubr.bf16.mxu0 0
  %1067 = vmatmul.mubr.bf16.gmra.mxu0 %v1013
  %v1068 = vpop.f32.mrf.mxu0
  %v1069 = vadd.f32 0.0, %v1068
  %v1070 = vpop.f32.mrf.mxu0
  %v1071 = vpop.f32.mrf.mxu0
  %v1072 = vadd.f32 0.0, %v1071
  %v1073 = vpop.f32.mrf.mxu0
  %1074 = vmatprep.mubr.bf16.mxu0 0
  %1075 = vmatmul.mubr.bf16.gmra.mxu0 %v1016
  %v1076 = vpop.f32.mrf.mxu0
  %v1077 = vadd.f32 0.0, %v1076
  %v1078 = vpop.f32.mrf.mxu0
  %v1079 = vpop.f32.mrf.mxu0
  %v1080 = vpop.f32.mrf.mxu0
  %1081 = vdwg.mxu0
  %v1082 = vadd.f32 %v959, %v1053
  %v1083 = vadd.f32 %v960, %v1056
  %v1084 = vadd.f32 %v961, %v1061
  %v1085 = vadd.f32 %v962, %v1064
  %v1086 = vadd.f32 %v963, %v1069
  %v1087 = vadd.f32 %v964, %v1072
  %v1088 = vadd.f32 %v965, %v1077
  %s1089 = scalar_lea.vmem %s7, 128
  %v1090 = vld [vmem:[%s1089] sm:$0xff]
  %v1091 = vld [vmem:[%s1089 + $0x8] sm:$0xff]
  %v1092 = vpack.c.bf16 %v1091, %v1090
  %vm1093 = vcmask 1045504
  %v1094 = vrot.slane %v864, 2
  %v1095 = vrot.slane %v865, 2
  %v1096 = vsel %vm1093, %v1094, %v1095
  %v1097 = vrot.slane %v866, 2
  %v1098 = vsel %vm1093, %v1095, %v1097
  %v1099 = vrot.slane %v867, 2
  %v1100 = vsel %vm1093, %v1097, %v1099
  %v1102 = vsel %vm309, %v1096, 0
  %v1105 = vsel %vm309, %v1098, 0
  %v1108 = vsel %vm309, %v1100, 0
  %v1111 = vsel %vm309, %v1099, 0
  %1113 = vmatprep.subr.bf16.mxu0 0
  %1114 = vmatpush1.bf16.msra.mxu0 0
  %1115 = vmatprep.subr.bf16.mxu0 0
  %1116 = vmatpush1.bf16.msra.mxu0 0
  %1117 = vmatprep.subr.bf16.mxu0 0
  %1118 = vmatpush1.bf16.msra.mxu0 0
  %1119 = vmatprep.subr.bf16.mxu0 0
  %1120 = vmatpush1.bf16.msra.mxu0 0
  %1121 = vmatprep.subr.bf16.mxu0 0
  %1122 = vmatpush1.bf16.msra.mxu0 0
  %1123 = vmatprep.subr.bf16.mxu0 0
  %1124 = vmatpush1.bf16.msra.mxu0 0
  %1125 = vmatprep.subr.bf16.mxu0 0
  %1126 = vmatpush1.bf16.msra.mxu0 0
  %1127 = vmatprep.subr.bf16.mxu0 0
  %1128 = vmatpush1.bf16.msra.mxu0 %v1092
  %1129 = vmatprep.subr.bf16.mxu0 0
  %1130 = vmatpush2.bf16.msra.mxu0 0
  %1131 = vmatprep.subr.bf16.mxu0 0
  %1132 = vmatpush2.bf16.msra.mxu0 0
  %1133 = vmatprep.subr.bf16.mxu0 0
  %1134 = vmatpush2.bf16.msra.mxu0 0
  %1135 = vmatprep.subr.bf16.mxu0 0
  %1136 = vmatpush2.bf16.msra.mxu0 0
  %1137 = vmatprep.subr.bf16.mxu0 0
  %1138 = vmatpush2.bf16.msra.mxu0 0
  %1139 = vmatprep.subr.bf16.mxu0 0
  %1140 = vmatpush2.bf16.msra.mxu0 0
  %1141 = vmatprep.subr.bf16.mxu0 0
  %1142 = vmatpush2.bf16.msra.mxu0 0
  %1143 = vmatprep.subr.bf16.mxu0 0
  %1144 = vmatpush2.bf16.msra.mxu0 0
  %1145 = vmatprep.mubr.bf16.mxu0 0
  %1146 = vmatmul.mubr.bf16.gmra.mxu0 %v1102
  %v1147 = vpop.f32.mrf.mxu0
  %v1148 = vadd.f32 0.0, %v1147
  %v1149 = vpop.f32.mrf.mxu0
  %v1150 = vpop.f32.mrf.mxu0
  %v1151 = vadd.f32 0.0, %v1150
  %v1152 = vpop.f32.mrf.mxu0
  %1153 = vmatprep.mubr.bf16.mxu0 0
  %1154 = vmatmul.mubr.bf16.gmra.mxu0 %v1105
  %v1155 = vpop.f32.mrf.mxu0
  %v1156 = vadd.f32 0.0, %v1155
  %v1157 = vpop.f32.mrf.mxu0
  %v1158 = vpop.f32.mrf.mxu0
  %v1159 = vadd.f32 0.0, %v1158
  %v1160 = vpop.f32.mrf.mxu0
  %1161 = vmatprep.mubr.bf16.mxu0 0
  %1162 = vmatmul.mubr.bf16.gmra.mxu0 %v1108
  %v1163 = vpop.f32.mrf.mxu0
  %v1164 = vadd.f32 0.0, %v1163
  %v1165 = vpop.f32.mrf.mxu0
  %v1166 = vpop.f32.mrf.mxu0
  %v1167 = vadd.f32 0.0, %v1166
  %v1168 = vpop.f32.mrf.mxu0
  %1169 = vmatprep.mubr.bf16.mxu0 0
  %1170 = vmatmul.mubr.bf16.gmra.mxu0 %v1111
  %v1171 = vpop.f32.mrf.mxu0
  %v1172 = vadd.f32 0.0, %v1171
  %v1173 = vpop.f32.mrf.mxu0
  %v1174 = vpop.f32.mrf.mxu0
  %v1175 = vpop.f32.mrf.mxu0
  %1176 = vdwg.mxu0
  %v1177 = vadd.f32 %v1082, %v1148
  %v1178 = vadd.f32 %v1083, %v1151
  %v1179 = vadd.f32 %v1084, %v1156
  %v1180 = vadd.f32 %v1085, %v1159
  %v1181 = vadd.f32 %v1086, %v1164
  %v1182 = vadd.f32 %v1087, %v1167
  %v1183 = vadd.f32 %v1088, %v1172
  %vm1184 = vcmask 31744
  %1185 = vst.msk [vmem:[%s8] sm:$0xff] %vm1184, %v1177
  %1186 = vst.msk [vmem:[%s8 + $0x8] sm:$0xff] %vm1184, %v1178
  %1187 = vst.msk [vmem:[%s8 + $0x10] sm:$0xff] %vm1184, %v1179
  %1188 = vst.msk [vmem:[%s8 + $0x18] sm:$0xff] %vm1184, %v1180
  %1189 = vst.msk [vmem:[%s8 + $0x20] sm:$0xff] %vm1184, %v1181
  %1190 = vst.msk [vmem:[%s8 + $0x28] sm:$0xff] %vm1184, %v1182
  %vm1191 = vcmask 25600
  %1192 = vst.msk [vmem:[%s8 + $0x30] sm:$0x3] %vm1191, %v1183
  // Predicated region
  $region34: #{mycnn_forward.13} parent=0 // pred_check
    _
  $region35: #{mycnn_forward.13} parent=0 // pred_check_branch
    %1194 = sbr.rel (0) target = $region37
  $region36: #{mycnn_forward.13} parent=0 // pred_region
    _
  $region37: #{mycnn_forward.13} parent=0 // pred_fallthru
    _
  // Predicated region
  $region38: #{mycnn_forward.13} parent=0 // pred_check
    _
  $region39: #{mycnn_forward.13} parent=0 // pred_check_branch
    %1196 = sbr.rel (0) target = $region41
  $region40: #{mycnn_forward.13} parent=0 // pred_region
    _
  $region41: #{mycnn_forward.13} parent=0 // pred_fallthru
    _

// kernel: mycnn_forward.14
$region0: #{mycnn_forward.14}
  #allocation0 [shape = 'u32[]', space=smem, size = 0x4, offset = 0x4, fixed_abs, tag = 'smem constant byte address 0x4 - core index']
  #allocation1 [shape = 'u32[144,128]{1,0:T(1,128)}', space=vmem, size = 0x12000, scoped, tag = 'internal scratch']
  %s0 = inlined_call_operand.vmem [shape: f32[62,12], index: 0, kind: input, shape index: {}]
  %s1 = inlined_call_operand.vmem [shape: f32[62,1], index: 1, kind: input, shape index: {}]
  %s2 = inlined_call_operand.vmem [shape: f32[1,12], index: 2, kind: input, shape index: {}]
  %s3 = inlined_call_operand.vmem [shape: f32[1,12], index: 3, kind: input, shape index: {}]
  %s4 = inlined_call_operand.vmem [shape: f32[12,16], index: 4, kind: input, shape index: {}]
  %s5 = inlined_call_operand.vmem [shape: f32[1,16], index: 5, kind: input, shape index: {}]
  %s6 = inlined_call_operand.vmem [shape: f32[1,16], index: 6, kind: input, shape index: {}]
  %s7 = inlined_call_operand.vmem [shape: f32[9,16,4], index: 7, kind: input, shape index: {}]
  %s8 = inlined_call_operand.vmem [shape: f32[50,4], index: 8, kind: output, shape index: {}]
  %s9 = sld [smem:[#allocation0]]
  $region42: #{mycnn_forward.14} parent=0
    _
  %s11 = ssub.s32 1, %s9
  %s12 = scalar_select 0, %s11, %s9
  // Predicated region
  $region2: #{mycnn_forward.14} parent=0 // pred_check
    _
  $region3: #{mycnn_forward.14} parent=0 // pred_check_branch
    %14 = sbr.rel (0) target = $region5
  $region4: #{mycnn_forward.14} parent=0 // pred_region
    _
  $region5: #{mycnn_forward.14} parent=0 // pred_fallthru
    _
  // Predicated region
  $region6: #{mycnn_forward.14} parent=0 // pred_check
    _
  $region7: #{mycnn_forward.14} parent=0 // pred_check_branch
    %16 = sbr.rel (0) target = $region9
  $region8: #{mycnn_forward.14} parent=0 // pred_region
    _
  $region9: #{mycnn_forward.14} parent=0 // pred_fallthru
    _
  // Predicated region
  $region10: #{mycnn_forward.14} parent=0 // pred_check
    _
  $region11: #{mycnn_forward.14} parent=0 // pred_check_branch
    %18 = sbr.rel (0) target = $region13
  $region12: #{mycnn_forward.14} parent=0 // pred_region
    _
  $region13: #{mycnn_forward.14} parent=0 // pred_fallthru
    _
  // Predicated region
  $region14: #{mycnn_forward.14} parent=0 // pred_check
    _
  $region15: #{mycnn_forward.14} parent=0 // pred_check_branch
    %20 = sbr.rel (0) target = $region17
  $region16: #{mycnn_forward.14} parent=0 // pred_region
    _
  $region17: #{mycnn_forward.14} parent=0 // pred_fallthru
    _
  // Predicated region
  $region18: #{mycnn_forward.14} parent=0 // pred_check
    _
  $region19: #{mycnn_forward.14} parent=0 // pred_check_branch
    %22 = sbr.rel (0) target = $region21
  $region20: #{mycnn_forward.14} parent=0 // pred_region
    _
  $region21: #{mycnn_forward.14} parent=0 // pred_fallthru
    _
  // Predicated region
  $region22: #{mycnn_forward.14} parent=0 // pred_check
    _
  $region23: #{mycnn_forward.14} parent=0 // pred_check_branch
    %24 = sbr.rel (0) target = $region25
  $region24: #{mycnn_forward.14} parent=0 // pred_region
    _
  $region25: #{mycnn_forward.14} parent=0 // pred_fallthru
    _
  // Predicated region
  $region26: #{mycnn_forward.14} parent=0 // pred_check
    _
  $region27: #{mycnn_forward.14} parent=0 // pred_check_branch
    %26 = sbr.rel (0) target = $region29
  $region28: #{mycnn_forward.14} parent=0 // pred_region
    _
  $region29: #{mycnn_forward.14} parent=0 // pred_fallthru
    _
  // Predicated region
  $region30: #{mycnn_forward.14} parent=0 // pred_check
    _
  $region31: #{mycnn_forward.14} parent=0 // pred_check_branch
    %28 = sbr.rel (0) target = $region33
  $region32: #{mycnn_forward.14} parent=0 // pred_region
    _
  $region33: #{mycnn_forward.14} parent=0 // pred_fallthru
    _
  %v30 = vld [vmem:[%s0] sm:$0xff]
  %v31 = vld [vmem:[%s0 + $0x8] sm:$0xff]
  %v32 = vld [vmem:[%s0 + $0x10] sm:$0xff]
  %v33 = vld [vmem:[%s0 + $0x18] sm:$0xff]
  %v34 = vld [vmem:[%s0 + $0x20] sm:$0xff]
  %v35 = vld [vmem:[%s0 + $0x28] sm:$0xff]
  %v36 = vld [vmem:[%s0 + $0x30] sm:$0xff]
  %v37 = vld [vmem:[%s0 + $0x38] sm:$0x3f]
  %v38 = vld [vmem:[%s2] sm:$0x1]
  %v40 = vlaneseq
  %v41 = vshrl.u32 %v40, 7
  %v42 = vsub.s32 0, %v41
  %v43 = vrot.slane %v38, %v42
  %v45 = vmul.f32 %v30, %v43
  %v46 = vmul.f32 %v31, %v43
  %v47 = vmul.f32 %v32, %v43
  %v48 = vmul.f32 %v33, %v43
  %v49 = vmul.f32 %v34, %v43
  %v50 = vmul.f32 %v35, %v43
  %v51 = vmul.f32 %v36, %v43
  %v52 = vmul.f32 %v37, %v43
  %v53 = vld [vmem:[%s3] sm:$0x1]
  %v55 = vlaneseq
  %v56 = vshrl.u32 %v55, 7
  %v57 = vsub.s32 0, %v56
  %v58 = vrot.slane %v53, %v57
  %v60 = vadd.f32 %v45, %v58
  %v61 = vadd.f32 %v46, %v58
  %v62 = vadd.f32 %v47, %v58
  %v63 = vadd.f32 %v48, %v58
  %v64 = vadd.f32 %v49, %v58
  %v65 = vadd.f32 %v50, %v58
  %v66 = vadd.f32 %v51, %v58
  %v67 = vadd.f32 %v52, %v58
  %v68 = vmax.f32 %v60, 0.0
  %v69 = vmax.f32 %v61, 0.0
  %v70 = vmax.f32 %v62, 0.0
  %v71 = vmax.f32 %v63, 0.0
  %v72 = vmax.f32 %v64, 0.0
  %v73 = vmax.f32 %v65, 0.0
  %v74 = vmax.f32 %v66, 0.0
  %v75 = vmax.f32 %v67, 0.0
  %v76 = vpack.c.bf16 %v69, %v68
  %v77 = vpack.c.bf16 %v71, %v70
  %v78 = vpack.c.bf16 %v73, %v72
  %v79 = vpack.c.bf16 %v75, %v74
  %v80 = vld [vmem:[%s4] sm:$0xff]
  %v81 = vld [vmem:[%s4 + $0x8] sm:$0xf]
  %v82 = vpack.c.bf16 %v81, %v80
  %vm83 = vcmask 97280
  %v85 = vsel %vm83, %v76, 0
  %v88 = vsel %vm83, %v77, 0
  %v91 = vsel %vm83, %v78, 0
  %v94 = vsel %vm83, %v79, 0
  %vm96 = vcmask 1045504
  %v98 = vsel %vm96, %v82, 0
  %100 = vmatprep.subr.bf16.mxu0 0
  %101 = vmatpush1.bf16.msra.mxu0 0
  %102 = vmatprep.subr.bf16.mxu0 0
  %103 = vmatpush1.bf16.msra.mxu0 0
  %104 = vmatprep.subr.bf16.mxu0 0
  %105 = vmatpush1.bf16.msra.mxu0 0
  %106 = vmatprep.subr.bf16.mxu0 0
  %107 = vmatpush1.bf16.msra.mxu0 0
  %108 = vmatprep.subr.bf16.mxu0 0
  %109 = vmatpush1.bf16.msra.mxu0 0
  %110 = vmatprep.subr.bf16.mxu0 0
  %111 = vmatpush1.bf16.msra.mxu0 0
  %112 = vmatprep.subr.bf16.mxu0 0
  %113 = vmatpush1.bf16.msra.mxu0 0
  %114 = vmatprep.subr.bf16.mxu0 0
  %115 = vmatpush1.bf16.msra.mxu0 %v98
  %116 = vmatprep.subr.bf16.mxu0 0
  %117 = vmatpush2.bf16.msra.mxu0 0
  %118 = vmatprep.subr.bf16.mxu0 0
  %119 = vmatpush2.bf16.msra.mxu0 0
  %120 = vmatprep.subr.bf16.mxu0 0
  %121 = vmatpush2.bf16.msra.mxu0 0
  %122 = vmatprep.subr.bf16.mxu0 0
  %123 = vmatpush2.bf16.msra.mxu0 0
  %124 = vmatprep.subr.bf16.mxu0 0
  %125 = vmatpush2.bf16.msra.mxu0 0
  %126 = vmatprep.subr.bf16.mxu0 0
  %127 = vmatpush2.bf16.msra.mxu0 0
  %128 = vmatprep.subr.bf16.mxu0 0
  %129 = vmatpush2.bf16.msra.mxu0 0
  %130 = vmatprep.subr.bf16.mxu0 0
  %131 = vmatpush2.bf16.msra.mxu0 0
  %132 = vmatprep.mubr.bf16.mxu0 0
  %133 = vmatmul.mubr.bf16.gmra.mxu0 %v85
  %v134 = vpop.f32.mrf.mxu0
  %v135 = vadd.f32 0.0, %v134
  %v136 = vpop.f32.mrf.mxu0
  %v137 = vpop.f32.mrf.mxu0
  %v138 = vadd.f32 0.0, %v137
  %v139 = vpop.f32.mrf.mxu0
  %140 = vmatprep.mubr.bf16.mxu0 0
  %141 = vmatmul.mubr.bf16.gmra.mxu0 %v88
  %v142 = vpop.f32.mrf.mxu0
  %v143 = vadd.f32 0.0, %v142
  %v144 = vpop.f32.mrf.mxu0
  %v145 = vpop.f32.mrf.mxu0
  %v146 = vadd.f32 0.0, %v145
  %v147 = vpop.f32.mrf.mxu0
  %148 = vmatprep.mubr.bf16.mxu0 0
  %149 = vmatmul.mubr.bf16.gmra.mxu0 %v91
  %v150 = vpop.f32.mrf.mxu0
  %v151 = vadd.f32 0.0, %v150
  %v152 = vpop.f32.mrf.mxu0
  %v153 = vpop.f32.mrf.mxu0
  %v154 = vadd.f32 0.0, %v153
  %v155 = vpop.f32.mrf.mxu0
  %156 = vmatprep.mubr.bf16.mxu0 0
  %157 = vmatmul.mubr.bf16.gmra.mxu0 %v94
  %v158 = vpop.f32.mrf.mxu0
  %v159 = vadd.f32 0.0, %v158
  %v160 = vpop.f32.mrf.mxu0
  %v161 = vpop.f32.mrf.mxu0
  %v162 = vadd.f32 0.0, %v161
  %v163 = vpop.f32.mrf.mxu0
  %164 = vdwg.mxu0
  %v165 = vld [vmem:[%s5] sm:$0x1]
  %v167 = vlaneseq
  %v168 = vshrl.u32 %v167, 7
  %v169 = vsub.s32 0, %v168
  %v170 = vrot.slane %v165, %v169
  %v172 = vmul.f32 %v135, %v170
  %v173 = vmul.f32 %v138, %v170
  %v174 = vmul.f32 %v143, %v170
  %v175 = vmul.f32 %v146, %v170
  %v176 = vmul.f32 %v151, %v170
  %v177 = vmul.f32 %v154, %v170
  %v178 = vmul.f32 %v159, %v170
  %v179 = vmul.f32 %v162, %v170
  %v180 = vld [vmem:[%s6] sm:$0x1]
  %v182 = vlaneseq
  %v183 = vshrl.u32 %v182, 7
  %v184 = vsub.s32 0, %v183
  %v185 = vrot.slane %v180, %v184
  %v187 = vadd.f32 %v172, %v185
  %v188 = vadd.f32 %v173, %v185
  %v189 = vadd.f32 %v174, %v185
  %v190 = vadd.f32 %v175, %v185
  %v191 = vadd.f32 %v176, %v185
  %v192 = vadd.f32 %v177, %v185
  %v193 = vadd.f32 %v178, %v185
  %v194 = vadd.f32 %v179, %v185
  %v195 = vmax.f32 %v187, 0.0
  %v196 = vmax.f32 %v188, 0.0
  %v197 = vmax.f32 %v189, 0.0
  %v198 = vmax.f32 %v190, 0.0
  %v199 = vmax.f32 %v191, 0.0
  %v200 = vmax.f32 %v192, 0.0
  %v201 = vmax.f32 %v193, 0.0
  %v202 = vmax.f32 %v194, 0.0
  %v203 = vld [vmem:[%s1] sm:$0xff]
  %v204 = vld [vmem:[%s1 + $0x8] sm:$0xff]
  %v205 = vld [vmem:[%s1 + $0x10] sm:$0xff]
  %v206 = vld [vmem:[%s1 + $0x18] sm:$0xff]
  %v207 = vld [vmem:[%s1 + $0x20] sm:$0xff]
  %v208 = vld [vmem:[%s1 + $0x28] sm:$0xff]
  %v209 = vld [vmem:[%s1 + $0x30] sm:$0xff]
  %v210 = vld [vmem:[%s1 + $0x38] sm:$0x3f]
  %vm211 = vcmp.gt.f32.partialorder %v203, 0.0
  %vm212 = vcmp.gt.f32.partialorder %v204, 0.0
  %vm213 = vcmp.gt.f32.partialorder %v205, 0.0
  %vm214 = vcmp.gt.f32.partialorder %v206, 0.0
  %vm215 = vcmp.gt.f32.partialorder %v207, 0.0
  %vm216 = vcmp.gt.f32.partialorder %v208, 0.0
  %vm217 = vcmp.gt.f32.partialorder %v209, 0.0
  %vm218 = vcmp.gt.f32.partialorder %v210, 0.0
  %v219 = vsel %vm211, 1, 0
  %v220 = vsel %vm212, 1, 0
  %v221 = vsel %vm213, 1, 0
  %v222 = vsel %vm214, 1, 0
  %v223 = vsel %vm215, 1, 0
  %v224 = vsel %vm216, 1, 0
  %v225 = vsel %vm217, 1, 0
  %v226 = vsel %vm218, 1, 0
  %227 = vset.pattern.permute.xlu0 0
  %228 = vperm.xlu0 %227, %v219
  %v229 = vpop.permute.xlu0 %228
  %230 = vset.pattern.permute.xlu0 0
  %231 = vperm.xlu0 %230, %v220
  %v232 = vpop.permute.xlu0 %231
  %233 = vset.pattern.permute.xlu0 0
  %234 = vperm.xlu0 %233, %v221
  %v235 = vpop.permute.xlu0 %234
  %236 = vset.pattern.permute.xlu0 0
  %237 = vperm.xlu0 %236, %v222
  %v238 = vpop.permute.xlu0 %237
  %239 = vset.pattern.permute.xlu0 0
  %240 = vperm.xlu0 %239, %v223
  %v241 = vpop.permute.xlu0 %240
  %242 = vset.pattern.permute.xlu0 0
  %243 = vperm.xlu0 %242, %v224
  %v244 = vpop.permute.xlu0 %243
  %245 = vset.pattern.permute.xlu0 0
  %246 = vperm.xlu0 %245, %v225
  %v247 = vpop.permute.xlu0 %246
  %248 = vset.pattern.permute.xlu0 0
  %249 = vperm.xlu0 %248, %v226
  %v250 = vpop.permute.xlu0 %249
  %vm251 = vcmp.eq.s32.totalorder %v229, 1
  %vm252 = vcmp.eq.s32.totalorder %v232, 1
  %vm253 = vcmp.eq.s32.totalorder %v235, 1
  %vm254 = vcmp.eq.s32.totalorder %v238, 1
  %vm255 = vcmp.eq.s32.totalorder %v241, 1
  %vm256 = vcmp.eq.s32.totalorder %v244, 1
  %vm257 = vcmp.eq.s32.totalorder %v247, 1
  %vm258 = vcmp.eq.s32.totalorder %v250, 1
  %v259 = vsel %vm251, %v195, 0.0
  %v260 = vsel %vm252, %v196, 0.0
  %v261 = vsel %vm253, %v197, 0.0
  %v262 = vsel %vm254, %v198, 0.0
  %v263 = vsel %vm255, %v199, 0.0
  %v264 = vsel %vm256, %v200, 0.0
  %v265 = vsel %vm257, %v201, 0.0
  %v266 = vsel %vm258, %v202, 0.0
  %v267 = vpack.c.bf16 %v260, %v259
  %v268 = vpack.c.bf16 %v262, %v261
  %v269 = vpack.c.bf16 %v264, %v263
  %v270 = vpack.c.bf16 %v265, %v265
  %v271 = vld [vmem:[%s7] sm:$0xff]
  %v272 = vld [vmem:[%s7 + $0x8] sm:$0xff]
  %v273 = vpack.c.bf16 %v272, %v271
  %s274 = scalar_lea.vmem %s7, 16
  %v275 = vld [vmem:[%s274] sm:$0xff]
  %v276 = vld [vmem:[%s274 + $0x8] sm:$0xff]
  %v277 = vpack.c.bf16 %v276, %v275
  %vm278 = vsmask.f32 7424
  %v280 = vshrl.u32 %v267, 16
  %v282 = vshll.u32 %v267, 16
  %v284 = vrot.slane %v282, 1
  %v285 = vor.u32 %v280, %v284
  %v287 = vshll.u32 %v268, 16
  %v289 = vrot.slane %v287, 1
  %v290 = vsel %vm278, %v285, %v289
  %v291 = vshrl.u32 %v268, 16
  %v293 = vor.u32 %v291, %v289
  %v295 = vshll.u32 %v269, 16
  %v297 = vrot.slane %v295, 1
  %v298 = vsel %vm278, %v293, %v297
  %v299 = vshrl.u32 %v269, 16
  %v301 = vor.u32 %v299, %v297
  %v303 = vshll.u32 %v270, 16
  %v305 = vrot.slane %v303, 1
  %v306 = vsel %vm278, %v301, %v305
  %v307 = vshrl.u32 %v270, 16
  %v309 = vor.u32 %v307, %v305
  %vm310 = vcmask 130048
  %v312 = vsel %vm310, %v290, 0
  %v315 = vsel %vm310, %v298, 0
  %v318 = vsel %vm310, %v306, 0
  %v321 = vsel %vm310, %v309, 0
  %323 = vmatprep.subr.bf16.mxu0 0
  %324 = vmatpush1.bf16.msra.mxu0 0
  %325 = vmatprep.subr.bf16.mxu0 0
  %326 = vmatpush1.bf16.msra.mxu0 0
  %327 = vmatprep.subr.bf16.mxu0 0
  %328 = vmatpush1.bf16.msra.mxu0 0
  %329 = vmatprep.subr.bf16.mxu0 0
  %330 = vmatpush1.bf16.msra.mxu0 0
  %331 = vmatprep.subr.bf16.mxu0 0
  %332 = vmatpush1.bf16.msra.mxu0 0
  %333 = vmatprep.subr.bf16.mxu0 0
  %334 = vmatpush1.bf16.msra.mxu0 0
  %335 = vmatprep.subr.bf16.mxu0 0
  %336 = vmatpush1.bf16.msra.mxu0 0
  %337 = vmatprep.subr.bf16.mxu0 0
  %338 = vmatpush1.bf16.msra.mxu0 %v277
  %339 = vmatprep.subr.bf16.mxu0 0
  %340 = vmatpush2.bf16.msra.mxu0 0
  %341 = vmatprep.subr.bf16.mxu0 0
  %342 = vmatpush2.bf16.msra.mxu0 0
  %343 = vmatprep.subr.bf16.mxu0 0
  %344 = vmatpush2.bf16.msra.mxu0 0
  %345 = vmatprep.subr.bf16.mxu0 0
  %346 = vmatpush2.bf16.msra.mxu0 0
  %347 = vmatprep.subr.bf16.mxu0 0
  %348 = vmatpush2.bf16.msra.mxu0 0
  %349 = vmatprep.subr.bf16.mxu0 0
  %350 = vmatpush2.bf16.msra.mxu0 0
  %351 = vmatprep.subr.bf16.mxu0 0
  %352 = vmatpush2.bf16.msra.mxu0 0
  %353 = vmatprep.subr.bf16.mxu0 0
  %354 = vmatpush2.bf16.msra.mxu0 0
  %355 = vmatprep.mubr.bf16.mxu0 0
  %356 = vmatmul.mubr.bf16.gmra.mxu0 %v312
  %v357 = vpop.f32.mrf.mxu0
  %v358 = vadd.f32 0.0, %v357
  %v359 = vpop.f32.mrf.mxu0
  %v360 = vpop.f32.mrf.mxu0
  %v361 = vadd.f32 0.0, %v360
  %v362 = vpop.f32.mrf.mxu0
  %363 = vmatprep.mubr.bf16.mxu0 0
  %364 = vmatmul.mubr.bf16.gmra.mxu0 %v315
  %v365 = vpop.f32.mrf.mxu0
  %v366 = vadd.f32 0.0, %v365
  %v367 = vpop.f32.mrf.mxu0
  %v368 = vpop.f32.mrf.mxu0
  %v369 = vadd.f32 0.0, %v368
  %v370 = vpop.f32.mrf.mxu0
  %371 = vmatprep.mubr.bf16.mxu0 0
  %372 = vmatmul.mubr.bf16.gmra.mxu0 %v318
  %v373 = vpop.f32.mrf.mxu0
  %v374 = vadd.f32 0.0, %v373
  %v375 = vpop.f32.mrf.mxu0
  %v376 = vpop.f32.mrf.mxu0
  %v377 = vadd.f32 0.0, %v376
  %v378 = vpop.f32.mrf.mxu0
  %379 = vmatprep.mubr.bf16.mxu0 0
  %380 = vmatmul.mubr.bf16.gmra.mxu0 %v321
  %v381 = vpop.f32.mrf.mxu0
  %v382 = vadd.f32 0.0, %v381
  %v383 = vpop.f32.mrf.mxu0
  %v384 = vpop.f32.mrf.mxu0
  %v385 = vpop.f32.mrf.mxu0
  %386 = vdwg.mxu0
  %v387 = vsel %vm310, %v267, 0
  %v389 = vsel %vm310, %v268, 0
  %v391 = vsel %vm310, %v269, 0
  %v393 = vsel %vm310, %v270, 0
  %395 = vmatprep.subr.bf16.mxu0 0
  %396 = vmatpush1.bf16.msra.mxu0 0
  %397 = vmatprep.subr.bf16.mxu0 0
  %398 = vmatpush1.bf16.msra.mxu0 0
  %399 = vmatprep.subr.bf16.mxu0 0
  %400 = vmatpush1.bf16.msra.mxu0 0
  %401 = vmatprep.subr.bf16.mxu0 0
  %402 = vmatpush1.bf16.msra.mxu0 0
  %403 = vmatprep.subr.bf16.mxu0 0
  %404 = vmatpush1.bf16.msra.mxu0 0
  %405 = vmatprep.subr.bf16.mxu0 0
  %406 = vmatpush1.bf16.msra.mxu0 0
  %407 = vmatprep.subr.bf16.mxu0 0
  %408 = vmatpush1.bf16.msra.mxu0 0
  %409 = vmatprep.subr.bf16.mxu0 0
  %410 = vmatpush1.bf16.msra.mxu0 %v273
  %411 = vmatprep.subr.bf16.mxu0 0
  %412 = vmatpush2.bf16.msra.mxu0 0
  %413 = vmatprep.subr.bf16.mxu0 0
  %414 = vmatpush2.bf16.msra.mxu0 0
  %415 = vmatprep.subr.bf16.mxu0 0
  %416 = vmatpush2.bf16.msra.mxu0 0
  %417 = vmatprep.subr.bf16.mxu0 0
  %418 = vmatpush2.bf16.msra.mxu0 0
  %419 = vmatprep.subr.bf16.mxu0 0
  %420 = vmatpush2.bf16.msra.mxu0 0
  %421 = vmatprep.subr.bf16.mxu0 0
  %422 = vmatpush2.bf16.msra.mxu0 0
  %423 = vmatprep.subr.bf16.mxu0 0
  %424 = vmatpush2.bf16.msra.mxu0 0
  %425 = vmatprep.subr.bf16.mxu0 0
  %426 = vmatpush2.bf16.msra.mxu0 0
  %427 = vmatprep.mubr.bf16.mxu0 0
  %428 = vmatmul.mubr.bf16.gmra.mxu0 %v387
  %v429 = vpop.f32.mrf.mxu0
  %v430 = vadd.f32 %v358, %v429
  %v431 = vpop.f32.mrf.mxu0
  %v432 = vpop.f32.mrf.mxu0
  %v433 = vadd.f32 %v361, %v432
  %v434 = vpop.f32.mrf.mxu0
  %435 = vmatprep.mubr.bf16.mxu0 0
  %436 = vmatmul.mubr.bf16.gmra.mxu0 %v389
  %v437 = vpop.f32.mrf.mxu0
  %v438 = vadd.f32 %v366, %v437
  %v439 = vpop.f32.mrf.mxu0
  %v440 = vpop.f32.mrf.mxu0
  %v441 = vadd.f32 %v369, %v440
  %v442 = vpop.f32.mrf.mxu0
  %443 = vmatprep.mubr.bf16.mxu0 0
  %444 = vmatmul.mubr.bf16.gmra.mxu0 %v391
  %v445 = vpop.f32.mrf.mxu0
  %v446 = vadd.f32 %v374, %v445
  %v447 = vpop.f32.mrf.mxu0
  %v448 = vpop.f32.mrf.mxu0
  %v449 = vadd.f32 %v377, %v448
  %v450 = vpop.f32.mrf.mxu0
  %451 = vmatprep.mubr.bf16.mxu0 0
  %452 = vmatmul.mubr.bf16.gmra.mxu0 %v393
  %v453 = vpop.f32.mrf.mxu0
  %v454 = vadd.f32 %v382, %v453
  %v455 = vpop.f32.mrf.mxu0
  %v456 = vpop.f32.mrf.mxu0
  %v457 = vpop.f32.mrf.mxu0
  %458 = vdwg.mxu0
  %s459 = scalar_lea.vmem %s7, 32
  %v460 = vld [vmem:[%s459] sm:$0xff]
  %v461 = vld [vmem:[%s459 + $0x8] sm:$0xff]
  %v462 = vpack.c.bf16 %v461, %v460
  %vm467 = vcmask 1046528
  %v468 = vrot.slane %v267, 1
  %v469 = vrot.slane %v268, 1
  %v470 = vsel %vm467, %v468, %v469
  %v471 = vrot.slane %v269, 1
  %v472 = vsel %vm467, %v469, %v471
  %v473 = vrot.slane %v270, 1
  %v474 = vsel %vm467, %v471, %v473
  %v476 = vsel %vm310, %v470, 0
  %v479 = vsel %vm310, %v472, 0
  %v482 = vsel %vm310, %v474, 0
  %v485 = vsel %vm310, %v473, 0
  %487 = vmatprep.subr.bf16.mxu0 0
  %488 = vmatpush1.bf16.msra.mxu0 0
  %489 = vmatprep.subr.bf16.mxu0 0
  %490 = vmatpush1.bf16.msra.mxu0 0
  %491 = vmatprep.subr.bf16.mxu0 0
  %492 = vmatpush1.bf16.msra.mxu0 0
  %493 = vmatprep.subr.bf16.mxu0 0
  %494 = vmatpush1.bf16.msra.mxu0 0
  %495 = vmatprep.subr.bf16.mxu0 0
  %496 = vmatpush1.bf16.msra.mxu0 0
  %497 = vmatprep.subr.bf16.mxu0 0
  %498 = vmatpush1.bf16.msra.mxu0 0
  %499 = vmatprep.subr.bf16.mxu0 0
  %500 = vmatpush1.bf16.msra.mxu0 0
  %501 = vmatprep.subr.bf16.mxu0 0
  %502 = vmatpush1.bf16.msra.mxu0 %v462
  %503 = vmatprep.subr.bf16.mxu0 0
  %504 = vmatpush2.bf16.msra.mxu0 0
  %505 = vmatprep.subr.bf16.mxu0 0
  %506 = vmatpush2.bf16.msra.mxu0 0
  %507 = vmatprep.subr.bf16.mxu0 0
  %508 = vmatpush2.bf16.msra.mxu0 0
  %509 = vmatprep.subr.bf16.mxu0 0
  %510 = vmatpush2.bf16.msra.mxu0 0
  %511 = vmatprep.subr.bf16.mxu0 0
  %512 = vmatpush2.bf16.msra.mxu0 0
  %513 = vmatprep.subr.bf16.mxu0 0
  %514 = vmatpush2.bf16.msra.mxu0 0
  %515 = vmatprep.subr.bf16.mxu0 0
  %516 = vmatpush2.bf16.msra.mxu0 0
  %517 = vmatprep.subr.bf16.mxu0 0
  %518 = vmatpush2.bf16.msra.mxu0 0
  %519 = vmatprep.mubr.bf16.mxu0 0
  %520 = vmatmul.mubr.bf16.gmra.mxu0 %v476
  %v521 = vpop.f32.mrf.mxu0
  %v522 = vadd.f32 0.0, %v521
  %v523 = vpop.f32.mrf.mxu0
  %v524 = vpop.f32.mrf.mxu0
  %v525 = vadd.f32 0.0, %v524
  %v526 = vpop.f32.mrf.mxu0
  %527 = vmatprep.mubr.bf16.mxu0 0
  %528 = vmatmul.mubr.bf16.gmra.mxu0 %v479
  %v529 = vpop.f32.mrf.mxu0
  %v530 = vadd.f32 0.0, %v529
  %v531 = vpop.f32.mrf.mxu0
  %v532 = vpop.f32.mrf.mxu0
  %v533 = vadd.f32 0.0, %v532
  %v534 = vpop.f32.mrf.mxu0
  %535 = vmatprep.mubr.bf16.mxu0 0
  %536 = vmatmul.mubr.bf16.gmra.mxu0 %v482
  %v537 = vpop.f32.mrf.mxu0
  %v538 = vadd.f32 0.0, %v537
  %v539 = vpop.f32.mrf.mxu0
  %v540 = vpop.f32.mrf.mxu0
  %v541 = vadd.f32 0.0, %v540
  %v542 = vpop.f32.mrf.mxu0
  %543 = vmatprep.mubr.bf16.mxu0 0
  %544 = vmatmul.mubr.bf16.gmra.mxu0 %v485
  %v545 = vpop.f32.mrf.mxu0
  %v546 = vadd.f32 0.0, %v545
  %v547 = vpop.f32.mrf.mxu0
  %v548 = vpop.f32.mrf.mxu0
  %v549 = vpop.f32.mrf.mxu0
  %550 = vdwg.mxu0
  %v551 = vadd.f32 %v430, %v522
  %v552 = vadd.f32 %v433, %v525
  %v553 = vadd.f32 %v438, %v530
  %v554 = vadd.f32 %v441, %v533
  %v555 = vadd.f32 %v446, %v538
  %v556 = vadd.f32 %v449, %v541
  %v557 = vadd.f32 %v454, %v546
  %s558 = scalar_lea.vmem %s7, 48
  %v559 = vld [vmem:[%s558] sm:$0xff]
  %v560 = vld [vmem:[%s558 + $0x8] sm:$0xff]
  %v561 = vpack.c.bf16 %v560, %v559
  %vm562 = vsmask.f32 5376
  %v563 = vrot.slane %v280, 2
  %v564 = vrot.slane %v282, 3
  %v565 = vor.u32 %v563, %v564
  %v566 = vrot.slane %v291, 2
  %v567 = vrot.slane %v287, 3
  %v568 = vor.u32 %v566, %v567
  %v569 = vsel %vm562, %v565, %v568
  %v570 = vrot.slane %v299, 2
  %v571 = vrot.slane %v295, 3
  %v572 = vor.u32 %v570, %v571
  %v573 = vsel %vm562, %v568, %v572
  %v574 = vrot.slane %v307, 2
  %v575 = vrot.slane %v303, 3
  %v576 = vor.u32 %v574, %v575
  %v577 = vsel %vm562, %v572, %v576
  %v579 = vsel %vm310, %v569, 0
  %v582 = vsel %vm310, %v573, 0
  %v585 = vsel %vm310, %v577, 0
  %v588 = vsel %vm310, %v576, 0
  %590 = vmatprep.subr.bf16.mxu0 0
  %591 = vmatpush1.bf16.msra.mxu0 0
  %592 = vmatprep.subr.bf16.mxu0 0
  %593 = vmatpush1.bf16.msra.mxu0 0
  %594 = vmatprep.subr.bf16.mxu0 0
  %595 = vmatpush1.bf16.msra.mxu0 0
  %596 = vmatprep.subr.bf16.mxu0 0
  %597 = vmatpush1.bf16.msra.mxu0 0
  %598 = vmatprep.subr.bf16.mxu0 0
  %599 = vmatpush1.bf16.msra.mxu0 0
  %600 = vmatprep.subr.bf16.mxu0 0
  %601 = vmatpush1.bf16.msra.mxu0 0
  %602 = vmatprep.subr.bf16.mxu0 0
  %603 = vmatpush1.bf16.msra.mxu0 0
  %604 = vmatprep.subr.bf16.mxu0 0
  %605 = vmatpush1.bf16.msra.mxu0 %v561
  %606 = vmatprep.subr.bf16.mxu0 0
  %607 = vmatpush2.bf16.msra.mxu0 0
  %608 = vmatprep.subr.bf16.mxu0 0
  %609 = vmatpush2.bf16.msra.mxu0 0
  %610 = vmatprep.subr.bf16.mxu0 0
  %611 = vmatpush2.bf16.msra.mxu0 0
  %612 = vmatprep.subr.bf16.mxu0 0
  %613 = vmatpush2.bf16.msra.mxu0 0
  %614 = vmatprep.subr.bf16.mxu0 0
  %615 = vmatpush2.bf16.msra.mxu0 0
  %616 = vmatprep.subr.bf16.mxu0 0
  %617 = vmatpush2.bf16.msra.mxu0 0
  %618 = vmatprep.subr.bf16.mxu0 0
  %619 = vmatpush2.bf16.msra.mxu0 0
  %620 = vmatprep.subr.bf16.mxu0 0
  %621 = vmatpush2.bf16.msra.mxu0 0
  %622 = vmatprep.mubr.bf16.mxu0 0
  %623 = vmatmul.mubr.bf16.gmra.mxu0 %v579
  %v624 = vpop.f32.mrf.mxu0
  %v625 = vadd.f32 0.0, %v624
  %v626 = vpop.f32.mrf.mxu0
  %v627 = vpop.f32.mrf.mxu0
  %v628 = vadd.f32 0.0, %v627
  %v629 = vpop.f32.mrf.mxu0
  %630 = vmatprep.mubr.bf16.mxu0 0
  %631 = vmatmul.mubr.bf16.gmra.mxu0 %v582
  %v632 = vpop.f32.mrf.mxu0
  %v633 = vadd.f32 0.0, %v632
  %v634 = vpop.f32.mrf.mxu0
  %v635 = vpop.f32.mrf.mxu0
  %v636 = vadd.f32 0.0, %v635
  %v637 = vpop.f32.mrf.mxu0
  %638 = vmatprep.mubr.bf16.mxu0 0
  %639 = vmatmul.mubr.bf16.gmra.mxu0 %v585
  %v640 = vpop.f32.mrf.mxu0
  %v641 = vadd.f32 0.0, %v640
  %v642 = vpop.f32.mrf.mxu0
  %v643 = vpop.f32.mrf.mxu0
  %v644 = vadd.f32 0.0, %v643
  %v645 = vpop.f32.mrf.mxu0
  %646 = vmatprep.mubr.bf16.mxu0 0
  %647 = vmatmul.mubr.bf16.gmra.mxu0 %v588
  %v648 = vpop.f32.mrf.mxu0
  %v649 = vadd.f32 0.0, %v648
  %v650 = vpop.f32.mrf.mxu0
  %v651 = vpop.f32.mrf.mxu0
  %v652 = vpop.f32.mrf.mxu0
  %653 = vdwg.mxu0
  %v654 = vadd.f32 %v551, %v625
  %v655 = vadd.f32 %v552, %v628
  %v656 = vadd.f32 %v553, %v633
  %v657 = vadd.f32 %v554, %v636
  %v658 = vadd.f32 %v555, %v641
  %v659 = vadd.f32 %v556, %v644
  %v660 = vadd.f32 %v557, %v649
  %s661 = scalar_lea.vmem %s7, 64
  %v662 = vld [vmem:[%s661] sm:$0xff]
  %v663 = vld [vmem:[%s661 + $0x8] sm:$0xff]
  %v664 = vpack.c.bf16 %v663, %v662
  %vm665 = vcmask 1044480
  %v666 = vrot.slane %v267, 3
  %v667 = vrot.slane %v268, 3
  %v668 = vsel %vm665, %v666, %v667
  %v669 = vrot.slane %v269, 3
  %v670 = vsel %vm665, %v667, %v669
  %v671 = vrot.slane %v270, 3
  %v672 = vsel %vm665, %v669, %v671
  %v674 = vsel %vm310, %v668, 0
  %v677 = vsel %vm310, %v670, 0
  %v680 = vsel %vm310, %v672, 0
  %v683 = vsel %vm310, %v671, 0
  %685 = vmatprep.subr.bf16.mxu0 0
  %686 = vmatpush1.bf16.msra.mxu0 0
  %687 = vmatprep.subr.bf16.mxu0 0
  %688 = vmatpush1.bf16.msra.mxu0 0
  %689 = vmatprep.subr.bf16.mxu0 0
  %690 = vmatpush1.bf16.msra.mxu0 0
  %691 = vmatprep.subr.bf16.mxu0 0
  %692 = vmatpush1.bf16.msra.mxu0 0
  %693 = vmatprep.subr.bf16.mxu0 0
  %694 = vmatpush1.bf16.msra.mxu0 0
  %695 = vmatprep.subr.bf16.mxu0 0
  %696 = vmatpush1.bf16.msra.mxu0 0
  %697 = vmatprep.subr.bf16.mxu0 0
  %698 = vmatpush1.bf16.msra.mxu0 0
  %699 = vmatprep.subr.bf16.mxu0 0
  %700 = vmatpush1.bf16.msra.mxu0 %v664
  %701 = vmatprep.subr.bf16.mxu0 0
  %702 = vmatpush2.bf16.msra.mxu0 0
  %703 = vmatprep.subr.bf16.mxu0 0
  %704 = vmatpush2.bf16.msra.mxu0 0
  %705 = vmatprep.subr.bf16.mxu0 0
  %706 = vmatpush2.bf16.msra.mxu0 0
  %707 = vmatprep.subr.bf16.mxu0 0
  %708 = vmatpush2.bf16.msra.mxu0 0
  %709 = vmatprep.subr.bf16.mxu0 0
  %710 = vmatpush2.bf16.msra.mxu0 0
  %711 = vmatprep.subr.bf16.mxu0 0
  %712 = vmatpush2.bf16.msra.mxu0 0
  %713 = vmatprep.subr.bf16.mxu0 0
  %714 = vmatpush2.bf16.msra.mxu0 0
  %715 = vmatprep.subr.bf16.mxu0 0
  %716 = vmatpush2.bf16.msra.mxu0 0
  %717 = vmatprep.mubr.bf16.mxu0 0
  %718 = vmatmul.mubr.bf16.gmra.mxu0 %v674
  %v719 = vpop.f32.mrf.mxu0
  %v720 = vadd.f32 0.0, %v719
  %v721 = vpop.f32.mrf.mxu0
  %v722 = vpop.f32.mrf.mxu0
  %v723 = vadd.f32 0.0, %v722
  %v724 = vpop.f32.mrf.mxu0
  %725 = vmatprep.mubr.bf16.mxu0 0
  %726 = vmatmul.mubr.bf16.gmra.mxu0 %v677
  %v727 = vpop.f32.mrf.mxu0
  %v728 = vadd.f32 0.0, %v727
  %v729 = vpop.f32.mrf.mxu0
  %v730 = vpop.f32.mrf.mxu0
  %v731 = vadd.f32 0.0, %v730
  %v732 = vpop.f32.mrf.mxu0
  %733 = vmatprep.mubr.bf16.mxu0 0
  %734 = vmatmul.mubr.bf16.gmra.mxu0 %v680
  %v735 = vpop.f32.mrf.mxu0
  %v736 = vadd.f32 0.0, %v735
  %v737 = vpop.f32.mrf.mxu0
  %v738 = vpop.f32.mrf.mxu0
  %v739 = vadd.f32 0.0, %v738
  %v740 = vpop.f32.mrf.mxu0
  %741 = vmatprep.mubr.bf16.mxu0 0
  %742 = vmatmul.mubr.bf16.gmra.mxu0 %v683
  %v743 = vpop.f32.mrf.mxu0
  %v744 = vadd.f32 0.0, %v743
  %v745 = vpop.f32.mrf.mxu0
  %v746 = vpop.f32.mrf.mxu0
  %v747 = vpop.f32.mrf.mxu0
  %748 = vdwg.mxu0
  %v749 = vadd.f32 %v654, %v720
  %v750 = vadd.f32 %v655, %v723
  %v751 = vadd.f32 %v656, %v728
  %v752 = vadd.f32 %v657, %v731
  %v753 = vadd.f32 %v658, %v736
  %v754 = vadd.f32 %v659, %v739
  %v755 = vadd.f32 %v660, %v744
  %v756 = vpack.c.bf16 %v266, %v265
  %s757 = scalar_lea.vmem %s7, 80
  %v758 = vld [vmem:[%s757] sm:$0xff]
  %v759 = vld [vmem:[%s757 + $0x8] sm:$0xff]
  %v760 = vpack.c.bf16 %v759, %v758
  %vm761 = vsmask.f32 4352
  %v762 = vrot.slane %v280, 3
  %v763 = vrot.slane %v282, 4
  %v764 = vor.u32 %v762, %v763
  %v765 = vrot.slane %v291, 3
  %v766 = vrot.slane %v287, 4
  %v767 = vor.u32 %v765, %v766
  %v768 = vsel %vm761, %v764, %v767
  %v769 = vrot.slane %v299, 3
  %v770 = vrot.slane %v295, 4
  %v771 = vor.u32 %v769, %v770
  %v772 = vsel %vm761, %v767, %v771
  %v774 = vshrl.u32 %v756, 16
  %v776 = vrot.slane %v774, 3
  %v777 = vshll.u32 %v756, 16
  %v779 = vrot.slane %v777, 4
  %v780 = vor.u32 %v776, %v779
  %v781 = vsel %vm761, %v771, %v780
  %v783 = vsel %vm310, %v768, 0
  %v786 = vsel %vm310, %v772, 0
  %v789 = vsel %vm310, %v781, 0
  %v792 = vsel %vm310, %v780, 0
  %794 = vmatprep.subr.bf16.mxu0 0
  %795 = vmatpush1.bf16.msra.mxu0 0
  %796 = vmatprep.subr.bf16.mxu0 0
  %797 = vmatpush1.bf16.msra.mxu0 0
  %798 = vmatprep.subr.bf16.mxu0 0
  %799 = vmatpush1.bf16.msra.mxu0 0
  %800 = vmatprep.subr.bf16.mxu0 0
  %801 = vmatpush1.bf16.msra.mxu0 0
  %802 = vmatprep.subr.bf16.mxu0 0
  %803 = vmatpush1.bf16.msra.mxu0 0
  %804 = vmatprep.subr.bf16.mxu0 0
  %805 = vmatpush1.bf16.msra.mxu0 0
  %806 = vmatprep.subr.bf16.mxu0 0
  %807 = vmatpush1.bf16.msra.mxu0 0
  %808 = vmatprep.subr.bf16.mxu0 0
  %809 = vmatpush1.bf16.msra.mxu0 %v760
  %810 = vmatprep.subr.bf16.mxu0 0
  %811 = vmatpush2.bf16.msra.mxu0 0
  %812 = vmatprep.subr.bf16.mxu0 0
  %813 = vmatpush2.bf16.msra.mxu0 0
  %814 = vmatprep.subr.bf16.mxu0 0
  %815 = vmatpush2.bf16.msra.mxu0 0
  %816 = vmatprep.subr.bf16.mxu0 0
  %817 = vmatpush2.bf16.msra.mxu0 0
  %818 = vmatprep.subr.bf16.mxu0 0
  %819 = vmatpush2.bf16.msra.mxu0 0
  %820 = vmatprep.subr.bf16.mxu0 0
  %821 = vmatpush2.bf16.msra.mxu0 0
  %822 = vmatprep.subr.bf16.mxu0 0
  %823 = vmatpush2.bf16.msra.mxu0 0
  %824 = vmatprep.subr.bf16.mxu0 0
  %825 = vmatpush2.bf16.msra.mxu0 0
  %826 = vmatprep.mubr.bf16.mxu0 0
  %827 = vmatmul.mubr.bf16.gmra.mxu0 %v783
  %v828 = vpop.f32.mrf.mxu0
  %v829 = vadd.f32 0.0, %v828
  %v830 = vpop.f32.mrf.mxu0
  %v831 = vpop.f32.mrf.mxu0
  %v832 = vadd.f32 0.0, %v831
  %v833 = vpop.f32.mrf.mxu0
  %834 = vmatprep.mubr.bf16.mxu0 0
  %835 = vmatmul.mubr.bf16.gmra.mxu0 %v786
  %v836 = vpop.f32.mrf.mxu0
  %v837 = vadd.f32 0.0, %v836
  %v838 = vpop.f32.mrf.mxu0
  %v839 = vpop.f32.mrf.mxu0
  %v840 = vadd.f32 0.0, %v839
  %v841 = vpop.f32.mrf.mxu0
  %842 = vmatprep.mubr.bf16.mxu0 0
  %843 = vmatmul.mubr.bf16.gmra.mxu0 %v789
  %v844 = vpop.f32.mrf.mxu0
  %v845 = vadd.f32 0.0, %v844
  %v846 = vpop.f32.mrf.mxu0
  %v847 = vpop.f32.mrf.mxu0
  %v848 = vadd.f32 0.0, %v847
  %v849 = vpop.f32.mrf.mxu0
  %850 = vmatprep.mubr.bf16.mxu0 0
  %851 = vmatmul.mubr.bf16.gmra.mxu0 %v792
  %v852 = vpop.f32.mrf.mxu0
  %v853 = vadd.f32 0.0, %v852
  %v854 = vpop.f32.mrf.mxu0
  %v855 = vpop.f32.mrf.mxu0
  %v856 = vpop.f32.mrf.mxu0
  %857 = vdwg.mxu0
  %v858 = vadd.f32 %v749, %v829
  %v859 = vadd.f32 %v750, %v832
  %v860 = vadd.f32 %v751, %v837
  %v861 = vadd.f32 %v752, %v840
  %v862 = vadd.f32 %v753, %v845
  %v863 = vadd.f32 %v754, %v848
  %v864 = vadd.f32 %v755, %v853
  %v865 = vpack.c.bf16 %v261, %v260
  %v866 = vpack.c.bf16 %v263, %v262
  %v867 = vpack.c.bf16 %v265, %v264
  %v868 = vpack.c.bf16 %v266, %v266
  %s869 = scalar_lea.vmem %s7, 96
  %v870 = vld [vmem:[%s869] sm:$0xff]
  %v871 = vld [vmem:[%s869 + $0x8] sm:$0xff]
  %v872 = vpack.c.bf16 %v871, %v870
  %v877 = vrot.slane %v865, 1
  %v878 = vrot.slane %v866, 1
  %v879 = vsel %vm467, %v877, %v878
  %v880 = vrot.slane %v867, 1
  %v881 = vsel %vm467, %v878, %v880
  %v882 = vrot.slane %v868, 1
  %v883 = vsel %vm467, %v880, %v882
  %v885 = vsel %vm310, %v879, 0
  %v888 = vsel %vm310, %v881, 0
  %v891 = vsel %vm310, %v883, 0
  %v894 = vsel %vm310, %v882, 0
  %896 = vmatprep.subr.bf16.mxu0 0
  %897 = vmatpush1.bf16.msra.mxu0 0
  %898 = vmatprep.subr.bf16.mxu0 0
  %899 = vmatpush1.bf16.msra.mxu0 0
  %900 = vmatprep.subr.bf16.mxu0 0
  %901 = vmatpush1.bf16.msra.mxu0 0
  %902 = vmatprep.subr.bf16.mxu0 0
  %903 = vmatpush1.bf16.msra.mxu0 0
  %904 = vmatprep.subr.bf16.mxu0 0
  %905 = vmatpush1.bf16.msra.mxu0 0
  %906 = vmatprep.subr.bf16.mxu0 0
  %907 = vmatpush1.bf16.msra.mxu0 0
  %908 = vmatprep.subr.bf16.mxu0 0
  %909 = vmatpush1.bf16.msra.mxu0 0
  %910 = vmatprep.subr.bf16.mxu0 0
  %911 = vmatpush1.bf16.msra.mxu0 %v872
  %912 = vmatprep.subr.bf16.mxu0 0
  %913 = vmatpush2.bf16.msra.mxu0 0
  %914 = vmatprep.subr.bf16.mxu0 0
  %915 = vmatpush2.bf16.msra.mxu0 0
  %916 = vmatprep.subr.bf16.mxu0 0
  %917 = vmatpush2.bf16.msra.mxu0 0
  %918 = vmatprep.subr.bf16.mxu0 0
  %919 = vmatpush2.bf16.msra.mxu0 0
  %920 = vmatprep.subr.bf16.mxu0 0
  %921 = vmatpush2.bf16.msra.mxu0 0
  %922 = vmatprep.subr.bf16.mxu0 0
  %923 = vmatpush2.bf16.msra.mxu0 0
  %924 = vmatprep.subr.bf16.mxu0 0
  %925 = vmatpush2.bf16.msra.mxu0 0
  %926 = vmatprep.subr.bf16.mxu0 0
  %927 = vmatpush2.bf16.msra.mxu0 0
  %928 = vmatprep.mubr.bf16.mxu0 0
  %929 = vmatmul.mubr.bf16.gmra.mxu0 %v885
  %v930 = vpop.f32.mrf.mxu0
  %v931 = vadd.f32 0.0, %v930
  %v932 = vpop.f32.mrf.mxu0
  %v933 = vpop.f32.mrf.mxu0
  %v934 = vadd.f32 0.0, %v933
  %v935 = vpop.f32.mrf.mxu0
  %936 = vmatprep.mubr.bf16.mxu0 0
  %937 = vmatmul.mubr.bf16.gmra.mxu0 %v888
  %v938 = vpop.f32.mrf.mxu0
  %v939 = vadd.f32 0.0, %v938
  %v940 = vpop.f32.mrf.mxu0
  %v941 = vpop.f32.mrf.mxu0
  %v942 = vadd.f32 0.0, %v941
  %v943 = vpop.f32.mrf.mxu0
  %944 = vmatprep.mubr.bf16.mxu0 0
  %945 = vmatmul.mubr.bf16.gmra.mxu0 %v891
  %v946 = vpop.f32.mrf.mxu0
  %v947 = vadd.f32 0.0, %v946
  %v948 = vpop.f32.mrf.mxu0
  %v949 = vpop.f32.mrf.mxu0
  %v950 = vadd.f32 0.0, %v949
  %v951 = vpop.f32.mrf.mxu0
  %952 = vmatprep.mubr.bf16.mxu0 0
  %953 = vmatmul.mubr.bf16.gmra.mxu0 %v894
  %v954 = vpop.f32.mrf.mxu0
  %v955 = vadd.f32 0.0, %v954
  %v956 = vpop.f32.mrf.mxu0
  %v957 = vpop.f32.mrf.mxu0
  %v958 = vpop.f32.mrf.mxu0
  %959 = vdwg.mxu0
  %v960 = vadd.f32 %v858, %v931
  %v961 = vadd.f32 %v859, %v934
  %v962 = vadd.f32 %v860, %v939
  %v963 = vadd.f32 %v861, %v942
  %v964 = vadd.f32 %v862, %v947
  %v965 = vadd.f32 %v863, %v950
  %v966 = vadd.f32 %v864, %v955
  %s967 = scalar_lea.vmem %s7, 112
  %v968 = vld [vmem:[%s967] sm:$0xff]
  %v969 = vld [vmem:[%s967 + $0x8] sm:$0xff]
  %v970 = vpack.c.bf16 %v969, %v968
  %vm971 = vsmask.f32 6400
  %v973 = vshrl.u32 %v865, 16
  %v975 = vrot.slane %v973, 1
  %v976 = vshll.u32 %v865, 16
  %v978 = vrot.slane %v976, 2
  %v979 = vor.u32 %v975, %v978
  %v981 = vshrl.u32 %v866, 16
  %v983 = vrot.slane %v981, 1
  %v984 = vshll.u32 %v866, 16
  %v986 = vrot.slane %v984, 2
  %v987 = vor.u32 %v983, %v986
  %v988 = vsel %vm971, %v979, %v987
  %v990 = vshrl.u32 %v867, 16
  %v992 = vrot.slane %v990, 1
  %v993 = vshll.u32 %v867, 16
  %v995 = vrot.slane %v993, 2
  %v996 = vor.u32 %v992, %v995
  %v997 = vsel %vm971, %v987, %v996
  %v999 = vshrl.u32 %v868, 16
  %v1001 = vrot.slane %v999, 1
  %v1002 = vshll.u32 %v868, 16
  %v1004 = vrot.slane %v1002, 2
  %v1005 = vor.u32 %v1001, %v1004
  %v1006 = vsel %vm971, %v996, %v1005
  %v1008 = vsel %vm310, %v988, 0
  %v1011 = vsel %vm310, %v997, 0
  %v1014 = vsel %vm310, %v1006, 0
  %v1017 = vsel %vm310, %v1005, 0
  %1019 = vmatprep.subr.bf16.mxu0 0
  %1020 = vmatpush1.bf16.msra.mxu0 0
  %1021 = vmatprep.subr.bf16.mxu0 0
  %1022 = vmatpush1.bf16.msra.mxu0 0
  %1023 = vmatprep.subr.bf16.mxu0 0
  %1024 = vmatpush1.bf16.msra.mxu0 0
  %1025 = vmatprep.subr.bf16.mxu0 0
  %1026 = vmatpush1.bf16.msra.mxu0 0
  %1027 = vmatprep.subr.bf16.mxu0 0
  %1028 = vmatpush1.bf16.msra.mxu0 0
  %1029 = vmatprep.subr.bf16.mxu0 0
  %1030 = vmatpush1.bf16.msra.mxu0 0
  %1031 = vmatprep.subr.bf16.mxu0 0
  %1032 = vmatpush1.bf16.msra.mxu0 0
  %1033 = vmatprep.subr.bf16.mxu0 0
  %1034 = vmatpush1.bf16.msra.mxu0 %v970
  %1035 = vmatprep.subr.bf16.mxu0 0
  %1036 = vmatpush2.bf16.msra.mxu0 0
  %1037 = vmatprep.subr.bf16.mxu0 0
  %1038 = vmatpush2.bf16.msra.mxu0 0
  %1039 = vmatprep.subr.bf16.mxu0 0
  %1040 = vmatpush2.bf16.msra.mxu0 0
  %1041 = vmatprep.subr.bf16.mxu0 0
  %1042 = vmatpush2.bf16.msra.mxu0 0
  %1043 = vmatprep.subr.bf16.mxu0 0
  %1044 = vmatpush2.bf16.msra.mxu0 0
  %1045 = vmatprep.subr.bf16.mxu0 0
  %1046 = vmatpush2.bf16.msra.mxu0 0
  %1047 = vmatprep.subr.bf16.mxu0 0
  %1048 = vmatpush2.bf16.msra.mxu0 0
  %1049 = vmatprep.subr.bf16.mxu0 0
  %1050 = vmatpush2.bf16.msra.mxu0 0
  %1051 = vmatprep.mubr.bf16.mxu0 0
  %1052 = vmatmul.mubr.bf16.gmra.mxu0 %v1008
  %v1053 = vpop.f32.mrf.mxu0
  %v1054 = vadd.f32 0.0, %v1053
  %v1055 = vpop.f32.mrf.mxu0
  %v1056 = vpop.f32.mrf.mxu0
  %v1057 = vadd.f32 0.0, %v1056
  %v1058 = vpop.f32.mrf.mxu0
  %1059 = vmatprep.mubr.bf16.mxu0 0
  %1060 = vmatmul.mubr.bf16.gmra.mxu0 %v1011
  %v1061 = vpop.f32.mrf.mxu0
  %v1062 = vadd.f32 0.0, %v1061
  %v1063 = vpop.f32.mrf.mxu0
  %v1064 = vpop.f32.mrf.mxu0
  %v1065 = vadd.f32 0.0, %v1064
  %v1066 = vpop.f32.mrf.mxu0
  %1067 = vmatprep.mubr.bf16.mxu0 0
  %1068 = vmatmul.mubr.bf16.gmra.mxu0 %v1014
  %v1069 = vpop.f32.mrf.mxu0
  %v1070 = vadd.f32 0.0, %v1069
  %v1071 = vpop.f32.mrf.mxu0
  %v1072 = vpop.f32.mrf.mxu0
  %v1073 = vadd.f32 0.0, %v1072
  %v1074 = vpop.f32.mrf.mxu0
  %1075 = vmatprep.mubr.bf16.mxu0 0
  %1076 = vmatmul.mubr.bf16.gmra.mxu0 %v1017
  %v1077 = vpop.f32.mrf.mxu0
  %v1078 = vadd.f32 0.0, %v1077
  %v1079 = vpop.f32.mrf.mxu0
  %v1080 = vpop.f32.mrf.mxu0
  %v1081 = vpop.f32.mrf.mxu0
  %1082 = vdwg.mxu0
  %v1083 = vadd.f32 %v960, %v1054
  %v1084 = vadd.f32 %v961, %v1057
  %v1085 = vadd.f32 %v962, %v1062
  %v1086 = vadd.f32 %v963, %v1065
  %v1087 = vadd.f32 %v964, %v1070
  %v1088 = vadd.f32 %v965, %v1073
  %v1089 = vadd.f32 %v966, %v1078
  %s1090 = scalar_lea.vmem %s7, 128
  %v1091 = vld [vmem:[%s1090] sm:$0xff]
  %v1092 = vld [vmem:[%s1090 + $0x8] sm:$0xff]
  %v1093 = vpack.c.bf16 %v1092, %v1091
  %vm1094 = vcmask 1045504
  %v1095 = vrot.slane %v865, 2
  %v1096 = vrot.slane %v866, 2
  %v1097 = vsel %vm1094, %v1095, %v1096
  %v1098 = vrot.slane %v867, 2
  %v1099 = vsel %vm1094, %v1096, %v1098
  %v1100 = vrot.slane %v868, 2
  %v1101 = vsel %vm1094, %v1098, %v1100
  %v1103 = vsel %vm310, %v1097, 0
  %v1106 = vsel %vm310, %v1099, 0
  %v1109 = vsel %vm310, %v1101, 0
  %v1112 = vsel %vm310, %v1100, 0
  %1114 = vmatprep.subr.bf16.mxu0 0
  %1115 = vmatpush1.bf16.msra.mxu0 0
  %1116 = vmatprep.subr.bf16.mxu0 0
  %1117 = vmatpush1.bf16.msra.mxu0 0
  %1118 = vmatprep.subr.bf16.mxu0 0
  %1119 = vmatpush1.bf16.msra.mxu0 0
  %1120 = vmatprep.subr.bf16.mxu0 0
  %1121 = vmatpush1.bf16.msra.mxu0 0
  %1122 = vmatprep.subr.bf16.mxu0 0
  %1123 = vmatpush1.bf16.msra.mxu0 0
  %1124 = vmatprep.subr.bf16.mxu0 0
  %1125 = vmatpush1.bf16.msra.mxu0 0
  %1126 = vmatprep.subr.bf16.mxu0 0
  %1127 = vmatpush1.bf16.msra.mxu0 0
  %1128 = vmatprep.subr.bf16.mxu0 0
  %1129 = vmatpush1.bf16.msra.mxu0 %v1093
  %1130 = vmatprep.subr.bf16.mxu0 0
  %1131 = vmatpush2.bf16.msra.mxu0 0
  %1132 = vmatprep.subr.bf16.mxu0 0
  %1133 = vmatpush2.bf16.msra.mxu0 0
  %1134 = vmatprep.subr.bf16.mxu0 0
  %1135 = vmatpush2.bf16.msra.mxu0 0
  %1136 = vmatprep.subr.bf16.mxu0 0
  %1137 = vmatpush2.bf16.msra.mxu0 0
  %1138 = vmatprep.subr.bf16.mxu0 0
  %1139 = vmatpush2.bf16.msra.mxu0 0
  %1140 = vmatprep.subr.bf16.mxu0 0
  %1141 = vmatpush2.bf16.msra.mxu0 0
  %1142 = vmatprep.subr.bf16.mxu0 0
  %1143 = vmatpush2.bf16.msra.mxu0 0
  %1144 = vmatprep.subr.bf16.mxu0 0
  %1145 = vmatpush2.bf16.msra.mxu0 0
  %1146 = vmatprep.mubr.bf16.mxu0 0
  %1147 = vmatmul.mubr.bf16.gmra.mxu0 %v1103
  %v1148 = vpop.f32.mrf.mxu0
  %v1149 = vadd.f32 0.0, %v1148
  %v1150 = vpop.f32.mrf.mxu0
  %v1151 = vpop.f32.mrf.mxu0
  %v1152 = vadd.f32 0.0, %v1151
  %v1153 = vpop.f32.mrf.mxu0
  %1154 = vmatprep.mubr.bf16.mxu0 0
  %1155 = vmatmul.mubr.bf16.gmra.mxu0 %v1106
  %v1156 = vpop.f32.mrf.mxu0
  %v1157 = vadd.f32 0.0, %v1156
  %v1158 = vpop.f32.mrf.mxu0
  %v1159 = vpop.f32.mrf.mxu0
  %v1160 = vadd.f32 0.0, %v1159
  %v1161 = vpop.f32.mrf.mxu0
  %1162 = vmatprep.mubr.bf16.mxu0 0
  %1163 = vmatmul.mubr.bf16.gmra.mxu0 %v1109
  %v1164 = vpop.f32.mrf.mxu0
  %v1165 = vadd.f32 0.0, %v1164
  %v1166 = vpop.f32.mrf.mxu0
  %v1167 = vpop.f32.mrf.mxu0
  %v1168 = vadd.f32 0.0, %v1167
  %v1169 = vpop.f32.mrf.mxu0
  %1170 = vmatprep.mubr.bf16.mxu0 0
  %1171 = vmatmul.mubr.bf16.gmra.mxu0 %v1112
  %v1172 = vpop.f32.mrf.mxu0
  %v1173 = vadd.f32 0.0, %v1172
  %v1174 = vpop.f32.mrf.mxu0
  %v1175 = vpop.f32.mrf.mxu0
  %v1176 = vpop.f32.mrf.mxu0
  %1177 = vdwg.mxu0
  %v1178 = vadd.f32 %v1083, %v1149
  %v1179 = vadd.f32 %v1084, %v1152
  %v1180 = vadd.f32 %v1085, %v1157
  %v1181 = vadd.f32 %v1086, %v1160
  %v1182 = vadd.f32 %v1087, %v1165
  %v1183 = vadd.f32 %v1088, %v1168
  %v1184 = vadd.f32 %v1089, %v1173
  %vm1185 = vcmask 31744
  %1186 = vst.msk [vmem:[%s8] sm:$0xff] %vm1185, %v1178
  %1187 = vst.msk [vmem:[%s8 + $0x8] sm:$0xff] %vm1185, %v1179
  %1188 = vst.msk [vmem:[%s8 + $0x10] sm:$0xff] %vm1185, %v1180
  %1189 = vst.msk [vmem:[%s8 + $0x18] sm:$0xff] %vm1185, %v1181
  %1190 = vst.msk [vmem:[%s8 + $0x20] sm:$0xff] %vm1185, %v1182
  %1191 = vst.msk [vmem:[%s8 + $0x28] sm:$0xff] %vm1185, %v1183
  %vm1192 = vcmask 25600
  %1193 = vst.msk [vmem:[%s8 + $0x30] sm:$0x3] %vm1192, %v1184
  // Predicated region
  $region34: #{mycnn_forward.14} parent=0 // pred_check
    _
  $region35: #{mycnn_forward.14} parent=0 // pred_check_branch
    %1195 = sbr.rel (0) target = $region37
  $region36: #{mycnn_forward.14} parent=0 // pred_region
    _
  $region37: #{mycnn_forward.14} parent=0 // pred_fallthru
    _
  // Predicated region
  $region38: #{mycnn_forward.14} parent=0 // pred_check
    _
  $region39: #{mycnn_forward.14} parent=0 // pred_check_branch
    %1197 = sbr.rel (0) target = $region41
  $region40: #{mycnn_forward.14} parent=0 // pred_region
    _
  $region41: #{mycnn_forward.14} parent=0 // pred_fallthru
    _

</llo_original>
